<compile_context>
chip_gen: v5e
topology: v5e:2x2
jax: 0.10.0
libtpu: 0.0.40
codegen_flags: <defaults>
</compile_context>

<pallas_src>
import functools

import jax
import jax.numpy as jnp
from jax import lax
from jax.experimental import pallas as pl
from jax.experimental.pallas import tpu as pltpu


def _cross_attention_kernel(x_ref, m_ref, wq_ref, wk_ref, wv_ref, wo_ref,
                            bo_ref, o_ref):
    """Cross_Attention.forward with softmax=False, mask=None, dropout=0.

    x_ref : (blk_n, D)       query tokens for this grid step
    m_ref : (M, D)           memory tokens (constant across the grid)
    wq/wk/wv_ref : (H, D, dh) per-head projection weights (no bias)
    wo_ref: (H, dh, D)       per-head slices of the output projection weight
    bo_ref: (1, D)           output projection bias
    o_ref : (D, blk_n)       output, channel-major (lane-dense stores)
    """
    heads = wq_ref.shape[0]
    blk_n, d = x_ref.shape
    mtok = m_ref.shape[0]
    scale = d ** (-0.5)                  # reference uses dim**-0.5 (not dim_head)

    bmm = functools.partial(lax.dot_general,
                            preferred_element_type=jnp.float32)

    # Broadcast tokens over the head axis so every matmul is one batched
    # dot_general on the MXU (no per-head loop, slices or concatenates).
    xb = jnp.broadcast_to(x_ref[...][None], (heads, blk_n, d))
    mb = jnp.broadcast_to(m_ref[...][None], (heads, mtok, d))

    # 'h n c, h c f -> h n f'
    q = bmm(xb, wq_ref[...], (((2,), (1,)), ((0,), (0,))))       # (H, blk_n, dh)
    k = bmm(mb, wk_ref[...], (((2,), (1,)), ((0,), (0,))))       # (H, M, dh)
    v = bmm(mb, wv_ref[...], (((2,), (1,)), ((0,), (0,))))       # (H, M, dh)

    # dots = einsum('bhid,bhjd->bhij', q, k) * scale  (no transpose materialized)
    dots = bmm(q, k, (((2,), (2,)), ((0,), (0,)))) * scale       # (H, blk_n, M)
    attn = dots        # softmax=False and mask=None in modality_token

    # out = einsum('bhij,bhjd->bhid', attn, v)
    o = bmm(attn, v, (((2,), (1,)), ((0,), (0,))))               # (H, blk_n, dh)

    # Output projection fused with the 'b h n d -> b n (h d)' rearrange:
    # per-head partials then a sum over heads (== concat(heads) @ Wo).
    parts = bmm(o, wo_ref[...], (((2,), (1,)), ((0,), (0,))))    # (H, blk_n, D)
    out = jnp.sum(parts, axis=0) + bo_ref[...]                   # (blk_n, D)

    # Channel-major store: lanes carry the token axis (dense stores) and the
    # wrapper's 'b (h w g) c -> b c h w g' becomes a pure reshape.
    o_ref[...] = out.T.astype(o_ref.dtype)


def _pick_block_n(n):
    """Largest query-token tile that keeps 128-multiple lane-dense blocks."""
    if n <= 512:
        return n
    for cand in (512, 256, 128):
        if n % cand == 0:
            return cand
    return 512          # trailing partial block is masked by Pallas


def cross_attention(x_tokens, m, p, *, heads, dim_head, block_n=None):
    """One Cross_Attention layer.  Returns the result channel-major: (D, N)."""
    n, d = x_tokens.shape
    mtok, _ = m.shape

    # Per-head weight layout, prepared once at trace time (tiny tensors).
    wq = p["wq"].reshape(d, heads, dim_head).transpose(1, 0, 2)   # (H, D, dh)
    wk = p["wk"].reshape(d, heads, dim_head).transpose(1, 0, 2)
    wv = p["wv"].reshape(d, heads, dim_head).transpose(1, 0, 2)
    wo = p["wo"].reshape(heads, dim_head, d)                      # (H, dh, D)
    bo = p["bo"].reshape(1, d)

    if block_n is None:
        block_n = _pick_block_n(n)
    grid = (pl.cdiv(n, block_n),)

    const = lambda shape: pl.BlockSpec(shape, lambda i: (0,) * len(shape))

    return pl.pallas_call(
        _cross_attention_kernel,
        out_shape=jax.ShapeDtypeStruct((d, n), jnp.float32),
        grid_spec=pltpu.PrefetchScalarGridSpec(
            num_scalar_prefetch=0,
            grid=grid,
            in_specs=[
                pl.BlockSpec((block_n, d), lambda i: (i, 0)),     # x tokens
                const((mtok, d)),                                 # memory m
                const((heads, d, dim_head)),                      # Wq
                const((heads, d, dim_head)),                      # Wk
                const((heads, d, dim_head)),                      # Wv
                const((heads, dim_head, d)),                      # Wo
                const((1, d)),                                    # b_out
            ],
            out_specs=pl.BlockSpec((d, block_n), lambda i: (0, i)),
        ),
        compiler_params=pltpu.CompilerParams(
            dimension_semantics=("parallel",)),
    )(x_tokens, m, wq, wk, wv, wo, bo)


def transformer_decoder_forward(x_tokens, m, layers, *, heads, dim_head):
    """TransformerDecoder.forward: `for (attn, ff) in layers: x = attn(x, m)`.
    (The PreNorm/FeedForward branch is dead code in the reference forward.)
    Returns the result channel-major (D, N)."""
    out_cn = None
    for i, layer_p in enumerate(layers):
        if i > 0:                       # only for depth > 1; modality_token uses depth=1
            x_tokens = out_cn.T
        out_cn = cross_attention(x_tokens, m, layer_p,
                                 heads=heads, dim_head=dim_head)
    return out_cn


def modality_token_forward(x, xq_list, layers, *, heads=16, dim_head=32):
    """modality_token.forward.  x: (1, dim, h, w, a); each xq is viewed as
    (-1, dim) memory tokens.  Returns a list of (1, dim, h, w, a) arrays."""
    b, c, hh, ww, aa = x.shape
    assert b == 1, "reference views the memory with batch 1, so b must be 1"
    n = hh * ww * aa
    # 'b c h w a -> b (h w a) c'  (b == 1)
    x_tokens = jnp.transpose(x, (0, 2, 3, 4, 1)).reshape(n, c)

    outs = []
    for xq in xq_list:
        m = xq.reshape(-1, c)                       # xq.view([1, -1, dim])
        out_cn = transformer_decoder_forward(x_tokens, m, layers,
                                             heads=heads, dim_head=dim_head)
        # Kernel output is already channel-major, so
        # 'b (h w g) c -> b c h w g' is just a reshape.
        outs.append(out_cn.reshape(1, c, hh, ww, aa))
    return outs


def _reference_forward(x, xq_list, layers, *, heads, dim_head):
    """Pure-XLA mirror of the PyTorch module, used for the in-script check."""
    hi = jax.lax.Precision.HIGHEST
    b, c, hh, ww, aa = x.shape
    scale = c ** (-0.5)
    xt = jnp.transpose(x, (0, 2, 3, 4, 1)).reshape(b, -1, c)
    outs = []
    for xq in xq_list:
        m = xq.reshape(1, -1, c)
        cur = xt
        for p in layers:
            q = jnp.einsum('bnc,cf->bnf', cur, p["wq"], precision=hi)
            k = jnp.einsum('bnc,cf->bnf', m, p["wk"], precision=hi)
            v = jnp.einsum('bnc,cf->bnf', m, p["wv"], precision=hi)

            def split(t):
                bb, nn, _ = t.shape
                return t.reshape(bb, nn, heads, dim_head).transpose(0, 2, 1, 3)

            qh, kh, vh = split(q), split(k), split(v)
            dots = jnp.einsum('bhid,bhjd->bhij', qh, kh, precision=hi) * scale
            attn = dots                               # softmax=False
            o = jnp.einsum('bhij,bhjd->bhid', attn, vh, precision=hi)
            o = o.transpose(0, 2, 1, 3).reshape(b, -1, heads * dim_head)
            cur = jnp.einsum('bnf,fc->bnc', o, p["wo"], precision=hi) + p["bo"]
        outs.append(jnp.transpose(cur.reshape(b, hh, ww, aa, c), (0, 4, 1, 2, 3)))
    return outs


if __name__ == "__main__":
    # modality_token hyper-params: dim=32, depth=1, heads=16, dim_head=32,
    # mlp_dim=128 (FeedForward is never applied), dropout=0, softmax=False.
    dim, depth, heads, dim_head = 32, 1, 16, 32
    inner = heads * dim_head

    # Small spatial extent for the demo (the real module hard-codes
    # h=20, w=24, g=16 -> 7680 tokens; 4*8*4 = 128 tokens here — the kernel
    # tiles the token axis, so the production size just adds grid steps).
    hh, ww, gg = 4, 8, 4

    key = jax.random.PRNGKey(0)
    kx, km1, km2, kq, kk, kv, ko, kb = jax.random.split(key, 8)
    x = jax.random.normal(kx, (1, dim, hh, ww, gg), jnp.float32)
    xq_list = [jax.random.normal(km1, (1, 8, dim), jnp.float32),
               jax.random.normal(km2, (4, 4, dim), jnp.float32)]

    layers = [dict(
        wq=0.05 * jax.random.normal(kq, (dim, inner), jnp.float32),
        wk=0.05 * jax.random.normal(kk, (dim, inner), jnp.float32),
        wv=0.05 * jax.random.normal(kv, (dim, inner), jnp.float32),
        wo=0.05 * jax.random.normal(ko, (inner, dim), jnp.float32),
        bo=0.05 * jax.random.normal(kb, (dim,), jnp.float32),
    ) for _ in range(depth)]

    outs = modality_token_forward(x, xq_list, layers,
                                  heads=heads, dim_head=dim_head)
    outs = jax.block_until_ready(outs)

    refs = _reference_forward(x, xq_list, layers,
                              heads=heads, dim_head=dim_head)
    for got, want in zip(outs, refs):
        assert got.shape == (1, dim, hh, ww, gg) and got.dtype == jnp.float32
        err = float(jnp.max(jnp.abs(got - want)))
        assert err < 2e-3, f"kernel/reference mismatch: max|diff|={err}"
    print("KERNEL_OK")
</pallas_src>

<mosaic_0001>
module attributes {stable_mosaic.version = 11 : i64} {
  func.func @_cross_attention_kernel(%arg0: i32, %arg1: memref<128x32xf32, #tpu.memory_space<vmem>>, %arg2: memref<8x32xf32, #tpu.memory_space<vmem>>, %arg3: memref<16x32x32xf32, #tpu.memory_space<vmem>>, %arg4: memref<16x32x32xf32, #tpu.memory_space<vmem>>, %arg5: memref<16x32x32xf32, #tpu.memory_space<vmem>>, %arg6: memref<16x32x32xf32, #tpu.memory_space<vmem>>, %arg7: memref<1x32xf32, #tpu.memory_space<vmem>>, %arg8: memref<32x128xf32, #tpu.memory_space<vmem>>) attributes {dimension_semantics = [#tpu.dimension_semantics<parallel>], iteration_bounds = array<i64: 1>, scalar_prefetch = 0 : i64, scratch_operands = 0 : i64, tpu.core_type = #tpu.core_type<tc>, window_params = [{transform_indices = @transform_0, window_bounds = array<i64: 128, 32>}, {pipeline_mode = #tpu.pipeline_mode<synchronous>, transform_indices = @transform_1, window_bounds = array<i64: 8, 32>}, {pipeline_mode = #tpu.pipeline_mode<synchronous>, transform_indices = @transform_2, window_bounds = array<i64: 16, 32, 32>}, {pipeline_mode = #tpu.pipeline_mode<synchronous>, transform_indices = @transform_3, window_bounds = array<i64: 16, 32, 32>}, {pipeline_mode = #tpu.pipeline_mode<synchronous>, transform_indices = @transform_4, window_bounds = array<i64: 16, 32, 32>}, {pipeline_mode = #tpu.pipeline_mode<synchronous>, transform_indices = @transform_5, window_bounds = array<i64: 16, 32, 32>}, {pipeline_mode = #tpu.pipeline_mode<synchronous>, transform_indices = @transform_6, window_bounds = array<i64: 1, 32>}, {transform_indices = @transform_7, window_bounds = array<i64: 32, 128>}]} {
    %c0 = arith.constant 0 : index
    %c0_0 = arith.constant 0 : index
    %0 = vector.load %arg1[%c0, %c0_0] : memref<128x32xf32, #tpu.memory_space<vmem>>, vector<128x32xf32>
    %1 = vector.shape_cast %0 : vector<128x32xf32> to vector<1x128x32xf32>
    %2 = vector.shape_cast %1 : vector<1x128x32xf32> to vector<1x128x32xf32>
    %3 = vector.broadcast %2 : vector<1x128x32xf32> to vector<16x128x32xf32>
    %c0_1 = arith.constant 0 : index
    %c0_2 = arith.constant 0 : index
    %4 = vector.load %arg2[%c0_1, %c0_2] : memref<8x32xf32, #tpu.memory_space<vmem>>, vector<8x32xf32>
    %5 = vector.shape_cast %4 : vector<8x32xf32> to vector<1x8x32xf32>
    %6 = vector.shape_cast %5 : vector<1x8x32xf32> to vector<1x8x32xf32>
    %7 = vector.broadcast %6 : vector<1x8x32xf32> to vector<16x8x32xf32>
    %c0_3 = arith.constant 0 : index
    %c0_4 = arith.constant 0 : index
    %c0_5 = arith.constant 0 : index
    %8 = vector.load %arg3[%c0_3, %c0_4, %c0_5] : memref<16x32x32xf32, #tpu.memory_space<vmem>>, vector<16x32x32xf32>
    %cst = arith.constant dense<0.000000e+00> : vector<16x128x32xf32>
    %9 = tpu.matmul %3, %8, %cst {dimension_numbers = #tpu.dot_dimension_numbers<[2], [1], [1], [2], [0, 0, 0, 1, 1, 2], [0], [0]>} : vector<16x128x32xf32>, vector<16x32x32xf32>, vector<16x128x32xf32> -> vector<16x128x32xf32>
    %c0_6 = arith.constant 0 : index
    %c0_7 = arith.constant 0 : index
    %c0_8 = arith.constant 0 : index
    %10 = vector.load %arg4[%c0_6, %c0_7, %c0_8] : memref<16x32x32xf32, #tpu.memory_space<vmem>>, vector<16x32x32xf32>
    %cst_9 = arith.constant dense<0.000000e+00> : vector<16x8x32xf32>
    %11 = tpu.matmul %7, %10, %cst_9 {dimension_numbers = #tpu.dot_dimension_numbers<[2], [1], [1], [2], [0, 0, 0, 1, 1, 2], [0], [0]>} : vector<16x8x32xf32>, vector<16x32x32xf32>, vector<16x8x32xf32> -> vector<16x8x32xf32>
    %c0_10 = arith.constant 0 : index
    %c0_11 = arith.constant 0 : index
    %c0_12 = arith.constant 0 : index
    %12 = vector.load %arg5[%c0_10, %c0_11, %c0_12] : memref<16x32x32xf32, #tpu.memory_space<vmem>>, vector<16x32x32xf32>
    %cst_13 = arith.constant dense<0.000000e+00> : vector<16x8x32xf32>
    %13 = tpu.matmul %7, %12, %cst_13 {dimension_numbers = #tpu.dot_dimension_numbers<[2], [1], [1], [2], [0, 0, 0, 1, 1, 2], [0], [0]>} : vector<16x8x32xf32>, vector<16x32x32xf32>, vector<16x8x32xf32> -> vector<16x8x32xf32>
    %cst_14 = arith.constant dense<0.000000e+00> : vector<16x128x8xf32>
    %14 = tpu.matmul %9, %11, %cst_14 {dimension_numbers = #tpu.dot_dimension_numbers<[2], [2], [1], [1], [0, 0, 0, 1, 1, 1], [0], [0]>} : vector<16x128x32xf32>, vector<16x8x32xf32>, vector<16x128x8xf32> -> vector<16x128x8xf32>
    %cst_15 = arith.constant 0.176776692 : f32
    %15 = vector.broadcast %cst_15 : f32 to vector<16x128x8xf32>
    %16 = arith.mulf %14, %15 : vector<16x128x8xf32>
    %cst_16 = arith.constant dense<0.000000e+00> : vector<16x128x32xf32>
    %17 = tpu.matmul %16, %13, %cst_16 {dimension_numbers = #tpu.dot_dimension_numbers<[2], [1], [1], [2], [0, 0, 0, 1, 1, 2], [0], [0]>} : vector<16x128x8xf32>, vector<16x8x32xf32>, vector<16x128x32xf32> -> vector<16x128x32xf32>
    %c0_17 = arith.constant 0 : index
    %c0_18 = arith.constant 0 : index
    %c0_19 = arith.constant 0 : index
    %18 = vector.load %arg6[%c0_17, %c0_18, %c0_19] : memref<16x32x32xf32, #tpu.memory_space<vmem>>, vector<16x32x32xf32>
    %cst_20 = arith.constant dense<0.000000e+00> : vector<16x128x32xf32>
    %19 = tpu.matmul %17, %18, %cst_20 {dimension_numbers = #tpu.dot_dimension_numbers<[2], [1], [1], [2], [0, 0, 0, 1, 1, 2], [0], [0]>} : vector<16x128x32xf32>, vector<16x32x32xf32>, vector<16x128x32xf32> -> vector<16x128x32xf32>
    %cst_21 = arith.constant dense<0.000000e+00> : vector<128x32xf32>
    %20 = vector.multi_reduction <add>, %19, %cst_21 [0] : vector<16x128x32xf32> to vector<128x32xf32>
    %c0_22 = arith.constant 0 : index
    %c0_23 = arith.constant 0 : index
    %21 = vector.load %arg7[%c0_22, %c0_23] : memref<1x32xf32, #tpu.memory_space<vmem>>, vector<1x32xf32>
    %22 = vector.broadcast %21 : vector<1x32xf32> to vector<128x32xf32>
    %23 = arith.addf %20, %22 : vector<128x32xf32>
    %24 = tpu.transpose %23, [1, 0] : vector<128x32xf32> -> vector<32x128xf32>
    %c0_24 = arith.constant 0 : index
    %c0_25 = arith.constant 0 : index
    %25 = vector.load %arg8[%c0_24, %c0_25] : memref<32x128xf32, #tpu.memory_space<vmem>>, vector<32x128xf32>
    tpu.vector_store %arg8[%c0_24, %c0_25], %24 {strides = array<i32>} : memref<32x128xf32, #tpu.memory_space<vmem>>, vector<32x128xf32>,
    return
  }
  func.func @transform_0(%arg0: i32) -> (i32, i32) {
    %c0_i32 = arith.constant 0 : i32
    %c0_i32_0 = arith.constant 0 : i32
    return %arg0, %c0_i32 : i32, i32
  }
  func.func @transform_1(%arg0: i32) -> (i32, i32) {
    %c0_i32 = arith.constant 0 : i32
    %c0_i32_0 = arith.constant 0 : i32
    %c0_i32_1 = arith.constant 0 : i32
    return %c0_i32, %c0_i32_0 : i32, i32
  }
  func.func @transform_2(%arg0: i32) -> (i32, i32, i32) {
    %c0_i32 = arith.constant 0 : i32
    %c0_i32_0 = arith.constant 0 : i32
    %c0_i32_1 = arith.constant 0 : i32
    %c0_i32_2 = arith.constant 0 : i32
    return %c0_i32, %c0_i32_0, %c0_i32_1 : i32, i32, i32
  }
  func.func @transform_3(%arg0: i32) -> (i32, i32, i32) {
    %c0_i32 = arith.constant 0 : i32
    %c0_i32_0 = arith.constant 0 : i32
    %c0_i32_1 = arith.constant 0 : i32
    %c0_i32_2 = arith.constant 0 : i32
    return %c0_i32, %c0_i32_0, %c0_i32_1 : i32, i32, i32
  }
  func.func @transform_4(%arg0: i32) -> (i32, i32, i32) {
    %c0_i32 = arith.constant 0 : i32
    %c0_i32_0 = arith.constant 0 : i32
    %c0_i32_1 = arith.constant 0 : i32
    %c0_i32_2 = arith.constant 0 : i32
    return %c0_i32, %c0_i32_0, %c0_i32_1 : i32, i32, i32
  }
  func.func @transform_5(%arg0: i32) -> (i32, i32, i32) {
    %c0_i32 = arith.constant 0 : i32
    %c0_i32_0 = arith.constant 0 : i32
    %c0_i32_1 = arith.constant 0 : i32
    %c0_i32_2 = arith.constant 0 : i32
    return %c0_i32, %c0_i32_0, %c0_i32_1 : i32, i32, i32
  }
  func.func @transform_6(%arg0: i32) -> (i32, i32) {
    %c0_i32 = arith.constant 0 : i32
    %c0_i32_0 = arith.constant 0 : i32
    %c0_i32_1 = arith.constant 0 : i32
    return %c0_i32, %c0_i32_0 : i32, i32
  }
  func.func @transform_7(%arg0: i32) -> (i32, i32) {
    %c0_i32 = arith.constant 0 : i32
    %c0_i32_0 = arith.constant 0 : i32
    return %c0_i32, %arg0 : i32, i32
  }
}

</mosaic_0001>

<llo_original>
// kernel: tpu_custom_call.1
$region0: #{tpu_custom_call.1}
  #allocation0 [shape = 'u32[]', space=smem, size = 0x4, offset = 0x4, fixed_abs, tag = 'smem constant byte address 0x4 - core index']
  #allocation1 [shape = 'u32[72,128]{1,0:T(1,128)}', space=vmem, size = 0x9000, scoped, tag = 'internal scratch']
  %s0 = inlined_call_operand.vmem [shape: f32[128,32], index: 0, kind: input, shape index: {}]
  %s1 = inlined_call_operand.vmem [shape: f32[8,32], index: 1, kind: input, shape index: {}]
  %s2 = inlined_call_operand.hbm [shape: f32[16,32,32], index: 2, kind: input, shape index: {}]
  %s3 = inlined_call_operand.hbm [shape: f32[16,32,32], index: 3, kind: input, shape index: {}]
  %s4 = inlined_call_operand.hbm [shape: f32[16,32,32], index: 4, kind: input, shape index: {}]
  %s5 = inlined_call_operand.hbm [shape: f32[16,32,32], index: 5, kind: input, shape index: {}]
  %s6 = inlined_call_operand.vmem [shape: f32[1,32], index: 6, kind: input, shape index: {}]
  %s7 = inlined_call_operand.hbm [shape: f32[32,128], index: 7, kind: output, shape index: {}]
  %s8 = sld [smem:[#allocation0]]
  $region54: #{tpu_custom_call.1} parent=0
    _
  %s10 = ssub.s32 1, %s8
  %s11 = scalar_select 0, %s10, %s8
  $region1: #{tpu_custom_call.1} parent=0
    #allocation2 [shape = 'u8[262144]{0}', space=vmem, size = 0x40000, scoped, tag = 'input window, operand 2, single buffered']
    #allocation3 [shape = 's32[1]{0}', space=sflag, size = 0x4, scoped, tag = 'scoped memory for tpu_custom_call.1']
    #allocation4 [shape = 's32[1]{0}', space=sflag, size = 0x4, scoped, tag = 'scoped memory for tpu_custom_call.1']
    #allocation5 [shape = 'u8[262144]{0}', space=vmem, size = 0x40000, scoped, tag = 'input window, operand 3, single buffered']
    #allocation6 [shape = 's32[1]{0}', space=sflag, size = 0x4, scoped, tag = 'scoped memory for tpu_custom_call.1']
    #allocation7 [shape = 'u8[262144]{0}', space=vmem, size = 0x40000, scoped, tag = 'input window, operand 4, single buffered']
    #allocation8 [shape = 'u8[262144]{0}', space=vmem, size = 0x40000, scoped, tag = 'input window, operand 5, single buffered']
    #allocation9 [shape = 's32[1]{0}', space=sflag, size = 0x4, scoped, tag = 'scoped memory for tpu_custom_call.1']
    #allocation10 [shape = 'u8[16384]{0}', space=vmem, size = 0x4000, scoped, tag = 'output window, operand 0, single buffered']
    %12 = vsyncpa [#allocation3], 0
    %13 = vsyncpa [#allocation6], 0
    %14 = vsyncpa [#allocation9], 0
    %15 = vsyncpa [#allocation4], 0
    // Predicated region
    $region2: #{tpu_custom_call.1} parent=1 // pred_check
      _
    $region3: #{tpu_custom_call.1} parent=1 // pred_check_branch
      %17 = sbr.rel (0) target = $region5
    $region4: #{tpu_custom_call.1} parent=1 // pred_region
      _
    $region5: #{tpu_custom_call.1} parent=1 // pred_fallthru
      _
    // Predicated region
    $region6: #{tpu_custom_call.1} parent=1 // pred_check
      _
    $region7: #{tpu_custom_call.1} parent=1 // pred_check_branch
      %19 = sbr.rel (0) target = $region9
    $region8: #{tpu_custom_call.1} parent=1 // pred_region
      _
    $region9: #{tpu_custom_call.1} parent=1 // pred_fallthru
      _
    // Predicated region
    $region10: #{tpu_custom_call.1} parent=1 // pred_check
      _
    $region11: #{tpu_custom_call.1} parent=1 // pred_check_branch
      %21 = sbr.rel (0) target = $region13
    $region12: #{tpu_custom_call.1} parent=1 // pred_region
      %23 = vsyncadd [#allocation3], 0
      %s24 = sshll.u32 %s2, 4
      %s25 = int_to_ptr.hbm [resolvable:$true] %s24
      %s26 = sshll.u32 [#allocation2], 4
      %s27 = int_to_ptr.vmem [resolvable:$true] %s26
      %32 = dma.hbm_to_vmem [thread:$0]  %s25, 8192, %s27, [#allocation3], 128, 128, 8
    $region13: #{tpu_custom_call.1} parent=1 // pred_fallthru
      _
    // Predicated region
    $region14: #{tpu_custom_call.1} parent=1 // pred_check
      _
    $region15: #{tpu_custom_call.1} parent=1 // pred_check_branch
      %34 = sbr.rel (0) target = $region17
    $region16: #{tpu_custom_call.1} parent=1 // pred_region
      %36 = vsyncadd [#allocation6], 0
      %s37 = sshll.u32 %s3, 4
      %s38 = int_to_ptr.hbm [resolvable:$true] %s37
      %s39 = sshll.u32 [#allocation5], 4
      %s40 = int_to_ptr.vmem [resolvable:$true] %s39
      %45 = dma.hbm_to_vmem [thread:$0]  %s38, 8192, %s40, [#allocation6], 128, 128, 8
    $region17: #{tpu_custom_call.1} parent=1 // pred_fallthru
      _
    // Predicated region
    $region18: #{tpu_custom_call.1} parent=1 // pred_check
      _
    $region19: #{tpu_custom_call.1} parent=1 // pred_check_branch
      %47 = sbr.rel (0) target = $region21
    $region20: #{tpu_custom_call.1} parent=1 // pred_region
      %49 = vsyncadd [#allocation6], 0
      %s50 = sshll.u32 %s4, 4
      %s51 = int_to_ptr.hbm [resolvable:$true] %s50
      %s52 = sshll.u32 [#allocation7], 4
      %s53 = int_to_ptr.vmem [resolvable:$true] %s52
      %58 = dma.hbm_to_vmem [thread:$0]  %s51, 8192, %s53, [#allocation6], 128, 128, 8
    $region21: #{tpu_custom_call.1} parent=1 // pred_fallthru
      _
    // Predicated region
    $region22: #{tpu_custom_call.1} parent=1 // pred_check
      _
    $region23: #{tpu_custom_call.1} parent=1 // pred_check_branch
      %60 = sbr.rel (0) target = $region25
    $region24: #{tpu_custom_call.1} parent=1 // pred_region
      %62 = vsyncadd [#allocation9], 0
      %s63 = sshll.u32 %s5, 4
      %s64 = int_to_ptr.hbm [resolvable:$true] %s63
      %s65 = sshll.u32 [#allocation8], 4
      %s66 = int_to_ptr.vmem [resolvable:$true] %s65
      %71 = dma.hbm_to_vmem [thread:$0]  %s64, 8192, %s66, [#allocation9], 128, 128, 8
    $region25: #{tpu_custom_call.1} parent=1 // pred_fallthru
      _
    // Predicated region
    $region26: #{tpu_custom_call.1} parent=1 // pred_check
      _
    $region27: #{tpu_custom_call.1} parent=1 // pred_check_branch
      %73 = sbr.rel (0) target = $region29
    $region28: #{tpu_custom_call.1} parent=1 // pred_region
      _
    $region29: #{tpu_custom_call.1} parent=1 // pred_fallthru
      _
    // Predicated region
    $region30: #{tpu_custom_call.1} parent=1 // pred_check
      _
    $region31: #{tpu_custom_call.1} parent=1 // pred_check_branch
      %75 = sbr.rel (0) target = $region33
    $region32: #{tpu_custom_call.1} parent=1 // pred_region
      %77 = dma.done [#allocation3], 8192
    $region33: #{tpu_custom_call.1} parent=1 // pred_fallthru
      _
    // Predicated region
    $region34: #{tpu_custom_call.1} parent=1 // pred_check
      _
    $region35: #{tpu_custom_call.1} parent=1 // pred_check_branch
      %79 = sbr.rel (0) target = $region37
    $region36: #{tpu_custom_call.1} parent=1 // pred_region
      %81 = dma.done [#allocation6], 8192
    $region37: #{tpu_custom_call.1} parent=1 // pred_fallthru
      _
    // Predicated region
    $region38: #{tpu_custom_call.1} parent=1 // pred_check
      _
    $region39: #{tpu_custom_call.1} parent=1 // pred_check_branch
      %83 = sbr.rel (0) target = $region41
    $region40: #{tpu_custom_call.1} parent=1 // pred_region
      %85 = dma.done [#allocation6], 8192
    $region41: #{tpu_custom_call.1} parent=1 // pred_fallthru
      _
    // Predicated region
    $region42: #{tpu_custom_call.1} parent=1 // pred_check
      _
    $region43: #{tpu_custom_call.1} parent=1 // pred_check_branch
      %87 = sbr.rel (0) target = $region45
    $region44: #{tpu_custom_call.1} parent=1 // pred_region
      %89 = dma.done [#allocation9], 8192
    $region45: #{tpu_custom_call.1} parent=1 // pred_fallthru
      _
    %v90 = vld [vmem:[%s0] sm:$0xff]
    %v91 = vld [vmem:[%s0 + $0x8] sm:$0xff]
    %v92 = vld [vmem:[%s0 + $0x10] sm:$0xff]
    %v93 = vld [vmem:[%s0 + $0x18] sm:$0xff]
    %v94 = vld [vmem:[%s0 + $0x20] sm:$0xff]
    %v95 = vld [vmem:[%s0 + $0x28] sm:$0xff]
    %v96 = vld [vmem:[%s0 + $0x30] sm:$0xff]
    %v97 = vld [vmem:[%s0 + $0x38] sm:$0xff]
    %v98 = vld [vmem:[%s0 + $0x40] sm:$0xff]
    %v99 = vld [vmem:[%s0 + $0x48] sm:$0xff]
    %v100 = vld [vmem:[%s0 + $0x50] sm:$0xff]
    %v101 = vld [vmem:[%s0 + $0x58] sm:$0xff]
    %v102 = vld [vmem:[%s0 + $0x60] sm:$0xff]
    %v103 = vld [vmem:[%s0 + $0x68] sm:$0xff]
    %v104 = vld [vmem:[%s0 + $0x70] sm:$0xff]
    %v105 = vld [vmem:[%s0 + $0x78] sm:$0xff]
    %v106 = vld [vmem:[%s1] sm:$0xff]
    %v107 = vld [vmem:[#allocation2] sm:$0xff]
    %v108 = vld [vmem:[#allocation2 + $0x8] sm:$0xff]
    %v109 = vld [vmem:[#allocation2 + $0x10] sm:$0xff]
    %v110 = vld [vmem:[#allocation2 + $0x18] sm:$0xff]
    %v111 = vld [vmem:[#allocation2 + $0x20] sm:$0xff]
    %v112 = vld [vmem:[#allocation2 + $0x28] sm:$0xff]
    %v113 = vld [vmem:[#allocation2 + $0x30] sm:$0xff]
    %v114 = vld [vmem:[#allocation2 + $0x38] sm:$0xff]
    %v115 = vld [vmem:[#allocation2 + $0x40] sm:$0xff]
    %v116 = vld [vmem:[#allocation2 + $0x48] sm:$0xff]
    %v117 = vld [vmem:[#allocation2 + $0x50] sm:$0xff]
    %v118 = vld [vmem:[#allocation2 + $0x58] sm:$0xff]
    %v119 = vld [vmem:[#allocation2 + $0x60] sm:$0xff]
    %v120 = vld [vmem:[#allocation2 + $0x68] sm:$0xff]
    %v121 = vld [vmem:[#allocation2 + $0x70] sm:$0xff]
    %v122 = vld [vmem:[#allocation2 + $0x78] sm:$0xff]
    %v123 = vld [vmem:[#allocation2 + $0x80] sm:$0xff]
    %v124 = vld [vmem:[#allocation2 + $0x88] sm:$0xff]
    %v125 = vld [vmem:[#allocation2 + $0x90] sm:$0xff]
    %v126 = vld [vmem:[#allocation2 + $0x98] sm:$0xff]
    %v127 = vld [vmem:[#allocation2 + $0xa0] sm:$0xff]
    %v128 = vld [vmem:[#allocation2 + $0xa8] sm:$0xff]
    %v129 = vld [vmem:[#allocation2 + $0xb0] sm:$0xff]
    %v130 = vld [vmem:[#allocation2 + $0xb8] sm:$0xff]
    %v131 = vld [vmem:[#allocation2 + $0xc0] sm:$0xff]
    %v132 = vld [vmem:[#allocation2 + $0xc8] sm:$0xff]
    %v133 = vld [vmem:[#allocation2 + $0xd0] sm:$0xff]
    %v134 = vld [vmem:[#allocation2 + $0xd8] sm:$0xff]
    %v135 = vld [vmem:[#allocation2 + $0xe0] sm:$0xff]
    %v136 = vld [vmem:[#allocation2 + $0xe8] sm:$0xff]
    %v137 = vld [vmem:[#allocation2 + $0xf0] sm:$0xff]
    %v138 = vld [vmem:[#allocation2 + $0xf8] sm:$0xff]
    %v139 = vld [vmem:[#allocation2 + $0x100] sm:$0xff]
    %v140 = vld [vmem:[#allocation2 + $0x108] sm:$0xff]
    %v141 = vld [vmem:[#allocation2 + $0x110] sm:$0xff]
    %v142 = vld [vmem:[#allocation2 + $0x118] sm:$0xff]
    %v143 = vld [vmem:[#allocation2 + $0x120] sm:$0xff]
    %v144 = vld [vmem:[#allocation2 + $0x128] sm:$0xff]
    %v145 = vld [vmem:[#allocation2 + $0x130] sm:$0xff]
    %v146 = vld [vmem:[#allocation2 + $0x138] sm:$0xff]
    %v147 = vld [vmem:[#allocation2 + $0x140] sm:$0xff]
    %v148 = vld [vmem:[#allocation2 + $0x148] sm:$0xff]
    %v149 = vld [vmem:[#allocation2 + $0x150] sm:$0xff]
    %v150 = vld [vmem:[#allocation2 + $0x158] sm:$0xff]
    %v151 = vld [vmem:[#allocation2 + $0x160] sm:$0xff]
    %v152 = vld [vmem:[#allocation2 + $0x168] sm:$0xff]
    %v153 = vld [vmem:[#allocation2 + $0x170] sm:$0xff]
    %v154 = vld [vmem:[#allocation2 + $0x178] sm:$0xff]
    %v155 = vld [vmem:[#allocation2 + $0x180] sm:$0xff]
    %v156 = vld [vmem:[#allocation2 + $0x188] sm:$0xff]
    %v157 = vld [vmem:[#allocation2 + $0x190] sm:$0xff]
    %v158 = vld [vmem:[#allocation2 + $0x198] sm:$0xff]
    %v159 = vld [vmem:[#allocation2 + $0x1a0] sm:$0xff]
    %v160 = vld [vmem:[#allocation2 + $0x1a8] sm:$0xff]
    %v161 = vld [vmem:[#allocation2 + $0x1b0] sm:$0xff]
    %v162 = vld [vmem:[#allocation2 + $0x1b8] sm:$0xff]
    %v163 = vld [vmem:[#allocation2 + $0x1c0] sm:$0xff]
    %v164 = vld [vmem:[#allocation2 + $0x1c8] sm:$0xff]
    %v165 = vld [vmem:[#allocation2 + $0x1d0] sm:$0xff]
    %v166 = vld [vmem:[#allocation2 + $0x1d8] sm:$0xff]
    %v167 = vld [vmem:[#allocation2 + $0x1e0] sm:$0xff]
    %v168 = vld [vmem:[#allocation2 + $0x1e8] sm:$0xff]
    %v169 = vld [vmem:[#allocation2 + $0x1f0] sm:$0xff]
    %v170 = vld [vmem:[#allocation2 + $0x1f8] sm:$0xff]
    %vm171 = vcmask 261120
    %v173 = vsel %vm171, %v90, 0
    %v176 = vsel %vm171, %v91, 0
    %v179 = vsel %vm171, %v92, 0
    %v182 = vsel %vm171, %v93, 0
    %v185 = vsel %vm171, %v94, 0
    %v188 = vsel %vm171, %v95, 0
    %v191 = vsel %vm171, %v96, 0
    %v194 = vsel %vm171, %v97, 0
    %v197 = vsel %vm171, %v98, 0
    %v200 = vsel %vm171, %v99, 0
    %v203 = vsel %vm171, %v100, 0
    %v206 = vsel %vm171, %v101, 0
    %v209 = vsel %vm171, %v102, 0
    %v212 = vsel %vm171, %v103, 0
    %v215 = vsel %vm171, %v104, 0
    %v218 = vsel %vm171, %v105, 0
    %220 = vmatpush.msra.mxu0 0.0
    %221 = vmatpush.msra.mxu0 0.0
    %222 = vmatpush.msra.mxu0 0.0
    %223 = vmatpush.msra.mxu0 0.0
    %224 = vmatpush.msra.mxu0 0.0
    %225 = vmatpush.msra.mxu0 0.0
    %226 = vmatpush.msra.mxu0 0.0
    %227 = vmatpush.msra.mxu0 0.0
    %228 = vmatpush.msra.mxu0 0.0
    %229 = vmatpush.msra.mxu0 0.0
    %230 = vmatpush.msra.mxu0 0.0
    %231 = vmatpush.msra.mxu0 0.0
    %232 = vmatpush.msra.mxu0 %v110
    %233 = vmatpush.msra.mxu0 %v109
    %234 = vmatpush.msra.mxu0 %v108
    %235 = vmatpush.msra.mxu0 %v107
    %236 = vmatmul.f32.gmra.mxu0 %v173
    %v237 = vpop.f32.mrf.mxu0
    %v238 = vadd.f32 0.0, %v237
    %239 = vmatmul.f32.gmra.mxu0 %v176
    %v240 = vpop.f32.mrf.mxu0
    %v241 = vadd.f32 0.0, %v240
    %242 = vmatmul.f32.gmra.mxu0 %v179
    %v243 = vpop.f32.mrf.mxu0
    %v244 = vadd.f32 0.0, %v243
    %245 = vmatmul.f32.gmra.mxu0 %v182
    %v246 = vpop.f32.mrf.mxu0
    %v247 = vadd.f32 0.0, %v246
    %248 = vmatmul.f32.gmra.mxu0 %v185
    %v249 = vpop.f32.mrf.mxu0
    %v250 = vadd.f32 0.0, %v249
    %251 = vmatmul.f32.gmra.mxu0 %v188
    %v252 = vpop.f32.mrf.mxu0
    %v253 = vadd.f32 0.0, %v252
    %254 = vmatmul.f32.gmra.mxu0 %v191
    %v255 = vpop.f32.mrf.mxu0
    %v256 = vadd.f32 0.0, %v255
    %257 = vmatmul.f32.gmra.mxu0 %v194
    %v258 = vpop.f32.mrf.mxu0
    %v259 = vadd.f32 0.0, %v258
    %260 = vmatmul.f32.gmra.mxu0 %v197
    %v261 = vpop.f32.mrf.mxu0
    %v262 = vadd.f32 0.0, %v261
    %263 = vmatmul.f32.gmra.mxu0 %v200
    %v264 = vpop.f32.mrf.mxu0
    %v265 = vadd.f32 0.0, %v264
    %266 = vmatmul.f32.gmra.mxu0 %v203
    %v267 = vpop.f32.mrf.mxu0
    %v268 = vadd.f32 0.0, %v267
    %269 = vmatmul.f32.gmra.mxu0 %v206
    %v270 = vpop.f32.mrf.mxu0
    %v271 = vadd.f32 0.0, %v270
    %272 = vmatmul.f32.gmra.mxu0 %v209
    %v273 = vpop.f32.mrf.mxu0
    %v274 = vadd.f32 0.0, %v273
    %275 = vmatmul.f32.gmra.mxu0 %v212
    %v276 = vpop.f32.mrf.mxu0
    %v277 = vadd.f32 0.0, %v276
    %278 = vmatmul.f32.gmra.mxu0 %v215
    %v279 = vpop.f32.mrf.mxu0
    %v280 = vadd.f32 0.0, %v279
    %281 = vmatmul.f32.gmra.mxu0 %v218
    %v282 = vpop.f32.mrf.mxu0
    %v283 = vadd.f32 0.0, %v282
    %284 = vdwg.mxu0
    %285 = vmatpush.msra.mxu0 0.0
    %286 = vmatpush.msra.mxu0 0.0
    %287 = vmatpush.msra.mxu0 0.0
    %288 = vmatpush.msra.mxu0 0.0
    %289 = vmatpush.msra.mxu0 0.0
    %290 = vmatpush.msra.mxu0 0.0
    %291 = vmatpush.msra.mxu0 0.0
    %292 = vmatpush.msra.mxu0 0.0
    %293 = vmatpush.msra.mxu0 0.0
    %294 = vmatpush.msra.mxu0 0.0
    %295 = vmatpush.msra.mxu0 0.0
    %296 = vmatpush.msra.mxu0 0.0
    %297 = vmatpush.msra.mxu0 %v114
    %298 = vmatpush.msra.mxu0 %v113
    %299 = vmatpush.msra.mxu0 %v112
    %300 = vmatpush.msra.mxu0 %v111
    %301 = vmatmul.f32.gmra.mxu0 %v173
    %v302 = vpop.f32.mrf.mxu0
    %v303 = vadd.f32 0.0, %v302
    %304 = vmatmul.f32.gmra.mxu0 %v176
    %v305 = vpop.f32.mrf.mxu0
    %v306 = vadd.f32 0.0, %v305
    %307 = vmatmul.f32.gmra.mxu0 %v179
    %v308 = vpop.f32.mrf.mxu0
    %v309 = vadd.f32 0.0, %v308
    %310 = vmatmul.f32.gmra.mxu0 %v182
    %v311 = vpop.f32.mrf.mxu0
    %v312 = vadd.f32 0.0, %v311
    %313 = vmatmul.f32.gmra.mxu0 %v185
    %v314 = vpop.f32.mrf.mxu0
    %v315 = vadd.f32 0.0, %v314
    %316 = vmatmul.f32.gmra.mxu0 %v188
    %v317 = vpop.f32.mrf.mxu0
    %v318 = vadd.f32 0.0, %v317
    %319 = vmatmul.f32.gmra.mxu0 %v191
    %v320 = vpop.f32.mrf.mxu0
    %v321 = vadd.f32 0.0, %v320
    %322 = vmatmul.f32.gmra.mxu0 %v194
    %v323 = vpop.f32.mrf.mxu0
    %v324 = vadd.f32 0.0, %v323
    %325 = vmatmul.f32.gmra.mxu0 %v197
    %v326 = vpop.f32.mrf.mxu0
    %v327 = vadd.f32 0.0, %v326
    %328 = vmatmul.f32.gmra.mxu0 %v200
    %v329 = vpop.f32.mrf.mxu0
    %v330 = vadd.f32 0.0, %v329
    %331 = vmatmul.f32.gmra.mxu0 %v203
    %v332 = vpop.f32.mrf.mxu0
    %v333 = vadd.f32 0.0, %v332
    %334 = vmatmul.f32.gmra.mxu0 %v206
    %v335 = vpop.f32.mrf.mxu0
    %v336 = vadd.f32 0.0, %v335
    %337 = vmatmul.f32.gmra.mxu0 %v209
    %v338 = vpop.f32.mrf.mxu0
    %v339 = vadd.f32 0.0, %v338
    %340 = vmatmul.f32.gmra.mxu0 %v212
    %v341 = vpop.f32.mrf.mxu0
    %v342 = vadd.f32 0.0, %v341
    %343 = vmatmul.f32.gmra.mxu0 %v215
    %v344 = vpop.f32.mrf.mxu0
    %v345 = vadd.f32 0.0, %v344
    %346 = vmatmul.f32.gmra.mxu0 %v218
    %v347 = vpop.f32.mrf.mxu0
    %v348 = vadd.f32 0.0, %v347
    %349 = vdwg.mxu0
    %350 = vmatpush.msra.mxu0 0.0
    %351 = vmatpush.msra.mxu0 0.0
    %352 = vmatpush.msra.mxu0 0.0
    %353 = vmatpush.msra.mxu0 0.0
    %354 = vmatpush.msra.mxu0 0.0
    %355 = vmatpush.msra.mxu0 0.0
    %356 = vmatpush.msra.mxu0 0.0
    %357 = vmatpush.msra.mxu0 0.0
    %358 = vmatpush.msra.mxu0 0.0
    %359 = vmatpush.msra.mxu0 0.0
    %360 = vmatpush.msra.mxu0 0.0
    %361 = vmatpush.msra.mxu0 0.0
    %362 = vmatpush.msra.mxu0 %v118
    %363 = vmatpush.msra.mxu0 %v117
    %364 = vmatpush.msra.mxu0 %v116
    %365 = vmatpush.msra.mxu0 %v115
    %366 = vmatmul.f32.gmra.mxu0 %v173
    %v367 = vpop.f32.mrf.mxu0
    %v368 = vadd.f32 0.0, %v367
    %369 = vmatmul.f32.gmra.mxu0 %v176
    %v370 = vpop.f32.mrf.mxu0
    %v371 = vadd.f32 0.0, %v370
    %372 = vmatmul.f32.gmra.mxu0 %v179
    %v373 = vpop.f32.mrf.mxu0
    %v374 = vadd.f32 0.0, %v373
    %375 = vmatmul.f32.gmra.mxu0 %v182
    %v376 = vpop.f32.mrf.mxu0
    %v377 = vadd.f32 0.0, %v376
    %378 = vmatmul.f32.gmra.mxu0 %v185
    %v379 = vpop.f32.mrf.mxu0
    %v380 = vadd.f32 0.0, %v379
    %381 = vmatmul.f32.gmra.mxu0 %v188
    %v382 = vpop.f32.mrf.mxu0
    %v383 = vadd.f32 0.0, %v382
    %384 = vmatmul.f32.gmra.mxu0 %v191
    %v385 = vpop.f32.mrf.mxu0
    %v386 = vadd.f32 0.0, %v385
    %387 = vmatmul.f32.gmra.mxu0 %v194
    %v388 = vpop.f32.mrf.mxu0
    %v389 = vadd.f32 0.0, %v388
    %390 = vmatmul.f32.gmra.mxu0 %v197
    %v391 = vpop.f32.mrf.mxu0
    %v392 = vadd.f32 0.0, %v391
    %393 = vmatmul.f32.gmra.mxu0 %v200
    %v394 = vpop.f32.mrf.mxu0
    %v395 = vadd.f32 0.0, %v394
    %396 = vmatmul.f32.gmra.mxu0 %v203
    %v397 = vpop.f32.mrf.mxu0
    %v398 = vadd.f32 0.0, %v397
    %399 = vmatmul.f32.gmra.mxu0 %v206
    %v400 = vpop.f32.mrf.mxu0
    %v401 = vadd.f32 0.0, %v400
    %402 = vmatmul.f32.gmra.mxu0 %v209
    %v403 = vpop.f32.mrf.mxu0
    %v404 = vadd.f32 0.0, %v403
    %405 = vmatmul.f32.gmra.mxu0 %v212
    %v406 = vpop.f32.mrf.mxu0
    %v407 = vadd.f32 0.0, %v406
    %408 = vmatmul.f32.gmra.mxu0 %v215
    %v409 = vpop.f32.mrf.mxu0
    %v410 = vadd.f32 0.0, %v409
    %411 = vmatmul.f32.gmra.mxu0 %v218
    %v412 = vpop.f32.mrf.mxu0
    %v413 = vadd.f32 0.0, %v412
    %414 = vdwg.mxu0
    %415 = vmatpush.msra.mxu0 0.0
    %416 = vmatpush.msra.mxu0 0.0
    %417 = vmatpush.msra.mxu0 0.0
    %418 = vmatpush.msra.mxu0 0.0
    %419 = vmatpush.msra.mxu0 0.0
    %420 = vmatpush.msra.mxu0 0.0
    %421 = vmatpush.msra.mxu0 0.0
    %422 = vmatpush.msra.mxu0 0.0
    %423 = vmatpush.msra.mxu0 0.0
    %424 = vmatpush.msra.mxu0 0.0
    %425 = vmatpush.msra.mxu0 0.0
    %426 = vmatpush.msra.mxu0 0.0
    %427 = vmatpush.msra.mxu0 %v122
    %428 = vmatpush.msra.mxu0 %v121
    %429 = vmatpush.msra.mxu0 %v120
    %430 = vmatpush.msra.mxu0 %v119
    %431 = vmatmul.f32.gmra.mxu0 %v173
    %v432 = vpop.f32.mrf.mxu0
    %v433 = vadd.f32 0.0, %v432
    %434 = vmatmul.f32.gmra.mxu0 %v176
    %v435 = vpop.f32.mrf.mxu0
    %v436 = vadd.f32 0.0, %v435
    %437 = vmatmul.f32.gmra.mxu0 %v179
    %v438 = vpop.f32.mrf.mxu0
    %v439 = vadd.f32 0.0, %v438
    %440 = vmatmul.f32.gmra.mxu0 %v182
    %v441 = vpop.f32.mrf.mxu0
    %v442 = vadd.f32 0.0, %v441
    %443 = vmatmul.f32.gmra.mxu0 %v185
    %v444 = vpop.f32.mrf.mxu0
    %v445 = vadd.f32 0.0, %v444
    %446 = vmatmul.f32.gmra.mxu0 %v188
    %v447 = vpop.f32.mrf.mxu0
    %v448 = vadd.f32 0.0, %v447
    %449 = vmatmul.f32.gmra.mxu0 %v191
    %v450 = vpop.f32.mrf.mxu0
    %v451 = vadd.f32 0.0, %v450
    %452 = vmatmul.f32.gmra.mxu0 %v194
    %v453 = vpop.f32.mrf.mxu0
    %v454 = vadd.f32 0.0, %v453
    %455 = vmatmul.f32.gmra.mxu0 %v197
    %v456 = vpop.f32.mrf.mxu0
    %v457 = vadd.f32 0.0, %v456
    %458 = vmatmul.f32.gmra.mxu0 %v200
    %v459 = vpop.f32.mrf.mxu0
    %v460 = vadd.f32 0.0, %v459
    %461 = vmatmul.f32.gmra.mxu0 %v203
    %v462 = vpop.f32.mrf.mxu0
    %v463 = vadd.f32 0.0, %v462
    %464 = vmatmul.f32.gmra.mxu0 %v206
    %v465 = vpop.f32.mrf.mxu0
    %v466 = vadd.f32 0.0, %v465
    %467 = vmatmul.f32.gmra.mxu0 %v209
    %v468 = vpop.f32.mrf.mxu0
    %v469 = vadd.f32 0.0, %v468
    %470 = vmatmul.f32.gmra.mxu0 %v212
    %v471 = vpop.f32.mrf.mxu0
    %v472 = vadd.f32 0.0, %v471
    %473 = vmatmul.f32.gmra.mxu0 %v215
    %v474 = vpop.f32.mrf.mxu0
    %v475 = vadd.f32 0.0, %v474
    %476 = vmatmul.f32.gmra.mxu0 %v218
    %v477 = vpop.f32.mrf.mxu0
    %v478 = vadd.f32 0.0, %v477
    %479 = vdwg.mxu0
    %480 = vmatpush.msra.mxu0 0.0
    %481 = vmatpush.msra.mxu0 0.0
    %482 = vmatpush.msra.mxu0 0.0
    %483 = vmatpush.msra.mxu0 0.0
    %484 = vmatpush.msra.mxu0 0.0
    %485 = vmatpush.msra.mxu0 0.0
    %486 = vmatpush.msra.mxu0 0.0
    %487 = vmatpush.msra.mxu0 0.0
    %488 = vmatpush.msra.mxu0 0.0
    %489 = vmatpush.msra.mxu0 0.0
    %490 = vmatpush.msra.mxu0 0.0
    %491 = vmatpush.msra.mxu0 0.0
    %492 = vmatpush.msra.mxu0 %v126
    %493 = vmatpush.msra.mxu0 %v125
    %494 = vmatpush.msra.mxu0 %v124
    %495 = vmatpush.msra.mxu0 %v123
    %496 = vmatmul.f32.gmra.mxu0 %v173
    %v497 = vpop.f32.mrf.mxu0
    %v498 = vadd.f32 0.0, %v497
    %499 = vmatmul.f32.gmra.mxu0 %v176
    %v500 = vpop.f32.mrf.mxu0
    %v501 = vadd.f32 0.0, %v500
    %502 = vmatmul.f32.gmra.mxu0 %v179
    %v503 = vpop.f32.mrf.mxu0
    %v504 = vadd.f32 0.0, %v503
    %505 = vmatmul.f32.gmra.mxu0 %v182
    %v506 = vpop.f32.mrf.mxu0
    %v507 = vadd.f32 0.0, %v506
    %508 = vmatmul.f32.gmra.mxu0 %v185
    %v509 = vpop.f32.mrf.mxu0
    %v510 = vadd.f32 0.0, %v509
    %511 = vmatmul.f32.gmra.mxu0 %v188
    %v512 = vpop.f32.mrf.mxu0
    %v513 = vadd.f32 0.0, %v512
    %514 = vmatmul.f32.gmra.mxu0 %v191
    %v515 = vpop.f32.mrf.mxu0
    %v516 = vadd.f32 0.0, %v515
    %517 = vmatmul.f32.gmra.mxu0 %v194
    %v518 = vpop.f32.mrf.mxu0
    %v519 = vadd.f32 0.0, %v518
    %520 = vmatmul.f32.gmra.mxu0 %v197
    %v521 = vpop.f32.mrf.mxu0
    %v522 = vadd.f32 0.0, %v521
    %523 = vmatmul.f32.gmra.mxu0 %v200
    %v524 = vpop.f32.mrf.mxu0
    %v525 = vadd.f32 0.0, %v524
    %526 = vmatmul.f32.gmra.mxu0 %v203
    %v527 = vpop.f32.mrf.mxu0
    %v528 = vadd.f32 0.0, %v527
    %529 = vmatmul.f32.gmra.mxu0 %v206
    %v530 = vpop.f32.mrf.mxu0
    %v531 = vadd.f32 0.0, %v530
    %532 = vmatmul.f32.gmra.mxu0 %v209
    %v533 = vpop.f32.mrf.mxu0
    %v534 = vadd.f32 0.0, %v533
    %535 = vmatmul.f32.gmra.mxu0 %v212
    %v536 = vpop.f32.mrf.mxu0
    %v537 = vadd.f32 0.0, %v536
    %538 = vmatmul.f32.gmra.mxu0 %v215
    %v539 = vpop.f32.mrf.mxu0
    %v540 = vadd.f32 0.0, %v539
    %541 = vmatmul.f32.gmra.mxu0 %v218
    %v542 = vpop.f32.mrf.mxu0
    %v543 = vadd.f32 0.0, %v542
    %544 = vdwg.mxu0
    %545 = vmatpush.msra.mxu0 0.0
    %546 = vmatpush.msra.mxu0 0.0
    %547 = vmatpush.msra.mxu0 0.0
    %548 = vmatpush.msra.mxu0 0.0
    %549 = vmatpush.msra.mxu0 0.0
    %550 = vmatpush.msra.mxu0 0.0
    %551 = vmatpush.msra.mxu0 0.0
    %552 = vmatpush.msra.mxu0 0.0
    %553 = vmatpush.msra.mxu0 0.0
    %554 = vmatpush.msra.mxu0 0.0
    %555 = vmatpush.msra.mxu0 0.0
    %556 = vmatpush.msra.mxu0 0.0
    %557 = vmatpush.msra.mxu0 %v130
    %558 = vmatpush.msra.mxu0 %v129
    %559 = vmatpush.msra.mxu0 %v128
    %560 = vmatpush.msra.mxu0 %v127
    %561 = vmatmul.f32.gmra.mxu0 %v173
    %v562 = vpop.f32.mrf.mxu0
    %v563 = vadd.f32 0.0, %v562
    %564 = vmatmul.f32.gmra.mxu0 %v176
    %v565 = vpop.f32.mrf.mxu0
    %v566 = vadd.f32 0.0, %v565
    %567 = vmatmul.f32.gmra.mxu0 %v179
    %v568 = vpop.f32.mrf.mxu0
    %v569 = vadd.f32 0.0, %v568
    %570 = vmatmul.f32.gmra.mxu0 %v182
    %v571 = vpop.f32.mrf.mxu0
    %v572 = vadd.f32 0.0, %v571
    %573 = vmatmul.f32.gmra.mxu0 %v185
    %v574 = vpop.f32.mrf.mxu0
    %v575 = vadd.f32 0.0, %v574
    %576 = vmatmul.f32.gmra.mxu0 %v188
    %v577 = vpop.f32.mrf.mxu0
    %v578 = vadd.f32 0.0, %v577
    %579 = vmatmul.f32.gmra.mxu0 %v191
    %v580 = vpop.f32.mrf.mxu0
    %v581 = vadd.f32 0.0, %v580
    %582 = vmatmul.f32.gmra.mxu0 %v194
    %v583 = vpop.f32.mrf.mxu0
    %v584 = vadd.f32 0.0, %v583
    %585 = vmatmul.f32.gmra.mxu0 %v197
    %v586 = vpop.f32.mrf.mxu0
    %v587 = vadd.f32 0.0, %v586
    %588 = vmatmul.f32.gmra.mxu0 %v200
    %v589 = vpop.f32.mrf.mxu0
    %v590 = vadd.f32 0.0, %v589
    %591 = vmatmul.f32.gmra.mxu0 %v203
    %v592 = vpop.f32.mrf.mxu0
    %v593 = vadd.f32 0.0, %v592
    %594 = vmatmul.f32.gmra.mxu0 %v206
    %v595 = vpop.f32.mrf.mxu0
    %v596 = vadd.f32 0.0, %v595
    %597 = vmatmul.f32.gmra.mxu0 %v209
    %v598 = vpop.f32.mrf.mxu0
    %v599 = vadd.f32 0.0, %v598
    %600 = vmatmul.f32.gmra.mxu0 %v212
    %v601 = vpop.f32.mrf.mxu0
    %v602 = vadd.f32 0.0, %v601
    %603 = vmatmul.f32.gmra.mxu0 %v215
    %v604 = vpop.f32.mrf.mxu0
    %v605 = vadd.f32 0.0, %v604
    %606 = vmatmul.f32.gmra.mxu0 %v218
    %v607 = vpop.f32.mrf.mxu0
    %v608 = vadd.f32 0.0, %v607
    %609 = vdwg.mxu0
    %610 = vmatpush.msra.mxu0 0.0
    %611 = vmatpush.msra.mxu0 0.0
    %612 = vmatpush.msra.mxu0 0.0
    %613 = vmatpush.msra.mxu0 0.0
    %614 = vmatpush.msra.mxu0 0.0
    %615 = vmatpush.msra.mxu0 0.0
    %616 = vmatpush.msra.mxu0 0.0
    %617 = vmatpush.msra.mxu0 0.0
    %618 = vmatpush.msra.mxu0 0.0
    %619 = vmatpush.msra.mxu0 0.0
    %620 = vmatpush.msra.mxu0 0.0
    %621 = vmatpush.msra.mxu0 0.0
    %622 = vmatpush.msra.mxu0 %v134
    %623 = vmatpush.msra.mxu0 %v133
    %624 = vmatpush.msra.mxu0 %v132
    %625 = vmatpush.msra.mxu0 %v131
    %626 = vmatmul.f32.gmra.mxu0 %v173
    %v627 = vpop.f32.mrf.mxu0
    %v628 = vadd.f32 0.0, %v627
    %629 = vmatmul.f32.gmra.mxu0 %v176
    %v630 = vpop.f32.mrf.mxu0
    %v631 = vadd.f32 0.0, %v630
    %632 = vmatmul.f32.gmra.mxu0 %v179
    %v633 = vpop.f32.mrf.mxu0
    %v634 = vadd.f32 0.0, %v633
    %635 = vmatmul.f32.gmra.mxu0 %v182
    %v636 = vpop.f32.mrf.mxu0
    %v637 = vadd.f32 0.0, %v636
    %638 = vmatmul.f32.gmra.mxu0 %v185
    %v639 = vpop.f32.mrf.mxu0
    %v640 = vadd.f32 0.0, %v639
    %641 = vmatmul.f32.gmra.mxu0 %v188
    %v642 = vpop.f32.mrf.mxu0
    %v643 = vadd.f32 0.0, %v642
    %644 = vmatmul.f32.gmra.mxu0 %v191
    %v645 = vpop.f32.mrf.mxu0
    %v646 = vadd.f32 0.0, %v645
    %647 = vmatmul.f32.gmra.mxu0 %v194
    %v648 = vpop.f32.mrf.mxu0
    %v649 = vadd.f32 0.0, %v648
    %650 = vmatmul.f32.gmra.mxu0 %v197
    %v651 = vpop.f32.mrf.mxu0
    %v652 = vadd.f32 0.0, %v651
    %653 = vmatmul.f32.gmra.mxu0 %v200
    %v654 = vpop.f32.mrf.mxu0
    %v655 = vadd.f32 0.0, %v654
    %656 = vmatmul.f32.gmra.mxu0 %v203
    %v657 = vpop.f32.mrf.mxu0
    %v658 = vadd.f32 0.0, %v657
    %659 = vmatmul.f32.gmra.mxu0 %v206
    %v660 = vpop.f32.mrf.mxu0
    %v661 = vadd.f32 0.0, %v660
    %662 = vmatmul.f32.gmra.mxu0 %v209
    %v663 = vpop.f32.mrf.mxu0
    %v664 = vadd.f32 0.0, %v663
    %665 = vmatmul.f32.gmra.mxu0 %v212
    %v666 = vpop.f32.mrf.mxu0
    %v667 = vadd.f32 0.0, %v666
    %668 = vmatmul.f32.gmra.mxu0 %v215
    %v669 = vpop.f32.mrf.mxu0
    %v670 = vadd.f32 0.0, %v669
    %671 = vmatmul.f32.gmra.mxu0 %v218
    %v672 = vpop.f32.mrf.mxu0
    %v673 = vadd.f32 0.0, %v672
    %674 = vdwg.mxu0
    %675 = vmatpush.msra.mxu0 0.0
    %676 = vmatpush.msra.mxu0 0.0
    %677 = vmatpush.msra.mxu0 0.0
    %678 = vmatpush.msra.mxu0 0.0
    %679 = vmatpush.msra.mxu0 0.0
    %680 = vmatpush.msra.mxu0 0.0
    %681 = vmatpush.msra.mxu0 0.0
    %682 = vmatpush.msra.mxu0 0.0
    %683 = vmatpush.msra.mxu0 0.0
    %684 = vmatpush.msra.mxu0 0.0
    %685 = vmatpush.msra.mxu0 0.0
    %686 = vmatpush.msra.mxu0 0.0
    %687 = vmatpush.msra.mxu0 %v138
    %688 = vmatpush.msra.mxu0 %v137
    %689 = vmatpush.msra.mxu0 %v136
    %690 = vmatpush.msra.mxu0 %v135
    %691 = vmatmul.f32.gmra.mxu0 %v173
    %v692 = vpop.f32.mrf.mxu0
    %v693 = vadd.f32 0.0, %v692
    %694 = vmatmul.f32.gmra.mxu0 %v176
    %v695 = vpop.f32.mrf.mxu0
    %v696 = vadd.f32 0.0, %v695
    %697 = vmatmul.f32.gmra.mxu0 %v179
    %v698 = vpop.f32.mrf.mxu0
    %v699 = vadd.f32 0.0, %v698
    %700 = vmatmul.f32.gmra.mxu0 %v182
    %v701 = vpop.f32.mrf.mxu0
    %v702 = vadd.f32 0.0, %v701
    %703 = vmatmul.f32.gmra.mxu0 %v185
    %v704 = vpop.f32.mrf.mxu0
    %v705 = vadd.f32 0.0, %v704
    %706 = vmatmul.f32.gmra.mxu0 %v188
    %v707 = vpop.f32.mrf.mxu0
    %v708 = vadd.f32 0.0, %v707
    %709 = vmatmul.f32.gmra.mxu0 %v191
    %v710 = vpop.f32.mrf.mxu0
    %v711 = vadd.f32 0.0, %v710
    %712 = vmatmul.f32.gmra.mxu0 %v194
    %v713 = vpop.f32.mrf.mxu0
    %v714 = vadd.f32 0.0, %v713
    %715 = vmatmul.f32.gmra.mxu0 %v197
    %v716 = vpop.f32.mrf.mxu0
    %v717 = vadd.f32 0.0, %v716
    %718 = vmatmul.f32.gmra.mxu0 %v200
    %v719 = vpop.f32.mrf.mxu0
    %v720 = vadd.f32 0.0, %v719
    %721 = vmatmul.f32.gmra.mxu0 %v203
    %v722 = vpop.f32.mrf.mxu0
    %v723 = vadd.f32 0.0, %v722
    %724 = vmatmul.f32.gmra.mxu0 %v206
    %v725 = vpop.f32.mrf.mxu0
    %v726 = vadd.f32 0.0, %v725
    %727 = vmatmul.f32.gmra.mxu0 %v209
    %v728 = vpop.f32.mrf.mxu0
    %v729 = vadd.f32 0.0, %v728
    %730 = vmatmul.f32.gmra.mxu0 %v212
    %v731 = vpop.f32.mrf.mxu0
    %v732 = vadd.f32 0.0, %v731
    %733 = vmatmul.f32.gmra.mxu0 %v215
    %v734 = vpop.f32.mrf.mxu0
    %v735 = vadd.f32 0.0, %v734
    %736 = vmatmul.f32.gmra.mxu0 %v218
    %v737 = vpop.f32.mrf.mxu0
    %v738 = vadd.f32 0.0, %v737
    %739 = vdwg.mxu0
    %740 = vmatpush.msra.mxu0 0.0
    %741 = vmatpush.msra.mxu0 0.0
    %742 = vmatpush.msra.mxu0 0.0
    %743 = vmatpush.msra.mxu0 0.0
    %744 = vmatpush.msra.mxu0 0.0
    %745 = vmatpush.msra.mxu0 0.0
    %746 = vmatpush.msra.mxu0 0.0
    %747 = vmatpush.msra.mxu0 0.0
    %748 = vmatpush.msra.mxu0 0.0
    %749 = vmatpush.msra.mxu0 0.0
    %750 = vmatpush.msra.mxu0 0.0
    %751 = vmatpush.msra.mxu0 0.0
    %752 = vmatpush.msra.mxu0 %v142
    %753 = vmatpush.msra.mxu0 %v141
    %754 = vmatpush.msra.mxu0 %v140
    %755 = vmatpush.msra.mxu0 %v139
    %756 = vmatmul.f32.gmra.mxu0 %v173
    %v757 = vpop.f32.mrf.mxu0
    %v758 = vadd.f32 0.0, %v757
    %759 = vmatmul.f32.gmra.mxu0 %v176
    %v760 = vpop.f32.mrf.mxu0
    %v761 = vadd.f32 0.0, %v760
    %762 = vmatmul.f32.gmra.mxu0 %v179
    %v763 = vpop.f32.mrf.mxu0
    %v764 = vadd.f32 0.0, %v763
    %765 = vmatmul.f32.gmra.mxu0 %v182
    %v766 = vpop.f32.mrf.mxu0
    %v767 = vadd.f32 0.0, %v766
    %768 = vmatmul.f32.gmra.mxu0 %v185
    %v769 = vpop.f32.mrf.mxu0
    %v770 = vadd.f32 0.0, %v769
    %771 = vmatmul.f32.gmra.mxu0 %v188
    %v772 = vpop.f32.mrf.mxu0
    %v773 = vadd.f32 0.0, %v772
    %774 = vmatmul.f32.gmra.mxu0 %v191
    %v775 = vpop.f32.mrf.mxu0
    %v776 = vadd.f32 0.0, %v775
    %777 = vmatmul.f32.gmra.mxu0 %v194
    %v778 = vpop.f32.mrf.mxu0
    %v779 = vadd.f32 0.0, %v778
    %780 = vmatmul.f32.gmra.mxu0 %v197
    %v781 = vpop.f32.mrf.mxu0
    %v782 = vadd.f32 0.0, %v781
    %783 = vmatmul.f32.gmra.mxu0 %v200
    %v784 = vpop.f32.mrf.mxu0
    %v785 = vadd.f32 0.0, %v784
    %786 = vmatmul.f32.gmra.mxu0 %v203
    %v787 = vpop.f32.mrf.mxu0
    %v788 = vadd.f32 0.0, %v787
    %789 = vmatmul.f32.gmra.mxu0 %v206
    %v790 = vpop.f32.mrf.mxu0
    %v791 = vadd.f32 0.0, %v790
    %792 = vmatmul.f32.gmra.mxu0 %v209
    %v793 = vpop.f32.mrf.mxu0
    %v794 = vadd.f32 0.0, %v793
    %795 = vmatmul.f32.gmra.mxu0 %v212
    %v796 = vpop.f32.mrf.mxu0
    %v797 = vadd.f32 0.0, %v796
    %798 = vmatmul.f32.gmra.mxu0 %v215
    %v799 = vpop.f32.mrf.mxu0
    %v800 = vadd.f32 0.0, %v799
    %801 = vmatmul.f32.gmra.mxu0 %v218
    %v802 = vpop.f32.mrf.mxu0
    %v803 = vadd.f32 0.0, %v802
    %804 = vdwg.mxu0
    %805 = vmatpush.msra.mxu0 0.0
    %806 = vmatpush.msra.mxu0 0.0
    %807 = vmatpush.msra.mxu0 0.0
    %808 = vmatpush.msra.mxu0 0.0
    %809 = vmatpush.msra.mxu0 0.0
    %810 = vmatpush.msra.mxu0 0.0
    %811 = vmatpush.msra.mxu0 0.0
    %812 = vmatpush.msra.mxu0 0.0
    %813 = vmatpush.msra.mxu0 0.0
    %814 = vmatpush.msra.mxu0 0.0
    %815 = vmatpush.msra.mxu0 0.0
    %816 = vmatpush.msra.mxu0 0.0
    %817 = vmatpush.msra.mxu0 %v146
    %818 = vmatpush.msra.mxu0 %v145
    %819 = vmatpush.msra.mxu0 %v144
    %820 = vmatpush.msra.mxu0 %v143
    %821 = vmatmul.f32.gmra.mxu0 %v173
    %v822 = vpop.f32.mrf.mxu0
    %v823 = vadd.f32 0.0, %v822
    %824 = vmatmul.f32.gmra.mxu0 %v176
    %v825 = vpop.f32.mrf.mxu0
    %v826 = vadd.f32 0.0, %v825
    %827 = vmatmul.f32.gmra.mxu0 %v179
    %v828 = vpop.f32.mrf.mxu0
    %v829 = vadd.f32 0.0, %v828
    %830 = vmatmul.f32.gmra.mxu0 %v182
    %v831 = vpop.f32.mrf.mxu0
    %v832 = vadd.f32 0.0, %v831
    %833 = vmatmul.f32.gmra.mxu0 %v185
    %v834 = vpop.f32.mrf.mxu0
    %v835 = vadd.f32 0.0, %v834
    %836 = vmatmul.f32.gmra.mxu0 %v188
    %v837 = vpop.f32.mrf.mxu0
    %v838 = vadd.f32 0.0, %v837
    %839 = vmatmul.f32.gmra.mxu0 %v191
    %v840 = vpop.f32.mrf.mxu0
    %v841 = vadd.f32 0.0, %v840
    %842 = vmatmul.f32.gmra.mxu0 %v194
    %v843 = vpop.f32.mrf.mxu0
    %v844 = vadd.f32 0.0, %v843
    %845 = vmatmul.f32.gmra.mxu0 %v197
    %v846 = vpop.f32.mrf.mxu0
    %v847 = vadd.f32 0.0, %v846
    %848 = vmatmul.f32.gmra.mxu0 %v200
    %v849 = vpop.f32.mrf.mxu0
    %v850 = vadd.f32 0.0, %v849
    %851 = vmatmul.f32.gmra.mxu0 %v203
    %v852 = vpop.f32.mrf.mxu0
    %v853 = vadd.f32 0.0, %v852
    %854 = vmatmul.f32.gmra.mxu0 %v206
    %v855 = vpop.f32.mrf.mxu0
    %v856 = vadd.f32 0.0, %v855
    %857 = vmatmul.f32.gmra.mxu0 %v209
    %v858 = vpop.f32.mrf.mxu0
    %v859 = vadd.f32 0.0, %v858
    %860 = vmatmul.f32.gmra.mxu0 %v212
    %v861 = vpop.f32.mrf.mxu0
    %v862 = vadd.f32 0.0, %v861
    %863 = vmatmul.f32.gmra.mxu0 %v215
    %v864 = vpop.f32.mrf.mxu0
    %v865 = vadd.f32 0.0, %v864
    %866 = vmatmul.f32.gmra.mxu0 %v218
    %v867 = vpop.f32.mrf.mxu0
    %v868 = vadd.f32 0.0, %v867
    %869 = vdwg.mxu0
    %870 = vmatpush.msra.mxu0 0.0
    %871 = vmatpush.msra.mxu0 0.0
    %872 = vmatpush.msra.mxu0 0.0
    %873 = vmatpush.msra.mxu0 0.0
    %874 = vmatpush.msra.mxu0 0.0
    %875 = vmatpush.msra.mxu0 0.0
    %876 = vmatpush.msra.mxu0 0.0
    %877 = vmatpush.msra.mxu0 0.0
    %878 = vmatpush.msra.mxu0 0.0
    %879 = vmatpush.msra.mxu0 0.0
    %880 = vmatpush.msra.mxu0 0.0
    %881 = vmatpush.msra.mxu0 0.0
    %882 = vmatpush.msra.mxu0 %v150
    %883 = vmatpush.msra.mxu0 %v149
    %884 = vmatpush.msra.mxu0 %v148
    %885 = vmatpush.msra.mxu0 %v147
    %886 = vmatmul.f32.gmra.mxu0 %v173
    %v887 = vpop.f32.mrf.mxu0
    %v888 = vadd.f32 0.0, %v887
    %889 = vmatmul.f32.gmra.mxu0 %v176
    %v890 = vpop.f32.mrf.mxu0
    %v891 = vadd.f32 0.0, %v890
    %892 = vmatmul.f32.gmra.mxu0 %v179
    %v893 = vpop.f32.mrf.mxu0
    %v894 = vadd.f32 0.0, %v893
    %895 = vmatmul.f32.gmra.mxu0 %v182
    %v896 = vpop.f32.mrf.mxu0
    %v897 = vadd.f32 0.0, %v896
    %898 = vmatmul.f32.gmra.mxu0 %v185
    %v899 = vpop.f32.mrf.mxu0
    %v900 = vadd.f32 0.0, %v899
    %901 = vmatmul.f32.gmra.mxu0 %v188
    %v902 = vpop.f32.mrf.mxu0
    %v903 = vadd.f32 0.0, %v902
    %904 = vmatmul.f32.gmra.mxu0 %v191
    %v905 = vpop.f32.mrf.mxu0
    %v906 = vadd.f32 0.0, %v905
    %907 = vmatmul.f32.gmra.mxu0 %v194
    %v908 = vpop.f32.mrf.mxu0
    %v909 = vadd.f32 0.0, %v908
    %910 = vmatmul.f32.gmra.mxu0 %v197
    %v911 = vpop.f32.mrf.mxu0
    %v912 = vadd.f32 0.0, %v911
    %913 = vmatmul.f32.gmra.mxu0 %v200
    %v914 = vpop.f32.mrf.mxu0
    %v915 = vadd.f32 0.0, %v914
    %916 = vmatmul.f32.gmra.mxu0 %v203
    %v917 = vpop.f32.mrf.mxu0
    %v918 = vadd.f32 0.0, %v917
    %919 = vmatmul.f32.gmra.mxu0 %v206
    %v920 = vpop.f32.mrf.mxu0
    %v921 = vadd.f32 0.0, %v920
    %922 = vmatmul.f32.gmra.mxu0 %v209
    %v923 = vpop.f32.mrf.mxu0
    %v924 = vadd.f32 0.0, %v923
    %925 = vmatmul.f32.gmra.mxu0 %v212
    %v926 = vpop.f32.mrf.mxu0
    %v927 = vadd.f32 0.0, %v926
    %928 = vmatmul.f32.gmra.mxu0 %v215
    %v929 = vpop.f32.mrf.mxu0
    %v930 = vadd.f32 0.0, %v929
    %931 = vmatmul.f32.gmra.mxu0 %v218
    %v932 = vpop.f32.mrf.mxu0
    %v933 = vadd.f32 0.0, %v932
    %934 = vdwg.mxu0
    %935 = vmatpush.msra.mxu0 0.0
    %936 = vmatpush.msra.mxu0 0.0
    %937 = vmatpush.msra.mxu0 0.0
    %938 = vmatpush.msra.mxu0 0.0
    %939 = vmatpush.msra.mxu0 0.0
    %940 = vmatpush.msra.mxu0 0.0
    %941 = vmatpush.msra.mxu0 0.0
    %942 = vmatpush.msra.mxu0 0.0
    %943 = vmatpush.msra.mxu0 0.0
    %944 = vmatpush.msra.mxu0 0.0
    %945 = vmatpush.msra.mxu0 0.0
    %946 = vmatpush.msra.mxu0 0.0
    %947 = vmatpush.msra.mxu0 %v154
    %948 = vmatpush.msra.mxu0 %v153
    %949 = vmatpush.msra.mxu0 %v152
    %950 = vmatpush.msra.mxu0 %v151
    %951 = vmatmul.f32.gmra.mxu0 %v173
    %v952 = vpop.f32.mrf.mxu0
    %v953 = vadd.f32 0.0, %v952
    %954 = vmatmul.f32.gmra.mxu0 %v176
    %v955 = vpop.f32.mrf.mxu0
    %v956 = vadd.f32 0.0, %v955
    %957 = vmatmul.f32.gmra.mxu0 %v179
    %v958 = vpop.f32.mrf.mxu0
    %v959 = vadd.f32 0.0, %v958
    %960 = vmatmul.f32.gmra.mxu0 %v182
    %v961 = vpop.f32.mrf.mxu0
    %v962 = vadd.f32 0.0, %v961
    %963 = vmatmul.f32.gmra.mxu0 %v185
    %v964 = vpop.f32.mrf.mxu0
    %v965 = vadd.f32 0.0, %v964
    %966 = vmatmul.f32.gmra.mxu0 %v188
    %v967 = vpop.f32.mrf.mxu0
    %v968 = vadd.f32 0.0, %v967
    %969 = vmatmul.f32.gmra.mxu0 %v191
    %v970 = vpop.f32.mrf.mxu0
    %v971 = vadd.f32 0.0, %v970
    %972 = vmatmul.f32.gmra.mxu0 %v194
    %v973 = vpop.f32.mrf.mxu0
    %v974 = vadd.f32 0.0, %v973
    %975 = vmatmul.f32.gmra.mxu0 %v197
    %v976 = vpop.f32.mrf.mxu0
    %v977 = vadd.f32 0.0, %v976
    %978 = vmatmul.f32.gmra.mxu0 %v200
    %v979 = vpop.f32.mrf.mxu0
    %v980 = vadd.f32 0.0, %v979
    %981 = vmatmul.f32.gmra.mxu0 %v203
    %v982 = vpop.f32.mrf.mxu0
    %v983 = vadd.f32 0.0, %v982
    %984 = vmatmul.f32.gmra.mxu0 %v206
    %v985 = vpop.f32.mrf.mxu0
    %v986 = vadd.f32 0.0, %v985
    %987 = vmatmul.f32.gmra.mxu0 %v209
    %v988 = vpop.f32.mrf.mxu0
    %v989 = vadd.f32 0.0, %v988
    %990 = vmatmul.f32.gmra.mxu0 %v212
    %v991 = vpop.f32.mrf.mxu0
    %v992 = vadd.f32 0.0, %v991
    %993 = vmatmul.f32.gmra.mxu0 %v215
    %v994 = vpop.f32.mrf.mxu0
    %v995 = vadd.f32 0.0, %v994
    %996 = vmatmul.f32.gmra.mxu0 %v218
    %v997 = vpop.f32.mrf.mxu0
    %v998 = vadd.f32 0.0, %v997
    %999 = vdwg.mxu0
    %1000 = vmatpush.msra.mxu0 0.0
    %1001 = vmatpush.msra.mxu0 0.0
    %1002 = vmatpush.msra.mxu0 0.0
    %1003 = vmatpush.msra.mxu0 0.0
    %1004 = vmatpush.msra.mxu0 0.0
    %1005 = vmatpush.msra.mxu0 0.0
    %1006 = vmatpush.msra.mxu0 0.0
    %1007 = vmatpush.msra.mxu0 0.0
    %1008 = vmatpush.msra.mxu0 0.0
    %1009 = vmatpush.msra.mxu0 0.0
    %1010 = vmatpush.msra.mxu0 0.0
    %1011 = vmatpush.msra.mxu0 0.0
    %1012 = vmatpush.msra.mxu0 %v158
    %1013 = vmatpush.msra.mxu0 %v157
    %1014 = vmatpush.msra.mxu0 %v156
    %1015 = vmatpush.msra.mxu0 %v155
    %1016 = vmatmul.f32.gmra.mxu0 %v173
    %v1017 = vpop.f32.mrf.mxu0
    %v1018 = vadd.f32 0.0, %v1017
    %1019 = vmatmul.f32.gmra.mxu0 %v176
    %v1020 = vpop.f32.mrf.mxu0
    %v1021 = vadd.f32 0.0, %v1020
    %1022 = vmatmul.f32.gmra.mxu0 %v179
    %v1023 = vpop.f32.mrf.mxu0
    %v1024 = vadd.f32 0.0, %v1023
    %1025 = vmatmul.f32.gmra.mxu0 %v182
    %v1026 = vpop.f32.mrf.mxu0
    %v1027 = vadd.f32 0.0, %v1026
    %1028 = vmatmul.f32.gmra.mxu0 %v185
    %v1029 = vpop.f32.mrf.mxu0
    %v1030 = vadd.f32 0.0, %v1029
    %1031 = vmatmul.f32.gmra.mxu0 %v188
    %v1032 = vpop.f32.mrf.mxu0
    %v1033 = vadd.f32 0.0, %v1032
    %1034 = vmatmul.f32.gmra.mxu0 %v191
    %v1035 = vpop.f32.mrf.mxu0
    %v1036 = vadd.f32 0.0, %v1035
    %1037 = vmatmul.f32.gmra.mxu0 %v194
    %v1038 = vpop.f32.mrf.mxu0
    %v1039 = vadd.f32 0.0, %v1038
    %1040 = vmatmul.f32.gmra.mxu0 %v197
    %v1041 = vpop.f32.mrf.mxu0
    %v1042 = vadd.f32 0.0, %v1041
    %1043 = vmatmul.f32.gmra.mxu0 %v200
    %v1044 = vpop.f32.mrf.mxu0
    %v1045 = vadd.f32 0.0, %v1044
    %1046 = vmatmul.f32.gmra.mxu0 %v203
    %v1047 = vpop.f32.mrf.mxu0
    %v1048 = vadd.f32 0.0, %v1047
    %1049 = vmatmul.f32.gmra.mxu0 %v206
    %v1050 = vpop.f32.mrf.mxu0
    %v1051 = vadd.f32 0.0, %v1050
    %1052 = vmatmul.f32.gmra.mxu0 %v209
    %v1053 = vpop.f32.mrf.mxu0
    %v1054 = vadd.f32 0.0, %v1053
    %1055 = vmatmul.f32.gmra.mxu0 %v212
    %v1056 = vpop.f32.mrf.mxu0
    %v1057 = vadd.f32 0.0, %v1056
    %1058 = vmatmul.f32.gmra.mxu0 %v215
    %v1059 = vpop.f32.mrf.mxu0
    %v1060 = vadd.f32 0.0, %v1059
    %1061 = vmatmul.f32.gmra.mxu0 %v218
    %v1062 = vpop.f32.mrf.mxu0
    %v1063 = vadd.f32 0.0, %v1062
    %1064 = vdwg.mxu0
    %1065 = vmatpush.msra.mxu0 0.0
    %1066 = vmatpush.msra.mxu0 0.0
    %1067 = vmatpush.msra.mxu0 0.0
    %1068 = vmatpush.msra.mxu0 0.0
    %1069 = vmatpush.msra.mxu0 0.0
    %1070 = vmatpush.msra.mxu0 0.0
    %1071 = vmatpush.msra.mxu0 0.0
    %1072 = vmatpush.msra.mxu0 0.0
    %1073 = vmatpush.msra.mxu0 0.0
    %1074 = vmatpush.msra.mxu0 0.0
    %1075 = vmatpush.msra.mxu0 0.0
    %1076 = vmatpush.msra.mxu0 0.0
    %1077 = vmatpush.msra.mxu0 %v162
    %1078 = vmatpush.msra.mxu0 %v161
    %1079 = vmatpush.msra.mxu0 %v160
    %1080 = vmatpush.msra.mxu0 %v159
    %1081 = vmatmul.f32.gmra.mxu0 %v173
    %v1082 = vpop.f32.mrf.mxu0
    %v1083 = vadd.f32 0.0, %v1082
    %1084 = vmatmul.f32.gmra.mxu0 %v176
    %v1085 = vpop.f32.mrf.mxu0
    %v1086 = vadd.f32 0.0, %v1085
    %1087 = vmatmul.f32.gmra.mxu0 %v179
    %v1088 = vpop.f32.mrf.mxu0
    %v1089 = vadd.f32 0.0, %v1088
    %1090 = vmatmul.f32.gmra.mxu0 %v182
    %v1091 = vpop.f32.mrf.mxu0
    %v1092 = vadd.f32 0.0, %v1091
    %1093 = vmatmul.f32.gmra.mxu0 %v185
    %v1094 = vpop.f32.mrf.mxu0
    %v1095 = vadd.f32 0.0, %v1094
    %1096 = vmatmul.f32.gmra.mxu0 %v188
    %v1097 = vpop.f32.mrf.mxu0
    %v1098 = vadd.f32 0.0, %v1097
    %1099 = vmatmul.f32.gmra.mxu0 %v191
    %v1100 = vpop.f32.mrf.mxu0
    %v1101 = vadd.f32 0.0, %v1100
    %1102 = vmatmul.f32.gmra.mxu0 %v194
    %v1103 = vpop.f32.mrf.mxu0
    %v1104 = vadd.f32 0.0, %v1103
    %1105 = vmatmul.f32.gmra.mxu0 %v197
    %v1106 = vpop.f32.mrf.mxu0
    %v1107 = vadd.f32 0.0, %v1106
    %1108 = vmatmul.f32.gmra.mxu0 %v200
    %v1109 = vpop.f32.mrf.mxu0
    %v1110 = vadd.f32 0.0, %v1109
    %1111 = vmatmul.f32.gmra.mxu0 %v203
    %v1112 = vpop.f32.mrf.mxu0
    %v1113 = vadd.f32 0.0, %v1112
    %1114 = vmatmul.f32.gmra.mxu0 %v206
    %v1115 = vpop.f32.mrf.mxu0
    %v1116 = vadd.f32 0.0, %v1115
    %1117 = vmatmul.f32.gmra.mxu0 %v209
    %v1118 = vpop.f32.mrf.mxu0
    %v1119 = vadd.f32 0.0, %v1118
    %1120 = vmatmul.f32.gmra.mxu0 %v212
    %v1121 = vpop.f32.mrf.mxu0
    %v1122 = vadd.f32 0.0, %v1121
    %1123 = vmatmul.f32.gmra.mxu0 %v215
    %v1124 = vpop.f32.mrf.mxu0
    %v1125 = vadd.f32 0.0, %v1124
    %1126 = vmatmul.f32.gmra.mxu0 %v218
    %v1127 = vpop.f32.mrf.mxu0
    %v1128 = vadd.f32 0.0, %v1127
    %1129 = vdwg.mxu0
    %1130 = vmatpush.msra.mxu0 0.0
    %1131 = vmatpush.msra.mxu0 0.0
    %1132 = vmatpush.msra.mxu0 0.0
    %1133 = vmatpush.msra.mxu0 0.0
    %1134 = vmatpush.msra.mxu0 0.0
    %1135 = vmatpush.msra.mxu0 0.0
    %1136 = vmatpush.msra.mxu0 0.0
    %1137 = vmatpush.msra.mxu0 0.0
    %1138 = vmatpush.msra.mxu0 0.0
    %1139 = vmatpush.msra.mxu0 0.0
    %1140 = vmatpush.msra.mxu0 0.0
    %1141 = vmatpush.msra.mxu0 0.0
    %1142 = vmatpush.msra.mxu0 %v166
    %1143 = vmatpush.msra.mxu0 %v165
    %1144 = vmatpush.msra.mxu0 %v164
    %1145 = vmatpush.msra.mxu0 %v163
    %1146 = vmatmul.f32.gmra.mxu0 %v173
    %v1147 = vpop.f32.mrf.mxu0
    %v1148 = vadd.f32 0.0, %v1147
    %1149 = vmatmul.f32.gmra.mxu0 %v176
    %v1150 = vpop.f32.mrf.mxu0
    %v1151 = vadd.f32 0.0, %v1150
    %1152 = vmatmul.f32.gmra.mxu0 %v179
    %v1153 = vpop.f32.mrf.mxu0
    %v1154 = vadd.f32 0.0, %v1153
    %1155 = vmatmul.f32.gmra.mxu0 %v182
    %v1156 = vpop.f32.mrf.mxu0
    %v1157 = vadd.f32 0.0, %v1156
    %1158 = vmatmul.f32.gmra.mxu0 %v185
    %v1159 = vpop.f32.mrf.mxu0
    %v1160 = vadd.f32 0.0, %v1159
    %1161 = vmatmul.f32.gmra.mxu0 %v188
    %v1162 = vpop.f32.mrf.mxu0
    %v1163 = vadd.f32 0.0, %v1162
    %1164 = vmatmul.f32.gmra.mxu0 %v191
    %v1165 = vpop.f32.mrf.mxu0
    %v1166 = vadd.f32 0.0, %v1165
    %1167 = vmatmul.f32.gmra.mxu0 %v194
    %v1168 = vpop.f32.mrf.mxu0
    %v1169 = vadd.f32 0.0, %v1168
    %1170 = vmatmul.f32.gmra.mxu0 %v197
    %v1171 = vpop.f32.mrf.mxu0
    %v1172 = vadd.f32 0.0, %v1171
    %1173 = vmatmul.f32.gmra.mxu0 %v200
    %v1174 = vpop.f32.mrf.mxu0
    %v1175 = vadd.f32 0.0, %v1174
    %1176 = vmatmul.f32.gmra.mxu0 %v203
    %v1177 = vpop.f32.mrf.mxu0
    %v1178 = vadd.f32 0.0, %v1177
    %1179 = vmatmul.f32.gmra.mxu0 %v206
    %v1180 = vpop.f32.mrf.mxu0
    %v1181 = vadd.f32 0.0, %v1180
    %1182 = vmatmul.f32.gmra.mxu0 %v209
    %v1183 = vpop.f32.mrf.mxu0
    %v1184 = vadd.f32 0.0, %v1183
    %1185 = vmatmul.f32.gmra.mxu0 %v212
    %v1186 = vpop.f32.mrf.mxu0
    %v1187 = vadd.f32 0.0, %v1186
    %1188 = vmatmul.f32.gmra.mxu0 %v215
    %v1189 = vpop.f32.mrf.mxu0
    %v1190 = vadd.f32 0.0, %v1189
    %1191 = vmatmul.f32.gmra.mxu0 %v218
    %v1192 = vpop.f32.mrf.mxu0
    %v1193 = vadd.f32 0.0, %v1192
    %1194 = vdwg.mxu0
    %1195 = vmatpush.msra.mxu0 0.0
    %1196 = vmatpush.msra.mxu0 0.0
    %1197 = vmatpush.msra.mxu0 0.0
    %1198 = vmatpush.msra.mxu0 0.0
    %1199 = vmatpush.msra.mxu0 0.0
    %1200 = vmatpush.msra.mxu0 0.0
    %1201 = vmatpush.msra.mxu0 0.0
    %1202 = vmatpush.msra.mxu0 0.0
    %1203 = vmatpush.msra.mxu0 0.0
    %1204 = vmatpush.msra.mxu0 0.0
    %1205 = vmatpush.msra.mxu0 0.0
    %1206 = vmatpush.msra.mxu0 0.0
    %1207 = vmatpush.msra.mxu0 %v170
    %1208 = vmatpush.msra.mxu0 %v169
    %1209 = vmatpush.msra.mxu0 %v168
    %1210 = vmatpush.msra.mxu0 %v167
    %1211 = vmatmul.f32.gmra.mxu0 %v173
    %v1212 = vpop.f32.mrf.mxu0
    %v1213 = vadd.f32 0.0, %v1212
    %1214 = vmatmul.f32.gmra.mxu0 %v176
    %v1215 = vpop.f32.mrf.mxu0
    %v1216 = vadd.f32 0.0, %v1215
    %1217 = vmatmul.f32.gmra.mxu0 %v179
    %v1218 = vpop.f32.mrf.mxu0
    %v1219 = vadd.f32 0.0, %v1218
    %1220 = vmatmul.f32.gmra.mxu0 %v182
    %v1221 = vpop.f32.mrf.mxu0
    %v1222 = vadd.f32 0.0, %v1221
    %1223 = vmatmul.f32.gmra.mxu0 %v185
    %v1224 = vpop.f32.mrf.mxu0
    %v1225 = vadd.f32 0.0, %v1224
    %1226 = vmatmul.f32.gmra.mxu0 %v188
    %v1227 = vpop.f32.mrf.mxu0
    %v1228 = vadd.f32 0.0, %v1227
    %1229 = vmatmul.f32.gmra.mxu0 %v191
    %v1230 = vpop.f32.mrf.mxu0
    %v1231 = vadd.f32 0.0, %v1230
    %1232 = vmatmul.f32.gmra.mxu0 %v194
    %v1233 = vpop.f32.mrf.mxu0
    %v1234 = vadd.f32 0.0, %v1233
    %1235 = vmatmul.f32.gmra.mxu0 %v197
    %v1236 = vpop.f32.mrf.mxu0
    %v1237 = vadd.f32 0.0, %v1236
    %1238 = vmatmul.f32.gmra.mxu0 %v200
    %v1239 = vpop.f32.mrf.mxu0
    %v1240 = vadd.f32 0.0, %v1239
    %1241 = vmatmul.f32.gmra.mxu0 %v203
    %v1242 = vpop.f32.mrf.mxu0
    %v1243 = vadd.f32 0.0, %v1242
    %1244 = vmatmul.f32.gmra.mxu0 %v206
    %v1245 = vpop.f32.mrf.mxu0
    %v1246 = vadd.f32 0.0, %v1245
    %1247 = vmatmul.f32.gmra.mxu0 %v209
    %v1248 = vpop.f32.mrf.mxu0
    %v1249 = vadd.f32 0.0, %v1248
    %1250 = vmatmul.f32.gmra.mxu0 %v212
    %v1251 = vpop.f32.mrf.mxu0
    %v1252 = vadd.f32 0.0, %v1251
    %1253 = vmatmul.f32.gmra.mxu0 %v215
    %v1254 = vpop.f32.mrf.mxu0
    %v1255 = vadd.f32 0.0, %v1254
    %1256 = vmatmul.f32.gmra.mxu0 %v218
    %v1257 = vpop.f32.mrf.mxu0
    %v1258 = vadd.f32 0.0, %v1257
    %1259 = vdwg.mxu0
    %v1260 = vld [vmem:[#allocation5] sm:$0xff]
    %v1261 = vld [vmem:[#allocation5 + $0x8] sm:$0xff]
    %v1262 = vld [vmem:[#allocation5 + $0x10] sm:$0xff]
    %v1263 = vld [vmem:[#allocation5 + $0x18] sm:$0xff]
    %v1264 = vld [vmem:[#allocation5 + $0x20] sm:$0xff]
    %v1265 = vld [vmem:[#allocation5 + $0x28] sm:$0xff]
    %v1266 = vld [vmem:[#allocation5 + $0x30] sm:$0xff]
    %v1267 = vld [vmem:[#allocation5 + $0x38] sm:$0xff]
    %v1268 = vld [vmem:[#allocation5 + $0x40] sm:$0xff]
    %v1269 = vld [vmem:[#allocation5 + $0x48] sm:$0xff]
    %v1270 = vld [vmem:[#allocation5 + $0x50] sm:$0xff]
    %v1271 = vld [vmem:[#allocation5 + $0x58] sm:$0xff]
    %v1272 = vld [vmem:[#allocation5 + $0x60] sm:$0xff]
    %v1273 = vld [vmem:[#allocation5 + $0x68] sm:$0xff]
    %v1274 = vld [vmem:[#allocation5 + $0x70] sm:$0xff]
    %v1275 = vld [vmem:[#allocation5 + $0x78] sm:$0xff]
    %v1276 = vld [vmem:[#allocation5 + $0x80] sm:$0xff]
    %v1277 = vld [vmem:[#allocation5 + $0x88] sm:$0xff]
    %v1278 = vld [vmem:[#allocation5 + $0x90] sm:$0xff]
    %v1279 = vld [vmem:[#allocation5 + $0x98] sm:$0xff]
    %v1280 = vld [vmem:[#allocation5 + $0xa0] sm:$0xff]
    %v1281 = vld [vmem:[#allocation5 + $0xa8] sm:$0xff]
    %v1282 = vld [vmem:[#allocation5 + $0xb0] sm:$0xff]
    %v1283 = vld [vmem:[#allocation5 + $0xb8] sm:$0xff]
    %v1284 = vld [vmem:[#allocation5 + $0xc0] sm:$0xff]
    %v1285 = vld [vmem:[#allocation5 + $0xc8] sm:$0xff]
    %v1286 = vld [vmem:[#allocation5 + $0xd0] sm:$0xff]
    %v1287 = vld [vmem:[#allocation5 + $0xd8] sm:$0xff]
    %v1288 = vld [vmem:[#allocation5 + $0xe0] sm:$0xff]
    %v1289 = vld [vmem:[#allocation5 + $0xe8] sm:$0xff]
    %v1290 = vld [vmem:[#allocation5 + $0xf0] sm:$0xff]
    %v1291 = vld [vmem:[#allocation5 + $0xf8] sm:$0xff]
    %v1292 = vld [vmem:[#allocation5 + $0x100] sm:$0xff]
    %v1293 = vld [vmem:[#allocation5 + $0x108] sm:$0xff]
    %v1294 = vld [vmem:[#allocation5 + $0x110] sm:$0xff]
    %v1295 = vld [vmem:[#allocation5 + $0x118] sm:$0xff]
    %v1296 = vld [vmem:[#allocation5 + $0x120] sm:$0xff]
    %v1297 = vld [vmem:[#allocation5 + $0x128] sm:$0xff]
    %v1298 = vld [vmem:[#allocation5 + $0x130] sm:$0xff]
    %v1299 = vld [vmem:[#allocation5 + $0x138] sm:$0xff]
    %v1300 = vld [vmem:[#allocation5 + $0x140] sm:$0xff]
    %v1301 = vld [vmem:[#allocation5 + $0x148] sm:$0xff]
    %v1302 = vld [vmem:[#allocation5 + $0x150] sm:$0xff]
    %v1303 = vld [vmem:[#allocation5 + $0x158] sm:$0xff]
    %v1304 = vld [vmem:[#allocation5 + $0x160] sm:$0xff]
    %v1305 = vld [vmem:[#allocation5 + $0x168] sm:$0xff]
    %v1306 = vld [vmem:[#allocation5 + $0x170] sm:$0xff]
    %v1307 = vld [vmem:[#allocation5 + $0x178] sm:$0xff]
    %v1308 = vld [vmem:[#allocation5 + $0x180] sm:$0xff]
    %v1309 = vld [vmem:[#allocation5 + $0x188] sm:$0xff]
    %v1310 = vld [vmem:[#allocation5 + $0x190] sm:$0xff]
    %v1311 = vld [vmem:[#allocation5 + $0x198] sm:$0xff]
    %v1312 = vld [vmem:[#allocation5 + $0x1a0] sm:$0xff]
    %v1313 = vld [vmem:[#allocation5 + $0x1a8] sm:$0xff]
    %v1314 = vld [vmem:[#allocation5 + $0x1b0] sm:$0xff]
    %v1315 = vld [vmem:[#allocation5 + $0x1b8] sm:$0xff]
    %v1316 = vld [vmem:[#allocation5 + $0x1c0] sm:$0xff]
    %v1317 = vld [vmem:[#allocation5 + $0x1c8] sm:$0xff]
    %v1318 = vld [vmem:[#allocation5 + $0x1d0] sm:$0xff]
    %v1319 = vld [vmem:[#allocation5 + $0x1d8] sm:$0xff]
    %v1320 = vld [vmem:[#allocation5 + $0x1e0] sm:$0xff]
    %v1321 = vld [vmem:[#allocation5 + $0x1e8] sm:$0xff]
    %v1322 = vld [vmem:[#allocation5 + $0x1f0] sm:$0xff]
    %v1323 = vld [vmem:[#allocation5 + $0x1f8] sm:$0xff]
    %v1325 = vsel %vm171, %v106, 0
    %1327 = vmatpush.msra.mxu0 0.0
    %1328 = vmatpush.msra.mxu0 0.0
    %1329 = vmatpush.msra.mxu0 0.0
    %1330 = vmatpush.msra.mxu0 0.0
    %1331 = vmatpush.msra.mxu0 0.0
    %1332 = vmatpush.msra.mxu0 0.0
    %1333 = vmatpush.msra.mxu0 0.0
    %1334 = vmatpush.msra.mxu0 0.0
    %1335 = vmatpush.msra.mxu0 0.0
    %1336 = vmatpush.msra.mxu0 0.0
    %1337 = vmatpush.msra.mxu0 0.0
    %1338 = vmatpush.msra.mxu0 0.0
    %1339 = vmatpush.msra.mxu0 %v1263
    %1340 = vmatpush.msra.mxu0 %v1262
    %1341 = vmatpush.msra.mxu0 %v1261
    %1342 = vmatpush.msra.mxu0 %v1260
    %1343 = vmatmul.f32.gmra.mxu0 %v1325
    %v1344 = vpop.f32.mrf.mxu0
    %v1345 = vadd.f32 0.0, %v1344
    %1346 = vdwg.mxu0
    %1347 = vmatpush.msra.mxu0 0.0
    %1348 = vmatpush.msra.mxu0 0.0
    %1349 = vmatpush.msra.mxu0 0.0
    %1350 = vmatpush.msra.mxu0 0.0
    %1351 = vmatpush.msra.mxu0 0.0
    %1352 = vmatpush.msra.mxu0 0.0
    %1353 = vmatpush.msra.mxu0 0.0
    %1354 = vmatpush.msra.mxu0 0.0
    %1355 = vmatpush.msra.mxu0 0.0
    %1356 = vmatpush.msra.mxu0 0.0
    %1357 = vmatpush.msra.mxu0 0.0
    %1358 = vmatpush.msra.mxu0 0.0
    %1359 = vmatpush.msra.mxu0 %v1267
    %1360 = vmatpush.msra.mxu0 %v1266
    %1361 = vmatpush.msra.mxu0 %v1265
    %1362 = vmatpush.msra.mxu0 %v1264
    %1363 = vmatmul.f32.gmra.mxu0 %v1325
    %v1364 = vpop.f32.mrf.mxu0
    %v1365 = vadd.f32 0.0, %v1364
    %1366 = vdwg.mxu0
    %1367 = vmatpush.msra.mxu0 0.0
    %1368 = vmatpush.msra.mxu0 0.0
    %1369 = vmatpush.msra.mxu0 0.0
    %1370 = vmatpush.msra.mxu0 0.0
    %1371 = vmatpush.msra.mxu0 0.0
    %1372 = vmatpush.msra.mxu0 0.0
    %1373 = vmatpush.msra.mxu0 0.0
    %1374 = vmatpush.msra.mxu0 0.0
    %1375 = vmatpush.msra.mxu0 0.0
    %1376 = vmatpush.msra.mxu0 0.0
    %1377 = vmatpush.msra.mxu0 0.0
    %1378 = vmatpush.msra.mxu0 0.0
    %1379 = vmatpush.msra.mxu0 %v1271
    %1380 = vmatpush.msra.mxu0 %v1270
    %1381 = vmatpush.msra.mxu0 %v1269
    %1382 = vmatpush.msra.mxu0 %v1268
    %1383 = vmatmul.f32.gmra.mxu0 %v1325
    %v1384 = vpop.f32.mrf.mxu0
    %v1385 = vadd.f32 0.0, %v1384
    %1386 = vdwg.mxu0
    %1387 = vmatpush.msra.mxu0 0.0
    %1388 = vmatpush.msra.mxu0 0.0
    %1389 = vmatpush.msra.mxu0 0.0
    %1390 = vmatpush.msra.mxu0 0.0
    %1391 = vmatpush.msra.mxu0 0.0
    %1392 = vmatpush.msra.mxu0 0.0
    %1393 = vmatpush.msra.mxu0 0.0
    %1394 = vmatpush.msra.mxu0 0.0
    %1395 = vmatpush.msra.mxu0 0.0
    %1396 = vmatpush.msra.mxu0 0.0
    %1397 = vmatpush.msra.mxu0 0.0
    %1398 = vmatpush.msra.mxu0 0.0
    %1399 = vmatpush.msra.mxu0 %v1275
    %1400 = vmatpush.msra.mxu0 %v1274
    %1401 = vmatpush.msra.mxu0 %v1273
    %1402 = vmatpush.msra.mxu0 %v1272
    %1403 = vmatmul.f32.gmra.mxu0 %v1325
    %v1404 = vpop.f32.mrf.mxu0
    %v1405 = vadd.f32 0.0, %v1404
    %1406 = vdwg.mxu0
    %1407 = vmatpush.msra.mxu0 0.0
    %1408 = vmatpush.msra.mxu0 0.0
    %1409 = vmatpush.msra.mxu0 0.0
    %1410 = vmatpush.msra.mxu0 0.0
    %1411 = vmatpush.msra.mxu0 0.0
    %1412 = vmatpush.msra.mxu0 0.0
    %1413 = vmatpush.msra.mxu0 0.0
    %1414 = vmatpush.msra.mxu0 0.0
    %1415 = vmatpush.msra.mxu0 0.0
    %1416 = vmatpush.msra.mxu0 0.0
    %1417 = vmatpush.msra.mxu0 0.0
    %1418 = vmatpush.msra.mxu0 0.0
    %1419 = vmatpush.msra.mxu0 %v1279
    %1420 = vmatpush.msra.mxu0 %v1278
    %1421 = vmatpush.msra.mxu0 %v1277
    %1422 = vmatpush.msra.mxu0 %v1276
    %1423 = vmatmul.f32.gmra.mxu0 %v1325
    %v1424 = vpop.f32.mrf.mxu0
    %v1425 = vadd.f32 0.0, %v1424
    %1426 = vdwg.mxu0
    %1427 = vmatpush.msra.mxu0 0.0
    %1428 = vmatpush.msra.mxu0 0.0
    %1429 = vmatpush.msra.mxu0 0.0
    %1430 = vmatpush.msra.mxu0 0.0
    %1431 = vmatpush.msra.mxu0 0.0
    %1432 = vmatpush.msra.mxu0 0.0
    %1433 = vmatpush.msra.mxu0 0.0
    %1434 = vmatpush.msra.mxu0 0.0
    %1435 = vmatpush.msra.mxu0 0.0
    %1436 = vmatpush.msra.mxu0 0.0
    %1437 = vmatpush.msra.mxu0 0.0
    %1438 = vmatpush.msra.mxu0 0.0
    %1439 = vmatpush.msra.mxu0 %v1283
    %1440 = vmatpush.msra.mxu0 %v1282
    %1441 = vmatpush.msra.mxu0 %v1281
    %1442 = vmatpush.msra.mxu0 %v1280
    %1443 = vmatmul.f32.gmra.mxu0 %v1325
    %v1444 = vpop.f32.mrf.mxu0
    %v1445 = vadd.f32 0.0, %v1444
    %1446 = vdwg.mxu0
    %1447 = vmatpush.msra.mxu0 0.0
    %1448 = vmatpush.msra.mxu0 0.0
    %1449 = vmatpush.msra.mxu0 0.0
    %1450 = vmatpush.msra.mxu0 0.0
    %1451 = vmatpush.msra.mxu0 0.0
    %1452 = vmatpush.msra.mxu0 0.0
    %1453 = vmatpush.msra.mxu0 0.0
    %1454 = vmatpush.msra.mxu0 0.0
    %1455 = vmatpush.msra.mxu0 0.0
    %1456 = vmatpush.msra.mxu0 0.0
    %1457 = vmatpush.msra.mxu0 0.0
    %1458 = vmatpush.msra.mxu0 0.0
    %1459 = vmatpush.msra.mxu0 %v1287
    %1460 = vmatpush.msra.mxu0 %v1286
    %1461 = vmatpush.msra.mxu0 %v1285
    %1462 = vmatpush.msra.mxu0 %v1284
    %1463 = vmatmul.f32.gmra.mxu0 %v1325
    %v1464 = vpop.f32.mrf.mxu0
    %v1465 = vadd.f32 0.0, %v1464
    %1466 = vdwg.mxu0
    %1467 = vmatpush.msra.mxu0 0.0
    %1468 = vmatpush.msra.mxu0 0.0
    %1469 = vmatpush.msra.mxu0 0.0
    %1470 = vmatpush.msra.mxu0 0.0
    %1471 = vmatpush.msra.mxu0 0.0
    %1472 = vmatpush.msra.mxu0 0.0
    %1473 = vmatpush.msra.mxu0 0.0
    %1474 = vmatpush.msra.mxu0 0.0
    %1475 = vmatpush.msra.mxu0 0.0
    %1476 = vmatpush.msra.mxu0 0.0
    %1477 = vmatpush.msra.mxu0 0.0
    %1478 = vmatpush.msra.mxu0 0.0
    %1479 = vmatpush.msra.mxu0 %v1291
    %1480 = vmatpush.msra.mxu0 %v1290
    %1481 = vmatpush.msra.mxu0 %v1289
    %1482 = vmatpush.msra.mxu0 %v1288
    %1483 = vmatmul.f32.gmra.mxu0 %v1325
    %v1484 = vpop.f32.mrf.mxu0
    %v1485 = vadd.f32 0.0, %v1484
    %1486 = vdwg.mxu0
    %1487 = vmatpush.msra.mxu0 0.0
    %1488 = vmatpush.msra.mxu0 0.0
    %1489 = vmatpush.msra.mxu0 0.0
    %1490 = vmatpush.msra.mxu0 0.0
    %1491 = vmatpush.msra.mxu0 0.0
    %1492 = vmatpush.msra.mxu0 0.0
    %1493 = vmatpush.msra.mxu0 0.0
    %1494 = vmatpush.msra.mxu0 0.0
    %1495 = vmatpush.msra.mxu0 0.0
    %1496 = vmatpush.msra.mxu0 0.0
    %1497 = vmatpush.msra.mxu0 0.0
    %1498 = vmatpush.msra.mxu0 0.0
    %1499 = vmatpush.msra.mxu0 %v1295
    %1500 = vmatpush.msra.mxu0 %v1294
    %1501 = vmatpush.msra.mxu0 %v1293
    %1502 = vmatpush.msra.mxu0 %v1292
    %1503 = vmatmul.f32.gmra.mxu0 %v1325
    %v1504 = vpop.f32.mrf.mxu0
    %v1505 = vadd.f32 0.0, %v1504
    %1506 = vdwg.mxu0
    %1507 = vmatpush.msra.mxu0 0.0
    %1508 = vmatpush.msra.mxu0 0.0
    %1509 = vmatpush.msra.mxu0 0.0
    %1510 = vmatpush.msra.mxu0 0.0
    %1511 = vmatpush.msra.mxu0 0.0
    %1512 = vmatpush.msra.mxu0 0.0
    %1513 = vmatpush.msra.mxu0 0.0
    %1514 = vmatpush.msra.mxu0 0.0
    %1515 = vmatpush.msra.mxu0 0.0
    %1516 = vmatpush.msra.mxu0 0.0
    %1517 = vmatpush.msra.mxu0 0.0
    %1518 = vmatpush.msra.mxu0 0.0
    %1519 = vmatpush.msra.mxu0 %v1299
    %1520 = vmatpush.msra.mxu0 %v1298
    %1521 = vmatpush.msra.mxu0 %v1297
    %1522 = vmatpush.msra.mxu0 %v1296
    %1523 = vmatmul.f32.gmra.mxu0 %v1325
    %v1524 = vpop.f32.mrf.mxu0
    %v1525 = vadd.f32 0.0, %v1524
    %1526 = vdwg.mxu0
    %1527 = vmatpush.msra.mxu0 0.0
    %1528 = vmatpush.msra.mxu0 0.0
    %1529 = vmatpush.msra.mxu0 0.0
    %1530 = vmatpush.msra.mxu0 0.0
    %1531 = vmatpush.msra.mxu0 0.0
    %1532 = vmatpush.msra.mxu0 0.0
    %1533 = vmatpush.msra.mxu0 0.0
    %1534 = vmatpush.msra.mxu0 0.0
    %1535 = vmatpush.msra.mxu0 0.0
    %1536 = vmatpush.msra.mxu0 0.0
    %1537 = vmatpush.msra.mxu0 0.0
    %1538 = vmatpush.msra.mxu0 0.0
    %1539 = vmatpush.msra.mxu0 %v1303
    %1540 = vmatpush.msra.mxu0 %v1302
    %1541 = vmatpush.msra.mxu0 %v1301
    %1542 = vmatpush.msra.mxu0 %v1300
    %1543 = vmatmul.f32.gmra.mxu0 %v1325
    %v1544 = vpop.f32.mrf.mxu0
    %v1545 = vadd.f32 0.0, %v1544
    %1546 = vdwg.mxu0
    %1547 = vmatpush.msra.mxu0 0.0
    %1548 = vmatpush.msra.mxu0 0.0
    %1549 = vmatpush.msra.mxu0 0.0
    %1550 = vmatpush.msra.mxu0 0.0
    %1551 = vmatpush.msra.mxu0 0.0
    %1552 = vmatpush.msra.mxu0 0.0
    %1553 = vmatpush.msra.mxu0 0.0
    %1554 = vmatpush.msra.mxu0 0.0
    %1555 = vmatpush.msra.mxu0 0.0
    %1556 = vmatpush.msra.mxu0 0.0
    %1557 = vmatpush.msra.mxu0 0.0
    %1558 = vmatpush.msra.mxu0 0.0
    %1559 = vmatpush.msra.mxu0 %v1307
    %1560 = vmatpush.msra.mxu0 %v1306
    %1561 = vmatpush.msra.mxu0 %v1305
    %1562 = vmatpush.msra.mxu0 %v1304
    %1563 = vmatmul.f32.gmra.mxu0 %v1325
    %v1564 = vpop.f32.mrf.mxu0
    %v1565 = vadd.f32 0.0, %v1564
    %1566 = vdwg.mxu0
    %1567 = vmatpush.msra.mxu0 0.0
    %1568 = vmatpush.msra.mxu0 0.0
    %1569 = vmatpush.msra.mxu0 0.0
    %1570 = vmatpush.msra.mxu0 0.0
    %1571 = vmatpush.msra.mxu0 0.0
    %1572 = vmatpush.msra.mxu0 0.0
    %1573 = vmatpush.msra.mxu0 0.0
    %1574 = vmatpush.msra.mxu0 0.0
    %1575 = vmatpush.msra.mxu0 0.0
    %1576 = vmatpush.msra.mxu0 0.0
    %1577 = vmatpush.msra.mxu0 0.0
    %1578 = vmatpush.msra.mxu0 0.0
    %1579 = vmatpush.msra.mxu0 %v1311
    %1580 = vmatpush.msra.mxu0 %v1310
    %1581 = vmatpush.msra.mxu0 %v1309
    %1582 = vmatpush.msra.mxu0 %v1308
    %1583 = vmatmul.f32.gmra.mxu0 %v1325
    %v1584 = vpop.f32.mrf.mxu0
    %v1585 = vadd.f32 0.0, %v1584
    %1586 = vdwg.mxu0
    %1587 = vmatpush.msra.mxu0 0.0
    %1588 = vmatpush.msra.mxu0 0.0
    %1589 = vmatpush.msra.mxu0 0.0
    %1590 = vmatpush.msra.mxu0 0.0
    %1591 = vmatpush.msra.mxu0 0.0
    %1592 = vmatpush.msra.mxu0 0.0
    %1593 = vmatpush.msra.mxu0 0.0
    %1594 = vmatpush.msra.mxu0 0.0
    %1595 = vmatpush.msra.mxu0 0.0
    %1596 = vmatpush.msra.mxu0 0.0
    %1597 = vmatpush.msra.mxu0 0.0
    %1598 = vmatpush.msra.mxu0 0.0
    %1599 = vmatpush.msra.mxu0 %v1315
    %1600 = vmatpush.msra.mxu0 %v1314
    %1601 = vmatpush.msra.mxu0 %v1313
    %1602 = vmatpush.msra.mxu0 %v1312
    %1603 = vmatmul.f32.gmra.mxu0 %v1325
    %v1604 = vpop.f32.mrf.mxu0
    %v1605 = vadd.f32 0.0, %v1604
    %1606 = vdwg.mxu0
    %1607 = vmatpush.msra.mxu0 0.0
    %1608 = vmatpush.msra.mxu0 0.0
    %1609 = vmatpush.msra.mxu0 0.0
    %1610 = vmatpush.msra.mxu0 0.0
    %1611 = vmatpush.msra.mxu0 0.0
    %1612 = vmatpush.msra.mxu0 0.0
    %1613 = vmatpush.msra.mxu0 0.0
    %1614 = vmatpush.msra.mxu0 0.0
    %1615 = vmatpush.msra.mxu0 0.0
    %1616 = vmatpush.msra.mxu0 0.0
    %1617 = vmatpush.msra.mxu0 0.0
    %1618 = vmatpush.msra.mxu0 0.0
    %1619 = vmatpush.msra.mxu0 %v1319
    %1620 = vmatpush.msra.mxu0 %v1318
    %1621 = vmatpush.msra.mxu0 %v1317
    %1622 = vmatpush.msra.mxu0 %v1316
    %1623 = vmatmul.f32.gmra.mxu0 %v1325
    %v1624 = vpop.f32.mrf.mxu0
    %v1625 = vadd.f32 0.0, %v1624
    %1626 = vdwg.mxu0
    %1627 = vmatpush.msra.mxu0 0.0
    %1628 = vmatpush.msra.mxu0 0.0
    %1629 = vmatpush.msra.mxu0 0.0
    %1630 = vmatpush.msra.mxu0 0.0
    %1631 = vmatpush.msra.mxu0 0.0
    %1632 = vmatpush.msra.mxu0 0.0
    %1633 = vmatpush.msra.mxu0 0.0
    %1634 = vmatpush.msra.mxu0 0.0
    %1635 = vmatpush.msra.mxu0 0.0
    %1636 = vmatpush.msra.mxu0 0.0
    %1637 = vmatpush.msra.mxu0 0.0
    %1638 = vmatpush.msra.mxu0 0.0
    %1639 = vmatpush.msra.mxu0 %v1323
    %1640 = vmatpush.msra.mxu0 %v1322
    %1641 = vmatpush.msra.mxu0 %v1321
    %1642 = vmatpush.msra.mxu0 %v1320
    %1643 = vmatmul.f32.gmra.mxu0 %v1325
    %v1644 = vpop.f32.mrf.mxu0
    %v1645 = vadd.f32 0.0, %v1644
    %1646 = vdwg.mxu0
    %v1647 = vld [vmem:[#allocation7] sm:$0xff]
    %v1648 = vld [vmem:[#allocation7 + $0x8] sm:$0xff]
    %v1649 = vld [vmem:[#allocation7 + $0x10] sm:$0xff]
    %v1650 = vld [vmem:[#allocation7 + $0x18] sm:$0xff]
    %v1651 = vld [vmem:[#allocation7 + $0x20] sm:$0xff]
    %v1652 = vld [vmem:[#allocation7 + $0x28] sm:$0xff]
    %v1653 = vld [vmem:[#allocation7 + $0x30] sm:$0xff]
    %v1654 = vld [vmem:[#allocation7 + $0x38] sm:$0xff]
    %v1655 = vld [vmem:[#allocation7 + $0x40] sm:$0xff]
    %v1656 = vld [vmem:[#allocation7 + $0x48] sm:$0xff]
    %v1657 = vld [vmem:[#allocation7 + $0x50] sm:$0xff]
    %v1658 = vld [vmem:[#allocation7 + $0x58] sm:$0xff]
    %v1659 = vld [vmem:[#allocation7 + $0x60] sm:$0xff]
    %v1660 = vld [vmem:[#allocation7 + $0x68] sm:$0xff]
    %v1661 = vld [vmem:[#allocation7 + $0x70] sm:$0xff]
    %v1662 = vld [vmem:[#allocation7 + $0x78] sm:$0xff]
    %v1663 = vld [vmem:[#allocation7 + $0x80] sm:$0xff]
    %v1664 = vld [vmem:[#allocation7 + $0x88] sm:$0xff]
    %v1665 = vld [vmem:[#allocation7 + $0x90] sm:$0xff]
    %v1666 = vld [vmem:[#allocation7 + $0x98] sm:$0xff]
    %v1667 = vld [vmem:[#allocation7 + $0xa0] sm:$0xff]
    %v1668 = vld [vmem:[#allocation7 + $0xa8] sm:$0xff]
    %v1669 = vld [vmem:[#allocation7 + $0xb0] sm:$0xff]
    %v1670 = vld [vmem:[#allocation7 + $0xb8] sm:$0xff]
    %v1671 = vld [vmem:[#allocation7 + $0xc0] sm:$0xff]
    %v1672 = vld [vmem:[#allocation7 + $0xc8] sm:$0xff]
    %v1673 = vld [vmem:[#allocation7 + $0xd0] sm:$0xff]
    %v1674 = vld [vmem:[#allocation7 + $0xd8] sm:$0xff]
    %v1675 = vld [vmem:[#allocation7 + $0xe0] sm:$0xff]
    %v1676 = vld [vmem:[#allocation7 + $0xe8] sm:$0xff]
    %v1677 = vld [vmem:[#allocation7 + $0xf0] sm:$0xff]
    %v1678 = vld [vmem:[#allocation7 + $0xf8] sm:$0xff]
    %v1679 = vld [vmem:[#allocation7 + $0x100] sm:$0xff]
    %v1680 = vld [vmem:[#allocation7 + $0x108] sm:$0xff]
    %v1681 = vld [vmem:[#allocation7 + $0x110] sm:$0xff]
    %v1682 = vld [vmem:[#allocation7 + $0x118] sm:$0xff]
    %v1683 = vld [vmem:[#allocation7 + $0x120] sm:$0xff]
    %v1684 = vld [vmem:[#allocation7 + $0x128] sm:$0xff]
    %v1685 = vld [vmem:[#allocation7 + $0x130] sm:$0xff]
    %v1686 = vld [vmem:[#allocation7 + $0x138] sm:$0xff]
    %v1687 = vld [vmem:[#allocation7 + $0x140] sm:$0xff]
    %v1688 = vld [vmem:[#allocation7 + $0x148] sm:$0xff]
    %v1689 = vld [vmem:[#allocation7 + $0x150] sm:$0xff]
    %v1690 = vld [vmem:[#allocation7 + $0x158] sm:$0xff]
    %v1691 = vld [vmem:[#allocation7 + $0x160] sm:$0xff]
    %v1692 = vld [vmem:[#allocation7 + $0x168] sm:$0xff]
    %v1693 = vld [vmem:[#allocation7 + $0x170] sm:$0xff]
    %v1694 = vld [vmem:[#allocation7 + $0x178] sm:$0xff]
    %v1695 = vld [vmem:[#allocation7 + $0x180] sm:$0xff]
    %v1696 = vld [vmem:[#allocation7 + $0x188] sm:$0xff]
    %v1697 = vld [vmem:[#allocation7 + $0x190] sm:$0xff]
    %v1698 = vld [vmem:[#allocation7 + $0x198] sm:$0xff]
    %v1699 = vld [vmem:[#allocation7 + $0x1a0] sm:$0xff]
    %v1700 = vld [vmem:[#allocation7 + $0x1a8] sm:$0xff]
    %v1701 = vld [vmem:[#allocation7 + $0x1b0] sm:$0xff]
    %v1702 = vld [vmem:[#allocation7 + $0x1b8] sm:$0xff]
    %v1703 = vld [vmem:[#allocation7 + $0x1c0] sm:$0xff]
    %v1704 = vld [vmem:[#allocation7 + $0x1c8] sm:$0xff]
    %v1705 = vld [vmem:[#allocation7 + $0x1d0] sm:$0xff]
    %v1706 = vld [vmem:[#allocation7 + $0x1d8] sm:$0xff]
    %v1707 = vld [vmem:[#allocation7 + $0x1e0] sm:$0xff]
    %v1708 = vld [vmem:[#allocation7 + $0x1e8] sm:$0xff]
    %v1709 = vld [vmem:[#allocation7 + $0x1f0] sm:$0xff]
    %v1710 = vld [vmem:[#allocation7 + $0x1f8] sm:$0xff]
    %1711 = vmatpush.msra.mxu0 0.0
    %1712 = vmatpush.msra.mxu0 0.0
    %1713 = vmatpush.msra.mxu0 0.0
    %1714 = vmatpush.msra.mxu0 0.0
    %1715 = vmatpush.msra.mxu0 0.0
    %1716 = vmatpush.msra.mxu0 0.0
    %1717 = vmatpush.msra.mxu0 0.0
    %1718 = vmatpush.msra.mxu0 0.0
    %1719 = vmatpush.msra.mxu0 0.0
    %1720 = vmatpush.msra.mxu0 0.0
    %1721 = vmatpush.msra.mxu0 0.0
    %1722 = vmatpush.msra.mxu0 0.0
    %1723 = vmatpush.msra.mxu0 %v1650
    %1724 = vmatpush.msra.mxu0 %v1649
    %1725 = vmatpush.msra.mxu0 %v1648
    %1726 = vmatpush.msra.mxu0 %v1647
    %1727 = vmatmul.f32.gmra.mxu0 %v1325
    %v1728 = vpop.f32.mrf.mxu0
    %v1729 = vadd.f32 0.0, %v1728
    %1730 = vdwg.mxu0
    %1731 = vmatpush.msra.mxu0 0.0
    %1732 = vmatpush.msra.mxu0 0.0
    %1733 = vmatpush.msra.mxu0 0.0
    %1734 = vmatpush.msra.mxu0 0.0
    %1735 = vmatpush.msra.mxu0 0.0
    %1736 = vmatpush.msra.mxu0 0.0
    %1737 = vmatpush.msra.mxu0 0.0
    %1738 = vmatpush.msra.mxu0 0.0
    %1739 = vmatpush.msra.mxu0 0.0
    %1740 = vmatpush.msra.mxu0 0.0
    %1741 = vmatpush.msra.mxu0 0.0
    %1742 = vmatpush.msra.mxu0 0.0
    %1743 = vmatpush.msra.mxu0 %v1654
    %1744 = vmatpush.msra.mxu0 %v1653
    %1745 = vmatpush.msra.mxu0 %v1652
    %1746 = vmatpush.msra.mxu0 %v1651
    %1747 = vmatmul.f32.gmra.mxu0 %v1325
    %v1748 = vpop.f32.mrf.mxu0
    %v1749 = vadd.f32 0.0, %v1748
    %1750 = vdwg.mxu0
    %1751 = vmatpush.msra.mxu0 0.0
    %1752 = vmatpush.msra.mxu0 0.0
    %1753 = vmatpush.msra.mxu0 0.0
    %1754 = vmatpush.msra.mxu0 0.0
    %1755 = vmatpush.msra.mxu0 0.0
    %1756 = vmatpush.msra.mxu0 0.0
    %1757 = vmatpush.msra.mxu0 0.0
    %1758 = vmatpush.msra.mxu0 0.0
    %1759 = vmatpush.msra.mxu0 0.0
    %1760 = vmatpush.msra.mxu0 0.0
    %1761 = vmatpush.msra.mxu0 0.0
    %1762 = vmatpush.msra.mxu0 0.0
    %1763 = vmatpush.msra.mxu0 %v1658
    %1764 = vmatpush.msra.mxu0 %v1657
    %1765 = vmatpush.msra.mxu0 %v1656
    %1766 = vmatpush.msra.mxu0 %v1655
    %1767 = vmatmul.f32.gmra.mxu0 %v1325
    %v1768 = vpop.f32.mrf.mxu0
    %v1769 = vadd.f32 0.0, %v1768
    %1770 = vdwg.mxu0
    %1771 = vmatpush.msra.mxu0 0.0
    %1772 = vmatpush.msra.mxu0 0.0
    %1773 = vmatpush.msra.mxu0 0.0
    %1774 = vmatpush.msra.mxu0 0.0
    %1775 = vmatpush.msra.mxu0 0.0
    %1776 = vmatpush.msra.mxu0 0.0
    %1777 = vmatpush.msra.mxu0 0.0
    %1778 = vmatpush.msra.mxu0 0.0
    %1779 = vmatpush.msra.mxu0 0.0
    %1780 = vmatpush.msra.mxu0 0.0
    %1781 = vmatpush.msra.mxu0 0.0
    %1782 = vmatpush.msra.mxu0 0.0
    %1783 = vmatpush.msra.mxu0 %v1662
    %1784 = vmatpush.msra.mxu0 %v1661
    %1785 = vmatpush.msra.mxu0 %v1660
    %1786 = vmatpush.msra.mxu0 %v1659
    %1787 = vmatmul.f32.gmra.mxu0 %v1325
    %v1788 = vpop.f32.mrf.mxu0
    %v1789 = vadd.f32 0.0, %v1788
    %1790 = vdwg.mxu0
    %1791 = vmatpush.msra.mxu0 0.0
    %1792 = vmatpush.msra.mxu0 0.0
    %1793 = vmatpush.msra.mxu0 0.0
    %1794 = vmatpush.msra.mxu0 0.0
    %1795 = vmatpush.msra.mxu0 0.0
    %1796 = vmatpush.msra.mxu0 0.0
    %1797 = vmatpush.msra.mxu0 0.0
    %1798 = vmatpush.msra.mxu0 0.0
    %1799 = vmatpush.msra.mxu0 0.0
    %1800 = vmatpush.msra.mxu0 0.0
    %1801 = vmatpush.msra.mxu0 0.0
    %1802 = vmatpush.msra.mxu0 0.0
    %1803 = vmatpush.msra.mxu0 %v1666
    %1804 = vmatpush.msra.mxu0 %v1665
    %1805 = vmatpush.msra.mxu0 %v1664
    %1806 = vmatpush.msra.mxu0 %v1663
    %1807 = vmatmul.f32.gmra.mxu0 %v1325
    %v1808 = vpop.f32.mrf.mxu0
    %v1809 = vadd.f32 0.0, %v1808
    %1810 = vdwg.mxu0
    %1811 = vmatpush.msra.mxu0 0.0
    %1812 = vmatpush.msra.mxu0 0.0
    %1813 = vmatpush.msra.mxu0 0.0
    %1814 = vmatpush.msra.mxu0 0.0
    %1815 = vmatpush.msra.mxu0 0.0
    %1816 = vmatpush.msra.mxu0 0.0
    %1817 = vmatpush.msra.mxu0 0.0
    %1818 = vmatpush.msra.mxu0 0.0
    %1819 = vmatpush.msra.mxu0 0.0
    %1820 = vmatpush.msra.mxu0 0.0
    %1821 = vmatpush.msra.mxu0 0.0
    %1822 = vmatpush.msra.mxu0 0.0
    %1823 = vmatpush.msra.mxu0 %v1670
    %1824 = vmatpush.msra.mxu0 %v1669
    %1825 = vmatpush.msra.mxu0 %v1668
    %1826 = vmatpush.msra.mxu0 %v1667
    %1827 = vmatmul.f32.gmra.mxu0 %v1325
    %v1828 = vpop.f32.mrf.mxu0
    %v1829 = vadd.f32 0.0, %v1828
    %1830 = vdwg.mxu0
    %1831 = vmatpush.msra.mxu0 0.0
    %1832 = vmatpush.msra.mxu0 0.0
    %1833 = vmatpush.msra.mxu0 0.0
    %1834 = vmatpush.msra.mxu0 0.0
    %1835 = vmatpush.msra.mxu0 0.0
    %1836 = vmatpush.msra.mxu0 0.0
    %1837 = vmatpush.msra.mxu0 0.0
    %1838 = vmatpush.msra.mxu0 0.0
    %1839 = vmatpush.msra.mxu0 0.0
    %1840 = vmatpush.msra.mxu0 0.0
    %1841 = vmatpush.msra.mxu0 0.0
    %1842 = vmatpush.msra.mxu0 0.0
    %1843 = vmatpush.msra.mxu0 %v1674
    %1844 = vmatpush.msra.mxu0 %v1673
    %1845 = vmatpush.msra.mxu0 %v1672
    %1846 = vmatpush.msra.mxu0 %v1671
    %1847 = vmatmul.f32.gmra.mxu0 %v1325
    %v1848 = vpop.f32.mrf.mxu0
    %v1849 = vadd.f32 0.0, %v1848
    %1850 = vdwg.mxu0
    %1851 = vmatpush.msra.mxu0 0.0
    %1852 = vmatpush.msra.mxu0 0.0
    %1853 = vmatpush.msra.mxu0 0.0
    %1854 = vmatpush.msra.mxu0 0.0
    %1855 = vmatpush.msra.mxu0 0.0
    %1856 = vmatpush.msra.mxu0 0.0
    %1857 = vmatpush.msra.mxu0 0.0
    %1858 = vmatpush.msra.mxu0 0.0
    %1859 = vmatpush.msra.mxu0 0.0
    %1860 = vmatpush.msra.mxu0 0.0
    %1861 = vmatpush.msra.mxu0 0.0
    %1862 = vmatpush.msra.mxu0 0.0
    %1863 = vmatpush.msra.mxu0 %v1678
    %1864 = vmatpush.msra.mxu0 %v1677
    %1865 = vmatpush.msra.mxu0 %v1676
    %1866 = vmatpush.msra.mxu0 %v1675
    %1867 = vmatmul.f32.gmra.mxu0 %v1325
    %v1868 = vpop.f32.mrf.mxu0
    %v1869 = vadd.f32 0.0, %v1868
    %1870 = vdwg.mxu0
    %1871 = vmatpush.msra.mxu0 0.0
    %1872 = vmatpush.msra.mxu0 0.0
    %1873 = vmatpush.msra.mxu0 0.0
    %1874 = vmatpush.msra.mxu0 0.0
    %1875 = vmatpush.msra.mxu0 0.0
    %1876 = vmatpush.msra.mxu0 0.0
    %1877 = vmatpush.msra.mxu0 0.0
    %1878 = vmatpush.msra.mxu0 0.0
    %1879 = vmatpush.msra.mxu0 0.0
    %1880 = vmatpush.msra.mxu0 0.0
    %1881 = vmatpush.msra.mxu0 0.0
    %1882 = vmatpush.msra.mxu0 0.0
    %1883 = vmatpush.msra.mxu0 %v1682
    %1884 = vmatpush.msra.mxu0 %v1681
    %1885 = vmatpush.msra.mxu0 %v1680
    %1886 = vmatpush.msra.mxu0 %v1679
    %1887 = vmatmul.f32.gmra.mxu0 %v1325
    %v1888 = vpop.f32.mrf.mxu0
    %v1889 = vadd.f32 0.0, %v1888
    %1890 = vdwg.mxu0
    %1891 = vmatpush.msra.mxu0 0.0
    %1892 = vmatpush.msra.mxu0 0.0
    %1893 = vmatpush.msra.mxu0 0.0
    %1894 = vmatpush.msra.mxu0 0.0
    %1895 = vmatpush.msra.mxu0 0.0
    %1896 = vmatpush.msra.mxu0 0.0
    %1897 = vmatpush.msra.mxu0 0.0
    %1898 = vmatpush.msra.mxu0 0.0
    %1899 = vmatpush.msra.mxu0 0.0
    %1900 = vmatpush.msra.mxu0 0.0
    %1901 = vmatpush.msra.mxu0 0.0
    %1902 = vmatpush.msra.mxu0 0.0
    %1903 = vmatpush.msra.mxu0 %v1686
    %1904 = vmatpush.msra.mxu0 %v1685
    %1905 = vmatpush.msra.mxu0 %v1684
    %1906 = vmatpush.msra.mxu0 %v1683
    %1907 = vmatmul.f32.gmra.mxu0 %v1325
    %v1908 = vpop.f32.mrf.mxu0
    %v1909 = vadd.f32 0.0, %v1908
    %1910 = vdwg.mxu0
    %1911 = vmatpush.msra.mxu0 0.0
    %1912 = vmatpush.msra.mxu0 0.0
    %1913 = vmatpush.msra.mxu0 0.0
    %1914 = vmatpush.msra.mxu0 0.0
    %1915 = vmatpush.msra.mxu0 0.0
    %1916 = vmatpush.msra.mxu0 0.0
    %1917 = vmatpush.msra.mxu0 0.0
    %1918 = vmatpush.msra.mxu0 0.0
    %1919 = vmatpush.msra.mxu0 0.0
    %1920 = vmatpush.msra.mxu0 0.0
    %1921 = vmatpush.msra.mxu0 0.0
    %1922 = vmatpush.msra.mxu0 0.0
    %1923 = vmatpush.msra.mxu0 %v1690
    %1924 = vmatpush.msra.mxu0 %v1689
    %1925 = vmatpush.msra.mxu0 %v1688
    %1926 = vmatpush.msra.mxu0 %v1687
    %1927 = vmatmul.f32.gmra.mxu0 %v1325
    %v1928 = vpop.f32.mrf.mxu0
    %v1929 = vadd.f32 0.0, %v1928
    %1930 = vdwg.mxu0
    %1931 = vmatpush.msra.mxu0 0.0
    %1932 = vmatpush.msra.mxu0 0.0
    %1933 = vmatpush.msra.mxu0 0.0
    %1934 = vmatpush.msra.mxu0 0.0
    %1935 = vmatpush.msra.mxu0 0.0
    %1936 = vmatpush.msra.mxu0 0.0
    %1937 = vmatpush.msra.mxu0 0.0
    %1938 = vmatpush.msra.mxu0 0.0
    %1939 = vmatpush.msra.mxu0 0.0
    %1940 = vmatpush.msra.mxu0 0.0
    %1941 = vmatpush.msra.mxu0 0.0
    %1942 = vmatpush.msra.mxu0 0.0
    %1943 = vmatpush.msra.mxu0 %v1694
    %1944 = vmatpush.msra.mxu0 %v1693
    %1945 = vmatpush.msra.mxu0 %v1692
    %1946 = vmatpush.msra.mxu0 %v1691
    %1947 = vmatmul.f32.gmra.mxu0 %v1325
    %v1948 = vpop.f32.mrf.mxu0
    %v1949 = vadd.f32 0.0, %v1948
    %1950 = vdwg.mxu0
    %1951 = vmatpush.msra.mxu0 0.0
    %1952 = vmatpush.msra.mxu0 0.0
    %1953 = vmatpush.msra.mxu0 0.0
    %1954 = vmatpush.msra.mxu0 0.0
    %1955 = vmatpush.msra.mxu0 0.0
    %1956 = vmatpush.msra.mxu0 0.0
    %1957 = vmatpush.msra.mxu0 0.0
    %1958 = vmatpush.msra.mxu0 0.0
    %1959 = vmatpush.msra.mxu0 0.0
    %1960 = vmatpush.msra.mxu0 0.0
    %1961 = vmatpush.msra.mxu0 0.0
    %1962 = vmatpush.msra.mxu0 0.0
    %1963 = vmatpush.msra.mxu0 %v1698
    %1964 = vmatpush.msra.mxu0 %v1697
    %1965 = vmatpush.msra.mxu0 %v1696
    %1966 = vmatpush.msra.mxu0 %v1695
    %1967 = vmatmul.f32.gmra.mxu0 %v1325
    %v1968 = vpop.f32.mrf.mxu0
    %v1969 = vadd.f32 0.0, %v1968
    %1970 = vdwg.mxu0
    %1971 = vmatpush.msra.mxu0 0.0
    %1972 = vmatpush.msra.mxu0 0.0
    %1973 = vmatpush.msra.mxu0 0.0
    %1974 = vmatpush.msra.mxu0 0.0
    %1975 = vmatpush.msra.mxu0 0.0
    %1976 = vmatpush.msra.mxu0 0.0
    %1977 = vmatpush.msra.mxu0 0.0
    %1978 = vmatpush.msra.mxu0 0.0
    %1979 = vmatpush.msra.mxu0 0.0
    %1980 = vmatpush.msra.mxu0 0.0
    %1981 = vmatpush.msra.mxu0 0.0
    %1982 = vmatpush.msra.mxu0 0.0
    %1983 = vmatpush.msra.mxu0 %v1702
    %1984 = vmatpush.msra.mxu0 %v1701
    %1985 = vmatpush.msra.mxu0 %v1700
    %1986 = vmatpush.msra.mxu0 %v1699
    %1987 = vmatmul.f32.gmra.mxu0 %v1325
    %v1988 = vpop.f32.mrf.mxu0
    %v1989 = vadd.f32 0.0, %v1988
    %1990 = vdwg.mxu0
    %1991 = vmatpush.msra.mxu0 0.0
    %1992 = vmatpush.msra.mxu0 0.0
    %1993 = vmatpush.msra.mxu0 0.0
    %1994 = vmatpush.msra.mxu0 0.0
    %1995 = vmatpush.msra.mxu0 0.0
    %1996 = vmatpush.msra.mxu0 0.0
    %1997 = vmatpush.msra.mxu0 0.0
    %1998 = vmatpush.msra.mxu0 0.0
    %1999 = vmatpush.msra.mxu0 0.0
    %2000 = vmatpush.msra.mxu0 0.0
    %2001 = vmatpush.msra.mxu0 0.0
    %2002 = vmatpush.msra.mxu0 0.0
    %2003 = vmatpush.msra.mxu0 %v1706
    %2004 = vmatpush.msra.mxu0 %v1705
    %2005 = vmatpush.msra.mxu0 %v1704
    %2006 = vmatpush.msra.mxu0 %v1703
    %2007 = vmatmul.f32.gmra.mxu0 %v1325
    %v2008 = vpop.f32.mrf.mxu0
    %v2009 = vadd.f32 0.0, %v2008
    %2010 = vdwg.mxu0
    %2011 = vmatpush.msra.mxu0 0.0
    %2012 = vmatpush.msra.mxu0 0.0
    %2013 = vmatpush.msra.mxu0 0.0
    %2014 = vmatpush.msra.mxu0 0.0
    %2015 = vmatpush.msra.mxu0 0.0
    %2016 = vmatpush.msra.mxu0 0.0
    %2017 = vmatpush.msra.mxu0 0.0
    %2018 = vmatpush.msra.mxu0 0.0
    %2019 = vmatpush.msra.mxu0 0.0
    %2020 = vmatpush.msra.mxu0 0.0
    %2021 = vmatpush.msra.mxu0 0.0
    %2022 = vmatpush.msra.mxu0 0.0
    %2023 = vmatpush.msra.mxu0 %v1710
    %2024 = vmatpush.msra.mxu0 %v1709
    %2025 = vmatpush.msra.mxu0 %v1708
    %2026 = vmatpush.msra.mxu0 %v1707
    %2027 = vmatmul.f32.gmra.mxu0 %v1325
    %v2028 = vpop.f32.mrf.mxu0
    %v2029 = vadd.f32 0.0, %v2028
    %2030 = vdwg.mxu0
    %v2032 = vsel %vm171, %v238, 0
    %v2035 = vsel %vm171, %v241, 0
    %v2038 = vsel %vm171, %v244, 0
    %v2041 = vsel %vm171, %v247, 0
    %v2044 = vsel %vm171, %v250, 0
    %v2047 = vsel %vm171, %v253, 0
    %v2050 = vsel %vm171, %v256, 0
    %v2053 = vsel %vm171, %v259, 0
    %v2056 = vsel %vm171, %v262, 0
    %v2059 = vsel %vm171, %v265, 0
    %v2062 = vsel %vm171, %v268, 0
    %v2065 = vsel %vm171, %v271, 0
    %v2068 = vsel %vm171, %v274, 0
    %v2071 = vsel %vm171, %v277, 0
    %v2074 = vsel %vm171, %v280, 0
    %v2077 = vsel %vm171, %v283, 0
    %v2080 = vsel %vm171, %v1345, 0
    %2082 = vmatpush.xpose.msra.mxu0 0.0
    %2083 = vmatpush.xpose.msra.mxu0 0.0
    %2084 = vmatpush.xpose.msra.mxu0 0.0
    %2085 = vmatpush.xpose.msra.mxu0 0.0
    %2086 = vmatpush.xpose.msra.mxu0 0.0
    %2087 = vmatpush.xpose.msra.mxu0 0.0
    %2088 = vmatpush.xpose.msra.mxu0 0.0
    %2089 = vmatpush.xpose.msra.mxu0 0.0
    %2090 = vmatpush.xpose.msra.mxu0 0.0
    %2091 = vmatpush.xpose.msra.mxu0 0.0
    %2092 = vmatpush.xpose.msra.mxu0 0.0
    %2093 = vmatpush.xpose.msra.mxu0 0.0
    %2094 = vmatpush.xpose.msra.mxu0 0.0
    %2095 = vmatpush.xpose.msra.mxu0 0.0
    %2096 = vmatpush.xpose.msra.mxu0 0.0
    %2097 = vmatpush.xpose.msra.mxu0 %v2080
    %2098 = vmatmul.f32.gmra.mxu0 %v2032
    %v2099 = vpop.f32.mrf.mxu0
    %v2100 = vadd.f32 0.0, %v2099
    %2101 = vmatmul.f32.gmra.mxu0 %v2035
    %v2102 = vpop.f32.mrf.mxu0
    %v2103 = vadd.f32 0.0, %v2102
    %2104 = vmatmul.f32.gmra.mxu0 %v2038
    %v2105 = vpop.f32.mrf.mxu0
    %v2106 = vadd.f32 0.0, %v2105
    %2107 = vmatmul.f32.gmra.mxu0 %v2041
    %v2108 = vpop.f32.mrf.mxu0
    %v2109 = vadd.f32 0.0, %v2108
    %2110 = vmatmul.f32.gmra.mxu0 %v2044
    %v2111 = vpop.f32.mrf.mxu0
    %v2112 = vadd.f32 0.0, %v2111
    %2113 = vmatmul.f32.gmra.mxu0 %v2047
    %v2114 = vpop.f32.mrf.mxu0
    %v2115 = vadd.f32 0.0, %v2114
    %2116 = vmatmul.f32.gmra.mxu0 %v2050
    %v2117 = vpop.f32.mrf.mxu0
    %v2118 = vadd.f32 0.0, %v2117
    %2119 = vmatmul.f32.gmra.mxu0 %v2053
    %v2120 = vpop.f32.mrf.mxu0
    %v2121 = vadd.f32 0.0, %v2120
    %2122 = vmatmul.f32.gmra.mxu0 %v2056
    %v2123 = vpop.f32.mrf.mxu0
    %v2124 = vadd.f32 0.0, %v2123
    %2125 = vmatmul.f32.gmra.mxu0 %v2059
    %v2126 = vpop.f32.mrf.mxu0
    %v2127 = vadd.f32 0.0, %v2126
    %2128 = vmatmul.f32.gmra.mxu0 %v2062
    %v2129 = vpop.f32.mrf.mxu0
    %v2130 = vadd.f32 0.0, %v2129
    %2131 = vmatmul.f32.gmra.mxu0 %v2065
    %v2132 = vpop.f32.mrf.mxu0
    %v2133 = vadd.f32 0.0, %v2132
    %2134 = vmatmul.f32.gmra.mxu0 %v2068
    %v2135 = vpop.f32.mrf.mxu0
    %v2136 = vadd.f32 0.0, %v2135
    %2137 = vmatmul.f32.gmra.mxu0 %v2071
    %v2138 = vpop.f32.mrf.mxu0
    %v2139 = vadd.f32 0.0, %v2138
    %2140 = vmatmul.f32.gmra.mxu0 %v2074
    %v2141 = vpop.f32.mrf.mxu0
    %v2142 = vadd.f32 0.0, %v2141
    %2143 = vmatmul.f32.gmra.mxu0 %v2077
    %v2144 = vpop.f32.mrf.mxu0
    %v2145 = vadd.f32 0.0, %v2144
    %2146 = vdwg.mxu0
    %v2148 = vsel %vm171, %v303, 0
    %v2151 = vsel %vm171, %v306, 0
    %v2154 = vsel %vm171, %v309, 0
    %v2157 = vsel %vm171, %v312, 0
    %v2160 = vsel %vm171, %v315, 0
    %v2163 = vsel %vm171, %v318, 0
    %v2166 = vsel %vm171, %v321, 0
    %v2169 = vsel %vm171, %v324, 0
    %v2172 = vsel %vm171, %v327, 0
    %v2175 = vsel %vm171, %v330, 0
    %v2178 = vsel %vm171, %v333, 0
    %v2181 = vsel %vm171, %v336, 0
    %v2184 = vsel %vm171, %v339, 0
    %v2187 = vsel %vm171, %v342, 0
    %v2190 = vsel %vm171, %v345, 0
    %v2193 = vsel %vm171, %v348, 0
    %v2196 = vsel %vm171, %v1365, 0
    %2198 = vmatpush.xpose.msra.mxu0 0.0
    %2199 = vmatpush.xpose.msra.mxu0 0.0
    %2200 = vmatpush.xpose.msra.mxu0 0.0
    %2201 = vmatpush.xpose.msra.mxu0 0.0
    %2202 = vmatpush.xpose.msra.mxu0 0.0
    %2203 = vmatpush.xpose.msra.mxu0 0.0
    %2204 = vmatpush.xpose.msra.mxu0 0.0
    %2205 = vmatpush.xpose.msra.mxu0 0.0
    %2206 = vmatpush.xpose.msra.mxu0 0.0
    %2207 = vmatpush.xpose.msra.mxu0 0.0
    %2208 = vmatpush.xpose.msra.mxu0 0.0
    %2209 = vmatpush.xpose.msra.mxu0 0.0
    %2210 = vmatpush.xpose.msra.mxu0 0.0
    %2211 = vmatpush.xpose.msra.mxu0 0.0
    %2212 = vmatpush.xpose.msra.mxu0 0.0
    %2213 = vmatpush.xpose.msra.mxu0 %v2196
    %2214 = vmatmul.f32.gmra.mxu0 %v2148
    %v2215 = vpop.f32.mrf.mxu0
    %v2216 = vadd.f32 0.0, %v2215
    %2217 = vmatmul.f32.gmra.mxu0 %v2151
    %v2218 = vpop.f32.mrf.mxu0
    %v2219 = vadd.f32 0.0, %v2218
    %2220 = vmatmul.f32.gmra.mxu0 %v2154
    %v2221 = vpop.f32.mrf.mxu0
    %v2222 = vadd.f32 0.0, %v2221
    %2223 = vmatmul.f32.gmra.mxu0 %v2157
    %v2224 = vpop.f32.mrf.mxu0
    %v2225 = vadd.f32 0.0, %v2224
    %2226 = vmatmul.f32.gmra.mxu0 %v2160
    %v2227 = vpop.f32.mrf.mxu0
    %v2228 = vadd.f32 0.0, %v2227
    %2229 = vmatmul.f32.gmra.mxu0 %v2163
    %v2230 = vpop.f32.mrf.mxu0
    %v2231 = vadd.f32 0.0, %v2230
    %2232 = vmatmul.f32.gmra.mxu0 %v2166
    %v2233 = vpop.f32.mrf.mxu0
    %v2234 = vadd.f32 0.0, %v2233
    %2235 = vmatmul.f32.gmra.mxu0 %v2169
    %v2236 = vpop.f32.mrf.mxu0
    %v2237 = vadd.f32 0.0, %v2236
    %2238 = vmatmul.f32.gmra.mxu0 %v2172
    %v2239 = vpop.f32.mrf.mxu0
    %v2240 = vadd.f32 0.0, %v2239
    %2241 = vmatmul.f32.gmra.mxu0 %v2175
    %v2242 = vpop.f32.mrf.mxu0
    %v2243 = vadd.f32 0.0, %v2242
    %2244 = vmatmul.f32.gmra.mxu0 %v2178
    %v2245 = vpop.f32.mrf.mxu0
    %v2246 = vadd.f32 0.0, %v2245
    %2247 = vmatmul.f32.gmra.mxu0 %v2181
    %v2248 = vpop.f32.mrf.mxu0
    %v2249 = vadd.f32 0.0, %v2248
    %2250 = vmatmul.f32.gmra.mxu0 %v2184
    %v2251 = vpop.f32.mrf.mxu0
    %v2252 = vadd.f32 0.0, %v2251
    %2253 = vmatmul.f32.gmra.mxu0 %v2187
    %v2254 = vpop.f32.mrf.mxu0
    %v2255 = vadd.f32 0.0, %v2254
    %2256 = vmatmul.f32.gmra.mxu0 %v2190
    %v2257 = vpop.f32.mrf.mxu0
    %v2258 = vadd.f32 0.0, %v2257
    %2259 = vmatmul.f32.gmra.mxu0 %v2193
    %v2260 = vpop.f32.mrf.mxu0
    %v2261 = vadd.f32 0.0, %v2260
    %2262 = vdwg.mxu0
    %v2264 = vsel %vm171, %v368, 0
    %v2267 = vsel %vm171, %v371, 0
    %v2270 = vsel %vm171, %v374, 0
    %v2273 = vsel %vm171, %v377, 0
    %v2276 = vsel %vm171, %v380, 0
    %v2279 = vsel %vm171, %v383, 0
    %v2282 = vsel %vm171, %v386, 0
    %v2285 = vsel %vm171, %v389, 0
    %v2288 = vsel %vm171, %v392, 0
    %v2291 = vsel %vm171, %v395, 0
    %v2294 = vsel %vm171, %v398, 0
    %v2297 = vsel %vm171, %v401, 0
    %v2300 = vsel %vm171, %v404, 0
    %v2303 = vsel %vm171, %v407, 0
    %v2306 = vsel %vm171, %v410, 0
    %v2309 = vsel %vm171, %v413, 0
    %v2312 = vsel %vm171, %v1385, 0
    %2314 = vmatpush.xpose.msra.mxu0 0.0
    %2315 = vmatpush.xpose.msra.mxu0 0.0
    %2316 = vmatpush.xpose.msra.mxu0 0.0
    %2317 = vmatpush.xpose.msra.mxu0 0.0
    %2318 = vmatpush.xpose.msra.mxu0 0.0
    %2319 = vmatpush.xpose.msra.mxu0 0.0
    %2320 = vmatpush.xpose.msra.mxu0 0.0
    %2321 = vmatpush.xpose.msra.mxu0 0.0
    %2322 = vmatpush.xpose.msra.mxu0 0.0
    %2323 = vmatpush.xpose.msra.mxu0 0.0
    %2324 = vmatpush.xpose.msra.mxu0 0.0
    %2325 = vmatpush.xpose.msra.mxu0 0.0
    %2326 = vmatpush.xpose.msra.mxu0 0.0
    %2327 = vmatpush.xpose.msra.mxu0 0.0
    %2328 = vmatpush.xpose.msra.mxu0 0.0
    %2329 = vmatpush.xpose.msra.mxu0 %v2312
    %2330 = vmatmul.f32.gmra.mxu0 %v2264
    %v2331 = vpop.f32.mrf.mxu0
    %v2332 = vadd.f32 0.0, %v2331
    %2333 = vmatmul.f32.gmra.mxu0 %v2267
    %v2334 = vpop.f32.mrf.mxu0
    %v2335 = vadd.f32 0.0, %v2334
    %2336 = vmatmul.f32.gmra.mxu0 %v2270
    %v2337 = vpop.f32.mrf.mxu0
    %v2338 = vadd.f32 0.0, %v2337
    %2339 = vmatmul.f32.gmra.mxu0 %v2273
    %v2340 = vpop.f32.mrf.mxu0
    %v2341 = vadd.f32 0.0, %v2340
    %2342 = vmatmul.f32.gmra.mxu0 %v2276
    %v2343 = vpop.f32.mrf.mxu0
    %v2344 = vadd.f32 0.0, %v2343
    %2345 = vmatmul.f32.gmra.mxu0 %v2279
    %v2346 = vpop.f32.mrf.mxu0
    %v2347 = vadd.f32 0.0, %v2346
    %2348 = vmatmul.f32.gmra.mxu0 %v2282
    %v2349 = vpop.f32.mrf.mxu0
    %v2350 = vadd.f32 0.0, %v2349
    %2351 = vmatmul.f32.gmra.mxu0 %v2285
    %v2352 = vpop.f32.mrf.mxu0
    %v2353 = vadd.f32 0.0, %v2352
    %2354 = vmatmul.f32.gmra.mxu0 %v2288
    %v2355 = vpop.f32.mrf.mxu0
    %v2356 = vadd.f32 0.0, %v2355
    %2357 = vmatmul.f32.gmra.mxu0 %v2291
    %v2358 = vpop.f32.mrf.mxu0
    %v2359 = vadd.f32 0.0, %v2358
    %2360 = vmatmul.f32.gmra.mxu0 %v2294
    %v2361 = vpop.f32.mrf.mxu0
    %v2362 = vadd.f32 0.0, %v2361
    %2363 = vmatmul.f32.gmra.mxu0 %v2297
    %v2364 = vpop.f32.mrf.mxu0
    %v2365 = vadd.f32 0.0, %v2364
    %2366 = vmatmul.f32.gmra.mxu0 %v2300
    %v2367 = vpop.f32.mrf.mxu0
    %v2368 = vadd.f32 0.0, %v2367
    %2369 = vmatmul.f32.gmra.mxu0 %v2303
    %v2370 = vpop.f32.mrf.mxu0
    %v2371 = vadd.f32 0.0, %v2370
    %2372 = vmatmul.f32.gmra.mxu0 %v2306
    %v2373 = vpop.f32.mrf.mxu0
    %v2374 = vadd.f32 0.0, %v2373
    %2375 = vmatmul.f32.gmra.mxu0 %v2309
    %v2376 = vpop.f32.mrf.mxu0
    %v2377 = vadd.f32 0.0, %v2376
    %2378 = vdwg.mxu0
    %v2380 = vsel %vm171, %v433, 0
    %v2383 = vsel %vm171, %v436, 0
    %v2386 = vsel %vm171, %v439, 0
    %v2389 = vsel %vm171, %v442, 0
    %v2392 = vsel %vm171, %v445, 0
    %v2395 = vsel %vm171, %v448, 0
    %v2398 = vsel %vm171, %v451, 0
    %v2401 = vsel %vm171, %v454, 0
    %v2404 = vsel %vm171, %v457, 0
    %v2407 = vsel %vm171, %v460, 0
    %v2410 = vsel %vm171, %v463, 0
    %v2413 = vsel %vm171, %v466, 0
    %v2416 = vsel %vm171, %v469, 0
    %v2419 = vsel %vm171, %v472, 0
    %v2422 = vsel %vm171, %v475, 0
    %v2425 = vsel %vm171, %v478, 0
    %v2428 = vsel %vm171, %v1405, 0
    %2430 = vmatpush.xpose.msra.mxu0 0.0
    %2431 = vmatpush.xpose.msra.mxu0 0.0
    %2432 = vmatpush.xpose.msra.mxu0 0.0
    %2433 = vmatpush.xpose.msra.mxu0 0.0
    %2434 = vmatpush.xpose.msra.mxu0 0.0
    %2435 = vmatpush.xpose.msra.mxu0 0.0
    %2436 = vmatpush.xpose.msra.mxu0 0.0
    %2437 = vmatpush.xpose.msra.mxu0 0.0
    %2438 = vmatpush.xpose.msra.mxu0 0.0
    %2439 = vmatpush.xpose.msra.mxu0 0.0
    %2440 = vmatpush.xpose.msra.mxu0 0.0
    %2441 = vmatpush.xpose.msra.mxu0 0.0
    %2442 = vmatpush.xpose.msra.mxu0 0.0
    %2443 = vmatpush.xpose.msra.mxu0 0.0
    %2444 = vmatpush.xpose.msra.mxu0 0.0
    %2445 = vmatpush.xpose.msra.mxu0 %v2428
    %2446 = vmatmul.f32.gmra.mxu0 %v2380
    %v2447 = vpop.f32.mrf.mxu0
    %v2448 = vadd.f32 0.0, %v2447
    %2449 = vmatmul.f32.gmra.mxu0 %v2383
    %v2450 = vpop.f32.mrf.mxu0
    %v2451 = vadd.f32 0.0, %v2450
    %2452 = vmatmul.f32.gmra.mxu0 %v2386
    %v2453 = vpop.f32.mrf.mxu0
    %v2454 = vadd.f32 0.0, %v2453
    %2455 = vmatmul.f32.gmra.mxu0 %v2389
    %v2456 = vpop.f32.mrf.mxu0
    %v2457 = vadd.f32 0.0, %v2456
    %2458 = vmatmul.f32.gmra.mxu0 %v2392
    %v2459 = vpop.f32.mrf.mxu0
    %v2460 = vadd.f32 0.0, %v2459
    %2461 = vmatmul.f32.gmra.mxu0 %v2395
    %v2462 = vpop.f32.mrf.mxu0
    %v2463 = vadd.f32 0.0, %v2462
    %2464 = vmatmul.f32.gmra.mxu0 %v2398
    %v2465 = vpop.f32.mrf.mxu0
    %v2466 = vadd.f32 0.0, %v2465
    %2467 = vmatmul.f32.gmra.mxu0 %v2401
    %v2468 = vpop.f32.mrf.mxu0
    %v2469 = vadd.f32 0.0, %v2468
    %2470 = vmatmul.f32.gmra.mxu0 %v2404
    %v2471 = vpop.f32.mrf.mxu0
    %v2472 = vadd.f32 0.0, %v2471
    %2473 = vmatmul.f32.gmra.mxu0 %v2407
    %v2474 = vpop.f32.mrf.mxu0
    %v2475 = vadd.f32 0.0, %v2474
    %2476 = vmatmul.f32.gmra.mxu0 %v2410
    %v2477 = vpop.f32.mrf.mxu0
    %v2478 = vadd.f32 0.0, %v2477
    %2479 = vmatmul.f32.gmra.mxu0 %v2413
    %v2480 = vpop.f32.mrf.mxu0
    %v2481 = vadd.f32 0.0, %v2480
    %2482 = vmatmul.f32.gmra.mxu0 %v2416
    %v2483 = vpop.f32.mrf.mxu0
    %v2484 = vadd.f32 0.0, %v2483
    %2485 = vmatmul.f32.gmra.mxu0 %v2419
    %v2486 = vpop.f32.mrf.mxu0
    %v2487 = vadd.f32 0.0, %v2486
    %2488 = vmatmul.f32.gmra.mxu0 %v2422
    %v2489 = vpop.f32.mrf.mxu0
    %v2490 = vadd.f32 0.0, %v2489
    %2491 = vmatmul.f32.gmra.mxu0 %v2425
    %v2492 = vpop.f32.mrf.mxu0
    %v2493 = vadd.f32 0.0, %v2492
    %2494 = vdwg.mxu0
    %v2496 = vsel %vm171, %v498, 0
    %v2499 = vsel %vm171, %v501, 0
    %v2502 = vsel %vm171, %v504, 0
    %v2505 = vsel %vm171, %v507, 0
    %v2508 = vsel %vm171, %v510, 0
    %v2511 = vsel %vm171, %v513, 0
    %v2514 = vsel %vm171, %v516, 0
    %v2517 = vsel %vm171, %v519, 0
    %v2520 = vsel %vm171, %v522, 0
    %v2523 = vsel %vm171, %v525, 0
    %v2526 = vsel %vm171, %v528, 0
    %v2529 = vsel %vm171, %v531, 0
    %v2532 = vsel %vm171, %v534, 0
    %v2535 = vsel %vm171, %v537, 0
    %v2538 = vsel %vm171, %v540, 0
    %v2541 = vsel %vm171, %v543, 0
    %v2544 = vsel %vm171, %v1425, 0
    %2546 = vmatpush.xpose.msra.mxu0 0.0
    %2547 = vmatpush.xpose.msra.mxu0 0.0
    %2548 = vmatpush.xpose.msra.mxu0 0.0
    %2549 = vmatpush.xpose.msra.mxu0 0.0
    %2550 = vmatpush.xpose.msra.mxu0 0.0
    %2551 = vmatpush.xpose.msra.mxu0 0.0
    %2552 = vmatpush.xpose.msra.mxu0 0.0
    %2553 = vmatpush.xpose.msra.mxu0 0.0
    %2554 = vmatpush.xpose.msra.mxu0 0.0
    %2555 = vmatpush.xpose.msra.mxu0 0.0
    %2556 = vmatpush.xpose.msra.mxu0 0.0
    %2557 = vmatpush.xpose.msra.mxu0 0.0
    %2558 = vmatpush.xpose.msra.mxu0 0.0
    %2559 = vmatpush.xpose.msra.mxu0 0.0
    %2560 = vmatpush.xpose.msra.mxu0 0.0
    %2561 = vmatpush.xpose.msra.mxu0 %v2544
    %2562 = vmatmul.f32.gmra.mxu0 %v2496
    %v2563 = vpop.f32.mrf.mxu0
    %v2564 = vadd.f32 0.0, %v2563
    %2565 = vmatmul.f32.gmra.mxu0 %v2499
    %v2566 = vpop.f32.mrf.mxu0
    %v2567 = vadd.f32 0.0, %v2566
    %2568 = vmatmul.f32.gmra.mxu0 %v2502
    %v2569 = vpop.f32.mrf.mxu0
    %v2570 = vadd.f32 0.0, %v2569
    %2571 = vmatmul.f32.gmra.mxu0 %v2505
    %v2572 = vpop.f32.mrf.mxu0
    %v2573 = vadd.f32 0.0, %v2572
    %2574 = vmatmul.f32.gmra.mxu0 %v2508
    %v2575 = vpop.f32.mrf.mxu0
    %v2576 = vadd.f32 0.0, %v2575
    %2577 = vmatmul.f32.gmra.mxu0 %v2511
    %v2578 = vpop.f32.mrf.mxu0
    %v2579 = vadd.f32 0.0, %v2578
    %2580 = vmatmul.f32.gmra.mxu0 %v2514
    %v2581 = vpop.f32.mrf.mxu0
    %v2582 = vadd.f32 0.0, %v2581
    %2583 = vmatmul.f32.gmra.mxu0 %v2517
    %v2584 = vpop.f32.mrf.mxu0
    %v2585 = vadd.f32 0.0, %v2584
    %2586 = vmatmul.f32.gmra.mxu0 %v2520
    %v2587 = vpop.f32.mrf.mxu0
    %v2588 = vadd.f32 0.0, %v2587
    %2589 = vmatmul.f32.gmra.mxu0 %v2523
    %v2590 = vpop.f32.mrf.mxu0
    %v2591 = vadd.f32 0.0, %v2590
    %2592 = vmatmul.f32.gmra.mxu0 %v2526
    %v2593 = vpop.f32.mrf.mxu0
    %v2594 = vadd.f32 0.0, %v2593
    %2595 = vmatmul.f32.gmra.mxu0 %v2529
    %v2596 = vpop.f32.mrf.mxu0
    %v2597 = vadd.f32 0.0, %v2596
    %2598 = vmatmul.f32.gmra.mxu0 %v2532
    %v2599 = vpop.f32.mrf.mxu0
    %v2600 = vadd.f32 0.0, %v2599
    %2601 = vmatmul.f32.gmra.mxu0 %v2535
    %v2602 = vpop.f32.mrf.mxu0
    %v2603 = vadd.f32 0.0, %v2602
    %2604 = vmatmul.f32.gmra.mxu0 %v2538
    %v2605 = vpop.f32.mrf.mxu0
    %v2606 = vadd.f32 0.0, %v2605
    %2607 = vmatmul.f32.gmra.mxu0 %v2541
    %v2608 = vpop.f32.mrf.mxu0
    %v2609 = vadd.f32 0.0, %v2608
    %2610 = vdwg.mxu0
    %v2612 = vsel %vm171, %v563, 0
    %v2615 = vsel %vm171, %v566, 0
    %v2618 = vsel %vm171, %v569, 0
    %v2621 = vsel %vm171, %v572, 0
    %v2624 = vsel %vm171, %v575, 0
    %v2627 = vsel %vm171, %v578, 0
    %v2630 = vsel %vm171, %v581, 0
    %v2633 = vsel %vm171, %v584, 0
    %v2636 = vsel %vm171, %v587, 0
    %v2639 = vsel %vm171, %v590, 0
    %v2642 = vsel %vm171, %v593, 0
    %v2645 = vsel %vm171, %v596, 0
    %v2648 = vsel %vm171, %v599, 0
    %v2651 = vsel %vm171, %v602, 0
    %v2654 = vsel %vm171, %v605, 0
    %v2657 = vsel %vm171, %v608, 0
    %v2660 = vsel %vm171, %v1445, 0
    %2662 = vmatpush.xpose.msra.mxu0 0.0
    %2663 = vmatpush.xpose.msra.mxu0 0.0
    %2664 = vmatpush.xpose.msra.mxu0 0.0
    %2665 = vmatpush.xpose.msra.mxu0 0.0
    %2666 = vmatpush.xpose.msra.mxu0 0.0
    %2667 = vmatpush.xpose.msra.mxu0 0.0
    %2668 = vmatpush.xpose.msra.mxu0 0.0
    %2669 = vmatpush.xpose.msra.mxu0 0.0
    %2670 = vmatpush.xpose.msra.mxu0 0.0
    %2671 = vmatpush.xpose.msra.mxu0 0.0
    %2672 = vmatpush.xpose.msra.mxu0 0.0
    %2673 = vmatpush.xpose.msra.mxu0 0.0
    %2674 = vmatpush.xpose.msra.mxu0 0.0
    %2675 = vmatpush.xpose.msra.mxu0 0.0
    %2676 = vmatpush.xpose.msra.mxu0 0.0
    %2677 = vmatpush.xpose.msra.mxu0 %v2660
    %2678 = vmatmul.f32.gmra.mxu0 %v2612
    %v2679 = vpop.f32.mrf.mxu0
    %v2680 = vadd.f32 0.0, %v2679
    %2681 = vmatmul.f32.gmra.mxu0 %v2615
    %v2682 = vpop.f32.mrf.mxu0
    %v2683 = vadd.f32 0.0, %v2682
    %2684 = vmatmul.f32.gmra.mxu0 %v2618
    %v2685 = vpop.f32.mrf.mxu0
    %v2686 = vadd.f32 0.0, %v2685
    %2687 = vmatmul.f32.gmra.mxu0 %v2621
    %v2688 = vpop.f32.mrf.mxu0
    %v2689 = vadd.f32 0.0, %v2688
    %2690 = vmatmul.f32.gmra.mxu0 %v2624
    %v2691 = vpop.f32.mrf.mxu0
    %v2692 = vadd.f32 0.0, %v2691
    %2693 = vmatmul.f32.gmra.mxu0 %v2627
    %v2694 = vpop.f32.mrf.mxu0
    %v2695 = vadd.f32 0.0, %v2694
    %2696 = vmatmul.f32.gmra.mxu0 %v2630
    %v2697 = vpop.f32.mrf.mxu0
    %v2698 = vadd.f32 0.0, %v2697
    %2699 = vmatmul.f32.gmra.mxu0 %v2633
    %v2700 = vpop.f32.mrf.mxu0
    %v2701 = vadd.f32 0.0, %v2700
    %2702 = vmatmul.f32.gmra.mxu0 %v2636
    %v2703 = vpop.f32.mrf.mxu0
    %v2704 = vadd.f32 0.0, %v2703
    %2705 = vmatmul.f32.gmra.mxu0 %v2639
    %v2706 = vpop.f32.mrf.mxu0
    %v2707 = vadd.f32 0.0, %v2706
    %2708 = vmatmul.f32.gmra.mxu0 %v2642
    %v2709 = vpop.f32.mrf.mxu0
    %v2710 = vadd.f32 0.0, %v2709
    %2711 = vmatmul.f32.gmra.mxu0 %v2645
    %v2712 = vpop.f32.mrf.mxu0
    %v2713 = vadd.f32 0.0, %v2712
    %2714 = vmatmul.f32.gmra.mxu0 %v2648
    %v2715 = vpop.f32.mrf.mxu0
    %v2716 = vadd.f32 0.0, %v2715
    %2717 = vmatmul.f32.gmra.mxu0 %v2651
    %v2718 = vpop.f32.mrf.mxu0
    %v2719 = vadd.f32 0.0, %v2718
    %2720 = vmatmul.f32.gmra.mxu0 %v2654
    %v2721 = vpop.f32.mrf.mxu0
    %v2722 = vadd.f32 0.0, %v2721
    %2723 = vmatmul.f32.gmra.mxu0 %v2657
    %v2724 = vpop.f32.mrf.mxu0
    %v2725 = vadd.f32 0.0, %v2724
    %2726 = vdwg.mxu0
    %v2728 = vsel %vm171, %v628, 0
    %v2731 = vsel %vm171, %v631, 0
    %v2734 = vsel %vm171, %v634, 0
    %v2737 = vsel %vm171, %v637, 0
    %v2740 = vsel %vm171, %v640, 0
    %v2743 = vsel %vm171, %v643, 0
    %v2746 = vsel %vm171, %v646, 0
    %v2749 = vsel %vm171, %v649, 0
    %v2752 = vsel %vm171, %v652, 0
    %v2755 = vsel %vm171, %v655, 0
    %v2758 = vsel %vm171, %v658, 0
    %v2761 = vsel %vm171, %v661, 0
    %v2764 = vsel %vm171, %v664, 0
    %v2767 = vsel %vm171, %v667, 0
    %v2770 = vsel %vm171, %v670, 0
    %v2773 = vsel %vm171, %v673, 0
    %v2776 = vsel %vm171, %v1465, 0
    %2778 = vmatpush.xpose.msra.mxu0 0.0
    %2779 = vmatpush.xpose.msra.mxu0 0.0
    %2780 = vmatpush.xpose.msra.mxu0 0.0
    %2781 = vmatpush.xpose.msra.mxu0 0.0
    %2782 = vmatpush.xpose.msra.mxu0 0.0
    %2783 = vmatpush.xpose.msra.mxu0 0.0
    %2784 = vmatpush.xpose.msra.mxu0 0.0
    %2785 = vmatpush.xpose.msra.mxu0 0.0
    %2786 = vmatpush.xpose.msra.mxu0 0.0
    %2787 = vmatpush.xpose.msra.mxu0 0.0
    %2788 = vmatpush.xpose.msra.mxu0 0.0
    %2789 = vmatpush.xpose.msra.mxu0 0.0
    %2790 = vmatpush.xpose.msra.mxu0 0.0
    %2791 = vmatpush.xpose.msra.mxu0 0.0
    %2792 = vmatpush.xpose.msra.mxu0 0.0
    %2793 = vmatpush.xpose.msra.mxu0 %v2776
    %2794 = vmatmul.f32.gmra.mxu0 %v2728
    %v2795 = vpop.f32.mrf.mxu0
    %v2796 = vadd.f32 0.0, %v2795
    %2797 = vmatmul.f32.gmra.mxu0 %v2731
    %v2798 = vpop.f32.mrf.mxu0
    %v2799 = vadd.f32 0.0, %v2798
    %2800 = vmatmul.f32.gmra.mxu0 %v2734
    %v2801 = vpop.f32.mrf.mxu0
    %v2802 = vadd.f32 0.0, %v2801
    %2803 = vmatmul.f32.gmra.mxu0 %v2737
    %v2804 = vpop.f32.mrf.mxu0
    %v2805 = vadd.f32 0.0, %v2804
    %2806 = vmatmul.f32.gmra.mxu0 %v2740
    %v2807 = vpop.f32.mrf.mxu0
    %v2808 = vadd.f32 0.0, %v2807
    %2809 = vmatmul.f32.gmra.mxu0 %v2743
    %v2810 = vpop.f32.mrf.mxu0
    %v2811 = vadd.f32 0.0, %v2810
    %2812 = vmatmul.f32.gmra.mxu0 %v2746
    %v2813 = vpop.f32.mrf.mxu0
    %v2814 = vadd.f32 0.0, %v2813
    %2815 = vmatmul.f32.gmra.mxu0 %v2749
    %v2816 = vpop.f32.mrf.mxu0
    %v2817 = vadd.f32 0.0, %v2816
    %2818 = vmatmul.f32.gmra.mxu0 %v2752
    %v2819 = vpop.f32.mrf.mxu0
    %v2820 = vadd.f32 0.0, %v2819
    %2821 = vmatmul.f32.gmra.mxu0 %v2755
    %v2822 = vpop.f32.mrf.mxu0
    %v2823 = vadd.f32 0.0, %v2822
    %2824 = vmatmul.f32.gmra.mxu0 %v2758
    %v2825 = vpop.f32.mrf.mxu0
    %v2826 = vadd.f32 0.0, %v2825
    %2827 = vmatmul.f32.gmra.mxu0 %v2761
    %v2828 = vpop.f32.mrf.mxu0
    %v2829 = vadd.f32 0.0, %v2828
    %2830 = vmatmul.f32.gmra.mxu0 %v2764
    %v2831 = vpop.f32.mrf.mxu0
    %v2832 = vadd.f32 0.0, %v2831
    %2833 = vmatmul.f32.gmra.mxu0 %v2767
    %v2834 = vpop.f32.mrf.mxu0
    %v2835 = vadd.f32 0.0, %v2834
    %2836 = vmatmul.f32.gmra.mxu0 %v2770
    %v2837 = vpop.f32.mrf.mxu0
    %v2838 = vadd.f32 0.0, %v2837
    %2839 = vmatmul.f32.gmra.mxu0 %v2773
    %v2840 = vpop.f32.mrf.mxu0
    %v2841 = vadd.f32 0.0, %v2840
    %2842 = vdwg.mxu0
    %v2844 = vsel %vm171, %v693, 0
    %v2847 = vsel %vm171, %v696, 0
    %v2850 = vsel %vm171, %v699, 0
    %v2853 = vsel %vm171, %v702, 0
    %v2856 = vsel %vm171, %v705, 0
    %v2859 = vsel %vm171, %v708, 0
    %v2862 = vsel %vm171, %v711, 0
    %v2865 = vsel %vm171, %v714, 0
    %v2868 = vsel %vm171, %v717, 0
    %v2871 = vsel %vm171, %v720, 0
    %v2874 = vsel %vm171, %v723, 0
    %v2877 = vsel %vm171, %v726, 0
    %v2880 = vsel %vm171, %v729, 0
    %v2883 = vsel %vm171, %v732, 0
    %v2886 = vsel %vm171, %v735, 0
    %v2889 = vsel %vm171, %v738, 0
    %v2892 = vsel %vm171, %v1485, 0
    %2894 = vmatpush.xpose.msra.mxu0 0.0
    %2895 = vmatpush.xpose.msra.mxu0 0.0
    %2896 = vmatpush.xpose.msra.mxu0 0.0
    %2897 = vmatpush.xpose.msra.mxu0 0.0
    %2898 = vmatpush.xpose.msra.mxu0 0.0
    %2899 = vmatpush.xpose.msra.mxu0 0.0
    %2900 = vmatpush.xpose.msra.mxu0 0.0
    %2901 = vmatpush.xpose.msra.mxu0 0.0
    %2902 = vmatpush.xpose.msra.mxu0 0.0
    %2903 = vmatpush.xpose.msra.mxu0 0.0
    %2904 = vmatpush.xpose.msra.mxu0 0.0
    %2905 = vmatpush.xpose.msra.mxu0 0.0
    %2906 = vmatpush.xpose.msra.mxu0 0.0
    %2907 = vmatpush.xpose.msra.mxu0 0.0
    %2908 = vmatpush.xpose.msra.mxu0 0.0
    %2909 = vmatpush.xpose.msra.mxu0 %v2892
    %2910 = vmatmul.f32.gmra.mxu0 %v2844
    %v2911 = vpop.f32.mrf.mxu0
    %v2912 = vadd.f32 0.0, %v2911
    %2913 = vmatmul.f32.gmra.mxu0 %v2847
    %v2914 = vpop.f32.mrf.mxu0
    %v2915 = vadd.f32 0.0, %v2914
    %2916 = vmatmul.f32.gmra.mxu0 %v2850
    %v2917 = vpop.f32.mrf.mxu0
    %v2918 = vadd.f32 0.0, %v2917
    %2919 = vmatmul.f32.gmra.mxu0 %v2853
    %v2920 = vpop.f32.mrf.mxu0
    %v2921 = vadd.f32 0.0, %v2920
    %2922 = vmatmul.f32.gmra.mxu0 %v2856
    %v2923 = vpop.f32.mrf.mxu0
    %v2924 = vadd.f32 0.0, %v2923
    %2925 = vmatmul.f32.gmra.mxu0 %v2859
    %v2926 = vpop.f32.mrf.mxu0
    %v2927 = vadd.f32 0.0, %v2926
    %2928 = vmatmul.f32.gmra.mxu0 %v2862
    %v2929 = vpop.f32.mrf.mxu0
    %v2930 = vadd.f32 0.0, %v2929
    %2931 = vmatmul.f32.gmra.mxu0 %v2865
    %v2932 = vpop.f32.mrf.mxu0
    %v2933 = vadd.f32 0.0, %v2932
    %2934 = vmatmul.f32.gmra.mxu0 %v2868
    %v2935 = vpop.f32.mrf.mxu0
    %v2936 = vadd.f32 0.0, %v2935
    %2937 = vmatmul.f32.gmra.mxu0 %v2871
    %v2938 = vpop.f32.mrf.mxu0
    %v2939 = vadd.f32 0.0, %v2938
    %2940 = vmatmul.f32.gmra.mxu0 %v2874
    %v2941 = vpop.f32.mrf.mxu0
    %v2942 = vadd.f32 0.0, %v2941
    %2943 = vmatmul.f32.gmra.mxu0 %v2877
    %v2944 = vpop.f32.mrf.mxu0
    %v2945 = vadd.f32 0.0, %v2944
    %2946 = vmatmul.f32.gmra.mxu0 %v2880
    %v2947 = vpop.f32.mrf.mxu0
    %v2948 = vadd.f32 0.0, %v2947
    %2949 = vmatmul.f32.gmra.mxu0 %v2883
    %v2950 = vpop.f32.mrf.mxu0
    %v2951 = vadd.f32 0.0, %v2950
    %2952 = vmatmul.f32.gmra.mxu0 %v2886
    %v2953 = vpop.f32.mrf.mxu0
    %v2954 = vadd.f32 0.0, %v2953
    %2955 = vmatmul.f32.gmra.mxu0 %v2889
    %v2956 = vpop.f32.mrf.mxu0
    %v2957 = vadd.f32 0.0, %v2956
    %2958 = vdwg.mxu0
    %v2960 = vsel %vm171, %v758, 0
    %v2963 = vsel %vm171, %v761, 0
    %v2966 = vsel %vm171, %v764, 0
    %v2969 = vsel %vm171, %v767, 0
    %v2972 = vsel %vm171, %v770, 0
    %v2975 = vsel %vm171, %v773, 0
    %v2978 = vsel %vm171, %v776, 0
    %v2981 = vsel %vm171, %v779, 0
    %v2984 = vsel %vm171, %v782, 0
    %v2987 = vsel %vm171, %v785, 0
    %v2990 = vsel %vm171, %v788, 0
    %v2993 = vsel %vm171, %v791, 0
    %v2996 = vsel %vm171, %v794, 0
    %v2999 = vsel %vm171, %v797, 0
    %v3002 = vsel %vm171, %v800, 0
    %v3005 = vsel %vm171, %v803, 0
    %v3008 = vsel %vm171, %v1505, 0
    %3010 = vmatpush.xpose.msra.mxu0 0.0
    %3011 = vmatpush.xpose.msra.mxu0 0.0
    %3012 = vmatpush.xpose.msra.mxu0 0.0
    %3013 = vmatpush.xpose.msra.mxu0 0.0
    %3014 = vmatpush.xpose.msra.mxu0 0.0
    %3015 = vmatpush.xpose.msra.mxu0 0.0
    %3016 = vmatpush.xpose.msra.mxu0 0.0
    %3017 = vmatpush.xpose.msra.mxu0 0.0
    %3018 = vmatpush.xpose.msra.mxu0 0.0
    %3019 = vmatpush.xpose.msra.mxu0 0.0
    %3020 = vmatpush.xpose.msra.mxu0 0.0
    %3021 = vmatpush.xpose.msra.mxu0 0.0
    %3022 = vmatpush.xpose.msra.mxu0 0.0
    %3023 = vmatpush.xpose.msra.mxu0 0.0
    %3024 = vmatpush.xpose.msra.mxu0 0.0
    %3025 = vmatpush.xpose.msra.mxu0 %v3008
    %3026 = vmatmul.f32.gmra.mxu0 %v2960
    %v3027 = vpop.f32.mrf.mxu0
    %v3028 = vadd.f32 0.0, %v3027
    %3029 = vmatmul.f32.gmra.mxu0 %v2963
    %v3030 = vpop.f32.mrf.mxu0
    %v3031 = vadd.f32 0.0, %v3030
    %3032 = vmatmul.f32.gmra.mxu0 %v2966
    %v3033 = vpop.f32.mrf.mxu0
    %v3034 = vadd.f32 0.0, %v3033
    %3035 = vmatmul.f32.gmra.mxu0 %v2969
    %v3036 = vpop.f32.mrf.mxu0
    %v3037 = vadd.f32 0.0, %v3036
    %3038 = vmatmul.f32.gmra.mxu0 %v2972
    %v3039 = vpop.f32.mrf.mxu0
    %v3040 = vadd.f32 0.0, %v3039
    %3041 = vmatmul.f32.gmra.mxu0 %v2975
    %v3042 = vpop.f32.mrf.mxu0
    %v3043 = vadd.f32 0.0, %v3042
    %3044 = vmatmul.f32.gmra.mxu0 %v2978
    %v3045 = vpop.f32.mrf.mxu0
    %v3046 = vadd.f32 0.0, %v3045
    %3047 = vmatmul.f32.gmra.mxu0 %v2981
    %v3048 = vpop.f32.mrf.mxu0
    %v3049 = vadd.f32 0.0, %v3048
    %3050 = vmatmul.f32.gmra.mxu0 %v2984
    %v3051 = vpop.f32.mrf.mxu0
    %v3052 = vadd.f32 0.0, %v3051
    %3053 = vmatmul.f32.gmra.mxu0 %v2987
    %v3054 = vpop.f32.mrf.mxu0
    %v3055 = vadd.f32 0.0, %v3054
    %3056 = vmatmul.f32.gmra.mxu0 %v2990
    %v3057 = vpop.f32.mrf.mxu0
    %v3058 = vadd.f32 0.0, %v3057
    %3059 = vmatmul.f32.gmra.mxu0 %v2993
    %v3060 = vpop.f32.mrf.mxu0
    %v3061 = vadd.f32 0.0, %v3060
    %3062 = vmatmul.f32.gmra.mxu0 %v2996
    %v3063 = vpop.f32.mrf.mxu0
    %v3064 = vadd.f32 0.0, %v3063
    %3065 = vmatmul.f32.gmra.mxu0 %v2999
    %v3066 = vpop.f32.mrf.mxu0
    %v3067 = vadd.f32 0.0, %v3066
    %3068 = vmatmul.f32.gmra.mxu0 %v3002
    %v3069 = vpop.f32.mrf.mxu0
    %v3070 = vadd.f32 0.0, %v3069
    %3071 = vmatmul.f32.gmra.mxu0 %v3005
    %v3072 = vpop.f32.mrf.mxu0
    %v3073 = vadd.f32 0.0, %v3072
    %3074 = vdwg.mxu0
    %v3076 = vsel %vm171, %v823, 0
    %v3079 = vsel %vm171, %v826, 0
    %v3082 = vsel %vm171, %v829, 0
    %v3085 = vsel %vm171, %v832, 0
    %v3088 = vsel %vm171, %v835, 0
    %v3091 = vsel %vm171, %v838, 0
    %v3094 = vsel %vm171, %v841, 0
    %v3097 = vsel %vm171, %v844, 0
    %v3100 = vsel %vm171, %v847, 0
    %v3103 = vsel %vm171, %v850, 0
    %v3106 = vsel %vm171, %v853, 0
    %v3109 = vsel %vm171, %v856, 0
    %v3112 = vsel %vm171, %v859, 0
    %v3115 = vsel %vm171, %v862, 0
    %v3118 = vsel %vm171, %v865, 0
    %v3121 = vsel %vm171, %v868, 0
    %v3124 = vsel %vm171, %v1525, 0
    %3126 = vmatpush.xpose.msra.mxu0 0.0
    %3127 = vmatpush.xpose.msra.mxu0 0.0
    %3128 = vmatpush.xpose.msra.mxu0 0.0
    %3129 = vmatpush.xpose.msra.mxu0 0.0
    %3130 = vmatpush.xpose.msra.mxu0 0.0
    %3131 = vmatpush.xpose.msra.mxu0 0.0
    %3132 = vmatpush.xpose.msra.mxu0 0.0
    %3133 = vmatpush.xpose.msra.mxu0 0.0
    %3134 = vmatpush.xpose.msra.mxu0 0.0
    %3135 = vmatpush.xpose.msra.mxu0 0.0
    %3136 = vmatpush.xpose.msra.mxu0 0.0
    %3137 = vmatpush.xpose.msra.mxu0 0.0
    %3138 = vmatpush.xpose.msra.mxu0 0.0
    %3139 = vmatpush.xpose.msra.mxu0 0.0
    %3140 = vmatpush.xpose.msra.mxu0 0.0
    %3141 = vmatpush.xpose.msra.mxu0 %v3124
    %3142 = vmatmul.f32.gmra.mxu0 %v3076
    %v3143 = vpop.f32.mrf.mxu0
    %v3144 = vadd.f32 0.0, %v3143
    %3145 = vmatmul.f32.gmra.mxu0 %v3079
    %v3146 = vpop.f32.mrf.mxu0
    %v3147 = vadd.f32 0.0, %v3146
    %3148 = vmatmul.f32.gmra.mxu0 %v3082
    %v3149 = vpop.f32.mrf.mxu0
    %v3150 = vadd.f32 0.0, %v3149
    %3151 = vmatmul.f32.gmra.mxu0 %v3085
    %v3152 = vpop.f32.mrf.mxu0
    %v3153 = vadd.f32 0.0, %v3152
    %3154 = vmatmul.f32.gmra.mxu0 %v3088
    %v3155 = vpop.f32.mrf.mxu0
    %v3156 = vadd.f32 0.0, %v3155
    %3157 = vmatmul.f32.gmra.mxu0 %v3091
    %v3158 = vpop.f32.mrf.mxu0
    %v3159 = vadd.f32 0.0, %v3158
    %3160 = vmatmul.f32.gmra.mxu0 %v3094
    %v3161 = vpop.f32.mrf.mxu0
    %v3162 = vadd.f32 0.0, %v3161
    %3163 = vmatmul.f32.gmra.mxu0 %v3097
    %v3164 = vpop.f32.mrf.mxu0
    %v3165 = vadd.f32 0.0, %v3164
    %3166 = vmatmul.f32.gmra.mxu0 %v3100
    %v3167 = vpop.f32.mrf.mxu0
    %v3168 = vadd.f32 0.0, %v3167
    %3169 = vmatmul.f32.gmra.mxu0 %v3103
    %v3170 = vpop.f32.mrf.mxu0
    %v3171 = vadd.f32 0.0, %v3170
    %3172 = vmatmul.f32.gmra.mxu0 %v3106
    %v3173 = vpop.f32.mrf.mxu0
    %v3174 = vadd.f32 0.0, %v3173
    %3175 = vmatmul.f32.gmra.mxu0 %v3109
    %v3176 = vpop.f32.mrf.mxu0
    %v3177 = vadd.f32 0.0, %v3176
    %3178 = vmatmul.f32.gmra.mxu0 %v3112
    %v3179 = vpop.f32.mrf.mxu0
    %v3180 = vadd.f32 0.0, %v3179
    %3181 = vmatmul.f32.gmra.mxu0 %v3115
    %v3182 = vpop.f32.mrf.mxu0
    %v3183 = vadd.f32 0.0, %v3182
    %3184 = vmatmul.f32.gmra.mxu0 %v3118
    %v3185 = vpop.f32.mrf.mxu0
    %v3186 = vadd.f32 0.0, %v3185
    %3187 = vmatmul.f32.gmra.mxu0 %v3121
    %v3188 = vpop.f32.mrf.mxu0
    %v3189 = vadd.f32 0.0, %v3188
    %3190 = vdwg.mxu0
    %v3192 = vsel %vm171, %v888, 0
    %v3195 = vsel %vm171, %v891, 0
    %v3198 = vsel %vm171, %v894, 0
    %v3201 = vsel %vm171, %v897, 0
    %v3204 = vsel %vm171, %v900, 0
    %v3207 = vsel %vm171, %v903, 0
    %v3210 = vsel %vm171, %v906, 0
    %v3213 = vsel %vm171, %v909, 0
    %v3216 = vsel %vm171, %v912, 0
    %v3219 = vsel %vm171, %v915, 0
    %v3222 = vsel %vm171, %v918, 0
    %v3225 = vsel %vm171, %v921, 0
    %v3228 = vsel %vm171, %v924, 0
    %v3231 = vsel %vm171, %v927, 0
    %v3234 = vsel %vm171, %v930, 0
    %v3237 = vsel %vm171, %v933, 0
    %v3240 = vsel %vm171, %v1545, 0
    %3242 = vmatpush.xpose.msra.mxu0 0.0
    %3243 = vmatpush.xpose.msra.mxu0 0.0
    %3244 = vmatpush.xpose.msra.mxu0 0.0
    %3245 = vmatpush.xpose.msra.mxu0 0.0
    %3246 = vmatpush.xpose.msra.mxu0 0.0
    %3247 = vmatpush.xpose.msra.mxu0 0.0
    %3248 = vmatpush.xpose.msra.mxu0 0.0
    %3249 = vmatpush.xpose.msra.mxu0 0.0
    %3250 = vmatpush.xpose.msra.mxu0 0.0
    %3251 = vmatpush.xpose.msra.mxu0 0.0
    %3252 = vmatpush.xpose.msra.mxu0 0.0
    %3253 = vmatpush.xpose.msra.mxu0 0.0
    %3254 = vmatpush.xpose.msra.mxu0 0.0
    %3255 = vmatpush.xpose.msra.mxu0 0.0
    %3256 = vmatpush.xpose.msra.mxu0 0.0
    %3257 = vmatpush.xpose.msra.mxu0 %v3240
    %3258 = vmatmul.f32.gmra.mxu0 %v3192
    %v3259 = vpop.f32.mrf.mxu0
    %v3260 = vadd.f32 0.0, %v3259
    %3261 = vmatmul.f32.gmra.mxu0 %v3195
    %v3262 = vpop.f32.mrf.mxu0
    %v3263 = vadd.f32 0.0, %v3262
    %3264 = vmatmul.f32.gmra.mxu0 %v3198
    %v3265 = vpop.f32.mrf.mxu0
    %v3266 = vadd.f32 0.0, %v3265
    %3267 = vmatmul.f32.gmra.mxu0 %v3201
    %v3268 = vpop.f32.mrf.mxu0
    %v3269 = vadd.f32 0.0, %v3268
    %3270 = vmatmul.f32.gmra.mxu0 %v3204
    %v3271 = vpop.f32.mrf.mxu0
    %v3272 = vadd.f32 0.0, %v3271
    %3273 = vmatmul.f32.gmra.mxu0 %v3207
    %v3274 = vpop.f32.mrf.mxu0
    %v3275 = vadd.f32 0.0, %v3274
    %3276 = vmatmul.f32.gmra.mxu0 %v3210
    %v3277 = vpop.f32.mrf.mxu0
    %v3278 = vadd.f32 0.0, %v3277
    %3279 = vmatmul.f32.gmra.mxu0 %v3213
    %v3280 = vpop.f32.mrf.mxu0
    %v3281 = vadd.f32 0.0, %v3280
    %3282 = vmatmul.f32.gmra.mxu0 %v3216
    %v3283 = vpop.f32.mrf.mxu0
    %v3284 = vadd.f32 0.0, %v3283
    %3285 = vmatmul.f32.gmra.mxu0 %v3219
    %v3286 = vpop.f32.mrf.mxu0
    %v3287 = vadd.f32 0.0, %v3286
    %3288 = vmatmul.f32.gmra.mxu0 %v3222
    %v3289 = vpop.f32.mrf.mxu0
    %v3290 = vadd.f32 0.0, %v3289
    %3291 = vmatmul.f32.gmra.mxu0 %v3225
    %v3292 = vpop.f32.mrf.mxu0
    %v3293 = vadd.f32 0.0, %v3292
    %3294 = vmatmul.f32.gmra.mxu0 %v3228
    %v3295 = vpop.f32.mrf.mxu0
    %v3296 = vadd.f32 0.0, %v3295
    %3297 = vmatmul.f32.gmra.mxu0 %v3231
    %v3298 = vpop.f32.mrf.mxu0
    %v3299 = vadd.f32 0.0, %v3298
    %3300 = vmatmul.f32.gmra.mxu0 %v3234
    %v3301 = vpop.f32.mrf.mxu0
    %v3302 = vadd.f32 0.0, %v3301
    %3303 = vmatmul.f32.gmra.mxu0 %v3237
    %v3304 = vpop.f32.mrf.mxu0
    %v3305 = vadd.f32 0.0, %v3304
    %3306 = vdwg.mxu0
    %v3308 = vsel %vm171, %v953, 0
    %v3311 = vsel %vm171, %v956, 0
    %v3314 = vsel %vm171, %v959, 0
    %v3317 = vsel %vm171, %v962, 0
    %v3320 = vsel %vm171, %v965, 0
    %v3323 = vsel %vm171, %v968, 0
    %v3326 = vsel %vm171, %v971, 0
    %v3329 = vsel %vm171, %v974, 0
    %v3332 = vsel %vm171, %v977, 0
    %v3335 = vsel %vm171, %v980, 0
    %v3338 = vsel %vm171, %v983, 0
    %v3341 = vsel %vm171, %v986, 0
    %v3344 = vsel %vm171, %v989, 0
    %v3347 = vsel %vm171, %v992, 0
    %v3350 = vsel %vm171, %v995, 0
    %v3353 = vsel %vm171, %v998, 0
    %v3356 = vsel %vm171, %v1565, 0
    %3358 = vmatpush.xpose.msra.mxu0 0.0
    %3359 = vmatpush.xpose.msra.mxu0 0.0
    %3360 = vmatpush.xpose.msra.mxu0 0.0
    %3361 = vmatpush.xpose.msra.mxu0 0.0
    %3362 = vmatpush.xpose.msra.mxu0 0.0
    %3363 = vmatpush.xpose.msra.mxu0 0.0
    %3364 = vmatpush.xpose.msra.mxu0 0.0
    %3365 = vmatpush.xpose.msra.mxu0 0.0
    %3366 = vmatpush.xpose.msra.mxu0 0.0
    %3367 = vmatpush.xpose.msra.mxu0 0.0
    %3368 = vmatpush.xpose.msra.mxu0 0.0
    %3369 = vmatpush.xpose.msra.mxu0 0.0
    %3370 = vmatpush.xpose.msra.mxu0 0.0
    %3371 = vmatpush.xpose.msra.mxu0 0.0
    %3372 = vmatpush.xpose.msra.mxu0 0.0
    %3373 = vmatpush.xpose.msra.mxu0 %v3356
    %3374 = vmatmul.f32.gmra.mxu0 %v3308
    %v3375 = vpop.f32.mrf.mxu0
    %v3376 = vadd.f32 0.0, %v3375
    %3377 = vmatmul.f32.gmra.mxu0 %v3311
    %v3378 = vpop.f32.mrf.mxu0
    %v3379 = vadd.f32 0.0, %v3378
    %3380 = vmatmul.f32.gmra.mxu0 %v3314
    %v3381 = vpop.f32.mrf.mxu0
    %v3382 = vadd.f32 0.0, %v3381
    %3383 = vmatmul.f32.gmra.mxu0 %v3317
    %v3384 = vpop.f32.mrf.mxu0
    %v3385 = vadd.f32 0.0, %v3384
    %3386 = vmatmul.f32.gmra.mxu0 %v3320
    %v3387 = vpop.f32.mrf.mxu0
    %v3388 = vadd.f32 0.0, %v3387
    %3389 = vmatmul.f32.gmra.mxu0 %v3323
    %v3390 = vpop.f32.mrf.mxu0
    %v3391 = vadd.f32 0.0, %v3390
    %3392 = vmatmul.f32.gmra.mxu0 %v3326
    %v3393 = vpop.f32.mrf.mxu0
    %v3394 = vadd.f32 0.0, %v3393
    %3395 = vmatmul.f32.gmra.mxu0 %v3329
    %v3396 = vpop.f32.mrf.mxu0
    %v3397 = vadd.f32 0.0, %v3396
    %3398 = vmatmul.f32.gmra.mxu0 %v3332
    %v3399 = vpop.f32.mrf.mxu0
    %v3400 = vadd.f32 0.0, %v3399
    %3401 = vmatmul.f32.gmra.mxu0 %v3335
    %v3402 = vpop.f32.mrf.mxu0
    %v3403 = vadd.f32 0.0, %v3402
    %3404 = vmatmul.f32.gmra.mxu0 %v3338
    %v3405 = vpop.f32.mrf.mxu0
    %v3406 = vadd.f32 0.0, %v3405
    %3407 = vmatmul.f32.gmra.mxu0 %v3341
    %v3408 = vpop.f32.mrf.mxu0
    %v3409 = vadd.f32 0.0, %v3408
    %3410 = vmatmul.f32.gmra.mxu0 %v3344
    %v3411 = vpop.f32.mrf.mxu0
    %v3412 = vadd.f32 0.0, %v3411
    %3413 = vmatmul.f32.gmra.mxu0 %v3347
    %v3414 = vpop.f32.mrf.mxu0
    %v3415 = vadd.f32 0.0, %v3414
    %3416 = vmatmul.f32.gmra.mxu0 %v3350
    %v3417 = vpop.f32.mrf.mxu0
    %v3418 = vadd.f32 0.0, %v3417
    %3419 = vmatmul.f32.gmra.mxu0 %v3353
    %v3420 = vpop.f32.mrf.mxu0
    %v3421 = vadd.f32 0.0, %v3420
    %3422 = vdwg.mxu0
    %v3424 = vsel %vm171, %v1018, 0
    %v3427 = vsel %vm171, %v1021, 0
    %v3430 = vsel %vm171, %v1024, 0
    %v3433 = vsel %vm171, %v1027, 0
    %v3436 = vsel %vm171, %v1030, 0
    %v3439 = vsel %vm171, %v1033, 0
    %v3442 = vsel %vm171, %v1036, 0
    %v3445 = vsel %vm171, %v1039, 0
    %v3448 = vsel %vm171, %v1042, 0
    %v3451 = vsel %vm171, %v1045, 0
    %v3454 = vsel %vm171, %v1048, 0
    %v3457 = vsel %vm171, %v1051, 0
    %v3460 = vsel %vm171, %v1054, 0
    %v3463 = vsel %vm171, %v1057, 0
    %v3466 = vsel %vm171, %v1060, 0
    %v3469 = vsel %vm171, %v1063, 0
    %v3472 = vsel %vm171, %v1585, 0
    %3474 = vmatpush.xpose.msra.mxu0 0.0
    %3475 = vmatpush.xpose.msra.mxu0 0.0
    %3476 = vmatpush.xpose.msra.mxu0 0.0
    %3477 = vmatpush.xpose.msra.mxu0 0.0
    %3478 = vmatpush.xpose.msra.mxu0 0.0
    %3479 = vmatpush.xpose.msra.mxu0 0.0
    %3480 = vmatpush.xpose.msra.mxu0 0.0
    %3481 = vmatpush.xpose.msra.mxu0 0.0
    %3482 = vmatpush.xpose.msra.mxu0 0.0
    %3483 = vmatpush.xpose.msra.mxu0 0.0
    %3484 = vmatpush.xpose.msra.mxu0 0.0
    %3485 = vmatpush.xpose.msra.mxu0 0.0
    %3486 = vmatpush.xpose.msra.mxu0 0.0
    %3487 = vmatpush.xpose.msra.mxu0 0.0
    %3488 = vmatpush.xpose.msra.mxu0 0.0
    %3489 = vmatpush.xpose.msra.mxu0 %v3472
    %3490 = vmatmul.f32.gmra.mxu0 %v3424
    %v3491 = vpop.f32.mrf.mxu0
    %v3492 = vadd.f32 0.0, %v3491
    %3493 = vmatmul.f32.gmra.mxu0 %v3427
    %v3494 = vpop.f32.mrf.mxu0
    %v3495 = vadd.f32 0.0, %v3494
    %3496 = vmatmul.f32.gmra.mxu0 %v3430
    %v3497 = vpop.f32.mrf.mxu0
    %v3498 = vadd.f32 0.0, %v3497
    %3499 = vmatmul.f32.gmra.mxu0 %v3433
    %v3500 = vpop.f32.mrf.mxu0
    %v3501 = vadd.f32 0.0, %v3500
    %3502 = vmatmul.f32.gmra.mxu0 %v3436
    %v3503 = vpop.f32.mrf.mxu0
    %v3504 = vadd.f32 0.0, %v3503
    %3505 = vmatmul.f32.gmra.mxu0 %v3439
    %v3506 = vpop.f32.mrf.mxu0
    %v3507 = vadd.f32 0.0, %v3506
    %3508 = vmatmul.f32.gmra.mxu0 %v3442
    %v3509 = vpop.f32.mrf.mxu0
    %v3510 = vadd.f32 0.0, %v3509
    %3511 = vmatmul.f32.gmra.mxu0 %v3445
    %v3512 = vpop.f32.mrf.mxu0
    %v3513 = vadd.f32 0.0, %v3512
    %3514 = vmatmul.f32.gmra.mxu0 %v3448
    %v3515 = vpop.f32.mrf.mxu0
    %v3516 = vadd.f32 0.0, %v3515
    %3517 = vmatmul.f32.gmra.mxu0 %v3451
    %v3518 = vpop.f32.mrf.mxu0
    %v3519 = vadd.f32 0.0, %v3518
    %3520 = vmatmul.f32.gmra.mxu0 %v3454
    %v3521 = vpop.f32.mrf.mxu0
    %v3522 = vadd.f32 0.0, %v3521
    %3523 = vmatmul.f32.gmra.mxu0 %v3457
    %v3524 = vpop.f32.mrf.mxu0
    %v3525 = vadd.f32 0.0, %v3524
    %3526 = vmatmul.f32.gmra.mxu0 %v3460
    %v3527 = vpop.f32.mrf.mxu0
    %v3528 = vadd.f32 0.0, %v3527
    %3529 = vmatmul.f32.gmra.mxu0 %v3463
    %v3530 = vpop.f32.mrf.mxu0
    %v3531 = vadd.f32 0.0, %v3530
    %3532 = vmatmul.f32.gmra.mxu0 %v3466
    %v3533 = vpop.f32.mrf.mxu0
    %v3534 = vadd.f32 0.0, %v3533
    %3535 = vmatmul.f32.gmra.mxu0 %v3469
    %v3536 = vpop.f32.mrf.mxu0
    %v3537 = vadd.f32 0.0, %v3536
    %3538 = vdwg.mxu0
    %v3540 = vsel %vm171, %v1083, 0
    %v3543 = vsel %vm171, %v1086, 0
    %v3546 = vsel %vm171, %v1089, 0
    %v3549 = vsel %vm171, %v1092, 0
    %v3552 = vsel %vm171, %v1095, 0
    %v3555 = vsel %vm171, %v1098, 0
    %v3558 = vsel %vm171, %v1101, 0
    %v3561 = vsel %vm171, %v1104, 0
    %v3564 = vsel %vm171, %v1107, 0
    %v3567 = vsel %vm171, %v1110, 0
    %v3570 = vsel %vm171, %v1113, 0
    %v3573 = vsel %vm171, %v1116, 0
    %v3576 = vsel %vm171, %v1119, 0
    %v3579 = vsel %vm171, %v1122, 0
    %v3582 = vsel %vm171, %v1125, 0
    %v3585 = vsel %vm171, %v1128, 0
    %v3588 = vsel %vm171, %v1605, 0
    %3590 = vmatpush.xpose.msra.mxu0 0.0
    %3591 = vmatpush.xpose.msra.mxu0 0.0
    %3592 = vmatpush.xpose.msra.mxu0 0.0
    %3593 = vmatpush.xpose.msra.mxu0 0.0
    %3594 = vmatpush.xpose.msra.mxu0 0.0
    %3595 = vmatpush.xpose.msra.mxu0 0.0
    %3596 = vmatpush.xpose.msra.mxu0 0.0
    %3597 = vmatpush.xpose.msra.mxu0 0.0
    %3598 = vmatpush.xpose.msra.mxu0 0.0
    %3599 = vmatpush.xpose.msra.mxu0 0.0
    %3600 = vmatpush.xpose.msra.mxu0 0.0
    %3601 = vmatpush.xpose.msra.mxu0 0.0
    %3602 = vmatpush.xpose.msra.mxu0 0.0
    %3603 = vmatpush.xpose.msra.mxu0 0.0
    %3604 = vmatpush.xpose.msra.mxu0 0.0
    %3605 = vmatpush.xpose.msra.mxu0 %v3588
    %3606 = vmatmul.f32.gmra.mxu0 %v3540
    %v3607 = vpop.f32.mrf.mxu0
    %v3608 = vadd.f32 0.0, %v3607
    %3609 = vmatmul.f32.gmra.mxu0 %v3543
    %v3610 = vpop.f32.mrf.mxu0
    %v3611 = vadd.f32 0.0, %v3610
    %3612 = vmatmul.f32.gmra.mxu0 %v3546
    %v3613 = vpop.f32.mrf.mxu0
    %v3614 = vadd.f32 0.0, %v3613
    %3615 = vmatmul.f32.gmra.mxu0 %v3549
    %v3616 = vpop.f32.mrf.mxu0
    %v3617 = vadd.f32 0.0, %v3616
    %3618 = vmatmul.f32.gmra.mxu0 %v3552
    %v3619 = vpop.f32.mrf.mxu0
    %v3620 = vadd.f32 0.0, %v3619
    %3621 = vmatmul.f32.gmra.mxu0 %v3555
    %v3622 = vpop.f32.mrf.mxu0
    %v3623 = vadd.f32 0.0, %v3622
    %3624 = vmatmul.f32.gmra.mxu0 %v3558
    %v3625 = vpop.f32.mrf.mxu0
    %v3626 = vadd.f32 0.0, %v3625
    %3627 = vmatmul.f32.gmra.mxu0 %v3561
    %v3628 = vpop.f32.mrf.mxu0
    %v3629 = vadd.f32 0.0, %v3628
    %3630 = vmatmul.f32.gmra.mxu0 %v3564
    %v3631 = vpop.f32.mrf.mxu0
    %v3632 = vadd.f32 0.0, %v3631
    %3633 = vmatmul.f32.gmra.mxu0 %v3567
    %v3634 = vpop.f32.mrf.mxu0
    %v3635 = vadd.f32 0.0, %v3634
    %3636 = vmatmul.f32.gmra.mxu0 %v3570
    %v3637 = vpop.f32.mrf.mxu0
    %v3638 = vadd.f32 0.0, %v3637
    %3639 = vmatmul.f32.gmra.mxu0 %v3573
    %v3640 = vpop.f32.mrf.mxu0
    %v3641 = vadd.f32 0.0, %v3640
    %3642 = vmatmul.f32.gmra.mxu0 %v3576
    %v3643 = vpop.f32.mrf.mxu0
    %v3644 = vadd.f32 0.0, %v3643
    %3645 = vmatmul.f32.gmra.mxu0 %v3579
    %v3646 = vpop.f32.mrf.mxu0
    %v3647 = vadd.f32 0.0, %v3646
    %3648 = vmatmul.f32.gmra.mxu0 %v3582
    %v3649 = vpop.f32.mrf.mxu0
    %v3650 = vadd.f32 0.0, %v3649
    %3651 = vmatmul.f32.gmra.mxu0 %v3585
    %v3652 = vpop.f32.mrf.mxu0
    %v3653 = vadd.f32 0.0, %v3652
    %3654 = vdwg.mxu0
    %v3656 = vsel %vm171, %v1148, 0
    %v3659 = vsel %vm171, %v1151, 0
    %v3662 = vsel %vm171, %v1154, 0
    %v3665 = vsel %vm171, %v1157, 0
    %v3668 = vsel %vm171, %v1160, 0
    %v3671 = vsel %vm171, %v1163, 0
    %v3674 = vsel %vm171, %v1166, 0
    %v3677 = vsel %vm171, %v1169, 0
    %v3680 = vsel %vm171, %v1172, 0
    %v3683 = vsel %vm171, %v1175, 0
    %v3686 = vsel %vm171, %v1178, 0
    %v3689 = vsel %vm171, %v1181, 0
    %v3692 = vsel %vm171, %v1184, 0
    %v3695 = vsel %vm171, %v1187, 0
    %v3698 = vsel %vm171, %v1190, 0
    %v3701 = vsel %vm171, %v1193, 0
    %v3704 = vsel %vm171, %v1625, 0
    %3706 = vmatpush.xpose.msra.mxu0 0.0
    %3707 = vmatpush.xpose.msra.mxu0 0.0
    %3708 = vmatpush.xpose.msra.mxu0 0.0
    %3709 = vmatpush.xpose.msra.mxu0 0.0
    %3710 = vmatpush.xpose.msra.mxu0 0.0
    %3711 = vmatpush.xpose.msra.mxu0 0.0
    %3712 = vmatpush.xpose.msra.mxu0 0.0
    %3713 = vmatpush.xpose.msra.mxu0 0.0
    %3714 = vmatpush.xpose.msra.mxu0 0.0
    %3715 = vmatpush.xpose.msra.mxu0 0.0
    %3716 = vmatpush.xpose.msra.mxu0 0.0
    %3717 = vmatpush.xpose.msra.mxu0 0.0
    %3718 = vmatpush.xpose.msra.mxu0 0.0
    %3719 = vmatpush.xpose.msra.mxu0 0.0
    %3720 = vmatpush.xpose.msra.mxu0 0.0
    %3721 = vmatpush.xpose.msra.mxu0 %v3704
    %3722 = vmatmul.f32.gmra.mxu0 %v3656
    %v3723 = vpop.f32.mrf.mxu0
    %v3724 = vadd.f32 0.0, %v3723
    %3725 = vmatmul.f32.gmra.mxu0 %v3659
    %v3726 = vpop.f32.mrf.mxu0
    %v3727 = vadd.f32 0.0, %v3726
    %3728 = vmatmul.f32.gmra.mxu0 %v3662
    %v3729 = vpop.f32.mrf.mxu0
    %v3730 = vadd.f32 0.0, %v3729
    %3731 = vmatmul.f32.gmra.mxu0 %v3665
    %v3732 = vpop.f32.mrf.mxu0
    %v3733 = vadd.f32 0.0, %v3732
    %3734 = vmatmul.f32.gmra.mxu0 %v3668
    %v3735 = vpop.f32.mrf.mxu0
    %v3736 = vadd.f32 0.0, %v3735
    %3737 = vmatmul.f32.gmra.mxu0 %v3671
    %v3738 = vpop.f32.mrf.mxu0
    %v3739 = vadd.f32 0.0, %v3738
    %3740 = vmatmul.f32.gmra.mxu0 %v3674
    %v3741 = vpop.f32.mrf.mxu0
    %v3742 = vadd.f32 0.0, %v3741
    %3743 = vmatmul.f32.gmra.mxu0 %v3677
    %v3744 = vpop.f32.mrf.mxu0
    %v3745 = vadd.f32 0.0, %v3744
    %3746 = vmatmul.f32.gmra.mxu0 %v3680
    %v3747 = vpop.f32.mrf.mxu0
    %v3748 = vadd.f32 0.0, %v3747
    %3749 = vmatmul.f32.gmra.mxu0 %v3683
    %v3750 = vpop.f32.mrf.mxu0
    %v3751 = vadd.f32 0.0, %v3750
    %3752 = vmatmul.f32.gmra.mxu0 %v3686
    %v3753 = vpop.f32.mrf.mxu0
    %v3754 = vadd.f32 0.0, %v3753
    %3755 = vmatmul.f32.gmra.mxu0 %v3689
    %v3756 = vpop.f32.mrf.mxu0
    %v3757 = vadd.f32 0.0, %v3756
    %3758 = vmatmul.f32.gmra.mxu0 %v3692
    %v3759 = vpop.f32.mrf.mxu0
    %v3760 = vadd.f32 0.0, %v3759
    %3761 = vmatmul.f32.gmra.mxu0 %v3695
    %v3762 = vpop.f32.mrf.mxu0
    %v3763 = vadd.f32 0.0, %v3762
    %3764 = vmatmul.f32.gmra.mxu0 %v3698
    %v3765 = vpop.f32.mrf.mxu0
    %v3766 = vadd.f32 0.0, %v3765
    %3767 = vmatmul.f32.gmra.mxu0 %v3701
    %v3768 = vpop.f32.mrf.mxu0
    %v3769 = vadd.f32 0.0, %v3768
    %3770 = vdwg.mxu0
    %v3772 = vsel %vm171, %v1213, 0
    %v3775 = vsel %vm171, %v1216, 0
    %v3778 = vsel %vm171, %v1219, 0
    %v3781 = vsel %vm171, %v1222, 0
    %v3784 = vsel %vm171, %v1225, 0
    %v3787 = vsel %vm171, %v1228, 0
    %v3790 = vsel %vm171, %v1231, 0
    %v3793 = vsel %vm171, %v1234, 0
    %v3796 = vsel %vm171, %v1237, 0
    %v3799 = vsel %vm171, %v1240, 0
    %v3802 = vsel %vm171, %v1243, 0
    %v3805 = vsel %vm171, %v1246, 0
    %v3808 = vsel %vm171, %v1249, 0
    %v3811 = vsel %vm171, %v1252, 0
    %v3814 = vsel %vm171, %v1255, 0
    %v3817 = vsel %vm171, %v1258, 0
    %v3820 = vsel %vm171, %v1645, 0
    %3822 = vmatpush.xpose.msra.mxu0 0.0
    %3823 = vmatpush.xpose.msra.mxu0 0.0
    %3824 = vmatpush.xpose.msra.mxu0 0.0
    %3825 = vmatpush.xpose.msra.mxu0 0.0
    %3826 = vmatpush.xpose.msra.mxu0 0.0
    %3827 = vmatpush.xpose.msra.mxu0 0.0
    %3828 = vmatpush.xpose.msra.mxu0 0.0
    %3829 = vmatpush.xpose.msra.mxu0 0.0
    %3830 = vmatpush.xpose.msra.mxu0 0.0
    %3831 = vmatpush.xpose.msra.mxu0 0.0
    %3832 = vmatpush.xpose.msra.mxu0 0.0
    %3833 = vmatpush.xpose.msra.mxu0 0.0
    %3834 = vmatpush.xpose.msra.mxu0 0.0
    %3835 = vmatpush.xpose.msra.mxu0 0.0
    %3836 = vmatpush.xpose.msra.mxu0 0.0
    %3837 = vmatpush.xpose.msra.mxu0 %v3820
    %3838 = vmatmul.f32.gmra.mxu0 %v3772
    %v3839 = vpop.f32.mrf.mxu0
    %v3840 = vadd.f32 0.0, %v3839
    %3841 = vmatmul.f32.gmra.mxu0 %v3775
    %v3842 = vpop.f32.mrf.mxu0
    %v3843 = vadd.f32 0.0, %v3842
    %3844 = vmatmul.f32.gmra.mxu0 %v3778
    %v3845 = vpop.f32.mrf.mxu0
    %v3846 = vadd.f32 0.0, %v3845
    %3847 = vmatmul.f32.gmra.mxu0 %v3781
    %v3848 = vpop.f32.mrf.mxu0
    %v3849 = vadd.f32 0.0, %v3848
    %3850 = vmatmul.f32.gmra.mxu0 %v3784
    %v3851 = vpop.f32.mrf.mxu0
    %v3852 = vadd.f32 0.0, %v3851
    %3853 = vmatmul.f32.gmra.mxu0 %v3787
    %v3854 = vpop.f32.mrf.mxu0
    %v3855 = vadd.f32 0.0, %v3854
    %3856 = vmatmul.f32.gmra.mxu0 %v3790
    %v3857 = vpop.f32.mrf.mxu0
    %v3858 = vadd.f32 0.0, %v3857
    %3859 = vmatmul.f32.gmra.mxu0 %v3793
    %v3860 = vpop.f32.mrf.mxu0
    %v3861 = vadd.f32 0.0, %v3860
    %3862 = vmatmul.f32.gmra.mxu0 %v3796
    %v3863 = vpop.f32.mrf.mxu0
    %v3864 = vadd.f32 0.0, %v3863
    %3865 = vmatmul.f32.gmra.mxu0 %v3799
    %v3866 = vpop.f32.mrf.mxu0
    %v3867 = vadd.f32 0.0, %v3866
    %3868 = vmatmul.f32.gmra.mxu0 %v3802
    %v3869 = vpop.f32.mrf.mxu0
    %v3870 = vadd.f32 0.0, %v3869
    %3871 = vmatmul.f32.gmra.mxu0 %v3805
    %v3872 = vpop.f32.mrf.mxu0
    %v3873 = vadd.f32 0.0, %v3872
    %3874 = vmatmul.f32.gmra.mxu0 %v3808
    %v3875 = vpop.f32.mrf.mxu0
    %v3876 = vadd.f32 0.0, %v3875
    %3877 = vmatmul.f32.gmra.mxu0 %v3811
    %v3878 = vpop.f32.mrf.mxu0
    %v3879 = vadd.f32 0.0, %v3878
    %3880 = vmatmul.f32.gmra.mxu0 %v3814
    %v3881 = vpop.f32.mrf.mxu0
    %v3882 = vadd.f32 0.0, %v3881
    %3883 = vmatmul.f32.gmra.mxu0 %v3817
    %v3884 = vpop.f32.mrf.mxu0
    %v3885 = vadd.f32 0.0, %v3884
    %3886 = vdwg.mxu0
    %v3887 = vmul.f32 %v2100, 0.17677669
    %v3888 = vmul.f32 %v2103, 0.17677669
    %v3889 = vmul.f32 %v2106, 0.17677669
    %v3890 = vmul.f32 %v2109, 0.17677669
    %v3891 = vmul.f32 %v2112, 0.17677669
    %v3892 = vmul.f32 %v2115, 0.17677669
    %v3893 = vmul.f32 %v2118, 0.17677669
    %v3894 = vmul.f32 %v2121, 0.17677669
    %v3895 = vmul.f32 %v2124, 0.17677669
    %v3896 = vmul.f32 %v2127, 0.17677669
    %v3897 = vmul.f32 %v2130, 0.17677669
    %v3898 = vmul.f32 %v2133, 0.17677669
    %v3899 = vmul.f32 %v2136, 0.17677669
    %v3900 = vmul.f32 %v2139, 0.17677669
    %v3901 = vmul.f32 %v2142, 0.17677669
    %v3902 = vmul.f32 %v2145, 0.17677669
    %v3903 = vmul.f32 %v2216, 0.17677669
    %v3904 = vmul.f32 %v2219, 0.17677669
    %v3905 = vmul.f32 %v2222, 0.17677669
    %v3906 = vmul.f32 %v2225, 0.17677669
    %v3907 = vmul.f32 %v2228, 0.17677669
    %v3908 = vmul.f32 %v2231, 0.17677669
    %v3909 = vmul.f32 %v2234, 0.17677669
    %v3910 = vmul.f32 %v2237, 0.17677669
    %v3911 = vmul.f32 %v2240, 0.17677669
    %v3912 = vmul.f32 %v2243, 0.17677669
    %v3913 = vmul.f32 %v2246, 0.17677669
    %v3914 = vmul.f32 %v2249, 0.17677669
    %v3915 = vmul.f32 %v2252, 0.17677669
    %v3916 = vmul.f32 %v2255, 0.17677669
    %v3917 = vmul.f32 %v2258, 0.17677669
    %v3918 = vmul.f32 %v2261, 0.17677669
    %v3919 = vmul.f32 %v2332, 0.17677669
    %v3920 = vmul.f32 %v2335, 0.17677669
    %v3921 = vmul.f32 %v2338, 0.17677669
    %v3922 = vmul.f32 %v2341, 0.17677669
    %v3923 = vmul.f32 %v2344, 0.17677669
    %v3924 = vmul.f32 %v2347, 0.17677669
    %v3925 = vmul.f32 %v2350, 0.17677669
    %v3926 = vmul.f32 %v2353, 0.17677669
    %v3927 = vmul.f32 %v2356, 0.17677669
    %v3928 = vmul.f32 %v2359, 0.17677669
    %v3929 = vmul.f32 %v2362, 0.17677669
    %v3930 = vmul.f32 %v2365, 0.17677669
    %v3931 = vmul.f32 %v2368, 0.17677669
    %v3932 = vmul.f32 %v2371, 0.17677669
    %v3933 = vmul.f32 %v2374, 0.17677669
    %v3934 = vmul.f32 %v2377, 0.17677669
    %v3935 = vmul.f32 %v2448, 0.17677669
    %v3936 = vmul.f32 %v2451, 0.17677669
    %v3937 = vmul.f32 %v2454, 0.17677669
    %v3938 = vmul.f32 %v2457, 0.17677669
    %v3939 = vmul.f32 %v2460, 0.17677669
    %v3940 = vmul.f32 %v2463, 0.17677669
    %v3941 = vmul.f32 %v2466, 0.17677669
    %v3942 = vmul.f32 %v2469, 0.17677669
    %v3943 = vmul.f32 %v2472, 0.17677669
    %v3944 = vmul.f32 %v2475, 0.17677669
    %v3945 = vmul.f32 %v2478, 0.17677669
    %v3946 = vmul.f32 %v2481, 0.17677669
    %v3947 = vmul.f32 %v2484, 0.17677669
    %v3948 = vmul.f32 %v2487, 0.17677669
    %v3949 = vmul.f32 %v2490, 0.17677669
    %v3950 = vmul.f32 %v2493, 0.17677669
    %v3951 = vmul.f32 %v2564, 0.17677669
    %v3952 = vmul.f32 %v2567, 0.17677669
    %v3953 = vmul.f32 %v2570, 0.17677669
    %v3954 = vmul.f32 %v2573, 0.17677669
    %v3955 = vmul.f32 %v2576, 0.17677669
    %v3956 = vmul.f32 %v2579, 0.17677669
    %v3957 = vmul.f32 %v2582, 0.17677669
    %v3958 = vmul.f32 %v2585, 0.17677669
    %v3959 = vmul.f32 %v2588, 0.17677669
    %v3960 = vmul.f32 %v2591, 0.17677669
    %v3961 = vmul.f32 %v2594, 0.17677669
    %v3962 = vmul.f32 %v2597, 0.17677669
    %v3963 = vmul.f32 %v2600, 0.17677669
    %v3964 = vmul.f32 %v2603, 0.17677669
    %v3965 = vmul.f32 %v2606, 0.17677669
    %v3966 = vmul.f32 %v2609, 0.17677669
    %v3967 = vmul.f32 %v2680, 0.17677669
    %v3968 = vmul.f32 %v2683, 0.17677669
    %v3969 = vmul.f32 %v2686, 0.17677669
    %v3970 = vmul.f32 %v2689, 0.17677669
    %v3971 = vmul.f32 %v2692, 0.17677669
    %v3972 = vmul.f32 %v2695, 0.17677669
    %v3973 = vmul.f32 %v2698, 0.17677669
    %v3974 = vmul.f32 %v2701, 0.17677669
    %v3975 = vmul.f32 %v2704, 0.17677669
    %v3976 = vmul.f32 %v2707, 0.17677669
    %v3977 = vmul.f32 %v2710, 0.17677669
    %v3978 = vmul.f32 %v2713, 0.17677669
    %v3979 = vmul.f32 %v2716, 0.17677669
    %v3980 = vmul.f32 %v2719, 0.17677669
    %v3981 = vmul.f32 %v2722, 0.17677669
    %v3982 = vmul.f32 %v2725, 0.17677669
    %v3983 = vmul.f32 %v2796, 0.17677669
    %v3984 = vmul.f32 %v2799, 0.17677669
    %v3985 = vmul.f32 %v2802, 0.17677669
    %v3986 = vmul.f32 %v2805, 0.17677669
    %v3987 = vmul.f32 %v2808, 0.17677669
    %v3988 = vmul.f32 %v2811, 0.17677669
    %v3989 = vmul.f32 %v2814, 0.17677669
    %v3990 = vmul.f32 %v2817, 0.17677669
    %v3991 = vmul.f32 %v2820, 0.17677669
    %v3992 = vmul.f32 %v2823, 0.17677669
    %v3993 = vmul.f32 %v2826, 0.17677669
    %v3994 = vmul.f32 %v2829, 0.17677669
    %v3995 = vmul.f32 %v2832, 0.17677669
    %v3996 = vmul.f32 %v2835, 0.17677669
    %v3997 = vmul.f32 %v2838, 0.17677669
    %v3998 = vmul.f32 %v2841, 0.17677669
    %v3999 = vmul.f32 %v2912, 0.17677669
    %v4000 = vmul.f32 %v2915, 0.17677669
    %v4001 = vmul.f32 %v2918, 0.17677669
    %v4002 = vmul.f32 %v2921, 0.17677669
    %v4003 = vmul.f32 %v2924, 0.17677669
    %v4004 = vmul.f32 %v2927, 0.17677669
    %v4005 = vmul.f32 %v2930, 0.17677669
    %v4006 = vmul.f32 %v2933, 0.17677669
    %v4007 = vmul.f32 %v2936, 0.17677669
    %v4008 = vmul.f32 %v2939, 0.17677669
    %v4009 = vmul.f32 %v2942, 0.17677669
    %v4010 = vmul.f32 %v2945, 0.17677669
    %v4011 = vmul.f32 %v2948, 0.17677669
    %v4012 = vmul.f32 %v2951, 0.17677669
    %v4013 = vmul.f32 %v2954, 0.17677669
    %v4014 = vmul.f32 %v2957, 0.17677669
    %v4015 = vmul.f32 %v3028, 0.17677669
    %v4016 = vmul.f32 %v3031, 0.17677669
    %v4017 = vmul.f32 %v3034, 0.17677669
    %v4018 = vmul.f32 %v3037, 0.17677669
    %v4019 = vmul.f32 %v3040, 0.17677669
    %v4020 = vmul.f32 %v3043, 0.17677669
    %v4021 = vmul.f32 %v3046, 0.17677669
    %v4022 = vmul.f32 %v3049, 0.17677669
    %v4023 = vmul.f32 %v3052, 0.17677669
    %v4024 = vmul.f32 %v3055, 0.17677669
    %v4025 = vmul.f32 %v3058, 0.17677669
    %v4026 = vmul.f32 %v3061, 0.17677669
    %v4027 = vmul.f32 %v3064, 0.17677669
    %v4028 = vmul.f32 %v3067, 0.17677669
    %v4029 = vmul.f32 %v3070, 0.17677669
    %v4030 = vmul.f32 %v3073, 0.17677669
    %v4031 = vmul.f32 %v3144, 0.17677669
    %v4032 = vmul.f32 %v3147, 0.17677669
    %v4033 = vmul.f32 %v3150, 0.17677669
    %v4034 = vmul.f32 %v3153, 0.17677669
    %v4035 = vmul.f32 %v3156, 0.17677669
    %v4036 = vmul.f32 %v3159, 0.17677669
    %v4037 = vmul.f32 %v3162, 0.17677669
    %v4038 = vmul.f32 %v3165, 0.17677669
    %v4039 = vmul.f32 %v3168, 0.17677669
    %v4040 = vmul.f32 %v3171, 0.17677669
    %v4041 = vmul.f32 %v3174, 0.17677669
    %v4042 = vmul.f32 %v3177, 0.17677669
    %v4043 = vmul.f32 %v3180, 0.17677669
    %v4044 = vmul.f32 %v3183, 0.17677669
    %v4045 = vmul.f32 %v3186, 0.17677669
    %v4046 = vmul.f32 %v3189, 0.17677669
    %v4047 = vmul.f32 %v3260, 0.17677669
    %v4048 = vmul.f32 %v3263, 0.17677669
    %v4049 = vmul.f32 %v3266, 0.17677669
    %v4050 = vmul.f32 %v3269, 0.17677669
    %v4051 = vmul.f32 %v3272, 0.17677669
    %v4052 = vmul.f32 %v3275, 0.17677669
    %v4053 = vmul.f32 %v3278, 0.17677669
    %v4054 = vmul.f32 %v3281, 0.17677669
    %v4055 = vmul.f32 %v3284, 0.17677669
    %v4056 = vmul.f32 %v3287, 0.17677669
    %v4057 = vmul.f32 %v3290, 0.17677669
    %v4058 = vmul.f32 %v3293, 0.17677669
    %v4059 = vmul.f32 %v3296, 0.17677669
    %v4060 = vmul.f32 %v3299, 0.17677669
    %v4061 = vmul.f32 %v3302, 0.17677669
    %v4062 = vmul.f32 %v3305, 0.17677669
    %v4063 = vmul.f32 %v3376, 0.17677669
    %v4064 = vmul.f32 %v3379, 0.17677669
    %v4065 = vmul.f32 %v3382, 0.17677669
    %v4066 = vmul.f32 %v3385, 0.17677669
    %v4067 = vmul.f32 %v3388, 0.17677669
    %v4068 = vmul.f32 %v3391, 0.17677669
    %v4069 = vmul.f32 %v3394, 0.17677669
    %v4070 = vmul.f32 %v3397, 0.17677669
    %v4071 = vmul.f32 %v3400, 0.17677669
    %v4072 = vmul.f32 %v3403, 0.17677669
    %v4073 = vmul.f32 %v3406, 0.17677669
    %v4074 = vmul.f32 %v3409, 0.17677669
    %v4075 = vmul.f32 %v3412, 0.17677669
    %v4076 = vmul.f32 %v3415, 0.17677669
    %v4077 = vmul.f32 %v3418, 0.17677669
    %v4078 = vmul.f32 %v3421, 0.17677669
    %v4079 = vmul.f32 %v3492, 0.17677669
    %v4080 = vmul.f32 %v3495, 0.17677669
    %v4081 = vmul.f32 %v3498, 0.17677669
    %v4082 = vmul.f32 %v3501, 0.17677669
    %v4083 = vmul.f32 %v3504, 0.17677669
    %v4084 = vmul.f32 %v3507, 0.17677669
    %v4085 = vmul.f32 %v3510, 0.17677669
    %v4086 = vmul.f32 %v3513, 0.17677669
    %v4087 = vmul.f32 %v3516, 0.17677669
    %v4088 = vmul.f32 %v3519, 0.17677669
    %v4089 = vmul.f32 %v3522, 0.17677669
    %v4090 = vmul.f32 %v3525, 0.17677669
    %v4091 = vmul.f32 %v3528, 0.17677669
    %v4092 = vmul.f32 %v3531, 0.17677669
    %v4093 = vmul.f32 %v3534, 0.17677669
    %v4094 = vmul.f32 %v3537, 0.17677669
    %v4095 = vmul.f32 %v3608, 0.17677669
    %v4096 = vmul.f32 %v3611, 0.17677669
    %v4097 = vmul.f32 %v3614, 0.17677669
    %v4098 = vmul.f32 %v3617, 0.17677669
    %v4099 = vmul.f32 %v3620, 0.17677669
    %v4100 = vmul.f32 %v3623, 0.17677669
    %v4101 = vmul.f32 %v3626, 0.17677669
    %v4102 = vmul.f32 %v3629, 0.17677669
    %v4103 = vmul.f32 %v3632, 0.17677669
    %v4104 = vmul.f32 %v3635, 0.17677669
    %v4105 = vmul.f32 %v3638, 0.17677669
    %v4106 = vmul.f32 %v3641, 0.17677669
    %v4107 = vmul.f32 %v3644, 0.17677669
    %v4108 = vmul.f32 %v3647, 0.17677669
    %v4109 = vmul.f32 %v3650, 0.17677669
    %v4110 = vmul.f32 %v3653, 0.17677669
    %v4111 = vmul.f32 %v3724, 0.17677669
    %v4112 = vmul.f32 %v3727, 0.17677669
    %v4113 = vmul.f32 %v3730, 0.17677669
    %v4114 = vmul.f32 %v3733, 0.17677669
    %v4115 = vmul.f32 %v3736, 0.17677669
    %v4116 = vmul.f32 %v3739, 0.17677669
    %v4117 = vmul.f32 %v3742, 0.17677669
    %v4118 = vmul.f32 %v3745, 0.17677669
    %v4119 = vmul.f32 %v3748, 0.17677669
    %v4120 = vmul.f32 %v3751, 0.17677669
    %v4121 = vmul.f32 %v3754, 0.17677669
    %v4122 = vmul.f32 %v3757, 0.17677669
    %v4123 = vmul.f32 %v3760, 0.17677669
    %v4124 = vmul.f32 %v3763, 0.17677669
    %v4125 = vmul.f32 %v3766, 0.17677669
    %v4126 = vmul.f32 %v3769, 0.17677669
    %v4127 = vmul.f32 %v3840, 0.17677669
    %v4128 = vmul.f32 %v3843, 0.17677669
    %v4129 = vmul.f32 %v3846, 0.17677669
    %v4130 = vmul.f32 %v3849, 0.17677669
    %v4131 = vmul.f32 %v3852, 0.17677669
    %v4132 = vmul.f32 %v3855, 0.17677669
    %v4133 = vmul.f32 %v3858, 0.17677669
    %v4134 = vmul.f32 %v3861, 0.17677669
    %v4135 = vmul.f32 %v3864, 0.17677669
    %v4136 = vmul.f32 %v3867, 0.17677669
    %v4137 = vmul.f32 %v3870, 0.17677669
    %v4138 = vmul.f32 %v3873, 0.17677669
    %v4139 = vmul.f32 %v3876, 0.17677669
    %v4140 = vmul.f32 %v3879, 0.17677669
    %v4141 = vmul.f32 %v3882, 0.17677669
    %v4142 = vmul.f32 %v3885, 0.17677669
    %vm4143 = vcmask 64512
    %v4145 = vsel %vm4143, %v3887, 0
    %v4148 = vsel %vm4143, %v3888, 0
    %v4151 = vsel %vm4143, %v3889, 0
    %v4154 = vsel %vm4143, %v3890, 0
    %v4157 = vsel %vm4143, %v3891, 0
    %v4160 = vsel %vm4143, %v3892, 0
    %v4163 = vsel %vm4143, %v3893, 0
    %v4166 = vsel %vm4143, %v3894, 0
    %v4169 = vsel %vm4143, %v3895, 0
    %v4172 = vsel %vm4143, %v3896, 0
    %v4175 = vsel %vm4143, %v3897, 0
    %v4178 = vsel %vm4143, %v3898, 0
    %v4181 = vsel %vm4143, %v3899, 0
    %v4184 = vsel %vm4143, %v3900, 0
    %v4187 = vsel %vm4143, %v3901, 0
    %v4190 = vsel %vm4143, %v3902, 0
    %4192 = vmatpush.msra.mxu0 0.0
    %4193 = vmatpush.msra.mxu0 0.0
    %4194 = vmatpush.msra.mxu0 0.0
    %4195 = vmatpush.msra.mxu0 0.0
    %4196 = vmatpush.msra.mxu0 0.0
    %4197 = vmatpush.msra.mxu0 0.0
    %4198 = vmatpush.msra.mxu0 0.0
    %4199 = vmatpush.msra.mxu0 0.0
    %4200 = vmatpush.msra.mxu0 0.0
    %4201 = vmatpush.msra.mxu0 0.0
    %4202 = vmatpush.msra.mxu0 0.0
    %4203 = vmatpush.msra.mxu0 0.0
    %4204 = vmatpush.msra.mxu0 0.0
    %4205 = vmatpush.msra.mxu0 0.0
    %4206 = vmatpush.msra.mxu0 0.0
    %4207 = vmatpush.msra.mxu0 %v1729
    %4208 = vmatmul.f32.gmra.mxu0 %v4145
    %v4209 = vpop.f32.mrf.mxu0
    %v4210 = vadd.f32 0.0, %v4209
    %4211 = vmatmul.f32.gmra.mxu0 %v4148
    %v4212 = vpop.f32.mrf.mxu0
    %v4213 = vadd.f32 0.0, %v4212
    %4214 = vmatmul.f32.gmra.mxu0 %v4151
    %v4215 = vpop.f32.mrf.mxu0
    %v4216 = vadd.f32 0.0, %v4215
    %4217 = vmatmul.f32.gmra.mxu0 %v4154
    %v4218 = vpop.f32.mrf.mxu0
    %v4219 = vadd.f32 0.0, %v4218
    %4220 = vmatmul.f32.gmra.mxu0 %v4157
    %v4221 = vpop.f32.mrf.mxu0
    %v4222 = vadd.f32 0.0, %v4221
    %4223 = vmatmul.f32.gmra.mxu0 %v4160
    %v4224 = vpop.f32.mrf.mxu0
    %v4225 = vadd.f32 0.0, %v4224
    %4226 = vmatmul.f32.gmra.mxu0 %v4163
    %v4227 = vpop.f32.mrf.mxu0
    %v4228 = vadd.f32 0.0, %v4227
    %4229 = vmatmul.f32.gmra.mxu0 %v4166
    %v4230 = vpop.f32.mrf.mxu0
    %v4231 = vadd.f32 0.0, %v4230
    %4232 = vmatmul.f32.gmra.mxu0 %v4169
    %v4233 = vpop.f32.mrf.mxu0
    %v4234 = vadd.f32 0.0, %v4233
    %4235 = vmatmul.f32.gmra.mxu0 %v4172
    %v4236 = vpop.f32.mrf.mxu0
    %v4237 = vadd.f32 0.0, %v4236
    %4238 = vmatmul.f32.gmra.mxu0 %v4175
    %v4239 = vpop.f32.mrf.mxu0
    %v4240 = vadd.f32 0.0, %v4239
    %4241 = vmatmul.f32.gmra.mxu0 %v4178
    %v4242 = vpop.f32.mrf.mxu0
    %v4243 = vadd.f32 0.0, %v4242
    %4244 = vmatmul.f32.gmra.mxu0 %v4181
    %v4245 = vpop.f32.mrf.mxu0
    %v4246 = vadd.f32 0.0, %v4245
    %4247 = vmatmul.f32.gmra.mxu0 %v4184
    %v4248 = vpop.f32.mrf.mxu0
    %v4249 = vadd.f32 0.0, %v4248
    %4250 = vmatmul.f32.gmra.mxu0 %v4187
    %v4251 = vpop.f32.mrf.mxu0
    %v4252 = vadd.f32 0.0, %v4251
    %4253 = vmatmul.f32.gmra.mxu0 %v4190
    %v4254 = vpop.f32.mrf.mxu0
    %v4255 = vadd.f32 0.0, %v4254
    %4256 = vdwg.mxu0
    %v4258 = vsel %vm4143, %v3903, 0
    %v4261 = vsel %vm4143, %v3904, 0
    %v4264 = vsel %vm4143, %v3905, 0
    %v4267 = vsel %vm4143, %v3906, 0
    %v4270 = vsel %vm4143, %v3907, 0
    %v4273 = vsel %vm4143, %v3908, 0
    %v4276 = vsel %vm4143, %v3909, 0
    %v4279 = vsel %vm4143, %v3910, 0
    %v4282 = vsel %vm4143, %v3911, 0
    %v4285 = vsel %vm4143, %v3912, 0
    %v4288 = vsel %vm4143, %v3913, 0
    %v4291 = vsel %vm4143, %v3914, 0
    %v4294 = vsel %vm4143, %v3915, 0
    %v4297 = vsel %vm4143, %v3916, 0
    %v4300 = vsel %vm4143, %v3917, 0
    %v4303 = vsel %vm4143, %v3918, 0
    %4305 = vmatpush.msra.mxu0 0.0
    %4306 = vmatpush.msra.mxu0 0.0
    %4307 = vmatpush.msra.mxu0 0.0
    %4308 = vmatpush.msra.mxu0 0.0
    %4309 = vmatpush.msra.mxu0 0.0
    %4310 = vmatpush.msra.mxu0 0.0
    %4311 = vmatpush.msra.mxu0 0.0
    %4312 = vmatpush.msra.mxu0 0.0
    %4313 = vmatpush.msra.mxu0 0.0
    %4314 = vmatpush.msra.mxu0 0.0
    %4315 = vmatpush.msra.mxu0 0.0
    %4316 = vmatpush.msra.mxu0 0.0
    %4317 = vmatpush.msra.mxu0 0.0
    %4318 = vmatpush.msra.mxu0 0.0
    %4319 = vmatpush.msra.mxu0 0.0
    %4320 = vmatpush.msra.mxu0 %v1749
    %4321 = vmatmul.f32.gmra.mxu0 %v4258
    %v4322 = vpop.f32.mrf.mxu0
    %v4323 = vadd.f32 0.0, %v4322
    %4324 = vmatmul.f32.gmra.mxu0 %v4261
    %v4325 = vpop.f32.mrf.mxu0
    %v4326 = vadd.f32 0.0, %v4325
    %4327 = vmatmul.f32.gmra.mxu0 %v4264
    %v4328 = vpop.f32.mrf.mxu0
    %v4329 = vadd.f32 0.0, %v4328
    %4330 = vmatmul.f32.gmra.mxu0 %v4267
    %v4331 = vpop.f32.mrf.mxu0
    %v4332 = vadd.f32 0.0, %v4331
    %4333 = vmatmul.f32.gmra.mxu0 %v4270
    %v4334 = vpop.f32.mrf.mxu0
    %v4335 = vadd.f32 0.0, %v4334
    %4336 = vmatmul.f32.gmra.mxu0 %v4273
    %v4337 = vpop.f32.mrf.mxu0
    %v4338 = vadd.f32 0.0, %v4337
    %4339 = vmatmul.f32.gmra.mxu0 %v4276
    %v4340 = vpop.f32.mrf.mxu0
    %v4341 = vadd.f32 0.0, %v4340
    %4342 = vmatmul.f32.gmra.mxu0 %v4279
    %v4343 = vpop.f32.mrf.mxu0
    %v4344 = vadd.f32 0.0, %v4343
    %4345 = vmatmul.f32.gmra.mxu0 %v4282
    %v4346 = vpop.f32.mrf.mxu0
    %v4347 = vadd.f32 0.0, %v4346
    %4348 = vmatmul.f32.gmra.mxu0 %v4285
    %v4349 = vpop.f32.mrf.mxu0
    %v4350 = vadd.f32 0.0, %v4349
    %4351 = vmatmul.f32.gmra.mxu0 %v4288
    %v4352 = vpop.f32.mrf.mxu0
    %v4353 = vadd.f32 0.0, %v4352
    %4354 = vmatmul.f32.gmra.mxu0 %v4291
    %v4355 = vpop.f32.mrf.mxu0
    %v4356 = vadd.f32 0.0, %v4355
    %4357 = vmatmul.f32.gmra.mxu0 %v4294
    %v4358 = vpop.f32.mrf.mxu0
    %v4359 = vadd.f32 0.0, %v4358
    %4360 = vmatmul.f32.gmra.mxu0 %v4297
    %v4361 = vpop.f32.mrf.mxu0
    %v4362 = vadd.f32 0.0, %v4361
    %4363 = vmatmul.f32.gmra.mxu0 %v4300
    %v4364 = vpop.f32.mrf.mxu0
    %v4365 = vadd.f32 0.0, %v4364
    %4366 = vmatmul.f32.gmra.mxu0 %v4303
    %v4367 = vpop.f32.mrf.mxu0
    %v4368 = vadd.f32 0.0, %v4367
    %4369 = vdwg.mxu0
    %v4371 = vsel %vm4143, %v3919, 0
    %v4374 = vsel %vm4143, %v3920, 0
    %v4377 = vsel %vm4143, %v3921, 0
    %v4380 = vsel %vm4143, %v3922, 0
    %v4383 = vsel %vm4143, %v3923, 0
    %v4386 = vsel %vm4143, %v3924, 0
    %v4389 = vsel %vm4143, %v3925, 0
    %v4392 = vsel %vm4143, %v3926, 0
    %v4395 = vsel %vm4143, %v3927, 0
    %v4398 = vsel %vm4143, %v3928, 0
    %v4401 = vsel %vm4143, %v3929, 0
    %v4404 = vsel %vm4143, %v3930, 0
    %v4407 = vsel %vm4143, %v3931, 0
    %v4410 = vsel %vm4143, %v3932, 0
    %v4413 = vsel %vm4143, %v3933, 0
    %v4416 = vsel %vm4143, %v3934, 0
    %4418 = vmatpush.msra.mxu0 0.0
    %4419 = vmatpush.msra.mxu0 0.0
    %4420 = vmatpush.msra.mxu0 0.0
    %4421 = vmatpush.msra.mxu0 0.0
    %4422 = vmatpush.msra.mxu0 0.0
    %4423 = vmatpush.msra.mxu0 0.0
    %4424 = vmatpush.msra.mxu0 0.0
    %4425 = vmatpush.msra.mxu0 0.0
    %4426 = vmatpush.msra.mxu0 0.0
    %4427 = vmatpush.msra.mxu0 0.0
    %4428 = vmatpush.msra.mxu0 0.0
    %4429 = vmatpush.msra.mxu0 0.0
    %4430 = vmatpush.msra.mxu0 0.0
    %4431 = vmatpush.msra.mxu0 0.0
    %4432 = vmatpush.msra.mxu0 0.0
    %4433 = vmatpush.msra.mxu0 %v1769
    %4434 = vmatmul.f32.gmra.mxu0 %v4371
    %v4435 = vpop.f32.mrf.mxu0
    %v4436 = vadd.f32 0.0, %v4435
    %4437 = vmatmul.f32.gmra.mxu0 %v4374
    %v4438 = vpop.f32.mrf.mxu0
    %v4439 = vadd.f32 0.0, %v4438
    %4440 = vmatmul.f32.gmra.mxu0 %v4377
    %v4441 = vpop.f32.mrf.mxu0
    %v4442 = vadd.f32 0.0, %v4441
    %4443 = vmatmul.f32.gmra.mxu0 %v4380
    %v4444 = vpop.f32.mrf.mxu0
    %v4445 = vadd.f32 0.0, %v4444
    %4446 = vmatmul.f32.gmra.mxu0 %v4383
    %v4447 = vpop.f32.mrf.mxu0
    %v4448 = vadd.f32 0.0, %v4447
    %4449 = vmatmul.f32.gmra.mxu0 %v4386
    %v4450 = vpop.f32.mrf.mxu0
    %v4451 = vadd.f32 0.0, %v4450
    %4452 = vmatmul.f32.gmra.mxu0 %v4389
    %v4453 = vpop.f32.mrf.mxu0
    %v4454 = vadd.f32 0.0, %v4453
    %4455 = vmatmul.f32.gmra.mxu0 %v4392
    %v4456 = vpop.f32.mrf.mxu0
    %v4457 = vadd.f32 0.0, %v4456
    %4458 = vmatmul.f32.gmra.mxu0 %v4395
    %v4459 = vpop.f32.mrf.mxu0
    %v4460 = vadd.f32 0.0, %v4459
    %4461 = vmatmul.f32.gmra.mxu0 %v4398
    %v4462 = vpop.f32.mrf.mxu0
    %v4463 = vadd.f32 0.0, %v4462
    %4464 = vmatmul.f32.gmra.mxu0 %v4401
    %v4465 = vpop.f32.mrf.mxu0
    %v4466 = vadd.f32 0.0, %v4465
    %4467 = vmatmul.f32.gmra.mxu0 %v4404
    %v4468 = vpop.f32.mrf.mxu0
    %v4469 = vadd.f32 0.0, %v4468
    %4470 = vmatmul.f32.gmra.mxu0 %v4407
    %v4471 = vpop.f32.mrf.mxu0
    %v4472 = vadd.f32 0.0, %v4471
    %4473 = vmatmul.f32.gmra.mxu0 %v4410
    %v4474 = vpop.f32.mrf.mxu0
    %v4475 = vadd.f32 0.0, %v4474
    %4476 = vmatmul.f32.gmra.mxu0 %v4413
    %v4477 = vpop.f32.mrf.mxu0
    %v4478 = vadd.f32 0.0, %v4477
    %4479 = vmatmul.f32.gmra.mxu0 %v4416
    %v4480 = vpop.f32.mrf.mxu0
    %v4481 = vadd.f32 0.0, %v4480
    %4482 = vdwg.mxu0
    %v4484 = vsel %vm4143, %v3935, 0
    %v4487 = vsel %vm4143, %v3936, 0
    %v4490 = vsel %vm4143, %v3937, 0
    %v4493 = vsel %vm4143, %v3938, 0
    %v4496 = vsel %vm4143, %v3939, 0
    %v4499 = vsel %vm4143, %v3940, 0
    %v4502 = vsel %vm4143, %v3941, 0
    %v4505 = vsel %vm4143, %v3942, 0
    %v4508 = vsel %vm4143, %v3943, 0
    %v4511 = vsel %vm4143, %v3944, 0
    %v4514 = vsel %vm4143, %v3945, 0
    %v4517 = vsel %vm4143, %v3946, 0
    %v4520 = vsel %vm4143, %v3947, 0
    %v4523 = vsel %vm4143, %v3948, 0
    %v4526 = vsel %vm4143, %v3949, 0
    %v4529 = vsel %vm4143, %v3950, 0
    %4531 = vmatpush.msra.mxu0 0.0
    %4532 = vmatpush.msra.mxu0 0.0
    %4533 = vmatpush.msra.mxu0 0.0
    %4534 = vmatpush.msra.mxu0 0.0
    %4535 = vmatpush.msra.mxu0 0.0
    %4536 = vmatpush.msra.mxu0 0.0
    %4537 = vmatpush.msra.mxu0 0.0
    %4538 = vmatpush.msra.mxu0 0.0
    %4539 = vmatpush.msra.mxu0 0.0
    %4540 = vmatpush.msra.mxu0 0.0
    %4541 = vmatpush.msra.mxu0 0.0
    %4542 = vmatpush.msra.mxu0 0.0
    %4543 = vmatpush.msra.mxu0 0.0
    %4544 = vmatpush.msra.mxu0 0.0
    %4545 = vmatpush.msra.mxu0 0.0
    %4546 = vmatpush.msra.mxu0 %v1789
    %4547 = vmatmul.f32.gmra.mxu0 %v4484
    %v4548 = vpop.f32.mrf.mxu0
    %v4549 = vadd.f32 0.0, %v4548
    %4550 = vmatmul.f32.gmra.mxu0 %v4487
    %v4551 = vpop.f32.mrf.mxu0
    %v4552 = vadd.f32 0.0, %v4551
    %4553 = vmatmul.f32.gmra.mxu0 %v4490
    %v4554 = vpop.f32.mrf.mxu0
    %v4555 = vadd.f32 0.0, %v4554
    %4556 = vmatmul.f32.gmra.mxu0 %v4493
    %v4557 = vpop.f32.mrf.mxu0
    %v4558 = vadd.f32 0.0, %v4557
    %4559 = vmatmul.f32.gmra.mxu0 %v4496
    %v4560 = vpop.f32.mrf.mxu0
    %v4561 = vadd.f32 0.0, %v4560
    %4562 = vmatmul.f32.gmra.mxu0 %v4499
    %v4563 = vpop.f32.mrf.mxu0
    %v4564 = vadd.f32 0.0, %v4563
    %4565 = vmatmul.f32.gmra.mxu0 %v4502
    %v4566 = vpop.f32.mrf.mxu0
    %v4567 = vadd.f32 0.0, %v4566
    %4568 = vmatmul.f32.gmra.mxu0 %v4505
    %v4569 = vpop.f32.mrf.mxu0
    %v4570 = vadd.f32 0.0, %v4569
    %4571 = vmatmul.f32.gmra.mxu0 %v4508
    %v4572 = vpop.f32.mrf.mxu0
    %v4573 = vadd.f32 0.0, %v4572
    %4574 = vmatmul.f32.gmra.mxu0 %v4511
    %v4575 = vpop.f32.mrf.mxu0
    %v4576 = vadd.f32 0.0, %v4575
    %4577 = vmatmul.f32.gmra.mxu0 %v4514
    %v4578 = vpop.f32.mrf.mxu0
    %v4579 = vadd.f32 0.0, %v4578
    %4580 = vmatmul.f32.gmra.mxu0 %v4517
    %v4581 = vpop.f32.mrf.mxu0
    %v4582 = vadd.f32 0.0, %v4581
    %4583 = vmatmul.f32.gmra.mxu0 %v4520
    %v4584 = vpop.f32.mrf.mxu0
    %v4585 = vadd.f32 0.0, %v4584
    %4586 = vmatmul.f32.gmra.mxu0 %v4523
    %v4587 = vpop.f32.mrf.mxu0
    %v4588 = vadd.f32 0.0, %v4587
    %4589 = vmatmul.f32.gmra.mxu0 %v4526
    %v4590 = vpop.f32.mrf.mxu0
    %v4591 = vadd.f32 0.0, %v4590
    %4592 = vmatmul.f32.gmra.mxu0 %v4529
    %v4593 = vpop.f32.mrf.mxu0
    %v4594 = vadd.f32 0.0, %v4593
    %4595 = vdwg.mxu0
    %v4597 = vsel %vm4143, %v3951, 0
    %v4600 = vsel %vm4143, %v3952, 0
    %v4603 = vsel %vm4143, %v3953, 0
    %v4606 = vsel %vm4143, %v3954, 0
    %v4609 = vsel %vm4143, %v3955, 0
    %v4612 = vsel %vm4143, %v3956, 0
    %v4615 = vsel %vm4143, %v3957, 0
    %v4618 = vsel %vm4143, %v3958, 0
    %v4621 = vsel %vm4143, %v3959, 0
    %v4624 = vsel %vm4143, %v3960, 0
    %v4627 = vsel %vm4143, %v3961, 0
    %v4630 = vsel %vm4143, %v3962, 0
    %v4633 = vsel %vm4143, %v3963, 0
    %v4636 = vsel %vm4143, %v3964, 0
    %v4639 = vsel %vm4143, %v3965, 0
    %v4642 = vsel %vm4143, %v3966, 0
    %4644 = vmatpush.msra.mxu0 0.0
    %4645 = vmatpush.msra.mxu0 0.0
    %4646 = vmatpush.msra.mxu0 0.0
    %4647 = vmatpush.msra.mxu0 0.0
    %4648 = vmatpush.msra.mxu0 0.0
    %4649 = vmatpush.msra.mxu0 0.0
    %4650 = vmatpush.msra.mxu0 0.0
    %4651 = vmatpush.msra.mxu0 0.0
    %4652 = vmatpush.msra.mxu0 0.0
    %4653 = vmatpush.msra.mxu0 0.0
    %4654 = vmatpush.msra.mxu0 0.0
    %4655 = vmatpush.msra.mxu0 0.0
    %4656 = vmatpush.msra.mxu0 0.0
    %4657 = vmatpush.msra.mxu0 0.0
    %4658 = vmatpush.msra.mxu0 0.0
    %4659 = vmatpush.msra.mxu0 %v1809
    %4660 = vmatmul.f32.gmra.mxu0 %v4597
    %v4661 = vpop.f32.mrf.mxu0
    %v4662 = vadd.f32 0.0, %v4661
    %4663 = vmatmul.f32.gmra.mxu0 %v4600
    %v4664 = vpop.f32.mrf.mxu0
    %v4665 = vadd.f32 0.0, %v4664
    %4666 = vmatmul.f32.gmra.mxu0 %v4603
    %v4667 = vpop.f32.mrf.mxu0
    %v4668 = vadd.f32 0.0, %v4667
    %4669 = vmatmul.f32.gmra.mxu0 %v4606
    %v4670 = vpop.f32.mrf.mxu0
    %v4671 = vadd.f32 0.0, %v4670
    %4672 = vmatmul.f32.gmra.mxu0 %v4609
    %v4673 = vpop.f32.mrf.mxu0
    %v4674 = vadd.f32 0.0, %v4673
    %4675 = vmatmul.f32.gmra.mxu0 %v4612
    %v4676 = vpop.f32.mrf.mxu0
    %v4677 = vadd.f32 0.0, %v4676
    %4678 = vmatmul.f32.gmra.mxu0 %v4615
    %v4679 = vpop.f32.mrf.mxu0
    %v4680 = vadd.f32 0.0, %v4679
    %4681 = vmatmul.f32.gmra.mxu0 %v4618
    %v4682 = vpop.f32.mrf.mxu0
    %v4683 = vadd.f32 0.0, %v4682
    %4684 = vmatmul.f32.gmra.mxu0 %v4621
    %v4685 = vpop.f32.mrf.mxu0
    %v4686 = vadd.f32 0.0, %v4685
    %4687 = vmatmul.f32.gmra.mxu0 %v4624
    %v4688 = vpop.f32.mrf.mxu0
    %v4689 = vadd.f32 0.0, %v4688
    %4690 = vmatmul.f32.gmra.mxu0 %v4627
    %v4691 = vpop.f32.mrf.mxu0
    %v4692 = vadd.f32 0.0, %v4691
    %4693 = vmatmul.f32.gmra.mxu0 %v4630
    %v4694 = vpop.f32.mrf.mxu0
    %v4695 = vadd.f32 0.0, %v4694
    %4696 = vmatmul.f32.gmra.mxu0 %v4633
    %v4697 = vpop.f32.mrf.mxu0
    %v4698 = vadd.f32 0.0, %v4697
    %4699 = vmatmul.f32.gmra.mxu0 %v4636
    %v4700 = vpop.f32.mrf.mxu0
    %v4701 = vadd.f32 0.0, %v4700
    %4702 = vmatmul.f32.gmra.mxu0 %v4639
    %v4703 = vpop.f32.mrf.mxu0
    %v4704 = vadd.f32 0.0, %v4703
    %4705 = vmatmul.f32.gmra.mxu0 %v4642
    %v4706 = vpop.f32.mrf.mxu0
    %v4707 = vadd.f32 0.0, %v4706
    %4708 = vdwg.mxu0
    %v4710 = vsel %vm4143, %v3967, 0
    %v4713 = vsel %vm4143, %v3968, 0
    %v4716 = vsel %vm4143, %v3969, 0
    %v4719 = vsel %vm4143, %v3970, 0
    %v4722 = vsel %vm4143, %v3971, 0
    %v4725 = vsel %vm4143, %v3972, 0
    %v4728 = vsel %vm4143, %v3973, 0
    %v4731 = vsel %vm4143, %v3974, 0
    %v4734 = vsel %vm4143, %v3975, 0
    %v4737 = vsel %vm4143, %v3976, 0
    %v4740 = vsel %vm4143, %v3977, 0
    %v4743 = vsel %vm4143, %v3978, 0
    %v4746 = vsel %vm4143, %v3979, 0
    %v4749 = vsel %vm4143, %v3980, 0
    %v4752 = vsel %vm4143, %v3981, 0
    %v4755 = vsel %vm4143, %v3982, 0
    %4757 = vmatpush.msra.mxu0 0.0
    %4758 = vmatpush.msra.mxu0 0.0
    %4759 = vmatpush.msra.mxu0 0.0
    %4760 = vmatpush.msra.mxu0 0.0
    %4761 = vmatpush.msra.mxu0 0.0
    %4762 = vmatpush.msra.mxu0 0.0
    %4763 = vmatpush.msra.mxu0 0.0
    %4764 = vmatpush.msra.mxu0 0.0
    %4765 = vmatpush.msra.mxu0 0.0
    %4766 = vmatpush.msra.mxu0 0.0
    %4767 = vmatpush.msra.mxu0 0.0
    %4768 = vmatpush.msra.mxu0 0.0
    %4769 = vmatpush.msra.mxu0 0.0
    %4770 = vmatpush.msra.mxu0 0.0
    %4771 = vmatpush.msra.mxu0 0.0
    %4772 = vmatpush.msra.mxu0 %v1829
    %4773 = vmatmul.f32.gmra.mxu0 %v4710
    %v4774 = vpop.f32.mrf.mxu0
    %v4775 = vadd.f32 0.0, %v4774
    %4776 = vmatmul.f32.gmra.mxu0 %v4713
    %v4777 = vpop.f32.mrf.mxu0
    %v4778 = vadd.f32 0.0, %v4777
    %4779 = vmatmul.f32.gmra.mxu0 %v4716
    %v4780 = vpop.f32.mrf.mxu0
    %v4781 = vadd.f32 0.0, %v4780
    %4782 = vmatmul.f32.gmra.mxu0 %v4719
    %v4783 = vpop.f32.mrf.mxu0
    %v4784 = vadd.f32 0.0, %v4783
    %4785 = vmatmul.f32.gmra.mxu0 %v4722
    %v4786 = vpop.f32.mrf.mxu0
    %v4787 = vadd.f32 0.0, %v4786
    %4788 = vmatmul.f32.gmra.mxu0 %v4725
    %v4789 = vpop.f32.mrf.mxu0
    %v4790 = vadd.f32 0.0, %v4789
    %4791 = vmatmul.f32.gmra.mxu0 %v4728
    %v4792 = vpop.f32.mrf.mxu0
    %v4793 = vadd.f32 0.0, %v4792
    %4794 = vmatmul.f32.gmra.mxu0 %v4731
    %v4795 = vpop.f32.mrf.mxu0
    %v4796 = vadd.f32 0.0, %v4795
    %4797 = vmatmul.f32.gmra.mxu0 %v4734
    %v4798 = vpop.f32.mrf.mxu0
    %v4799 = vadd.f32 0.0, %v4798
    %4800 = vmatmul.f32.gmra.mxu0 %v4737
    %v4801 = vpop.f32.mrf.mxu0
    %v4802 = vadd.f32 0.0, %v4801
    %4803 = vmatmul.f32.gmra.mxu0 %v4740
    %v4804 = vpop.f32.mrf.mxu0
    %v4805 = vadd.f32 0.0, %v4804
    %4806 = vmatmul.f32.gmra.mxu0 %v4743
    %v4807 = vpop.f32.mrf.mxu0
    %v4808 = vadd.f32 0.0, %v4807
    %4809 = vmatmul.f32.gmra.mxu0 %v4746
    %v4810 = vpop.f32.mrf.mxu0
    %v4811 = vadd.f32 0.0, %v4810
    %4812 = vmatmul.f32.gmra.mxu0 %v4749
    %v4813 = vpop.f32.mrf.mxu0
    %v4814 = vadd.f32 0.0, %v4813
    %4815 = vmatmul.f32.gmra.mxu0 %v4752
    %v4816 = vpop.f32.mrf.mxu0
    %v4817 = vadd.f32 0.0, %v4816
    %4818 = vmatmul.f32.gmra.mxu0 %v4755
    %v4819 = vpop.f32.mrf.mxu0
    %v4820 = vadd.f32 0.0, %v4819
    %4821 = vdwg.mxu0
    %v4823 = vsel %vm4143, %v3983, 0
    %v4826 = vsel %vm4143, %v3984, 0
    %v4829 = vsel %vm4143, %v3985, 0
    %v4832 = vsel %vm4143, %v3986, 0
    %v4835 = vsel %vm4143, %v3987, 0
    %v4838 = vsel %vm4143, %v3988, 0
    %v4841 = vsel %vm4143, %v3989, 0
    %v4844 = vsel %vm4143, %v3990, 0
    %v4847 = vsel %vm4143, %v3991, 0
    %v4850 = vsel %vm4143, %v3992, 0
    %v4853 = vsel %vm4143, %v3993, 0
    %v4856 = vsel %vm4143, %v3994, 0
    %v4859 = vsel %vm4143, %v3995, 0
    %v4862 = vsel %vm4143, %v3996, 0
    %v4865 = vsel %vm4143, %v3997, 0
    %v4868 = vsel %vm4143, %v3998, 0
    %4870 = vmatpush.msra.mxu0 0.0
    %4871 = vmatpush.msra.mxu0 0.0
    %4872 = vmatpush.msra.mxu0 0.0
    %4873 = vmatpush.msra.mxu0 0.0
    %4874 = vmatpush.msra.mxu0 0.0
    %4875 = vmatpush.msra.mxu0 0.0
    %4876 = vmatpush.msra.mxu0 0.0
    %4877 = vmatpush.msra.mxu0 0.0
    %4878 = vmatpush.msra.mxu0 0.0
    %4879 = vmatpush.msra.mxu0 0.0
    %4880 = vmatpush.msra.mxu0 0.0
    %4881 = vmatpush.msra.mxu0 0.0
    %4882 = vmatpush.msra.mxu0 0.0
    %4883 = vmatpush.msra.mxu0 0.0
    %4884 = vmatpush.msra.mxu0 0.0
    %4885 = vmatpush.msra.mxu0 %v1849
    %4886 = vmatmul.f32.gmra.mxu0 %v4823
    %v4887 = vpop.f32.mrf.mxu0
    %v4888 = vadd.f32 0.0, %v4887
    %4889 = vmatmul.f32.gmra.mxu0 %v4826
    %v4890 = vpop.f32.mrf.mxu0
    %v4891 = vadd.f32 0.0, %v4890
    %4892 = vmatmul.f32.gmra.mxu0 %v4829
    %v4893 = vpop.f32.mrf.mxu0
    %v4894 = vadd.f32 0.0, %v4893
    %4895 = vmatmul.f32.gmra.mxu0 %v4832
    %v4896 = vpop.f32.mrf.mxu0
    %v4897 = vadd.f32 0.0, %v4896
    %4898 = vmatmul.f32.gmra.mxu0 %v4835
    %v4899 = vpop.f32.mrf.mxu0
    %v4900 = vadd.f32 0.0, %v4899
    %4901 = vmatmul.f32.gmra.mxu0 %v4838
    %v4902 = vpop.f32.mrf.mxu0
    %v4903 = vadd.f32 0.0, %v4902
    %4904 = vmatmul.f32.gmra.mxu0 %v4841
    %v4905 = vpop.f32.mrf.mxu0
    %v4906 = vadd.f32 0.0, %v4905
    %4907 = vmatmul.f32.gmra.mxu0 %v4844
    %v4908 = vpop.f32.mrf.mxu0
    %v4909 = vadd.f32 0.0, %v4908
    %4910 = vmatmul.f32.gmra.mxu0 %v4847
    %v4911 = vpop.f32.mrf.mxu0
    %v4912 = vadd.f32 0.0, %v4911
    %4913 = vmatmul.f32.gmra.mxu0 %v4850
    %v4914 = vpop.f32.mrf.mxu0
    %v4915 = vadd.f32 0.0, %v4914
    %4916 = vmatmul.f32.gmra.mxu0 %v4853
    %v4917 = vpop.f32.mrf.mxu0
    %v4918 = vadd.f32 0.0, %v4917
    %4919 = vmatmul.f32.gmra.mxu0 %v4856
    %v4920 = vpop.f32.mrf.mxu0
    %v4921 = vadd.f32 0.0, %v4920
    %4922 = vmatmul.f32.gmra.mxu0 %v4859
    %v4923 = vpop.f32.mrf.mxu0
    %v4924 = vadd.f32 0.0, %v4923
    %4925 = vmatmul.f32.gmra.mxu0 %v4862
    %v4926 = vpop.f32.mrf.mxu0
    %v4927 = vadd.f32 0.0, %v4926
    %4928 = vmatmul.f32.gmra.mxu0 %v4865
    %v4929 = vpop.f32.mrf.mxu0
    %v4930 = vadd.f32 0.0, %v4929
    %4931 = vmatmul.f32.gmra.mxu0 %v4868
    %v4932 = vpop.f32.mrf.mxu0
    %v4933 = vadd.f32 0.0, %v4932
    %4934 = vdwg.mxu0
    %v4936 = vsel %vm4143, %v3999, 0
    %v4939 = vsel %vm4143, %v4000, 0
    %v4942 = vsel %vm4143, %v4001, 0
    %v4945 = vsel %vm4143, %v4002, 0
    %v4948 = vsel %vm4143, %v4003, 0
    %v4951 = vsel %vm4143, %v4004, 0
    %v4954 = vsel %vm4143, %v4005, 0
    %v4957 = vsel %vm4143, %v4006, 0
    %v4960 = vsel %vm4143, %v4007, 0
    %v4963 = vsel %vm4143, %v4008, 0
    %v4966 = vsel %vm4143, %v4009, 0
    %v4969 = vsel %vm4143, %v4010, 0
    %v4972 = vsel %vm4143, %v4011, 0
    %v4975 = vsel %vm4143, %v4012, 0
    %v4978 = vsel %vm4143, %v4013, 0
    %v4981 = vsel %vm4143, %v4014, 0
    %4983 = vmatpush.msra.mxu0 0.0
    %4984 = vmatpush.msra.mxu0 0.0
    %4985 = vmatpush.msra.mxu0 0.0
    %4986 = vmatpush.msra.mxu0 0.0
    %4987 = vmatpush.msra.mxu0 0.0
    %4988 = vmatpush.msra.mxu0 0.0
    %4989 = vmatpush.msra.mxu0 0.0
    %4990 = vmatpush.msra.mxu0 0.0
    %4991 = vmatpush.msra.mxu0 0.0
    %4992 = vmatpush.msra.mxu0 0.0
    %4993 = vmatpush.msra.mxu0 0.0
    %4994 = vmatpush.msra.mxu0 0.0
    %4995 = vmatpush.msra.mxu0 0.0
    %4996 = vmatpush.msra.mxu0 0.0
    %4997 = vmatpush.msra.mxu0 0.0
    %4998 = vmatpush.msra.mxu0 %v1869
    %4999 = vmatmul.f32.gmra.mxu0 %v4936
    %v5000 = vpop.f32.mrf.mxu0
    %v5001 = vadd.f32 0.0, %v5000
    %5002 = vmatmul.f32.gmra.mxu0 %v4939
    %v5003 = vpop.f32.mrf.mxu0
    %v5004 = vadd.f32 0.0, %v5003
    %5005 = vmatmul.f32.gmra.mxu0 %v4942
    %v5006 = vpop.f32.mrf.mxu0
    %v5007 = vadd.f32 0.0, %v5006
    %5008 = vmatmul.f32.gmra.mxu0 %v4945
    %v5009 = vpop.f32.mrf.mxu0
    %v5010 = vadd.f32 0.0, %v5009
    %5011 = vmatmul.f32.gmra.mxu0 %v4948
    %v5012 = vpop.f32.mrf.mxu0
    %v5013 = vadd.f32 0.0, %v5012
    %5014 = vmatmul.f32.gmra.mxu0 %v4951
    %v5015 = vpop.f32.mrf.mxu0
    %v5016 = vadd.f32 0.0, %v5015
    %5017 = vmatmul.f32.gmra.mxu0 %v4954
    %v5018 = vpop.f32.mrf.mxu0
    %v5019 = vadd.f32 0.0, %v5018
    %5020 = vmatmul.f32.gmra.mxu0 %v4957
    %v5021 = vpop.f32.mrf.mxu0
    %v5022 = vadd.f32 0.0, %v5021
    %5023 = vmatmul.f32.gmra.mxu0 %v4960
    %v5024 = vpop.f32.mrf.mxu0
    %v5025 = vadd.f32 0.0, %v5024
    %5026 = vmatmul.f32.gmra.mxu0 %v4963
    %v5027 = vpop.f32.mrf.mxu0
    %v5028 = vadd.f32 0.0, %v5027
    %5029 = vmatmul.f32.gmra.mxu0 %v4966
    %v5030 = vpop.f32.mrf.mxu0
    %v5031 = vadd.f32 0.0, %v5030
    %5032 = vmatmul.f32.gmra.mxu0 %v4969
    %v5033 = vpop.f32.mrf.mxu0
    %v5034 = vadd.f32 0.0, %v5033
    %5035 = vmatmul.f32.gmra.mxu0 %v4972
    %v5036 = vpop.f32.mrf.mxu0
    %v5037 = vadd.f32 0.0, %v5036
    %5038 = vmatmul.f32.gmra.mxu0 %v4975
    %v5039 = vpop.f32.mrf.mxu0
    %v5040 = vadd.f32 0.0, %v5039
    %5041 = vmatmul.f32.gmra.mxu0 %v4978
    %v5042 = vpop.f32.mrf.mxu0
    %v5043 = vadd.f32 0.0, %v5042
    %5044 = vmatmul.f32.gmra.mxu0 %v4981
    %v5045 = vpop.f32.mrf.mxu0
    %v5046 = vadd.f32 0.0, %v5045
    %5047 = vdwg.mxu0
    %v5049 = vsel %vm4143, %v4015, 0
    %v5052 = vsel %vm4143, %v4016, 0
    %v5055 = vsel %vm4143, %v4017, 0
    %v5058 = vsel %vm4143, %v4018, 0
    %v5061 = vsel %vm4143, %v4019, 0
    %v5064 = vsel %vm4143, %v4020, 0
    %v5067 = vsel %vm4143, %v4021, 0
    %v5070 = vsel %vm4143, %v4022, 0
    %v5073 = vsel %vm4143, %v4023, 0
    %v5076 = vsel %vm4143, %v4024, 0
    %v5079 = vsel %vm4143, %v4025, 0
    %v5082 = vsel %vm4143, %v4026, 0
    %v5085 = vsel %vm4143, %v4027, 0
    %v5088 = vsel %vm4143, %v4028, 0
    %v5091 = vsel %vm4143, %v4029, 0
    %v5094 = vsel %vm4143, %v4030, 0
    %5096 = vmatpush.msra.mxu0 0.0
    %5097 = vmatpush.msra.mxu0 0.0
    %5098 = vmatpush.msra.mxu0 0.0
    %5099 = vmatpush.msra.mxu0 0.0
    %5100 = vmatpush.msra.mxu0 0.0
    %5101 = vmatpush.msra.mxu0 0.0
    %5102 = vmatpush.msra.mxu0 0.0
    %5103 = vmatpush.msra.mxu0 0.0
    %5104 = vmatpush.msra.mxu0 0.0
    %5105 = vmatpush.msra.mxu0 0.0
    %5106 = vmatpush.msra.mxu0 0.0
    %5107 = vmatpush.msra.mxu0 0.0
    %5108 = vmatpush.msra.mxu0 0.0
    %5109 = vmatpush.msra.mxu0 0.0
    %5110 = vmatpush.msra.mxu0 0.0
    %5111 = vmatpush.msra.mxu0 %v1889
    %5112 = vmatmul.f32.gmra.mxu0 %v5049
    %v5113 = vpop.f32.mrf.mxu0
    %v5114 = vadd.f32 0.0, %v5113
    %5115 = vmatmul.f32.gmra.mxu0 %v5052
    %v5116 = vpop.f32.mrf.mxu0
    %v5117 = vadd.f32 0.0, %v5116
    %5118 = vmatmul.f32.gmra.mxu0 %v5055
    %v5119 = vpop.f32.mrf.mxu0
    %v5120 = vadd.f32 0.0, %v5119
    %5121 = vmatmul.f32.gmra.mxu0 %v5058
    %v5122 = vpop.f32.mrf.mxu0
    %v5123 = vadd.f32 0.0, %v5122
    %5124 = vmatmul.f32.gmra.mxu0 %v5061
    %v5125 = vpop.f32.mrf.mxu0
    %v5126 = vadd.f32 0.0, %v5125
    %5127 = vmatmul.f32.gmra.mxu0 %v5064
    %v5128 = vpop.f32.mrf.mxu0
    %v5129 = vadd.f32 0.0, %v5128
    %5130 = vmatmul.f32.gmra.mxu0 %v5067
    %v5131 = vpop.f32.mrf.mxu0
    %v5132 = vadd.f32 0.0, %v5131
    %5133 = vmatmul.f32.gmra.mxu0 %v5070
    %v5134 = vpop.f32.mrf.mxu0
    %v5135 = vadd.f32 0.0, %v5134
    %5136 = vmatmul.f32.gmra.mxu0 %v5073
    %v5137 = vpop.f32.mrf.mxu0
    %v5138 = vadd.f32 0.0, %v5137
    %5139 = vmatmul.f32.gmra.mxu0 %v5076
    %v5140 = vpop.f32.mrf.mxu0
    %v5141 = vadd.f32 0.0, %v5140
    %5142 = vmatmul.f32.gmra.mxu0 %v5079
    %v5143 = vpop.f32.mrf.mxu0
    %v5144 = vadd.f32 0.0, %v5143
    %5145 = vmatmul.f32.gmra.mxu0 %v5082
    %v5146 = vpop.f32.mrf.mxu0
    %v5147 = vadd.f32 0.0, %v5146
    %5148 = vmatmul.f32.gmra.mxu0 %v5085
    %v5149 = vpop.f32.mrf.mxu0
    %v5150 = vadd.f32 0.0, %v5149
    %5151 = vmatmul.f32.gmra.mxu0 %v5088
    %v5152 = vpop.f32.mrf.mxu0
    %v5153 = vadd.f32 0.0, %v5152
    %5154 = vmatmul.f32.gmra.mxu0 %v5091
    %v5155 = vpop.f32.mrf.mxu0
    %v5156 = vadd.f32 0.0, %v5155
    %5157 = vmatmul.f32.gmra.mxu0 %v5094
    %v5158 = vpop.f32.mrf.mxu0
    %v5159 = vadd.f32 0.0, %v5158
    %5160 = vdwg.mxu0
    %v5162 = vsel %vm4143, %v4031, 0
    %v5165 = vsel %vm4143, %v4032, 0
    %v5168 = vsel %vm4143, %v4033, 0
    %v5171 = vsel %vm4143, %v4034, 0
    %v5174 = vsel %vm4143, %v4035, 0
    %v5177 = vsel %vm4143, %v4036, 0
    %v5180 = vsel %vm4143, %v4037, 0
    %v5183 = vsel %vm4143, %v4038, 0
    %v5186 = vsel %vm4143, %v4039, 0
    %v5189 = vsel %vm4143, %v4040, 0
    %v5192 = vsel %vm4143, %v4041, 0
    %v5195 = vsel %vm4143, %v4042, 0
    %v5198 = vsel %vm4143, %v4043, 0
    %v5201 = vsel %vm4143, %v4044, 0
    %v5204 = vsel %vm4143, %v4045, 0
    %v5207 = vsel %vm4143, %v4046, 0
    %5209 = vmatpush.msra.mxu0 0.0
    %5210 = vmatpush.msra.mxu0 0.0
    %5211 = vmatpush.msra.mxu0 0.0
    %5212 = vmatpush.msra.mxu0 0.0
    %5213 = vmatpush.msra.mxu0 0.0
    %5214 = vmatpush.msra.mxu0 0.0
    %5215 = vmatpush.msra.mxu0 0.0
    %5216 = vmatpush.msra.mxu0 0.0
    %5217 = vmatpush.msra.mxu0 0.0
    %5218 = vmatpush.msra.mxu0 0.0
    %5219 = vmatpush.msra.mxu0 0.0
    %5220 = vmatpush.msra.mxu0 0.0
    %5221 = vmatpush.msra.mxu0 0.0
    %5222 = vmatpush.msra.mxu0 0.0
    %5223 = vmatpush.msra.mxu0 0.0
    %5224 = vmatpush.msra.mxu0 %v1909
    %5225 = vmatmul.f32.gmra.mxu0 %v5162
    %v5226 = vpop.f32.mrf.mxu0
    %v5227 = vadd.f32 0.0, %v5226
    %5228 = vmatmul.f32.gmra.mxu0 %v5165
    %v5229 = vpop.f32.mrf.mxu0
    %v5230 = vadd.f32 0.0, %v5229
    %5231 = vmatmul.f32.gmra.mxu0 %v5168
    %v5232 = vpop.f32.mrf.mxu0
    %v5233 = vadd.f32 0.0, %v5232
    %5234 = vmatmul.f32.gmra.mxu0 %v5171
    %v5235 = vpop.f32.mrf.mxu0
    %v5236 = vadd.f32 0.0, %v5235
    %5237 = vmatmul.f32.gmra.mxu0 %v5174
    %v5238 = vpop.f32.mrf.mxu0
    %v5239 = vadd.f32 0.0, %v5238
    %5240 = vmatmul.f32.gmra.mxu0 %v5177
    %v5241 = vpop.f32.mrf.mxu0
    %v5242 = vadd.f32 0.0, %v5241
    %5243 = vmatmul.f32.gmra.mxu0 %v5180
    %v5244 = vpop.f32.mrf.mxu0
    %v5245 = vadd.f32 0.0, %v5244
    %5246 = vmatmul.f32.gmra.mxu0 %v5183
    %v5247 = vpop.f32.mrf.mxu0
    %v5248 = vadd.f32 0.0, %v5247
    %5249 = vmatmul.f32.gmra.mxu0 %v5186
    %v5250 = vpop.f32.mrf.mxu0
    %v5251 = vadd.f32 0.0, %v5250
    %5252 = vmatmul.f32.gmra.mxu0 %v5189
    %v5253 = vpop.f32.mrf.mxu0
    %v5254 = vadd.f32 0.0, %v5253
    %5255 = vmatmul.f32.gmra.mxu0 %v5192
    %v5256 = vpop.f32.mrf.mxu0
    %v5257 = vadd.f32 0.0, %v5256
    %5258 = vmatmul.f32.gmra.mxu0 %v5195
    %v5259 = vpop.f32.mrf.mxu0
    %v5260 = vadd.f32 0.0, %v5259
    %5261 = vmatmul.f32.gmra.mxu0 %v5198
    %v5262 = vpop.f32.mrf.mxu0
    %v5263 = vadd.f32 0.0, %v5262
    %5264 = vmatmul.f32.gmra.mxu0 %v5201
    %v5265 = vpop.f32.mrf.mxu0
    %v5266 = vadd.f32 0.0, %v5265
    %5267 = vmatmul.f32.gmra.mxu0 %v5204
    %v5268 = vpop.f32.mrf.mxu0
    %v5269 = vadd.f32 0.0, %v5268
    %5270 = vmatmul.f32.gmra.mxu0 %v5207
    %v5271 = vpop.f32.mrf.mxu0
    %v5272 = vadd.f32 0.0, %v5271
    %5273 = vdwg.mxu0
    %v5275 = vsel %vm4143, %v4047, 0
    %v5278 = vsel %vm4143, %v4048, 0
    %v5281 = vsel %vm4143, %v4049, 0
    %v5284 = vsel %vm4143, %v4050, 0
    %v5287 = vsel %vm4143, %v4051, 0
    %v5290 = vsel %vm4143, %v4052, 0
    %v5293 = vsel %vm4143, %v4053, 0
    %v5296 = vsel %vm4143, %v4054, 0
    %v5299 = vsel %vm4143, %v4055, 0
    %v5302 = vsel %vm4143, %v4056, 0
    %v5305 = vsel %vm4143, %v4057, 0
    %v5308 = vsel %vm4143, %v4058, 0
    %v5311 = vsel %vm4143, %v4059, 0
    %v5314 = vsel %vm4143, %v4060, 0
    %v5317 = vsel %vm4143, %v4061, 0
    %v5320 = vsel %vm4143, %v4062, 0
    %5322 = vmatpush.msra.mxu0 0.0
    %5323 = vmatpush.msra.mxu0 0.0
    %5324 = vmatpush.msra.mxu0 0.0
    %5325 = vmatpush.msra.mxu0 0.0
    %5326 = vmatpush.msra.mxu0 0.0
    %5327 = vmatpush.msra.mxu0 0.0
    %5328 = vmatpush.msra.mxu0 0.0
    %5329 = vmatpush.msra.mxu0 0.0
    %5330 = vmatpush.msra.mxu0 0.0
    %5331 = vmatpush.msra.mxu0 0.0
    %5332 = vmatpush.msra.mxu0 0.0
    %5333 = vmatpush.msra.mxu0 0.0
    %5334 = vmatpush.msra.mxu0 0.0
    %5335 = vmatpush.msra.mxu0 0.0
    %5336 = vmatpush.msra.mxu0 0.0
    %5337 = vmatpush.msra.mxu0 %v1929
    %5338 = vmatmul.f32.gmra.mxu0 %v5275
    %v5339 = vpop.f32.mrf.mxu0
    %v5340 = vadd.f32 0.0, %v5339
    %5341 = vmatmul.f32.gmra.mxu0 %v5278
    %v5342 = vpop.f32.mrf.mxu0
    %v5343 = vadd.f32 0.0, %v5342
    %5344 = vmatmul.f32.gmra.mxu0 %v5281
    %v5345 = vpop.f32.mrf.mxu0
    %v5346 = vadd.f32 0.0, %v5345
    %5347 = vmatmul.f32.gmra.mxu0 %v5284
    %v5348 = vpop.f32.mrf.mxu0
    %v5349 = vadd.f32 0.0, %v5348
    %5350 = vmatmul.f32.gmra.mxu0 %v5287
    %v5351 = vpop.f32.mrf.mxu0
    %v5352 = vadd.f32 0.0, %v5351
    %5353 = vmatmul.f32.gmra.mxu0 %v5290
    %v5354 = vpop.f32.mrf.mxu0
    %v5355 = vadd.f32 0.0, %v5354
    %5356 = vmatmul.f32.gmra.mxu0 %v5293
    %v5357 = vpop.f32.mrf.mxu0
    %v5358 = vadd.f32 0.0, %v5357
    %5359 = vmatmul.f32.gmra.mxu0 %v5296
    %v5360 = vpop.f32.mrf.mxu0
    %v5361 = vadd.f32 0.0, %v5360
    %5362 = vmatmul.f32.gmra.mxu0 %v5299
    %v5363 = vpop.f32.mrf.mxu0
    %v5364 = vadd.f32 0.0, %v5363
    %5365 = vmatmul.f32.gmra.mxu0 %v5302
    %v5366 = vpop.f32.mrf.mxu0
    %v5367 = vadd.f32 0.0, %v5366
    %5368 = vmatmul.f32.gmra.mxu0 %v5305
    %v5369 = vpop.f32.mrf.mxu0
    %v5370 = vadd.f32 0.0, %v5369
    %5371 = vmatmul.f32.gmra.mxu0 %v5308
    %v5372 = vpop.f32.mrf.mxu0
    %v5373 = vadd.f32 0.0, %v5372
    %5374 = vmatmul.f32.gmra.mxu0 %v5311
    %v5375 = vpop.f32.mrf.mxu0
    %v5376 = vadd.f32 0.0, %v5375
    %5377 = vmatmul.f32.gmra.mxu0 %v5314
    %v5378 = vpop.f32.mrf.mxu0
    %v5379 = vadd.f32 0.0, %v5378
    %5380 = vmatmul.f32.gmra.mxu0 %v5317
    %v5381 = vpop.f32.mrf.mxu0
    %v5382 = vadd.f32 0.0, %v5381
    %5383 = vmatmul.f32.gmra.mxu0 %v5320
    %v5384 = vpop.f32.mrf.mxu0
    %v5385 = vadd.f32 0.0, %v5384
    %5386 = vdwg.mxu0
    %v5388 = vsel %vm4143, %v4063, 0
    %v5391 = vsel %vm4143, %v4064, 0
    %v5394 = vsel %vm4143, %v4065, 0
    %v5397 = vsel %vm4143, %v4066, 0
    %v5400 = vsel %vm4143, %v4067, 0
    %v5403 = vsel %vm4143, %v4068, 0
    %v5406 = vsel %vm4143, %v4069, 0
    %v5409 = vsel %vm4143, %v4070, 0
    %v5412 = vsel %vm4143, %v4071, 0
    %v5415 = vsel %vm4143, %v4072, 0
    %v5418 = vsel %vm4143, %v4073, 0
    %v5421 = vsel %vm4143, %v4074, 0
    %v5424 = vsel %vm4143, %v4075, 0
    %v5427 = vsel %vm4143, %v4076, 0
    %v5430 = vsel %vm4143, %v4077, 0
    %v5433 = vsel %vm4143, %v4078, 0
    %5435 = vmatpush.msra.mxu0 0.0
    %5436 = vmatpush.msra.mxu0 0.0
    %5437 = vmatpush.msra.mxu0 0.0
    %5438 = vmatpush.msra.mxu0 0.0
    %5439 = vmatpush.msra.mxu0 0.0
    %5440 = vmatpush.msra.mxu0 0.0
    %5441 = vmatpush.msra.mxu0 0.0
    %5442 = vmatpush.msra.mxu0 0.0
    %5443 = vmatpush.msra.mxu0 0.0
    %5444 = vmatpush.msra.mxu0 0.0
    %5445 = vmatpush.msra.mxu0 0.0
    %5446 = vmatpush.msra.mxu0 0.0
    %5447 = vmatpush.msra.mxu0 0.0
    %5448 = vmatpush.msra.mxu0 0.0
    %5449 = vmatpush.msra.mxu0 0.0
    %5450 = vmatpush.msra.mxu0 %v1949
    %5451 = vmatmul.f32.gmra.mxu0 %v5388
    %v5452 = vpop.f32.mrf.mxu0
    %v5453 = vadd.f32 0.0, %v5452
    %5454 = vmatmul.f32.gmra.mxu0 %v5391
    %v5455 = vpop.f32.mrf.mxu0
    %v5456 = vadd.f32 0.0, %v5455
    %5457 = vmatmul.f32.gmra.mxu0 %v5394
    %v5458 = vpop.f32.mrf.mxu0
    %v5459 = vadd.f32 0.0, %v5458
    %5460 = vmatmul.f32.gmra.mxu0 %v5397
    %v5461 = vpop.f32.mrf.mxu0
    %v5462 = vadd.f32 0.0, %v5461
    %5463 = vmatmul.f32.gmra.mxu0 %v5400
    %v5464 = vpop.f32.mrf.mxu0
    %v5465 = vadd.f32 0.0, %v5464
    %5466 = vmatmul.f32.gmra.mxu0 %v5403
    %v5467 = vpop.f32.mrf.mxu0
    %v5468 = vadd.f32 0.0, %v5467
    %5469 = vmatmul.f32.gmra.mxu0 %v5406
    %v5470 = vpop.f32.mrf.mxu0
    %v5471 = vadd.f32 0.0, %v5470
    %5472 = vmatmul.f32.gmra.mxu0 %v5409
    %v5473 = vpop.f32.mrf.mxu0
    %v5474 = vadd.f32 0.0, %v5473
    %5475 = vmatmul.f32.gmra.mxu0 %v5412
    %v5476 = vpop.f32.mrf.mxu0
    %v5477 = vadd.f32 0.0, %v5476
    %5478 = vmatmul.f32.gmra.mxu0 %v5415
    %v5479 = vpop.f32.mrf.mxu0
    %v5480 = vadd.f32 0.0, %v5479
    %5481 = vmatmul.f32.gmra.mxu0 %v5418
    %v5482 = vpop.f32.mrf.mxu0
    %v5483 = vadd.f32 0.0, %v5482
    %5484 = vmatmul.f32.gmra.mxu0 %v5421
    %v5485 = vpop.f32.mrf.mxu0
    %v5486 = vadd.f32 0.0, %v5485
    %5487 = vmatmul.f32.gmra.mxu0 %v5424
    %v5488 = vpop.f32.mrf.mxu0
    %v5489 = vadd.f32 0.0, %v5488
    %5490 = vmatmul.f32.gmra.mxu0 %v5427
    %v5491 = vpop.f32.mrf.mxu0
    %v5492 = vadd.f32 0.0, %v5491
    %5493 = vmatmul.f32.gmra.mxu0 %v5430
    %v5494 = vpop.f32.mrf.mxu0
    %v5495 = vadd.f32 0.0, %v5494
    %5496 = vmatmul.f32.gmra.mxu0 %v5433
    %v5497 = vpop.f32.mrf.mxu0
    %v5498 = vadd.f32 0.0, %v5497
    %5499 = vdwg.mxu0
    %v5501 = vsel %vm4143, %v4079, 0
    %v5504 = vsel %vm4143, %v4080, 0
    %v5507 = vsel %vm4143, %v4081, 0
    %v5510 = vsel %vm4143, %v4082, 0
    %v5513 = vsel %vm4143, %v4083, 0
    %v5516 = vsel %vm4143, %v4084, 0
    %v5519 = vsel %vm4143, %v4085, 0
    %v5522 = vsel %vm4143, %v4086, 0
    %v5525 = vsel %vm4143, %v4087, 0
    %v5528 = vsel %vm4143, %v4088, 0
    %v5531 = vsel %vm4143, %v4089, 0
    %v5534 = vsel %vm4143, %v4090, 0
    %v5537 = vsel %vm4143, %v4091, 0
    %v5540 = vsel %vm4143, %v4092, 0
    %v5543 = vsel %vm4143, %v4093, 0
    %v5546 = vsel %vm4143, %v4094, 0
    %5548 = vmatpush.msra.mxu0 0.0
    %5549 = vmatpush.msra.mxu0 0.0
    %5550 = vmatpush.msra.mxu0 0.0
    %5551 = vmatpush.msra.mxu0 0.0
    %5552 = vmatpush.msra.mxu0 0.0
    %5553 = vmatpush.msra.mxu0 0.0
    %5554 = vmatpush.msra.mxu0 0.0
    %5555 = vmatpush.msra.mxu0 0.0
    %5556 = vmatpush.msra.mxu0 0.0
    %5557 = vmatpush.msra.mxu0 0.0
    %5558 = vmatpush.msra.mxu0 0.0
    %5559 = vmatpush.msra.mxu0 0.0
    %5560 = vmatpush.msra.mxu0 0.0
    %5561 = vmatpush.msra.mxu0 0.0
    %5562 = vmatpush.msra.mxu0 0.0
    %5563 = vmatpush.msra.mxu0 %v1969
    %5564 = vmatmul.f32.gmra.mxu0 %v5501
    %v5565 = vpop.f32.mrf.mxu0
    %v5566 = vadd.f32 0.0, %v5565
    %5567 = vmatmul.f32.gmra.mxu0 %v5504
    %v5568 = vpop.f32.mrf.mxu0
    %v5569 = vadd.f32 0.0, %v5568
    %5570 = vmatmul.f32.gmra.mxu0 %v5507
    %v5571 = vpop.f32.mrf.mxu0
    %v5572 = vadd.f32 0.0, %v5571
    %5573 = vmatmul.f32.gmra.mxu0 %v5510
    %v5574 = vpop.f32.mrf.mxu0
    %v5575 = vadd.f32 0.0, %v5574
    %5576 = vmatmul.f32.gmra.mxu0 %v5513
    %v5577 = vpop.f32.mrf.mxu0
    %v5578 = vadd.f32 0.0, %v5577
    %5579 = vmatmul.f32.gmra.mxu0 %v5516
    %v5580 = vpop.f32.mrf.mxu0
    %v5581 = vadd.f32 0.0, %v5580
    %5582 = vmatmul.f32.gmra.mxu0 %v5519
    %v5583 = vpop.f32.mrf.mxu0
    %v5584 = vadd.f32 0.0, %v5583
    %5585 = vmatmul.f32.gmra.mxu0 %v5522
    %v5586 = vpop.f32.mrf.mxu0
    %v5587 = vadd.f32 0.0, %v5586
    %5588 = vmatmul.f32.gmra.mxu0 %v5525
    %v5589 = vpop.f32.mrf.mxu0
    %v5590 = vadd.f32 0.0, %v5589
    %5591 = vmatmul.f32.gmra.mxu0 %v5528
    %v5592 = vpop.f32.mrf.mxu0
    %v5593 = vadd.f32 0.0, %v5592
    %5594 = vmatmul.f32.gmra.mxu0 %v5531
    %v5595 = vpop.f32.mrf.mxu0
    %v5596 = vadd.f32 0.0, %v5595
    %5597 = vmatmul.f32.gmra.mxu0 %v5534
    %v5598 = vpop.f32.mrf.mxu0
    %v5599 = vadd.f32 0.0, %v5598
    %5600 = vmatmul.f32.gmra.mxu0 %v5537
    %v5601 = vpop.f32.mrf.mxu0
    %v5602 = vadd.f32 0.0, %v5601
    %5603 = vmatmul.f32.gmra.mxu0 %v5540
    %v5604 = vpop.f32.mrf.mxu0
    %v5605 = vadd.f32 0.0, %v5604
    %5606 = vmatmul.f32.gmra.mxu0 %v5543
    %v5607 = vpop.f32.mrf.mxu0
    %v5608 = vadd.f32 0.0, %v5607
    %5609 = vmatmul.f32.gmra.mxu0 %v5546
    %v5610 = vpop.f32.mrf.mxu0
    %v5611 = vadd.f32 0.0, %v5610
    %5612 = vdwg.mxu0
    %v5614 = vsel %vm4143, %v4095, 0
    %v5617 = vsel %vm4143, %v4096, 0
    %v5620 = vsel %vm4143, %v4097, 0
    %v5623 = vsel %vm4143, %v4098, 0
    %v5626 = vsel %vm4143, %v4099, 0
    %v5629 = vsel %vm4143, %v4100, 0
    %v5632 = vsel %vm4143, %v4101, 0
    %v5635 = vsel %vm4143, %v4102, 0
    %v5638 = vsel %vm4143, %v4103, 0
    %v5641 = vsel %vm4143, %v4104, 0
    %v5644 = vsel %vm4143, %v4105, 0
    %v5647 = vsel %vm4143, %v4106, 0
    %v5650 = vsel %vm4143, %v4107, 0
    %v5653 = vsel %vm4143, %v4108, 0
    %v5656 = vsel %vm4143, %v4109, 0
    %v5659 = vsel %vm4143, %v4110, 0
    %5661 = vmatpush.msra.mxu0 0.0
    %5662 = vmatpush.msra.mxu0 0.0
    %5663 = vmatpush.msra.mxu0 0.0
    %5664 = vmatpush.msra.mxu0 0.0
    %5665 = vmatpush.msra.mxu0 0.0
    %5666 = vmatpush.msra.mxu0 0.0
    %5667 = vmatpush.msra.mxu0 0.0
    %5668 = vmatpush.msra.mxu0 0.0
    %5669 = vmatpush.msra.mxu0 0.0
    %5670 = vmatpush.msra.mxu0 0.0
    %5671 = vmatpush.msra.mxu0 0.0
    %5672 = vmatpush.msra.mxu0 0.0
    %5673 = vmatpush.msra.mxu0 0.0
    %5674 = vmatpush.msra.mxu0 0.0
    %5675 = vmatpush.msra.mxu0 0.0
    %5676 = vmatpush.msra.mxu0 %v1989
    %5677 = vmatmul.f32.gmra.mxu0 %v5614
    %v5678 = vpop.f32.mrf.mxu0
    %v5679 = vadd.f32 0.0, %v5678
    %5680 = vmatmul.f32.gmra.mxu0 %v5617
    %v5681 = vpop.f32.mrf.mxu0
    %v5682 = vadd.f32 0.0, %v5681
    %5683 = vmatmul.f32.gmra.mxu0 %v5620
    %v5684 = vpop.f32.mrf.mxu0
    %v5685 = vadd.f32 0.0, %v5684
    %5686 = vmatmul.f32.gmra.mxu0 %v5623
    %v5687 = vpop.f32.mrf.mxu0
    %v5688 = vadd.f32 0.0, %v5687
    %5689 = vmatmul.f32.gmra.mxu0 %v5626
    %v5690 = vpop.f32.mrf.mxu0
    %v5691 = vadd.f32 0.0, %v5690
    %5692 = vmatmul.f32.gmra.mxu0 %v5629
    %v5693 = vpop.f32.mrf.mxu0
    %v5694 = vadd.f32 0.0, %v5693
    %5695 = vmatmul.f32.gmra.mxu0 %v5632
    %v5696 = vpop.f32.mrf.mxu0
    %v5697 = vadd.f32 0.0, %v5696
    %5698 = vmatmul.f32.gmra.mxu0 %v5635
    %v5699 = vpop.f32.mrf.mxu0
    %v5700 = vadd.f32 0.0, %v5699
    %5701 = vmatmul.f32.gmra.mxu0 %v5638
    %v5702 = vpop.f32.mrf.mxu0
    %v5703 = vadd.f32 0.0, %v5702
    %5704 = vmatmul.f32.gmra.mxu0 %v5641
    %v5705 = vpop.f32.mrf.mxu0
    %v5706 = vadd.f32 0.0, %v5705
    %5707 = vmatmul.f32.gmra.mxu0 %v5644
    %v5708 = vpop.f32.mrf.mxu0
    %v5709 = vadd.f32 0.0, %v5708
    %5710 = vmatmul.f32.gmra.mxu0 %v5647
    %v5711 = vpop.f32.mrf.mxu0
    %v5712 = vadd.f32 0.0, %v5711
    %5713 = vmatmul.f32.gmra.mxu0 %v5650
    %v5714 = vpop.f32.mrf.mxu0
    %v5715 = vadd.f32 0.0, %v5714
    %5716 = vmatmul.f32.gmra.mxu0 %v5653
    %v5717 = vpop.f32.mrf.mxu0
    %v5718 = vadd.f32 0.0, %v5717
    %5719 = vmatmul.f32.gmra.mxu0 %v5656
    %v5720 = vpop.f32.mrf.mxu0
    %v5721 = vadd.f32 0.0, %v5720
    %5722 = vmatmul.f32.gmra.mxu0 %v5659
    %v5723 = vpop.f32.mrf.mxu0
    %v5724 = vadd.f32 0.0, %v5723
    %5725 = vdwg.mxu0
    %v5727 = vsel %vm4143, %v4111, 0
    %v5730 = vsel %vm4143, %v4112, 0
    %v5733 = vsel %vm4143, %v4113, 0
    %v5736 = vsel %vm4143, %v4114, 0
    %v5739 = vsel %vm4143, %v4115, 0
    %v5742 = vsel %vm4143, %v4116, 0
    %v5745 = vsel %vm4143, %v4117, 0
    %v5748 = vsel %vm4143, %v4118, 0
    %v5751 = vsel %vm4143, %v4119, 0
    %v5754 = vsel %vm4143, %v4120, 0
    %v5757 = vsel %vm4143, %v4121, 0
    %v5760 = vsel %vm4143, %v4122, 0
    %v5763 = vsel %vm4143, %v4123, 0
    %v5766 = vsel %vm4143, %v4124, 0
    %v5769 = vsel %vm4143, %v4125, 0
    %v5772 = vsel %vm4143, %v4126, 0
    %5774 = vmatpush.msra.mxu0 0.0
    %5775 = vmatpush.msra.mxu0 0.0
    %5776 = vmatpush.msra.mxu0 0.0
    %5777 = vmatpush.msra.mxu0 0.0
    %5778 = vmatpush.msra.mxu0 0.0
    %5779 = vmatpush.msra.mxu0 0.0
    %5780 = vmatpush.msra.mxu0 0.0
    %5781 = vmatpush.msra.mxu0 0.0
    %5782 = vmatpush.msra.mxu0 0.0
    %5783 = vmatpush.msra.mxu0 0.0
    %5784 = vmatpush.msra.mxu0 0.0
    %5785 = vmatpush.msra.mxu0 0.0
    %5786 = vmatpush.msra.mxu0 0.0
    %5787 = vmatpush.msra.mxu0 0.0
    %5788 = vmatpush.msra.mxu0 0.0
    %5789 = vmatpush.msra.mxu0 %v2009
    %5790 = vmatmul.f32.gmra.mxu0 %v5727
    %v5791 = vpop.f32.mrf.mxu0
    %v5792 = vadd.f32 0.0, %v5791
    %5793 = vmatmul.f32.gmra.mxu0 %v5730
    %v5794 = vpop.f32.mrf.mxu0
    %v5795 = vadd.f32 0.0, %v5794
    %5796 = vmatmul.f32.gmra.mxu0 %v5733
    %v5797 = vpop.f32.mrf.mxu0
    %v5798 = vadd.f32 0.0, %v5797
    %5799 = vmatmul.f32.gmra.mxu0 %v5736
    %v5800 = vpop.f32.mrf.mxu0
    %v5801 = vadd.f32 0.0, %v5800
    %5802 = vmatmul.f32.gmra.mxu0 %v5739
    %v5803 = vpop.f32.mrf.mxu0
    %v5804 = vadd.f32 0.0, %v5803
    %5805 = vmatmul.f32.gmra.mxu0 %v5742
    %v5806 = vpop.f32.mrf.mxu0
    %v5807 = vadd.f32 0.0, %v5806
    %5808 = vmatmul.f32.gmra.mxu0 %v5745
    %v5809 = vpop.f32.mrf.mxu0
    %v5810 = vadd.f32 0.0, %v5809
    %5811 = vmatmul.f32.gmra.mxu0 %v5748
    %v5812 = vpop.f32.mrf.mxu0
    %v5813 = vadd.f32 0.0, %v5812
    %5814 = vmatmul.f32.gmra.mxu0 %v5751
    %v5815 = vpop.f32.mrf.mxu0
    %v5816 = vadd.f32 0.0, %v5815
    %5817 = vmatmul.f32.gmra.mxu0 %v5754
    %v5818 = vpop.f32.mrf.mxu0
    %v5819 = vadd.f32 0.0, %v5818
    %5820 = vmatmul.f32.gmra.mxu0 %v5757
    %v5821 = vpop.f32.mrf.mxu0
    %v5822 = vadd.f32 0.0, %v5821
    %5823 = vmatmul.f32.gmra.mxu0 %v5760
    %v5824 = vpop.f32.mrf.mxu0
    %v5825 = vadd.f32 0.0, %v5824
    %5826 = vmatmul.f32.gmra.mxu0 %v5763
    %v5827 = vpop.f32.mrf.mxu0
    %v5828 = vadd.f32 0.0, %v5827
    %5829 = vmatmul.f32.gmra.mxu0 %v5766
    %v5830 = vpop.f32.mrf.mxu0
    %v5831 = vadd.f32 0.0, %v5830
    %5832 = vmatmul.f32.gmra.mxu0 %v5769
    %v5833 = vpop.f32.mrf.mxu0
    %v5834 = vadd.f32 0.0, %v5833
    %5835 = vmatmul.f32.gmra.mxu0 %v5772
    %v5836 = vpop.f32.mrf.mxu0
    %v5837 = vadd.f32 0.0, %v5836
    %5838 = vdwg.mxu0
    %v5840 = vsel %vm4143, %v4127, 0
    %v5843 = vsel %vm4143, %v4128, 0
    %v5846 = vsel %vm4143, %v4129, 0
    %v5849 = vsel %vm4143, %v4130, 0
    %v5852 = vsel %vm4143, %v4131, 0
    %v5855 = vsel %vm4143, %v4132, 0
    %v5858 = vsel %vm4143, %v4133, 0
    %v5861 = vsel %vm4143, %v4134, 0
    %v5864 = vsel %vm4143, %v4135, 0
    %v5867 = vsel %vm4143, %v4136, 0
    %v5870 = vsel %vm4143, %v4137, 0
    %v5873 = vsel %vm4143, %v4138, 0
    %v5876 = vsel %vm4143, %v4139, 0
    %v5879 = vsel %vm4143, %v4140, 0
    %v5882 = vsel %vm4143, %v4141, 0
    %v5885 = vsel %vm4143, %v4142, 0
    %5887 = vmatpush.msra.mxu0 0.0
    %5888 = vmatpush.msra.mxu0 0.0
    %5889 = vmatpush.msra.mxu0 0.0
    %5890 = vmatpush.msra.mxu0 0.0
    %5891 = vmatpush.msra.mxu0 0.0
    %5892 = vmatpush.msra.mxu0 0.0
    %5893 = vmatpush.msra.mxu0 0.0
    %5894 = vmatpush.msra.mxu0 0.0
    %5895 = vmatpush.msra.mxu0 0.0
    %5896 = vmatpush.msra.mxu0 0.0
    %5897 = vmatpush.msra.mxu0 0.0
    %5898 = vmatpush.msra.mxu0 0.0
    %5899 = vmatpush.msra.mxu0 0.0
    %5900 = vmatpush.msra.mxu0 0.0
    %5901 = vmatpush.msra.mxu0 0.0
    %5902 = vmatpush.msra.mxu0 %v2029
    %5903 = vmatmul.f32.gmra.mxu0 %v5840
    %v5904 = vpop.f32.mrf.mxu0
    %v5905 = vadd.f32 0.0, %v5904
    %5906 = vmatmul.f32.gmra.mxu0 %v5843
    %v5907 = vpop.f32.mrf.mxu0
    %v5908 = vadd.f32 0.0, %v5907
    %5909 = vmatmul.f32.gmra.mxu0 %v5846
    %v5910 = vpop.f32.mrf.mxu0
    %v5911 = vadd.f32 0.0, %v5910
    %5912 = vmatmul.f32.gmra.mxu0 %v5849
    %v5913 = vpop.f32.mrf.mxu0
    %v5914 = vadd.f32 0.0, %v5913
    %5915 = vmatmul.f32.gmra.mxu0 %v5852
    %v5916 = vpop.f32.mrf.mxu0
    %v5917 = vadd.f32 0.0, %v5916
    %5918 = vmatmul.f32.gmra.mxu0 %v5855
    %v5919 = vpop.f32.mrf.mxu0
    %v5920 = vadd.f32 0.0, %v5919
    %5921 = vmatmul.f32.gmra.mxu0 %v5858
    %v5922 = vpop.f32.mrf.mxu0
    %v5923 = vadd.f32 0.0, %v5922
    %5924 = vmatmul.f32.gmra.mxu0 %v5861
    %v5925 = vpop.f32.mrf.mxu0
    %v5926 = vadd.f32 0.0, %v5925
    %5927 = vmatmul.f32.gmra.mxu0 %v5864
    %v5928 = vpop.f32.mrf.mxu0
    %v5929 = vadd.f32 0.0, %v5928
    %5930 = vmatmul.f32.gmra.mxu0 %v5867
    %v5931 = vpop.f32.mrf.mxu0
    %v5932 = vadd.f32 0.0, %v5931
    %5933 = vmatmul.f32.gmra.mxu0 %v5870
    %v5934 = vpop.f32.mrf.mxu0
    %v5935 = vadd.f32 0.0, %v5934
    %5936 = vmatmul.f32.gmra.mxu0 %v5873
    %v5937 = vpop.f32.mrf.mxu0
    %v5938 = vadd.f32 0.0, %v5937
    %5939 = vmatmul.f32.gmra.mxu0 %v5876
    %v5940 = vpop.f32.mrf.mxu0
    %v5941 = vadd.f32 0.0, %v5940
    %5942 = vmatmul.f32.gmra.mxu0 %v5879
    %v5943 = vpop.f32.mrf.mxu0
    %v5944 = vadd.f32 0.0, %v5943
    %5945 = vmatmul.f32.gmra.mxu0 %v5882
    %v5946 = vpop.f32.mrf.mxu0
    %v5947 = vadd.f32 0.0, %v5946
    %5948 = vmatmul.f32.gmra.mxu0 %v5885
    %v5949 = vpop.f32.mrf.mxu0
    %v5950 = vadd.f32 0.0, %v5949
    %5951 = vdwg.mxu0
    %v5952 = vld [vmem:[#allocation8] sm:$0xff]
    %v5953 = vld [vmem:[#allocation8 + $0x8] sm:$0xff]
    %v5954 = vld [vmem:[#allocation8 + $0x10] sm:$0xff]
    %v5955 = vld [vmem:[#allocation8 + $0x18] sm:$0xff]
    %v5956 = vld [vmem:[#allocation8 + $0x20] sm:$0xff]
    %v5957 = vld [vmem:[#allocation8 + $0x28] sm:$0xff]
    %v5958 = vld [vmem:[#allocation8 + $0x30] sm:$0xff]
    %v5959 = vld [vmem:[#allocation8 + $0x38] sm:$0xff]
    %v5960 = vld [vmem:[#allocation8 + $0x40] sm:$0xff]
    %v5961 = vld [vmem:[#allocation8 + $0x48] sm:$0xff]
    %v5962 = vld [vmem:[#allocation8 + $0x50] sm:$0xff]
    %v5963 = vld [vmem:[#allocation8 + $0x58] sm:$0xff]
    %v5964 = vld [vmem:[#allocation8 + $0x60] sm:$0xff]
    %v5965 = vld [vmem:[#allocation8 + $0x68] sm:$0xff]
    %v5966 = vld [vmem:[#allocation8 + $0x70] sm:$0xff]
    %v5967 = vld [vmem:[#allocation8 + $0x78] sm:$0xff]
    %v5968 = vld [vmem:[#allocation8 + $0x80] sm:$0xff]
    %v5969 = vld [vmem:[#allocation8 + $0x88] sm:$0xff]
    %v5970 = vld [vmem:[#allocation8 + $0x90] sm:$0xff]
    %v5971 = vld [vmem:[#allocation8 + $0x98] sm:$0xff]
    %v5972 = vld [vmem:[#allocation8 + $0xa0] sm:$0xff]
    %v5973 = vld [vmem:[#allocation8 + $0xa8] sm:$0xff]
    %v5974 = vld [vmem:[#allocation8 + $0xb0] sm:$0xff]
    %v5975 = vld [vmem:[#allocation8 + $0xb8] sm:$0xff]
    %v5976 = vld [vmem:[#allocation8 + $0xc0] sm:$0xff]
    %v5977 = vld [vmem:[#allocation8 + $0xc8] sm:$0xff]
    %v5978 = vld [vmem:[#allocation8 + $0xd0] sm:$0xff]
    %v5979 = vld [vmem:[#allocation8 + $0xd8] sm:$0xff]
    %v5980 = vld [vmem:[#allocation8 + $0xe0] sm:$0xff]
    %v5981 = vld [vmem:[#allocation8 + $0xe8] sm:$0xff]
    %v5982 = vld [vmem:[#allocation8 + $0xf0] sm:$0xff]
    %v5983 = vld [vmem:[#allocation8 + $0xf8] sm:$0xff]
    %v5984 = vld [vmem:[#allocation8 + $0x100] sm:$0xff]
    %v5985 = vld [vmem:[#allocation8 + $0x108] sm:$0xff]
    %v5986 = vld [vmem:[#allocation8 + $0x110] sm:$0xff]
    %v5987 = vld [vmem:[#allocation8 + $0x118] sm:$0xff]
    %v5988 = vld [vmem:[#allocation8 + $0x120] sm:$0xff]
    %v5989 = vld [vmem:[#allocation8 + $0x128] sm:$0xff]
    %v5990 = vld [vmem:[#allocation8 + $0x130] sm:$0xff]
    %v5991 = vld [vmem:[#allocation8 + $0x138] sm:$0xff]
    %v5992 = vld [vmem:[#allocation8 + $0x140] sm:$0xff]
    %v5993 = vld [vmem:[#allocation8 + $0x148] sm:$0xff]
    %v5994 = vld [vmem:[#allocation8 + $0x150] sm:$0xff]
    %v5995 = vld [vmem:[#allocation8 + $0x158] sm:$0xff]
    %v5996 = vld [vmem:[#allocation8 + $0x160] sm:$0xff]
    %v5997 = vld [vmem:[#allocation8 + $0x168] sm:$0xff]
    %v5998 = vld [vmem:[#allocation8 + $0x170] sm:$0xff]
    %v5999 = vld [vmem:[#allocation8 + $0x178] sm:$0xff]
    %v6000 = vld [vmem:[#allocation8 + $0x180] sm:$0xff]
    %v6001 = vld [vmem:[#allocation8 + $0x188] sm:$0xff]
    %v6002 = vld [vmem:[#allocation8 + $0x190] sm:$0xff]
    %v6003 = vld [vmem:[#allocation8 + $0x198] sm:$0xff]
    %v6004 = vld [vmem:[#allocation8 + $0x1a0] sm:$0xff]
    %v6005 = vld [vmem:[#allocation8 + $0x1a8] sm:$0xff]
    %v6006 = vld [vmem:[#allocation8 + $0x1b0] sm:$0xff]
    %v6007 = vld [vmem:[#allocation8 + $0x1b8] sm:$0xff]
    %v6008 = vld [vmem:[#allocation8 + $0x1c0] sm:$0xff]
    %v6009 = vld [vmem:[#allocation8 + $0x1c8] sm:$0xff]
    %v6010 = vld [vmem:[#allocation8 + $0x1d0] sm:$0xff]
    %v6011 = vld [vmem:[#allocation8 + $0x1d8] sm:$0xff]
    %v6012 = vld [vmem:[#allocation8 + $0x1e0] sm:$0xff]
    %v6013 = vld [vmem:[#allocation8 + $0x1e8] sm:$0xff]
    %v6014 = vld [vmem:[#allocation8 + $0x1f0] sm:$0xff]
    %v6015 = vld [vmem:[#allocation8 + $0x1f8] sm:$0xff]
    %v6017 = vsel %vm171, %v4210, 0
    %v6020 = vsel %vm171, %v4213, 0
    %v6023 = vsel %vm171, %v4216, 0
    %v6026 = vsel %vm171, %v4219, 0
    %v6029 = vsel %vm171, %v4222, 0
    %v6032 = vsel %vm171, %v4225, 0
    %v6035 = vsel %vm171, %v4228, 0
    %v6038 = vsel %vm171, %v4231, 0
    %v6041 = vsel %vm171, %v4234, 0
    %v6044 = vsel %vm171, %v4237, 0
    %v6047 = vsel %vm171, %v4240, 0
    %v6050 = vsel %vm171, %v4243, 0
    %v6053 = vsel %vm171, %v4246, 0
    %v6056 = vsel %vm171, %v4249, 0
    %v6059 = vsel %vm171, %v4252, 0
    %v6062 = vsel %vm171, %v4255, 0
    %6064 = vmatpush.msra.mxu0 0.0
    %6065 = vmatpush.msra.mxu0 0.0
    %6066 = vmatpush.msra.mxu0 0.0
    %6067 = vmatpush.msra.mxu0 0.0
    %6068 = vmatpush.msra.mxu0 0.0
    %6069 = vmatpush.msra.mxu0 0.0
    %6070 = vmatpush.msra.mxu0 0.0
    %6071 = vmatpush.msra.mxu0 0.0
    %6072 = vmatpush.msra.mxu0 0.0
    %6073 = vmatpush.msra.mxu0 0.0
    %6074 = vmatpush.msra.mxu0 0.0
    %6075 = vmatpush.msra.mxu0 0.0
    %6076 = vmatpush.msra.mxu0 %v5955
    %6077 = vmatpush.msra.mxu0 %v5954
    %6078 = vmatpush.msra.mxu0 %v5953
    %6079 = vmatpush.msra.mxu0 %v5952
    %6080 = vmatmul.f32.gmra.mxu0 %v6017
    %v6081 = vpop.f32.mrf.mxu0
    %v6082 = vadd.f32 0.0, %v6081
    %6083 = vmatmul.f32.gmra.mxu0 %v6020
    %v6084 = vpop.f32.mrf.mxu0
    %v6085 = vadd.f32 0.0, %v6084
    %6086 = vmatmul.f32.gmra.mxu0 %v6023
    %v6087 = vpop.f32.mrf.mxu0
    %v6088 = vadd.f32 0.0, %v6087
    %6089 = vmatmul.f32.gmra.mxu0 %v6026
    %v6090 = vpop.f32.mrf.mxu0
    %v6091 = vadd.f32 0.0, %v6090
    %6092 = vmatmul.f32.gmra.mxu0 %v6029
    %v6093 = vpop.f32.mrf.mxu0
    %v6094 = vadd.f32 0.0, %v6093
    %6095 = vmatmul.f32.gmra.mxu0 %v6032
    %v6096 = vpop.f32.mrf.mxu0
    %v6097 = vadd.f32 0.0, %v6096
    %6098 = vmatmul.f32.gmra.mxu0 %v6035
    %v6099 = vpop.f32.mrf.mxu0
    %v6100 = vadd.f32 0.0, %v6099
    %6101 = vmatmul.f32.gmra.mxu0 %v6038
    %v6102 = vpop.f32.mrf.mxu0
    %v6103 = vadd.f32 0.0, %v6102
    %6104 = vmatmul.f32.gmra.mxu0 %v6041
    %v6105 = vpop.f32.mrf.mxu0
    %v6106 = vadd.f32 0.0, %v6105
    %6107 = vmatmul.f32.gmra.mxu0 %v6044
    %v6108 = vpop.f32.mrf.mxu0
    %v6109 = vadd.f32 0.0, %v6108
    %6110 = vmatmul.f32.gmra.mxu0 %v6047
    %v6111 = vpop.f32.mrf.mxu0
    %v6112 = vadd.f32 0.0, %v6111
    %6113 = vmatmul.f32.gmra.mxu0 %v6050
    %v6114 = vpop.f32.mrf.mxu0
    %v6115 = vadd.f32 0.0, %v6114
    %6116 = vmatmul.f32.gmra.mxu0 %v6053
    %v6117 = vpop.f32.mrf.mxu0
    %v6118 = vadd.f32 0.0, %v6117
    %6119 = vmatmul.f32.gmra.mxu0 %v6056
    %v6120 = vpop.f32.mrf.mxu0
    %v6121 = vadd.f32 0.0, %v6120
    %6122 = vmatmul.f32.gmra.mxu0 %v6059
    %v6123 = vpop.f32.mrf.mxu0
    %v6124 = vadd.f32 0.0, %v6123
    %6125 = vmatmul.f32.gmra.mxu0 %v6062
    %v6126 = vpop.f32.mrf.mxu0
    %v6127 = vadd.f32 0.0, %v6126
    %6128 = vdwg.mxu0
    %v6130 = vsel %vm171, %v4323, 0
    %v6133 = vsel %vm171, %v4326, 0
    %v6136 = vsel %vm171, %v4329, 0
    %v6139 = vsel %vm171, %v4332, 0
    %v6142 = vsel %vm171, %v4335, 0
    %v6145 = vsel %vm171, %v4338, 0
    %v6148 = vsel %vm171, %v4341, 0
    %v6151 = vsel %vm171, %v4344, 0
    %v6154 = vsel %vm171, %v4347, 0
    %v6157 = vsel %vm171, %v4350, 0
    %v6160 = vsel %vm171, %v4353, 0
    %v6163 = vsel %vm171, %v4356, 0
    %v6166 = vsel %vm171, %v4359, 0
    %v6169 = vsel %vm171, %v4362, 0
    %v6172 = vsel %vm171, %v4365, 0
    %v6175 = vsel %vm171, %v4368, 0
    %6177 = vmatpush.msra.mxu0 0.0
    %6178 = vmatpush.msra.mxu0 0.0
    %6179 = vmatpush.msra.mxu0 0.0
    %6180 = vmatpush.msra.mxu0 0.0
    %6181 = vmatpush.msra.mxu0 0.0
    %6182 = vmatpush.msra.mxu0 0.0
    %6183 = vmatpush.msra.mxu0 0.0
    %6184 = vmatpush.msra.mxu0 0.0
    %6185 = vmatpush.msra.mxu0 0.0
    %6186 = vmatpush.msra.mxu0 0.0
    %6187 = vmatpush.msra.mxu0 0.0
    %6188 = vmatpush.msra.mxu0 0.0
    %6189 = vmatpush.msra.mxu0 %v5959
    %6190 = vmatpush.msra.mxu0 %v5958
    %6191 = vmatpush.msra.mxu0 %v5957
    %6192 = vmatpush.msra.mxu0 %v5956
    %6193 = vmatmul.f32.gmra.mxu0 %v6130
    %v6194 = vpop.f32.mrf.mxu0
    %v6195 = vadd.f32 0.0, %v6194
    %6196 = vmatmul.f32.gmra.mxu0 %v6133
    %v6197 = vpop.f32.mrf.mxu0
    %v6198 = vadd.f32 0.0, %v6197
    %6199 = vmatmul.f32.gmra.mxu0 %v6136
    %v6200 = vpop.f32.mrf.mxu0
    %v6201 = vadd.f32 0.0, %v6200
    %6202 = vmatmul.f32.gmra.mxu0 %v6139
    %v6203 = vpop.f32.mrf.mxu0
    %v6204 = vadd.f32 0.0, %v6203
    %6205 = vmatmul.f32.gmra.mxu0 %v6142
    %v6206 = vpop.f32.mrf.mxu0
    %v6207 = vadd.f32 0.0, %v6206
    %6208 = vmatmul.f32.gmra.mxu0 %v6145
    %v6209 = vpop.f32.mrf.mxu0
    %v6210 = vadd.f32 0.0, %v6209
    %6211 = vmatmul.f32.gmra.mxu0 %v6148
    %v6212 = vpop.f32.mrf.mxu0
    %v6213 = vadd.f32 0.0, %v6212
    %6214 = vmatmul.f32.gmra.mxu0 %v6151
    %v6215 = vpop.f32.mrf.mxu0
    %v6216 = vadd.f32 0.0, %v6215
    %6217 = vmatmul.f32.gmra.mxu0 %v6154
    %v6218 = vpop.f32.mrf.mxu0
    %v6219 = vadd.f32 0.0, %v6218
    %6220 = vmatmul.f32.gmra.mxu0 %v6157
    %v6221 = vpop.f32.mrf.mxu0
    %v6222 = vadd.f32 0.0, %v6221
    %6223 = vmatmul.f32.gmra.mxu0 %v6160
    %v6224 = vpop.f32.mrf.mxu0
    %v6225 = vadd.f32 0.0, %v6224
    %6226 = vmatmul.f32.gmra.mxu0 %v6163
    %v6227 = vpop.f32.mrf.mxu0
    %v6228 = vadd.f32 0.0, %v6227
    %6229 = vmatmul.f32.gmra.mxu0 %v6166
    %v6230 = vpop.f32.mrf.mxu0
    %v6231 = vadd.f32 0.0, %v6230
    %6232 = vmatmul.f32.gmra.mxu0 %v6169
    %v6233 = vpop.f32.mrf.mxu0
    %v6234 = vadd.f32 0.0, %v6233
    %6235 = vmatmul.f32.gmra.mxu0 %v6172
    %v6236 = vpop.f32.mrf.mxu0
    %v6237 = vadd.f32 0.0, %v6236
    %6238 = vmatmul.f32.gmra.mxu0 %v6175
    %v6239 = vpop.f32.mrf.mxu0
    %v6240 = vadd.f32 0.0, %v6239
    %6241 = vdwg.mxu0
    %v6243 = vsel %vm171, %v4436, 0
    %v6246 = vsel %vm171, %v4439, 0
    %v6249 = vsel %vm171, %v4442, 0
    %v6252 = vsel %vm171, %v4445, 0
    %v6255 = vsel %vm171, %v4448, 0
    %v6258 = vsel %vm171, %v4451, 0
    %v6261 = vsel %vm171, %v4454, 0
    %v6264 = vsel %vm171, %v4457, 0
    %v6267 = vsel %vm171, %v4460, 0
    %v6270 = vsel %vm171, %v4463, 0
    %v6273 = vsel %vm171, %v4466, 0
    %v6276 = vsel %vm171, %v4469, 0
    %v6279 = vsel %vm171, %v4472, 0
    %v6282 = vsel %vm171, %v4475, 0
    %v6285 = vsel %vm171, %v4478, 0
    %v6288 = vsel %vm171, %v4481, 0
    %6290 = vmatpush.msra.mxu0 0.0
    %6291 = vmatpush.msra.mxu0 0.0
    %6292 = vmatpush.msra.mxu0 0.0
    %6293 = vmatpush.msra.mxu0 0.0
    %6294 = vmatpush.msra.mxu0 0.0
    %6295 = vmatpush.msra.mxu0 0.0
    %6296 = vmatpush.msra.mxu0 0.0
    %6297 = vmatpush.msra.mxu0 0.0
    %6298 = vmatpush.msra.mxu0 0.0
    %6299 = vmatpush.msra.mxu0 0.0
    %6300 = vmatpush.msra.mxu0 0.0
    %6301 = vmatpush.msra.mxu0 0.0
    %6302 = vmatpush.msra.mxu0 %v5963
    %6303 = vmatpush.msra.mxu0 %v5962
    %6304 = vmatpush.msra.mxu0 %v5961
    %6305 = vmatpush.msra.mxu0 %v5960
    %6306 = vmatmul.f32.gmra.mxu0 %v6243
    %v6307 = vpop.f32.mrf.mxu0
    %v6308 = vadd.f32 0.0, %v6307
    %6309 = vmatmul.f32.gmra.mxu0 %v6246
    %v6310 = vpop.f32.mrf.mxu0
    %v6311 = vadd.f32 0.0, %v6310
    %6312 = vmatmul.f32.gmra.mxu0 %v6249
    %v6313 = vpop.f32.mrf.mxu0
    %v6314 = vadd.f32 0.0, %v6313
    %6315 = vmatmul.f32.gmra.mxu0 %v6252
    %v6316 = vpop.f32.mrf.mxu0
    %v6317 = vadd.f32 0.0, %v6316
    %6318 = vmatmul.f32.gmra.mxu0 %v6255
    %v6319 = vpop.f32.mrf.mxu0
    %v6320 = vadd.f32 0.0, %v6319
    %6321 = vmatmul.f32.gmra.mxu0 %v6258
    %v6322 = vpop.f32.mrf.mxu0
    %v6323 = vadd.f32 0.0, %v6322
    %6324 = vmatmul.f32.gmra.mxu0 %v6261
    %v6325 = vpop.f32.mrf.mxu0
    %v6326 = vadd.f32 0.0, %v6325
    %6327 = vmatmul.f32.gmra.mxu0 %v6264
    %v6328 = vpop.f32.mrf.mxu0
    %v6329 = vadd.f32 0.0, %v6328
    %6330 = vmatmul.f32.gmra.mxu0 %v6267
    %v6331 = vpop.f32.mrf.mxu0
    %v6332 = vadd.f32 0.0, %v6331
    %6333 = vmatmul.f32.gmra.mxu0 %v6270
    %v6334 = vpop.f32.mrf.mxu0
    %v6335 = vadd.f32 0.0, %v6334
    %6336 = vmatmul.f32.gmra.mxu0 %v6273
    %v6337 = vpop.f32.mrf.mxu0
    %v6338 = vadd.f32 0.0, %v6337
    %6339 = vmatmul.f32.gmra.mxu0 %v6276
    %v6340 = vpop.f32.mrf.mxu0
    %v6341 = vadd.f32 0.0, %v6340
    %6342 = vmatmul.f32.gmra.mxu0 %v6279
    %v6343 = vpop.f32.mrf.mxu0
    %v6344 = vadd.f32 0.0, %v6343
    %6345 = vmatmul.f32.gmra.mxu0 %v6282
    %v6346 = vpop.f32.mrf.mxu0
    %v6347 = vadd.f32 0.0, %v6346
    %6348 = vmatmul.f32.gmra.mxu0 %v6285
    %v6349 = vpop.f32.mrf.mxu0
    %v6350 = vadd.f32 0.0, %v6349
    %6351 = vmatmul.f32.gmra.mxu0 %v6288
    %v6352 = vpop.f32.mrf.mxu0
    %v6353 = vadd.f32 0.0, %v6352
    %6354 = vdwg.mxu0
    %v6356 = vsel %vm171, %v4549, 0
    %v6359 = vsel %vm171, %v4552, 0
    %v6362 = vsel %vm171, %v4555, 0
    %v6365 = vsel %vm171, %v4558, 0
    %v6368 = vsel %vm171, %v4561, 0
    %v6371 = vsel %vm171, %v4564, 0
    %v6374 = vsel %vm171, %v4567, 0
    %v6377 = vsel %vm171, %v4570, 0
    %v6380 = vsel %vm171, %v4573, 0
    %v6383 = vsel %vm171, %v4576, 0
    %v6386 = vsel %vm171, %v4579, 0
    %v6389 = vsel %vm171, %v4582, 0
    %v6392 = vsel %vm171, %v4585, 0
    %v6395 = vsel %vm171, %v4588, 0
    %v6398 = vsel %vm171, %v4591, 0
    %v6401 = vsel %vm171, %v4594, 0
    %6403 = vmatpush.msra.mxu0 0.0
    %6404 = vmatpush.msra.mxu0 0.0
    %6405 = vmatpush.msra.mxu0 0.0
    %6406 = vmatpush.msra.mxu0 0.0
    %6407 = vmatpush.msra.mxu0 0.0
    %6408 = vmatpush.msra.mxu0 0.0
    %6409 = vmatpush.msra.mxu0 0.0
    %6410 = vmatpush.msra.mxu0 0.0
    %6411 = vmatpush.msra.mxu0 0.0
    %6412 = vmatpush.msra.mxu0 0.0
    %6413 = vmatpush.msra.mxu0 0.0
    %6414 = vmatpush.msra.mxu0 0.0
    %6415 = vmatpush.msra.mxu0 %v5967
    %6416 = vmatpush.msra.mxu0 %v5966
    %6417 = vmatpush.msra.mxu0 %v5965
    %6418 = vmatpush.msra.mxu0 %v5964
    %6419 = vmatmul.f32.gmra.mxu0 %v6356
    %v6420 = vpop.f32.mrf.mxu0
    %v6421 = vadd.f32 0.0, %v6420
    %6422 = vmatmul.f32.gmra.mxu0 %v6359
    %v6423 = vpop.f32.mrf.mxu0
    %v6424 = vadd.f32 0.0, %v6423
    %6425 = vmatmul.f32.gmra.mxu0 %v6362
    %v6426 = vpop.f32.mrf.mxu0
    %v6427 = vadd.f32 0.0, %v6426
    %6428 = vmatmul.f32.gmra.mxu0 %v6365
    %v6429 = vpop.f32.mrf.mxu0
    %v6430 = vadd.f32 0.0, %v6429
    %6431 = vmatmul.f32.gmra.mxu0 %v6368
    %v6432 = vpop.f32.mrf.mxu0
    %v6433 = vadd.f32 0.0, %v6432
    %6434 = vmatmul.f32.gmra.mxu0 %v6371
    %v6435 = vpop.f32.mrf.mxu0
    %v6436 = vadd.f32 0.0, %v6435
    %6437 = vmatmul.f32.gmra.mxu0 %v6374
    %v6438 = vpop.f32.mrf.mxu0
    %v6439 = vadd.f32 0.0, %v6438
    %6440 = vmatmul.f32.gmra.mxu0 %v6377
    %v6441 = vpop.f32.mrf.mxu0
    %v6442 = vadd.f32 0.0, %v6441
    %6443 = vmatmul.f32.gmra.mxu0 %v6380
    %v6444 = vpop.f32.mrf.mxu0
    %v6445 = vadd.f32 0.0, %v6444
    %6446 = vmatmul.f32.gmra.mxu0 %v6383
    %v6447 = vpop.f32.mrf.mxu0
    %v6448 = vadd.f32 0.0, %v6447
    %6449 = vmatmul.f32.gmra.mxu0 %v6386
    %v6450 = vpop.f32.mrf.mxu0
    %v6451 = vadd.f32 0.0, %v6450
    %6452 = vmatmul.f32.gmra.mxu0 %v6389
    %v6453 = vpop.f32.mrf.mxu0
    %v6454 = vadd.f32 0.0, %v6453
    %6455 = vmatmul.f32.gmra.mxu0 %v6392
    %v6456 = vpop.f32.mrf.mxu0
    %v6457 = vadd.f32 0.0, %v6456
    %6458 = vmatmul.f32.gmra.mxu0 %v6395
    %v6459 = vpop.f32.mrf.mxu0
    %v6460 = vadd.f32 0.0, %v6459
    %6461 = vmatmul.f32.gmra.mxu0 %v6398
    %v6462 = vpop.f32.mrf.mxu0
    %v6463 = vadd.f32 0.0, %v6462
    %6464 = vmatmul.f32.gmra.mxu0 %v6401
    %v6465 = vpop.f32.mrf.mxu0
    %v6466 = vadd.f32 0.0, %v6465
    %6467 = vdwg.mxu0
    %v6469 = vsel %vm171, %v4662, 0
    %v6472 = vsel %vm171, %v4665, 0
    %v6475 = vsel %vm171, %v4668, 0
    %v6478 = vsel %vm171, %v4671, 0
    %v6481 = vsel %vm171, %v4674, 0
    %v6484 = vsel %vm171, %v4677, 0
    %v6487 = vsel %vm171, %v4680, 0
    %v6490 = vsel %vm171, %v4683, 0
    %v6493 = vsel %vm171, %v4686, 0
    %v6496 = vsel %vm171, %v4689, 0
    %v6499 = vsel %vm171, %v4692, 0
    %v6502 = vsel %vm171, %v4695, 0
    %v6505 = vsel %vm171, %v4698, 0
    %v6508 = vsel %vm171, %v4701, 0
    %v6511 = vsel %vm171, %v4704, 0
    %v6514 = vsel %vm171, %v4707, 0
    %6516 = vmatpush.msra.mxu0 0.0
    %6517 = vmatpush.msra.mxu0 0.0
    %6518 = vmatpush.msra.mxu0 0.0
    %6519 = vmatpush.msra.mxu0 0.0
    %6520 = vmatpush.msra.mxu0 0.0
    %6521 = vmatpush.msra.mxu0 0.0
    %6522 = vmatpush.msra.mxu0 0.0
    %6523 = vmatpush.msra.mxu0 0.0
    %6524 = vmatpush.msra.mxu0 0.0
    %6525 = vmatpush.msra.mxu0 0.0
    %6526 = vmatpush.msra.mxu0 0.0
    %6527 = vmatpush.msra.mxu0 0.0
    %6528 = vmatpush.msra.mxu0 %v5971
    %6529 = vmatpush.msra.mxu0 %v5970
    %6530 = vmatpush.msra.mxu0 %v5969
    %6531 = vmatpush.msra.mxu0 %v5968
    %6532 = vmatmul.f32.gmra.mxu0 %v6469
    %v6533 = vpop.f32.mrf.mxu0
    %v6534 = vadd.f32 0.0, %v6533
    %6535 = vmatmul.f32.gmra.mxu0 %v6472
    %v6536 = vpop.f32.mrf.mxu0
    %v6537 = vadd.f32 0.0, %v6536
    %6538 = vmatmul.f32.gmra.mxu0 %v6475
    %v6539 = vpop.f32.mrf.mxu0
    %v6540 = vadd.f32 0.0, %v6539
    %6541 = vmatmul.f32.gmra.mxu0 %v6478
    %v6542 = vpop.f32.mrf.mxu0
    %v6543 = vadd.f32 0.0, %v6542
    %6544 = vmatmul.f32.gmra.mxu0 %v6481
    %v6545 = vpop.f32.mrf.mxu0
    %v6546 = vadd.f32 0.0, %v6545
    %6547 = vmatmul.f32.gmra.mxu0 %v6484
    %v6548 = vpop.f32.mrf.mxu0
    %v6549 = vadd.f32 0.0, %v6548
    %6550 = vmatmul.f32.gmra.mxu0 %v6487
    %v6551 = vpop.f32.mrf.mxu0
    %v6552 = vadd.f32 0.0, %v6551
    %6553 = vmatmul.f32.gmra.mxu0 %v6490
    %v6554 = vpop.f32.mrf.mxu0
    %v6555 = vadd.f32 0.0, %v6554
    %6556 = vmatmul.f32.gmra.mxu0 %v6493
    %v6557 = vpop.f32.mrf.mxu0
    %v6558 = vadd.f32 0.0, %v6557
    %6559 = vmatmul.f32.gmra.mxu0 %v6496
    %v6560 = vpop.f32.mrf.mxu0
    %v6561 = vadd.f32 0.0, %v6560
    %6562 = vmatmul.f32.gmra.mxu0 %v6499
    %v6563 = vpop.f32.mrf.mxu0
    %v6564 = vadd.f32 0.0, %v6563
    %6565 = vmatmul.f32.gmra.mxu0 %v6502
    %v6566 = vpop.f32.mrf.mxu0
    %v6567 = vadd.f32 0.0, %v6566
    %6568 = vmatmul.f32.gmra.mxu0 %v6505
    %v6569 = vpop.f32.mrf.mxu0
    %v6570 = vadd.f32 0.0, %v6569
    %6571 = vmatmul.f32.gmra.mxu0 %v6508
    %v6572 = vpop.f32.mrf.mxu0
    %v6573 = vadd.f32 0.0, %v6572
    %6574 = vmatmul.f32.gmra.mxu0 %v6511
    %v6575 = vpop.f32.mrf.mxu0
    %v6576 = vadd.f32 0.0, %v6575
    %6577 = vmatmul.f32.gmra.mxu0 %v6514
    %v6578 = vpop.f32.mrf.mxu0
    %v6579 = vadd.f32 0.0, %v6578
    %6580 = vdwg.mxu0
    %v6582 = vsel %vm171, %v4775, 0
    %v6585 = vsel %vm171, %v4778, 0
    %v6588 = vsel %vm171, %v4781, 0
    %v6591 = vsel %vm171, %v4784, 0
    %v6594 = vsel %vm171, %v4787, 0
    %v6597 = vsel %vm171, %v4790, 0
    %v6600 = vsel %vm171, %v4793, 0
    %v6603 = vsel %vm171, %v4796, 0
    %v6606 = vsel %vm171, %v4799, 0
    %v6609 = vsel %vm171, %v4802, 0
    %v6612 = vsel %vm171, %v4805, 0
    %v6615 = vsel %vm171, %v4808, 0
    %v6618 = vsel %vm171, %v4811, 0
    %v6621 = vsel %vm171, %v4814, 0
    %v6624 = vsel %vm171, %v4817, 0
    %v6627 = vsel %vm171, %v4820, 0
    %6629 = vmatpush.msra.mxu0 0.0
    %6630 = vmatpush.msra.mxu0 0.0
    %6631 = vmatpush.msra.mxu0 0.0
    %6632 = vmatpush.msra.mxu0 0.0
    %6633 = vmatpush.msra.mxu0 0.0
    %6634 = vmatpush.msra.mxu0 0.0
    %6635 = vmatpush.msra.mxu0 0.0
    %6636 = vmatpush.msra.mxu0 0.0
    %6637 = vmatpush.msra.mxu0 0.0
    %6638 = vmatpush.msra.mxu0 0.0
    %6639 = vmatpush.msra.mxu0 0.0
    %6640 = vmatpush.msra.mxu0 0.0
    %6641 = vmatpush.msra.mxu0 %v5975
    %6642 = vmatpush.msra.mxu0 %v5974
    %6643 = vmatpush.msra.mxu0 %v5973
    %6644 = vmatpush.msra.mxu0 %v5972
    %6645 = vmatmul.f32.gmra.mxu0 %v6582
    %v6646 = vpop.f32.mrf.mxu0
    %v6647 = vadd.f32 0.0, %v6646
    %6648 = vmatmul.f32.gmra.mxu0 %v6585
    %v6649 = vpop.f32.mrf.mxu0
    %v6650 = vadd.f32 0.0, %v6649
    %6651 = vmatmul.f32.gmra.mxu0 %v6588
    %v6652 = vpop.f32.mrf.mxu0
    %v6653 = vadd.f32 0.0, %v6652
    %6654 = vmatmul.f32.gmra.mxu0 %v6591
    %v6655 = vpop.f32.mrf.mxu0
    %v6656 = vadd.f32 0.0, %v6655
    %6657 = vmatmul.f32.gmra.mxu0 %v6594
    %v6658 = vpop.f32.mrf.mxu0
    %v6659 = vadd.f32 0.0, %v6658
    %6660 = vmatmul.f32.gmra.mxu0 %v6597
    %v6661 = vpop.f32.mrf.mxu0
    %v6662 = vadd.f32 0.0, %v6661
    %6663 = vmatmul.f32.gmra.mxu0 %v6600
    %v6664 = vpop.f32.mrf.mxu0
    %v6665 = vadd.f32 0.0, %v6664
    %6666 = vmatmul.f32.gmra.mxu0 %v6603
    %v6667 = vpop.f32.mrf.mxu0
    %v6668 = vadd.f32 0.0, %v6667
    %6669 = vmatmul.f32.gmra.mxu0 %v6606
    %v6670 = vpop.f32.mrf.mxu0
    %v6671 = vadd.f32 0.0, %v6670
    %6672 = vmatmul.f32.gmra.mxu0 %v6609
    %v6673 = vpop.f32.mrf.mxu0
    %v6674 = vadd.f32 0.0, %v6673
    %6675 = vmatmul.f32.gmra.mxu0 %v6612
    %v6676 = vpop.f32.mrf.mxu0
    %v6677 = vadd.f32 0.0, %v6676
    %6678 = vmatmul.f32.gmra.mxu0 %v6615
    %v6679 = vpop.f32.mrf.mxu0
    %v6680 = vadd.f32 0.0, %v6679
    %6681 = vmatmul.f32.gmra.mxu0 %v6618
    %v6682 = vpop.f32.mrf.mxu0
    %v6683 = vadd.f32 0.0, %v6682
    %6684 = vmatmul.f32.gmra.mxu0 %v6621
    %v6685 = vpop.f32.mrf.mxu0
    %v6686 = vadd.f32 0.0, %v6685
    %6687 = vmatmul.f32.gmra.mxu0 %v6624
    %v6688 = vpop.f32.mrf.mxu0
    %v6689 = vadd.f32 0.0, %v6688
    %6690 = vmatmul.f32.gmra.mxu0 %v6627
    %v6691 = vpop.f32.mrf.mxu0
    %v6692 = vadd.f32 0.0, %v6691
    %6693 = vdwg.mxu0
    %v6695 = vsel %vm171, %v4888, 0
    %v6698 = vsel %vm171, %v4891, 0
    %v6701 = vsel %vm171, %v4894, 0
    %v6704 = vsel %vm171, %v4897, 0
    %v6707 = vsel %vm171, %v4900, 0
    %v6710 = vsel %vm171, %v4903, 0
    %v6713 = vsel %vm171, %v4906, 0
    %v6716 = vsel %vm171, %v4909, 0
    %v6719 = vsel %vm171, %v4912, 0
    %v6722 = vsel %vm171, %v4915, 0
    %v6725 = vsel %vm171, %v4918, 0
    %v6728 = vsel %vm171, %v4921, 0
    %v6731 = vsel %vm171, %v4924, 0
    %v6734 = vsel %vm171, %v4927, 0
    %v6737 = vsel %vm171, %v4930, 0
    %v6740 = vsel %vm171, %v4933, 0
    %6742 = vmatpush.msra.mxu0 0.0
    %6743 = vmatpush.msra.mxu0 0.0
    %6744 = vmatpush.msra.mxu0 0.0
    %6745 = vmatpush.msra.mxu0 0.0
    %6746 = vmatpush.msra.mxu0 0.0
    %6747 = vmatpush.msra.mxu0 0.0
    %6748 = vmatpush.msra.mxu0 0.0
    %6749 = vmatpush.msra.mxu0 0.0
    %6750 = vmatpush.msra.mxu0 0.0
    %6751 = vmatpush.msra.mxu0 0.0
    %6752 = vmatpush.msra.mxu0 0.0
    %6753 = vmatpush.msra.mxu0 0.0
    %6754 = vmatpush.msra.mxu0 %v5979
    %6755 = vmatpush.msra.mxu0 %v5978
    %6756 = vmatpush.msra.mxu0 %v5977
    %6757 = vmatpush.msra.mxu0 %v5976
    %6758 = vmatmul.f32.gmra.mxu0 %v6695
    %v6759 = vpop.f32.mrf.mxu0
    %v6760 = vadd.f32 0.0, %v6759
    %6761 = vmatmul.f32.gmra.mxu0 %v6698
    %v6762 = vpop.f32.mrf.mxu0
    %v6763 = vadd.f32 0.0, %v6762
    %6764 = vmatmul.f32.gmra.mxu0 %v6701
    %v6765 = vpop.f32.mrf.mxu0
    %v6766 = vadd.f32 0.0, %v6765
    %6767 = vmatmul.f32.gmra.mxu0 %v6704
    %v6768 = vpop.f32.mrf.mxu0
    %v6769 = vadd.f32 0.0, %v6768
    %6770 = vmatmul.f32.gmra.mxu0 %v6707
    %v6771 = vpop.f32.mrf.mxu0
    %v6772 = vadd.f32 0.0, %v6771
    %6773 = vmatmul.f32.gmra.mxu0 %v6710
    %v6774 = vpop.f32.mrf.mxu0
    %v6775 = vadd.f32 0.0, %v6774
    %6776 = vmatmul.f32.gmra.mxu0 %v6713
    %v6777 = vpop.f32.mrf.mxu0
    %v6778 = vadd.f32 0.0, %v6777
    %6779 = vmatmul.f32.gmra.mxu0 %v6716
    %v6780 = vpop.f32.mrf.mxu0
    %v6781 = vadd.f32 0.0, %v6780
    %6782 = vmatmul.f32.gmra.mxu0 %v6719
    %v6783 = vpop.f32.mrf.mxu0
    %v6784 = vadd.f32 0.0, %v6783
    %6785 = vmatmul.f32.gmra.mxu0 %v6722
    %v6786 = vpop.f32.mrf.mxu0
    %v6787 = vadd.f32 0.0, %v6786
    %6788 = vmatmul.f32.gmra.mxu0 %v6725
    %v6789 = vpop.f32.mrf.mxu0
    %v6790 = vadd.f32 0.0, %v6789
    %6791 = vmatmul.f32.gmra.mxu0 %v6728
    %v6792 = vpop.f32.mrf.mxu0
    %v6793 = vadd.f32 0.0, %v6792
    %6794 = vmatmul.f32.gmra.mxu0 %v6731
    %v6795 = vpop.f32.mrf.mxu0
    %v6796 = vadd.f32 0.0, %v6795
    %6797 = vmatmul.f32.gmra.mxu0 %v6734
    %v6798 = vpop.f32.mrf.mxu0
    %v6799 = vadd.f32 0.0, %v6798
    %6800 = vmatmul.f32.gmra.mxu0 %v6737
    %v6801 = vpop.f32.mrf.mxu0
    %v6802 = vadd.f32 0.0, %v6801
    %6803 = vmatmul.f32.gmra.mxu0 %v6740
    %v6804 = vpop.f32.mrf.mxu0
    %v6805 = vadd.f32 0.0, %v6804
    %6806 = vdwg.mxu0
    %v6808 = vsel %vm171, %v5001, 0
    %v6811 = vsel %vm171, %v5004, 0
    %v6814 = vsel %vm171, %v5007, 0
    %v6817 = vsel %vm171, %v5010, 0
    %v6820 = vsel %vm171, %v5013, 0
    %v6823 = vsel %vm171, %v5016, 0
    %v6826 = vsel %vm171, %v5019, 0
    %v6829 = vsel %vm171, %v5022, 0
    %v6832 = vsel %vm171, %v5025, 0
    %v6835 = vsel %vm171, %v5028, 0
    %v6838 = vsel %vm171, %v5031, 0
    %v6841 = vsel %vm171, %v5034, 0
    %v6844 = vsel %vm171, %v5037, 0
    %v6847 = vsel %vm171, %v5040, 0
    %v6850 = vsel %vm171, %v5043, 0
    %v6853 = vsel %vm171, %v5046, 0
    %6855 = vmatpush.msra.mxu0 0.0
    %6856 = vmatpush.msra.mxu0 0.0
    %6857 = vmatpush.msra.mxu0 0.0
    %6858 = vmatpush.msra.mxu0 0.0
    %6859 = vmatpush.msra.mxu0 0.0
    %6860 = vmatpush.msra.mxu0 0.0
    %6861 = vmatpush.msra.mxu0 0.0
    %6862 = vmatpush.msra.mxu0 0.0
    %6863 = vmatpush.msra.mxu0 0.0
    %6864 = vmatpush.msra.mxu0 0.0
    %6865 = vmatpush.msra.mxu0 0.0
    %6866 = vmatpush.msra.mxu0 0.0
    %6867 = vmatpush.msra.mxu0 %v5983
    %6868 = vmatpush.msra.mxu0 %v5982
    %6869 = vmatpush.msra.mxu0 %v5981
    %6870 = vmatpush.msra.mxu0 %v5980
    %6871 = vmatmul.f32.gmra.mxu0 %v6808
    %v6872 = vpop.f32.mrf.mxu0
    %v6873 = vadd.f32 0.0, %v6872
    %6874 = vmatmul.f32.gmra.mxu0 %v6811
    %v6875 = vpop.f32.mrf.mxu0
    %v6876 = vadd.f32 0.0, %v6875
    %6877 = vmatmul.f32.gmra.mxu0 %v6814
    %v6878 = vpop.f32.mrf.mxu0
    %v6879 = vadd.f32 0.0, %v6878
    %6880 = vmatmul.f32.gmra.mxu0 %v6817
    %v6881 = vpop.f32.mrf.mxu0
    %v6882 = vadd.f32 0.0, %v6881
    %6883 = vmatmul.f32.gmra.mxu0 %v6820
    %v6884 = vpop.f32.mrf.mxu0
    %v6885 = vadd.f32 0.0, %v6884
    %6886 = vmatmul.f32.gmra.mxu0 %v6823
    %v6887 = vpop.f32.mrf.mxu0
    %v6888 = vadd.f32 0.0, %v6887
    %6889 = vmatmul.f32.gmra.mxu0 %v6826
    %v6890 = vpop.f32.mrf.mxu0
    %v6891 = vadd.f32 0.0, %v6890
    %6892 = vmatmul.f32.gmra.mxu0 %v6829
    %v6893 = vpop.f32.mrf.mxu0
    %v6894 = vadd.f32 0.0, %v6893
    %6895 = vmatmul.f32.gmra.mxu0 %v6832
    %v6896 = vpop.f32.mrf.mxu0
    %v6897 = vadd.f32 0.0, %v6896
    %6898 = vmatmul.f32.gmra.mxu0 %v6835
    %v6899 = vpop.f32.mrf.mxu0
    %v6900 = vadd.f32 0.0, %v6899
    %6901 = vmatmul.f32.gmra.mxu0 %v6838
    %v6902 = vpop.f32.mrf.mxu0
    %v6903 = vadd.f32 0.0, %v6902
    %6904 = vmatmul.f32.gmra.mxu0 %v6841
    %v6905 = vpop.f32.mrf.mxu0
    %v6906 = vadd.f32 0.0, %v6905
    %6907 = vmatmul.f32.gmra.mxu0 %v6844
    %v6908 = vpop.f32.mrf.mxu0
    %v6909 = vadd.f32 0.0, %v6908
    %6910 = vmatmul.f32.gmra.mxu0 %v6847
    %v6911 = vpop.f32.mrf.mxu0
    %v6912 = vadd.f32 0.0, %v6911
    %6913 = vmatmul.f32.gmra.mxu0 %v6850
    %v6914 = vpop.f32.mrf.mxu0
    %v6915 = vadd.f32 0.0, %v6914
    %6916 = vmatmul.f32.gmra.mxu0 %v6853
    %v6917 = vpop.f32.mrf.mxu0
    %v6918 = vadd.f32 0.0, %v6917
    %6919 = vdwg.mxu0
    %v6921 = vsel %vm171, %v5114, 0
    %v6924 = vsel %vm171, %v5117, 0
    %v6927 = vsel %vm171, %v5120, 0
    %v6930 = vsel %vm171, %v5123, 0
    %v6933 = vsel %vm171, %v5126, 0
    %v6936 = vsel %vm171, %v5129, 0
    %v6939 = vsel %vm171, %v5132, 0
    %v6942 = vsel %vm171, %v5135, 0
    %v6945 = vsel %vm171, %v5138, 0
    %v6948 = vsel %vm171, %v5141, 0
    %v6951 = vsel %vm171, %v5144, 0
    %v6954 = vsel %vm171, %v5147, 0
    %v6957 = vsel %vm171, %v5150, 0
    %v6960 = vsel %vm171, %v5153, 0
    %v6963 = vsel %vm171, %v5156, 0
    %v6966 = vsel %vm171, %v5159, 0
    %6968 = vmatpush.msra.mxu0 0.0
    %6969 = vmatpush.msra.mxu0 0.0
    %6970 = vmatpush.msra.mxu0 0.0
    %6971 = vmatpush.msra.mxu0 0.0
    %6972 = vmatpush.msra.mxu0 0.0
    %6973 = vmatpush.msra.mxu0 0.0
    %6974 = vmatpush.msra.mxu0 0.0
    %6975 = vmatpush.msra.mxu0 0.0
    %6976 = vmatpush.msra.mxu0 0.0
    %6977 = vmatpush.msra.mxu0 0.0
    %6978 = vmatpush.msra.mxu0 0.0
    %6979 = vmatpush.msra.mxu0 0.0
    %6980 = vmatpush.msra.mxu0 %v5987
    %6981 = vmatpush.msra.mxu0 %v5986
    %6982 = vmatpush.msra.mxu0 %v5985
    %6983 = vmatpush.msra.mxu0 %v5984
    %6984 = vmatmul.f32.gmra.mxu0 %v6921
    %v6985 = vpop.f32.mrf.mxu0
    %v6986 = vadd.f32 0.0, %v6985
    %6987 = vmatmul.f32.gmra.mxu0 %v6924
    %v6988 = vpop.f32.mrf.mxu0
    %v6989 = vadd.f32 0.0, %v6988
    %6990 = vmatmul.f32.gmra.mxu0 %v6927
    %v6991 = vpop.f32.mrf.mxu0
    %v6992 = vadd.f32 0.0, %v6991
    %6993 = vmatmul.f32.gmra.mxu0 %v6930
    %v6994 = vpop.f32.mrf.mxu0
    %v6995 = vadd.f32 0.0, %v6994
    %6996 = vmatmul.f32.gmra.mxu0 %v6933
    %v6997 = vpop.f32.mrf.mxu0
    %v6998 = vadd.f32 0.0, %v6997
    %6999 = vmatmul.f32.gmra.mxu0 %v6936
    %v7000 = vpop.f32.mrf.mxu0
    %v7001 = vadd.f32 0.0, %v7000
    %7002 = vmatmul.f32.gmra.mxu0 %v6939
    %v7003 = vpop.f32.mrf.mxu0
    %v7004 = vadd.f32 0.0, %v7003
    %7005 = vmatmul.f32.gmra.mxu0 %v6942
    %v7006 = vpop.f32.mrf.mxu0
    %v7007 = vadd.f32 0.0, %v7006
    %7008 = vmatmul.f32.gmra.mxu0 %v6945
    %v7009 = vpop.f32.mrf.mxu0
    %v7010 = vadd.f32 0.0, %v7009
    %7011 = vmatmul.f32.gmra.mxu0 %v6948
    %v7012 = vpop.f32.mrf.mxu0
    %v7013 = vadd.f32 0.0, %v7012
    %7014 = vmatmul.f32.gmra.mxu0 %v6951
    %v7015 = vpop.f32.mrf.mxu0
    %v7016 = vadd.f32 0.0, %v7015
    %7017 = vmatmul.f32.gmra.mxu0 %v6954
    %v7018 = vpop.f32.mrf.mxu0
    %v7019 = vadd.f32 0.0, %v7018
    %7020 = vmatmul.f32.gmra.mxu0 %v6957
    %v7021 = vpop.f32.mrf.mxu0
    %v7022 = vadd.f32 0.0, %v7021
    %7023 = vmatmul.f32.gmra.mxu0 %v6960
    %v7024 = vpop.f32.mrf.mxu0
    %v7025 = vadd.f32 0.0, %v7024
    %7026 = vmatmul.f32.gmra.mxu0 %v6963
    %v7027 = vpop.f32.mrf.mxu0
    %v7028 = vadd.f32 0.0, %v7027
    %7029 = vmatmul.f32.gmra.mxu0 %v6966
    %v7030 = vpop.f32.mrf.mxu0
    %v7031 = vadd.f32 0.0, %v7030
    %7032 = vdwg.mxu0
    %v7034 = vsel %vm171, %v5227, 0
    %v7037 = vsel %vm171, %v5230, 0
    %v7040 = vsel %vm171, %v5233, 0
    %v7043 = vsel %vm171, %v5236, 0
    %v7046 = vsel %vm171, %v5239, 0
    %v7049 = vsel %vm171, %v5242, 0
    %v7052 = vsel %vm171, %v5245, 0
    %v7055 = vsel %vm171, %v5248, 0
    %v7058 = vsel %vm171, %v5251, 0
    %v7061 = vsel %vm171, %v5254, 0
    %v7064 = vsel %vm171, %v5257, 0
    %v7067 = vsel %vm171, %v5260, 0
    %v7070 = vsel %vm171, %v5263, 0
    %v7073 = vsel %vm171, %v5266, 0
    %v7076 = vsel %vm171, %v5269, 0
    %v7079 = vsel %vm171, %v5272, 0
    %7081 = vmatpush.msra.mxu0 0.0
    %7082 = vmatpush.msra.mxu0 0.0
    %7083 = vmatpush.msra.mxu0 0.0
    %7084 = vmatpush.msra.mxu0 0.0
    %7085 = vmatpush.msra.mxu0 0.0
    %7086 = vmatpush.msra.mxu0 0.0
    %7087 = vmatpush.msra.mxu0 0.0
    %7088 = vmatpush.msra.mxu0 0.0
    %7089 = vmatpush.msra.mxu0 0.0
    %7090 = vmatpush.msra.mxu0 0.0
    %7091 = vmatpush.msra.mxu0 0.0
    %7092 = vmatpush.msra.mxu0 0.0
    %7093 = vmatpush.msra.mxu0 %v5991
    %7094 = vmatpush.msra.mxu0 %v5990
    %7095 = vmatpush.msra.mxu0 %v5989
    %7096 = vmatpush.msra.mxu0 %v5988
    %7097 = vmatmul.f32.gmra.mxu0 %v7034
    %v7098 = vpop.f32.mrf.mxu0
    %v7099 = vadd.f32 0.0, %v7098
    %7100 = vmatmul.f32.gmra.mxu0 %v7037
    %v7101 = vpop.f32.mrf.mxu0
    %v7102 = vadd.f32 0.0, %v7101
    %7103 = vmatmul.f32.gmra.mxu0 %v7040
    %v7104 = vpop.f32.mrf.mxu0
    %v7105 = vadd.f32 0.0, %v7104
    %7106 = vmatmul.f32.gmra.mxu0 %v7043
    %v7107 = vpop.f32.mrf.mxu0
    %v7108 = vadd.f32 0.0, %v7107
    %7109 = vmatmul.f32.gmra.mxu0 %v7046
    %v7110 = vpop.f32.mrf.mxu0
    %v7111 = vadd.f32 0.0, %v7110
    %7112 = vmatmul.f32.gmra.mxu0 %v7049
    %v7113 = vpop.f32.mrf.mxu0
    %v7114 = vadd.f32 0.0, %v7113
    %7115 = vmatmul.f32.gmra.mxu0 %v7052
    %v7116 = vpop.f32.mrf.mxu0
    %v7117 = vadd.f32 0.0, %v7116
    %7118 = vmatmul.f32.gmra.mxu0 %v7055
    %v7119 = vpop.f32.mrf.mxu0
    %v7120 = vadd.f32 0.0, %v7119
    %7121 = vmatmul.f32.gmra.mxu0 %v7058
    %v7122 = vpop.f32.mrf.mxu0
    %v7123 = vadd.f32 0.0, %v7122
    %7124 = vmatmul.f32.gmra.mxu0 %v7061
    %v7125 = vpop.f32.mrf.mxu0
    %v7126 = vadd.f32 0.0, %v7125
    %7127 = vmatmul.f32.gmra.mxu0 %v7064
    %v7128 = vpop.f32.mrf.mxu0
    %v7129 = vadd.f32 0.0, %v7128
    %7130 = vmatmul.f32.gmra.mxu0 %v7067
    %v7131 = vpop.f32.mrf.mxu0
    %v7132 = vadd.f32 0.0, %v7131
    %7133 = vmatmul.f32.gmra.mxu0 %v7070
    %v7134 = vpop.f32.mrf.mxu0
    %v7135 = vadd.f32 0.0, %v7134
    %7136 = vmatmul.f32.gmra.mxu0 %v7073
    %v7137 = vpop.f32.mrf.mxu0
    %v7138 = vadd.f32 0.0, %v7137
    %7139 = vmatmul.f32.gmra.mxu0 %v7076
    %v7140 = vpop.f32.mrf.mxu0
    %v7141 = vadd.f32 0.0, %v7140
    %7142 = vmatmul.f32.gmra.mxu0 %v7079
    %v7143 = vpop.f32.mrf.mxu0
    %v7144 = vadd.f32 0.0, %v7143
    %7145 = vdwg.mxu0
    %v7147 = vsel %vm171, %v5340, 0
    %v7150 = vsel %vm171, %v5343, 0
    %v7153 = vsel %vm171, %v5346, 0
    %v7156 = vsel %vm171, %v5349, 0
    %v7159 = vsel %vm171, %v5352, 0
    %v7162 = vsel %vm171, %v5355, 0
    %v7165 = vsel %vm171, %v5358, 0
    %v7168 = vsel %vm171, %v5361, 0
    %v7171 = vsel %vm171, %v5364, 0
    %v7174 = vsel %vm171, %v5367, 0
    %v7177 = vsel %vm171, %v5370, 0
    %v7180 = vsel %vm171, %v5373, 0
    %v7183 = vsel %vm171, %v5376, 0
    %v7186 = vsel %vm171, %v5379, 0
    %v7189 = vsel %vm171, %v5382, 0
    %v7192 = vsel %vm171, %v5385, 0
    %7194 = vmatpush.msra.mxu0 0.0
    %7195 = vmatpush.msra.mxu0 0.0
    %7196 = vmatpush.msra.mxu0 0.0
    %7197 = vmatpush.msra.mxu0 0.0
    %7198 = vmatpush.msra.mxu0 0.0
    %7199 = vmatpush.msra.mxu0 0.0
    %7200 = vmatpush.msra.mxu0 0.0
    %7201 = vmatpush.msra.mxu0 0.0
    %7202 = vmatpush.msra.mxu0 0.0
    %7203 = vmatpush.msra.mxu0 0.0
    %7204 = vmatpush.msra.mxu0 0.0
    %7205 = vmatpush.msra.mxu0 0.0
    %7206 = vmatpush.msra.mxu0 %v5995
    %7207 = vmatpush.msra.mxu0 %v5994
    %7208 = vmatpush.msra.mxu0 %v5993
    %7209 = vmatpush.msra.mxu0 %v5992
    %7210 = vmatmul.f32.gmra.mxu0 %v7147
    %v7211 = vpop.f32.mrf.mxu0
    %v7212 = vadd.f32 0.0, %v7211
    %7213 = vmatmul.f32.gmra.mxu0 %v7150
    %v7214 = vpop.f32.mrf.mxu0
    %v7215 = vadd.f32 0.0, %v7214
    %7216 = vmatmul.f32.gmra.mxu0 %v7153
    %v7217 = vpop.f32.mrf.mxu0
    %v7218 = vadd.f32 0.0, %v7217
    %7219 = vmatmul.f32.gmra.mxu0 %v7156
    %v7220 = vpop.f32.mrf.mxu0
    %v7221 = vadd.f32 0.0, %v7220
    %7222 = vmatmul.f32.gmra.mxu0 %v7159
    %v7223 = vpop.f32.mrf.mxu0
    %v7224 = vadd.f32 0.0, %v7223
    %7225 = vmatmul.f32.gmra.mxu0 %v7162
    %v7226 = vpop.f32.mrf.mxu0
    %v7227 = vadd.f32 0.0, %v7226
    %7228 = vmatmul.f32.gmra.mxu0 %v7165
    %v7229 = vpop.f32.mrf.mxu0
    %v7230 = vadd.f32 0.0, %v7229
    %7231 = vmatmul.f32.gmra.mxu0 %v7168
    %v7232 = vpop.f32.mrf.mxu0
    %v7233 = vadd.f32 0.0, %v7232
    %7234 = vmatmul.f32.gmra.mxu0 %v7171
    %v7235 = vpop.f32.mrf.mxu0
    %v7236 = vadd.f32 0.0, %v7235
    %7237 = vmatmul.f32.gmra.mxu0 %v7174
    %v7238 = vpop.f32.mrf.mxu0
    %v7239 = vadd.f32 0.0, %v7238
    %7240 = vmatmul.f32.gmra.mxu0 %v7177
    %v7241 = vpop.f32.mrf.mxu0
    %v7242 = vadd.f32 0.0, %v7241
    %7243 = vmatmul.f32.gmra.mxu0 %v7180
    %v7244 = vpop.f32.mrf.mxu0
    %v7245 = vadd.f32 0.0, %v7244
    %7246 = vmatmul.f32.gmra.mxu0 %v7183
    %v7247 = vpop.f32.mrf.mxu0
    %v7248 = vadd.f32 0.0, %v7247
    %7249 = vmatmul.f32.gmra.mxu0 %v7186
    %v7250 = vpop.f32.mrf.mxu0
    %v7251 = vadd.f32 0.0, %v7250
    %7252 = vmatmul.f32.gmra.mxu0 %v7189
    %v7253 = vpop.f32.mrf.mxu0
    %v7254 = vadd.f32 0.0, %v7253
    %7255 = vmatmul.f32.gmra.mxu0 %v7192
    %v7256 = vpop.f32.mrf.mxu0
    %v7257 = vadd.f32 0.0, %v7256
    %7258 = vdwg.mxu0
    %v7260 = vsel %vm171, %v5453, 0
    %v7263 = vsel %vm171, %v5456, 0
    %v7266 = vsel %vm171, %v5459, 0
    %v7269 = vsel %vm171, %v5462, 0
    %v7272 = vsel %vm171, %v5465, 0
    %v7275 = vsel %vm171, %v5468, 0
    %v7278 = vsel %vm171, %v5471, 0
    %v7281 = vsel %vm171, %v5474, 0
    %v7284 = vsel %vm171, %v5477, 0
    %v7287 = vsel %vm171, %v5480, 0
    %v7290 = vsel %vm171, %v5483, 0
    %v7293 = vsel %vm171, %v5486, 0
    %v7296 = vsel %vm171, %v5489, 0
    %v7299 = vsel %vm171, %v5492, 0
    %v7302 = vsel %vm171, %v5495, 0
    %v7305 = vsel %vm171, %v5498, 0
    %7307 = vmatpush.msra.mxu0 0.0
    %7308 = vmatpush.msra.mxu0 0.0
    %7309 = vmatpush.msra.mxu0 0.0
    %7310 = vmatpush.msra.mxu0 0.0
    %7311 = vmatpush.msra.mxu0 0.0
    %7312 = vmatpush.msra.mxu0 0.0
    %7313 = vmatpush.msra.mxu0 0.0
    %7314 = vmatpush.msra.mxu0 0.0
    %7315 = vmatpush.msra.mxu0 0.0
    %7316 = vmatpush.msra.mxu0 0.0
    %7317 = vmatpush.msra.mxu0 0.0
    %7318 = vmatpush.msra.mxu0 0.0
    %7319 = vmatpush.msra.mxu0 %v5999
    %7320 = vmatpush.msra.mxu0 %v5998
    %7321 = vmatpush.msra.mxu0 %v5997
    %7322 = vmatpush.msra.mxu0 %v5996
    %7323 = vmatmul.f32.gmra.mxu0 %v7260
    %v7324 = vpop.f32.mrf.mxu0
    %v7325 = vadd.f32 0.0, %v7324
    %7326 = vmatmul.f32.gmra.mxu0 %v7263
    %v7327 = vpop.f32.mrf.mxu0
    %v7328 = vadd.f32 0.0, %v7327
    %7329 = vmatmul.f32.gmra.mxu0 %v7266
    %v7330 = vpop.f32.mrf.mxu0
    %v7331 = vadd.f32 0.0, %v7330
    %7332 = vmatmul.f32.gmra.mxu0 %v7269
    %v7333 = vpop.f32.mrf.mxu0
    %v7334 = vadd.f32 0.0, %v7333
    %7335 = vmatmul.f32.gmra.mxu0 %v7272
    %v7336 = vpop.f32.mrf.mxu0
    %v7337 = vadd.f32 0.0, %v7336
    %7338 = vmatmul.f32.gmra.mxu0 %v7275
    %v7339 = vpop.f32.mrf.mxu0
    %v7340 = vadd.f32 0.0, %v7339
    %7341 = vmatmul.f32.gmra.mxu0 %v7278
    %v7342 = vpop.f32.mrf.mxu0
    %v7343 = vadd.f32 0.0, %v7342
    %7344 = vmatmul.f32.gmra.mxu0 %v7281
    %v7345 = vpop.f32.mrf.mxu0
    %v7346 = vadd.f32 0.0, %v7345
    %7347 = vmatmul.f32.gmra.mxu0 %v7284
    %v7348 = vpop.f32.mrf.mxu0
    %v7349 = vadd.f32 0.0, %v7348
    %7350 = vmatmul.f32.gmra.mxu0 %v7287
    %v7351 = vpop.f32.mrf.mxu0
    %v7352 = vadd.f32 0.0, %v7351
    %7353 = vmatmul.f32.gmra.mxu0 %v7290
    %v7354 = vpop.f32.mrf.mxu0
    %v7355 = vadd.f32 0.0, %v7354
    %7356 = vmatmul.f32.gmra.mxu0 %v7293
    %v7357 = vpop.f32.mrf.mxu0
    %v7358 = vadd.f32 0.0, %v7357
    %7359 = vmatmul.f32.gmra.mxu0 %v7296
    %v7360 = vpop.f32.mrf.mxu0
    %v7361 = vadd.f32 0.0, %v7360
    %7362 = vmatmul.f32.gmra.mxu0 %v7299
    %v7363 = vpop.f32.mrf.mxu0
    %v7364 = vadd.f32 0.0, %v7363
    %7365 = vmatmul.f32.gmra.mxu0 %v7302
    %v7366 = vpop.f32.mrf.mxu0
    %v7367 = vadd.f32 0.0, %v7366
    %7368 = vmatmul.f32.gmra.mxu0 %v7305
    %v7369 = vpop.f32.mrf.mxu0
    %v7370 = vadd.f32 0.0, %v7369
    %7371 = vdwg.mxu0
    %v7373 = vsel %vm171, %v5566, 0
    %v7376 = vsel %vm171, %v5569, 0
    %v7379 = vsel %vm171, %v5572, 0
    %v7382 = vsel %vm171, %v5575, 0
    %v7385 = vsel %vm171, %v5578, 0
    %v7388 = vsel %vm171, %v5581, 0
    %v7391 = vsel %vm171, %v5584, 0
    %v7394 = vsel %vm171, %v5587, 0
    %v7397 = vsel %vm171, %v5590, 0
    %v7400 = vsel %vm171, %v5593, 0
    %v7403 = vsel %vm171, %v5596, 0
    %v7406 = vsel %vm171, %v5599, 0
    %v7409 = vsel %vm171, %v5602, 0
    %v7412 = vsel %vm171, %v5605, 0
    %v7415 = vsel %vm171, %v5608, 0
    %v7418 = vsel %vm171, %v5611, 0
    %7420 = vmatpush.msra.mxu0 0.0
    %7421 = vmatpush.msra.mxu0 0.0
    %7422 = vmatpush.msra.mxu0 0.0
    %7423 = vmatpush.msra.mxu0 0.0
    %7424 = vmatpush.msra.mxu0 0.0
    %7425 = vmatpush.msra.mxu0 0.0
    %7426 = vmatpush.msra.mxu0 0.0
    %7427 = vmatpush.msra.mxu0 0.0
    %7428 = vmatpush.msra.mxu0 0.0
    %7429 = vmatpush.msra.mxu0 0.0
    %7430 = vmatpush.msra.mxu0 0.0
    %7431 = vmatpush.msra.mxu0 0.0
    %7432 = vmatpush.msra.mxu0 %v6003
    %7433 = vmatpush.msra.mxu0 %v6002
    %7434 = vmatpush.msra.mxu0 %v6001
    %7435 = vmatpush.msra.mxu0 %v6000
    %7436 = vmatmul.f32.gmra.mxu0 %v7373
    %v7437 = vpop.f32.mrf.mxu0
    %v7438 = vadd.f32 0.0, %v7437
    %7439 = vmatmul.f32.gmra.mxu0 %v7376
    %v7440 = vpop.f32.mrf.mxu0
    %v7441 = vadd.f32 0.0, %v7440
    %7442 = vmatmul.f32.gmra.mxu0 %v7379
    %v7443 = vpop.f32.mrf.mxu0
    %v7444 = vadd.f32 0.0, %v7443
    %7445 = vmatmul.f32.gmra.mxu0 %v7382
    %v7446 = vpop.f32.mrf.mxu0
    %v7447 = vadd.f32 0.0, %v7446
    %7448 = vmatmul.f32.gmra.mxu0 %v7385
    %v7449 = vpop.f32.mrf.mxu0
    %v7450 = vadd.f32 0.0, %v7449
    %7451 = vmatmul.f32.gmra.mxu0 %v7388
    %v7452 = vpop.f32.mrf.mxu0
    %v7453 = vadd.f32 0.0, %v7452
    %7454 = vmatmul.f32.gmra.mxu0 %v7391
    %v7455 = vpop.f32.mrf.mxu0
    %v7456 = vadd.f32 0.0, %v7455
    %7457 = vmatmul.f32.gmra.mxu0 %v7394
    %v7458 = vpop.f32.mrf.mxu0
    %v7459 = vadd.f32 0.0, %v7458
    %7460 = vmatmul.f32.gmra.mxu0 %v7397
    %v7461 = vpop.f32.mrf.mxu0
    %v7462 = vadd.f32 0.0, %v7461
    %7463 = vmatmul.f32.gmra.mxu0 %v7400
    %v7464 = vpop.f32.mrf.mxu0
    %v7465 = vadd.f32 0.0, %v7464
    %7466 = vmatmul.f32.gmra.mxu0 %v7403
    %v7467 = vpop.f32.mrf.mxu0
    %v7468 = vadd.f32 0.0, %v7467
    %7469 = vmatmul.f32.gmra.mxu0 %v7406
    %v7470 = vpop.f32.mrf.mxu0
    %v7471 = vadd.f32 0.0, %v7470
    %7472 = vmatmul.f32.gmra.mxu0 %v7409
    %v7473 = vpop.f32.mrf.mxu0
    %v7474 = vadd.f32 0.0, %v7473
    %7475 = vmatmul.f32.gmra.mxu0 %v7412
    %v7476 = vpop.f32.mrf.mxu0
    %v7477 = vadd.f32 0.0, %v7476
    %7478 = vmatmul.f32.gmra.mxu0 %v7415
    %v7479 = vpop.f32.mrf.mxu0
    %v7480 = vadd.f32 0.0, %v7479
    %7481 = vmatmul.f32.gmra.mxu0 %v7418
    %v7482 = vpop.f32.mrf.mxu0
    %v7483 = vadd.f32 0.0, %v7482
    %7484 = vdwg.mxu0
    %v7486 = vsel %vm171, %v5679, 0
    %v7489 = vsel %vm171, %v5682, 0
    %v7492 = vsel %vm171, %v5685, 0
    %v7495 = vsel %vm171, %v5688, 0
    %v7498 = vsel %vm171, %v5691, 0
    %v7501 = vsel %vm171, %v5694, 0
    %v7504 = vsel %vm171, %v5697, 0
    %v7507 = vsel %vm171, %v5700, 0
    %v7510 = vsel %vm171, %v5703, 0
    %v7513 = vsel %vm171, %v5706, 0
    %v7516 = vsel %vm171, %v5709, 0
    %v7519 = vsel %vm171, %v5712, 0
    %v7522 = vsel %vm171, %v5715, 0
    %v7525 = vsel %vm171, %v5718, 0
    %v7528 = vsel %vm171, %v5721, 0
    %v7531 = vsel %vm171, %v5724, 0
    %7533 = vmatpush.msra.mxu0 0.0
    %7534 = vmatpush.msra.mxu0 0.0
    %7535 = vmatpush.msra.mxu0 0.0
    %7536 = vmatpush.msra.mxu0 0.0
    %7537 = vmatpush.msra.mxu0 0.0
    %7538 = vmatpush.msra.mxu0 0.0
    %7539 = vmatpush.msra.mxu0 0.0
    %7540 = vmatpush.msra.mxu0 0.0
    %7541 = vmatpush.msra.mxu0 0.0
    %7542 = vmatpush.msra.mxu0 0.0
    %7543 = vmatpush.msra.mxu0 0.0
    %7544 = vmatpush.msra.mxu0 0.0
    %7545 = vmatpush.msra.mxu0 %v6007
    %7546 = vmatpush.msra.mxu0 %v6006
    %7547 = vmatpush.msra.mxu0 %v6005
    %7548 = vmatpush.msra.mxu0 %v6004
    %7549 = vmatmul.f32.gmra.mxu0 %v7486
    %v7550 = vpop.f32.mrf.mxu0
    %v7551 = vadd.f32 0.0, %v7550
    %7552 = vmatmul.f32.gmra.mxu0 %v7489
    %v7553 = vpop.f32.mrf.mxu0
    %v7554 = vadd.f32 0.0, %v7553
    %7555 = vmatmul.f32.gmra.mxu0 %v7492
    %v7556 = vpop.f32.mrf.mxu0
    %v7557 = vadd.f32 0.0, %v7556
    %7558 = vmatmul.f32.gmra.mxu0 %v7495
    %v7559 = vpop.f32.mrf.mxu0
    %v7560 = vadd.f32 0.0, %v7559
    %7561 = vmatmul.f32.gmra.mxu0 %v7498
    %v7562 = vpop.f32.mrf.mxu0
    %v7563 = vadd.f32 0.0, %v7562
    %7564 = vmatmul.f32.gmra.mxu0 %v7501
    %v7565 = vpop.f32.mrf.mxu0
    %v7566 = vadd.f32 0.0, %v7565
    %7567 = vmatmul.f32.gmra.mxu0 %v7504
    %v7568 = vpop.f32.mrf.mxu0
    %v7569 = vadd.f32 0.0, %v7568
    %7570 = vmatmul.f32.gmra.mxu0 %v7507
    %v7571 = vpop.f32.mrf.mxu0
    %v7572 = vadd.f32 0.0, %v7571
    %7573 = vmatmul.f32.gmra.mxu0 %v7510
    %v7574 = vpop.f32.mrf.mxu0
    %v7575 = vadd.f32 0.0, %v7574
    %7576 = vmatmul.f32.gmra.mxu0 %v7513
    %v7577 = vpop.f32.mrf.mxu0
    %v7578 = vadd.f32 0.0, %v7577
    %7579 = vmatmul.f32.gmra.mxu0 %v7516
    %v7580 = vpop.f32.mrf.mxu0
    %v7581 = vadd.f32 0.0, %v7580
    %7582 = vmatmul.f32.gmra.mxu0 %v7519
    %v7583 = vpop.f32.mrf.mxu0
    %v7584 = vadd.f32 0.0, %v7583
    %7585 = vmatmul.f32.gmra.mxu0 %v7522
    %v7586 = vpop.f32.mrf.mxu0
    %v7587 = vadd.f32 0.0, %v7586
    %7588 = vmatmul.f32.gmra.mxu0 %v7525
    %v7589 = vpop.f32.mrf.mxu0
    %v7590 = vadd.f32 0.0, %v7589
    %7591 = vmatmul.f32.gmra.mxu0 %v7528
    %v7592 = vpop.f32.mrf.mxu0
    %v7593 = vadd.f32 0.0, %v7592
    %7594 = vmatmul.f32.gmra.mxu0 %v7531
    %v7595 = vpop.f32.mrf.mxu0
    %v7596 = vadd.f32 0.0, %v7595
    %7597 = vdwg.mxu0
    %v7599 = vsel %vm171, %v5792, 0
    %v7602 = vsel %vm171, %v5795, 0
    %v7605 = vsel %vm171, %v5798, 0
    %v7608 = vsel %vm171, %v5801, 0
    %v7611 = vsel %vm171, %v5804, 0
    %v7614 = vsel %vm171, %v5807, 0
    %v7617 = vsel %vm171, %v5810, 0
    %v7620 = vsel %vm171, %v5813, 0
    %v7623 = vsel %vm171, %v5816, 0
    %v7626 = vsel %vm171, %v5819, 0
    %v7629 = vsel %vm171, %v5822, 0
    %v7632 = vsel %vm171, %v5825, 0
    %v7635 = vsel %vm171, %v5828, 0
    %v7638 = vsel %vm171, %v5831, 0
    %v7641 = vsel %vm171, %v5834, 0
    %v7644 = vsel %vm171, %v5837, 0
    %7646 = vmatpush.msra.mxu0 0.0
    %7647 = vmatpush.msra.mxu0 0.0
    %7648 = vmatpush.msra.mxu0 0.0
    %7649 = vmatpush.msra.mxu0 0.0
    %7650 = vmatpush.msra.mxu0 0.0
    %7651 = vmatpush.msra.mxu0 0.0
    %7652 = vmatpush.msra.mxu0 0.0
    %7653 = vmatpush.msra.mxu0 0.0
    %7654 = vmatpush.msra.mxu0 0.0
    %7655 = vmatpush.msra.mxu0 0.0
    %7656 = vmatpush.msra.mxu0 0.0
    %7657 = vmatpush.msra.mxu0 0.0
    %7658 = vmatpush.msra.mxu0 %v6011
    %7659 = vmatpush.msra.mxu0 %v6010
    %7660 = vmatpush.msra.mxu0 %v6009
    %7661 = vmatpush.msra.mxu0 %v6008
    %7662 = vmatmul.f32.gmra.mxu0 %v7599
    %v7663 = vpop.f32.mrf.mxu0
    %v7664 = vadd.f32 0.0, %v7663
    %7665 = vmatmul.f32.gmra.mxu0 %v7602
    %v7666 = vpop.f32.mrf.mxu0
    %v7667 = vadd.f32 0.0, %v7666
    %7668 = vmatmul.f32.gmra.mxu0 %v7605
    %v7669 = vpop.f32.mrf.mxu0
    %v7670 = vadd.f32 0.0, %v7669
    %7671 = vmatmul.f32.gmra.mxu0 %v7608
    %v7672 = vpop.f32.mrf.mxu0
    %v7673 = vadd.f32 0.0, %v7672
    %7674 = vmatmul.f32.gmra.mxu0 %v7611
    %v7675 = vpop.f32.mrf.mxu0
    %v7676 = vadd.f32 0.0, %v7675
    %7677 = vmatmul.f32.gmra.mxu0 %v7614
    %v7678 = vpop.f32.mrf.mxu0
    %v7679 = vadd.f32 0.0, %v7678
    %7680 = vmatmul.f32.gmra.mxu0 %v7617
    %v7681 = vpop.f32.mrf.mxu0
    %v7682 = vadd.f32 0.0, %v7681
    %7683 = vmatmul.f32.gmra.mxu0 %v7620
    %v7684 = vpop.f32.mrf.mxu0
    %v7685 = vadd.f32 0.0, %v7684
    %7686 = vmatmul.f32.gmra.mxu0 %v7623
    %v7687 = vpop.f32.mrf.mxu0
    %v7688 = vadd.f32 0.0, %v7687
    %7689 = vmatmul.f32.gmra.mxu0 %v7626
    %v7690 = vpop.f32.mrf.mxu0
    %v7691 = vadd.f32 0.0, %v7690
    %7692 = vmatmul.f32.gmra.mxu0 %v7629
    %v7693 = vpop.f32.mrf.mxu0
    %v7694 = vadd.f32 0.0, %v7693
    %7695 = vmatmul.f32.gmra.mxu0 %v7632
    %v7696 = vpop.f32.mrf.mxu0
    %v7697 = vadd.f32 0.0, %v7696
    %7698 = vmatmul.f32.gmra.mxu0 %v7635
    %v7699 = vpop.f32.mrf.mxu0
    %v7700 = vadd.f32 0.0, %v7699
    %7701 = vmatmul.f32.gmra.mxu0 %v7638
    %v7702 = vpop.f32.mrf.mxu0
    %v7703 = vadd.f32 0.0, %v7702
    %7704 = vmatmul.f32.gmra.mxu0 %v7641
    %v7705 = vpop.f32.mrf.mxu0
    %v7706 = vadd.f32 0.0, %v7705
    %7707 = vmatmul.f32.gmra.mxu0 %v7644
    %v7708 = vpop.f32.mrf.mxu0
    %v7709 = vadd.f32 0.0, %v7708
    %7710 = vdwg.mxu0
    %v7712 = vsel %vm171, %v5905, 0
    %v7715 = vsel %vm171, %v5908, 0
    %v7718 = vsel %vm171, %v5911, 0
    %v7721 = vsel %vm171, %v5914, 0
    %v7724 = vsel %vm171, %v5917, 0
    %v7727 = vsel %vm171, %v5920, 0
    %v7730 = vsel %vm171, %v5923, 0
    %v7733 = vsel %vm171, %v5926, 0
    %v7736 = vsel %vm171, %v5929, 0
    %v7739 = vsel %vm171, %v5932, 0
    %v7742 = vsel %vm171, %v5935, 0
    %v7745 = vsel %vm171, %v5938, 0
    %v7748 = vsel %vm171, %v5941, 0
    %v7751 = vsel %vm171, %v5944, 0
    %v7754 = vsel %vm171, %v5947, 0
    %v7757 = vsel %vm171, %v5950, 0
    %7759 = vmatpush.msra.mxu0 0.0
    %7760 = vmatpush.msra.mxu0 0.0
    %7761 = vmatpush.msra.mxu0 0.0
    %7762 = vmatpush.msra.mxu0 0.0
    %7763 = vmatpush.msra.mxu0 0.0
    %7764 = vmatpush.msra.mxu0 0.0
    %7765 = vmatpush.msra.mxu0 0.0
    %7766 = vmatpush.msra.mxu0 0.0
    %7767 = vmatpush.msra.mxu0 0.0
    %7768 = vmatpush.msra.mxu0 0.0
    %7769 = vmatpush.msra.mxu0 0.0
    %7770 = vmatpush.msra.mxu0 0.0
    %7771 = vmatpush.msra.mxu0 %v6015
    %7772 = vmatpush.msra.mxu0 %v6014
    %7773 = vmatpush.msra.mxu0 %v6013
    %7774 = vmatpush.msra.mxu0 %v6012
    %7775 = vmatmul.f32.gmra.mxu0 %v7712
    %v7776 = vpop.f32.mrf.mxu0
    %v7777 = vadd.f32 0.0, %v7776
    %7778 = vmatmul.f32.gmra.mxu0 %v7715
    %v7779 = vpop.f32.mrf.mxu0
    %v7780 = vadd.f32 0.0, %v7779
    %7781 = vmatmul.f32.gmra.mxu0 %v7718
    %v7782 = vpop.f32.mrf.mxu0
    %v7783 = vadd.f32 0.0, %v7782
    %7784 = vmatmul.f32.gmra.mxu0 %v7721
    %v7785 = vpop.f32.mrf.mxu0
    %v7786 = vadd.f32 0.0, %v7785
    %7787 = vmatmul.f32.gmra.mxu0 %v7724
    %v7788 = vpop.f32.mrf.mxu0
    %v7789 = vadd.f32 0.0, %v7788
    %7790 = vmatmul.f32.gmra.mxu0 %v7727
    %v7791 = vpop.f32.mrf.mxu0
    %v7792 = vadd.f32 0.0, %v7791
    %7793 = vmatmul.f32.gmra.mxu0 %v7730
    %v7794 = vpop.f32.mrf.mxu0
    %v7795 = vadd.f32 0.0, %v7794
    %7796 = vmatmul.f32.gmra.mxu0 %v7733
    %v7797 = vpop.f32.mrf.mxu0
    %v7798 = vadd.f32 0.0, %v7797
    %7799 = vmatmul.f32.gmra.mxu0 %v7736
    %v7800 = vpop.f32.mrf.mxu0
    %v7801 = vadd.f32 0.0, %v7800
    %7802 = vmatmul.f32.gmra.mxu0 %v7739
    %v7803 = vpop.f32.mrf.mxu0
    %v7804 = vadd.f32 0.0, %v7803
    %7805 = vmatmul.f32.gmra.mxu0 %v7742
    %v7806 = vpop.f32.mrf.mxu0
    %v7807 = vadd.f32 0.0, %v7806
    %7808 = vmatmul.f32.gmra.mxu0 %v7745
    %v7809 = vpop.f32.mrf.mxu0
    %v7810 = vadd.f32 0.0, %v7809
    %7811 = vmatmul.f32.gmra.mxu0 %v7748
    %v7812 = vpop.f32.mrf.mxu0
    %v7813 = vadd.f32 0.0, %v7812
    %7814 = vmatmul.f32.gmra.mxu0 %v7751
    %v7815 = vpop.f32.mrf.mxu0
    %v7816 = vadd.f32 0.0, %v7815
    %7817 = vmatmul.f32.gmra.mxu0 %v7754
    %v7818 = vpop.f32.mrf.mxu0
    %v7819 = vadd.f32 0.0, %v7818
    %7820 = vmatmul.f32.gmra.mxu0 %v7757
    %v7821 = vpop.f32.mrf.mxu0
    %v7822 = vadd.f32 0.0, %v7821
    %7823 = vdwg.mxu0
    %v7824 = vsel %vm171, %v6082, 0.0
    %v7825 = vsel %vm171, %v6195, 0.0
    %v7826 = vadd.f32 %v7824, %v7825
    %v7827 = vsel %vm171, %v6308, 0.0
    %v7828 = vadd.f32 %v7826, %v7827
    %v7829 = vsel %vm171, %v6421, 0.0
    %v7830 = vadd.f32 %v7828, %v7829
    %v7831 = vsel %vm171, %v6534, 0.0
    %v7832 = vadd.f32 %v7830, %v7831
    %v7833 = vsel %vm171, %v6647, 0.0
    %v7834 = vadd.f32 %v7832, %v7833
    %v7835 = vsel %vm171, %v6760, 0.0
    %v7836 = vadd.f32 %v7834, %v7835
    %v7837 = vsel %vm171, %v6873, 0.0
    %v7838 = vadd.f32 %v7836, %v7837
    %v7839 = vsel %vm171, %v6986, 0.0
    %v7840 = vadd.f32 %v7838, %v7839
    %v7841 = vsel %vm171, %v7099, 0.0
    %v7842 = vadd.f32 %v7840, %v7841
    %v7843 = vsel %vm171, %v7212, 0.0
    %v7844 = vadd.f32 %v7842, %v7843
    %v7845 = vsel %vm171, %v7325, 0.0
    %v7846 = vadd.f32 %v7844, %v7845
    %v7847 = vsel %vm171, %v7438, 0.0
    %v7848 = vadd.f32 %v7846, %v7847
    %v7849 = vsel %vm171, %v7551, 0.0
    %v7850 = vadd.f32 %v7848, %v7849
    %v7851 = vsel %vm171, %v7664, 0.0
    %v7852 = vadd.f32 %v7850, %v7851
    %v7853 = vsel %vm171, %v7777, 0.0
    %v7854 = vadd.f32 %v7852, %v7853
    %v7855 = vsel %vm171, %v6085, 0.0
    %v7856 = vsel %vm171, %v6198, 0.0
    %v7857 = vadd.f32 %v7855, %v7856
    %v7858 = vsel %vm171, %v6311, 0.0
    %v7859 = vadd.f32 %v7857, %v7858
    %v7860 = vsel %vm171, %v6424, 0.0
    %v7861 = vadd.f32 %v7859, %v7860
    %v7862 = vsel %vm171, %v6537, 0.0
    %v7863 = vadd.f32 %v7861, %v7862
    %v7864 = vsel %vm171, %v6650, 0.0
    %v7865 = vadd.f32 %v7863, %v7864
    %v7866 = vsel %vm171, %v6763, 0.0
    %v7867 = vadd.f32 %v7865, %v7866
    %v7868 = vsel %vm171, %v6876, 0.0
    %v7869 = vadd.f32 %v7867, %v7868
    %v7870 = vsel %vm171, %v6989, 0.0
    %v7871 = vadd.f32 %v7869, %v7870
    %v7872 = vsel %vm171, %v7102, 0.0
    %v7873 = vadd.f32 %v7871, %v7872
    %v7874 = vsel %vm171, %v7215, 0.0
    %v7875 = vadd.f32 %v7873, %v7874
    %v7876 = vsel %vm171, %v7328, 0.0
    %v7877 = vadd.f32 %v7875, %v7876
    %v7878 = vsel %vm171, %v7441, 0.0
    %v7879 = vadd.f32 %v7877, %v7878
    %v7880 = vsel %vm171, %v7554, 0.0
    %v7881 = vadd.f32 %v7879, %v7880
    %v7882 = vsel %vm171, %v7667, 0.0
    %v7883 = vadd.f32 %v7881, %v7882
    %v7884 = vsel %vm171, %v7780, 0.0
    %v7885 = vadd.f32 %v7883, %v7884
    %v7886 = vsel %vm171, %v6088, 0.0
    %v7887 = vsel %vm171, %v6201, 0.0
    %v7888 = vadd.f32 %v7886, %v7887
    %v7889 = vsel %vm171, %v6314, 0.0
    %v7890 = vadd.f32 %v7888, %v7889
    %v7891 = vsel %vm171, %v6427, 0.0
    %v7892 = vadd.f32 %v7890, %v7891
    %v7893 = vsel %vm171, %v6540, 0.0
    %v7894 = vadd.f32 %v7892, %v7893
    %v7895 = vsel %vm171, %v6653, 0.0
    %v7896 = vadd.f32 %v7894, %v7895
    %v7897 = vsel %vm171, %v6766, 0.0
    %v7898 = vadd.f32 %v7896, %v7897
    %v7899 = vsel %vm171, %v6879, 0.0
    %v7900 = vadd.f32 %v7898, %v7899
    %v7901 = vsel %vm171, %v6992, 0.0
    %v7902 = vadd.f32 %v7900, %v7901
    %v7903 = vsel %vm171, %v7105, 0.0
    %v7904 = vadd.f32 %v7902, %v7903
    %v7905 = vsel %vm171, %v7218, 0.0
    %v7906 = vadd.f32 %v7904, %v7905
    %v7907 = vsel %vm171, %v7331, 0.0
    %v7908 = vadd.f32 %v7906, %v7907
    %v7909 = vsel %vm171, %v7444, 0.0
    %v7910 = vadd.f32 %v7908, %v7909
    %v7911 = vsel %vm171, %v7557, 0.0
    %v7912 = vadd.f32 %v7910, %v7911
    %v7913 = vsel %vm171, %v7670, 0.0
    %v7914 = vadd.f32 %v7912, %v7913
    %v7915 = vsel %vm171, %v7783, 0.0
    %v7916 = vadd.f32 %v7914, %v7915
    %v7917 = vsel %vm171, %v6091, 0.0
    %v7918 = vsel %vm171, %v6204, 0.0
    %v7919 = vadd.f32 %v7917, %v7918
    %v7920 = vsel %vm171, %v6317, 0.0
    %v7921 = vadd.f32 %v7919, %v7920
    %v7922 = vsel %vm171, %v6430, 0.0
    %v7923 = vadd.f32 %v7921, %v7922
    %v7924 = vsel %vm171, %v6543, 0.0
    %v7925 = vadd.f32 %v7923, %v7924
    %v7926 = vsel %vm171, %v6656, 0.0
    %v7927 = vadd.f32 %v7925, %v7926
    %v7928 = vsel %vm171, %v6769, 0.0
    %v7929 = vadd.f32 %v7927, %v7928
    %v7930 = vsel %vm171, %v6882, 0.0
    %v7931 = vadd.f32 %v7929, %v7930
    %v7932 = vsel %vm171, %v6995, 0.0
    %v7933 = vadd.f32 %v7931, %v7932
    %v7934 = vsel %vm171, %v7108, 0.0
    %v7935 = vadd.f32 %v7933, %v7934
    %v7936 = vsel %vm171, %v7221, 0.0
    %v7937 = vadd.f32 %v7935, %v7936
    %v7938 = vsel %vm171, %v7334, 0.0
    %v7939 = vadd.f32 %v7937, %v7938
    %v7940 = vsel %vm171, %v7447, 0.0
    %v7941 = vadd.f32 %v7939, %v7940
    %v7942 = vsel %vm171, %v7560, 0.0
    %v7943 = vadd.f32 %v7941, %v7942
    %v7944 = vsel %vm171, %v7673, 0.0
    %v7945 = vadd.f32 %v7943, %v7944
    %v7946 = vsel %vm171, %v7786, 0.0
    %v7947 = vadd.f32 %v7945, %v7946
    %v7948 = vsel %vm171, %v6094, 0.0
    %v7949 = vsel %vm171, %v6207, 0.0
    %v7950 = vadd.f32 %v7948, %v7949
    %v7951 = vsel %vm171, %v6320, 0.0
    %v7952 = vadd.f32 %v7950, %v7951
    %v7953 = vsel %vm171, %v6433, 0.0
    %v7954 = vadd.f32 %v7952, %v7953
    %v7955 = vsel %vm171, %v6546, 0.0
    %v7956 = vadd.f32 %v7954, %v7955
    %v7957 = vsel %vm171, %v6659, 0.0
    %v7958 = vadd.f32 %v7956, %v7957
    %v7959 = vsel %vm171, %v6772, 0.0
    %v7960 = vadd.f32 %v7958, %v7959
    %v7961 = vsel %vm171, %v6885, 0.0
    %v7962 = vadd.f32 %v7960, %v7961
    %v7963 = vsel %vm171, %v6998, 0.0
    %v7964 = vadd.f32 %v7962, %v7963
    %v7965 = vsel %vm171, %v7111, 0.0
    %v7966 = vadd.f32 %v7964, %v7965
    %v7967 = vsel %vm171, %v7224, 0.0
    %v7968 = vadd.f32 %v7966, %v7967
    %v7969 = vsel %vm171, %v7337, 0.0
    %v7970 = vadd.f32 %v7968, %v7969
    %v7971 = vsel %vm171, %v7450, 0.0
    %v7972 = vadd.f32 %v7970, %v7971
    %v7973 = vsel %vm171, %v7563, 0.0
    %v7974 = vadd.f32 %v7972, %v7973
    %v7975 = vsel %vm171, %v7676, 0.0
    %v7976 = vadd.f32 %v7974, %v7975
    %v7977 = vsel %vm171, %v7789, 0.0
    %v7978 = vadd.f32 %v7976, %v7977
    %v7979 = vsel %vm171, %v6097, 0.0
    %v7980 = vsel %vm171, %v6210, 0.0
    %v7981 = vadd.f32 %v7979, %v7980
    %v7982 = vsel %vm171, %v6323, 0.0
    %v7983 = vadd.f32 %v7981, %v7982
    %v7984 = vsel %vm171, %v6436, 0.0
    %v7985 = vadd.f32 %v7983, %v7984
    %v7986 = vsel %vm171, %v6549, 0.0
    %v7987 = vadd.f32 %v7985, %v7986
    %v7988 = vsel %vm171, %v6662, 0.0
    %v7989 = vadd.f32 %v7987, %v7988
    %v7990 = vsel %vm171, %v6775, 0.0
    %v7991 = vadd.f32 %v7989, %v7990
    %v7992 = vsel %vm171, %v6888, 0.0
    %v7993 = vadd.f32 %v7991, %v7992
    %v7994 = vsel %vm171, %v7001, 0.0
    %v7995 = vadd.f32 %v7993, %v7994
    %v7996 = vsel %vm171, %v7114, 0.0
    %v7997 = vadd.f32 %v7995, %v7996
    %v7998 = vsel %vm171, %v7227, 0.0
    %v7999 = vadd.f32 %v7997, %v7998
    %v8000 = vsel %vm171, %v7340, 0.0
    %v8001 = vadd.f32 %v7999, %v8000
    %v8002 = vsel %vm171, %v7453, 0.0
    %v8003 = vadd.f32 %v8001, %v8002
    %v8004 = vsel %vm171, %v7566, 0.0
    %v8005 = vadd.f32 %v8003, %v8004
    %v8006 = vsel %vm171, %v7679, 0.0
    %v8007 = vadd.f32 %v8005, %v8006
    %v8008 = vsel %vm171, %v7792, 0.0
    %v8009 = vadd.f32 %v8007, %v8008
    %v8010 = vsel %vm171, %v6100, 0.0
    %v8011 = vsel %vm171, %v6213, 0.0
    %v8012 = vadd.f32 %v8010, %v8011
    %v8013 = vsel %vm171, %v6326, 0.0
    %v8014 = vadd.f32 %v8012, %v8013
    %v8015 = vsel %vm171, %v6439, 0.0
    %v8016 = vadd.f32 %v8014, %v8015
    %v8017 = vsel %vm171, %v6552, 0.0
    %v8018 = vadd.f32 %v8016, %v8017
    %v8019 = vsel %vm171, %v6665, 0.0
    %v8020 = vadd.f32 %v8018, %v8019
    %v8021 = vsel %vm171, %v6778, 0.0
    %v8022 = vadd.f32 %v8020, %v8021
    %v8023 = vsel %vm171, %v6891, 0.0
    %v8024 = vadd.f32 %v8022, %v8023
    %v8025 = vsel %vm171, %v7004, 0.0
    %v8026 = vadd.f32 %v8024, %v8025
    %v8027 = vsel %vm171, %v7117, 0.0
    %v8028 = vadd.f32 %v8026, %v8027
    %v8029 = vsel %vm171, %v7230, 0.0
    %v8030 = vadd.f32 %v8028, %v8029
    %v8031 = vsel %vm171, %v7343, 0.0
    %v8032 = vadd.f32 %v8030, %v8031
    %v8033 = vsel %vm171, %v7456, 0.0
    %v8034 = vadd.f32 %v8032, %v8033
    %v8035 = vsel %vm171, %v7569, 0.0
    %v8036 = vadd.f32 %v8034, %v8035
    %v8037 = vsel %vm171, %v7682, 0.0
    %v8038 = vadd.f32 %v8036, %v8037
    %v8039 = vsel %vm171, %v7795, 0.0
    %v8040 = vadd.f32 %v8038, %v8039
    %v8041 = vsel %vm171, %v6103, 0.0
    %v8042 = vsel %vm171, %v6216, 0.0
    %v8043 = vadd.f32 %v8041, %v8042
    %v8044 = vsel %vm171, %v6329, 0.0
    %v8045 = vadd.f32 %v8043, %v8044
    %v8046 = vsel %vm171, %v6442, 0.0
    %v8047 = vadd.f32 %v8045, %v8046
    %v8048 = vsel %vm171, %v6555, 0.0
    %v8049 = vadd.f32 %v8047, %v8048
    %v8050 = vsel %vm171, %v6668, 0.0
    %v8051 = vadd.f32 %v8049, %v8050
    %v8052 = vsel %vm171, %v6781, 0.0
    %v8053 = vadd.f32 %v8051, %v8052
    %v8054 = vsel %vm171, %v6894, 0.0
    %v8055 = vadd.f32 %v8053, %v8054
    %v8056 = vsel %vm171, %v7007, 0.0
    %v8057 = vadd.f32 %v8055, %v8056
    %v8058 = vsel %vm171, %v7120, 0.0
    %v8059 = vadd.f32 %v8057, %v8058
    %v8060 = vsel %vm171, %v7233, 0.0
    %v8061 = vadd.f32 %v8059, %v8060
    %v8062 = vsel %vm171, %v7346, 0.0
    %v8063 = vadd.f32 %v8061, %v8062
    %v8064 = vsel %vm171, %v7459, 0.0
    %v8065 = vadd.f32 %v8063, %v8064
    %v8066 = vsel %vm171, %v7572, 0.0
    %v8067 = vadd.f32 %v8065, %v8066
    %v8068 = vsel %vm171, %v7685, 0.0
    %v8069 = vadd.f32 %v8067, %v8068
    %v8070 = vsel %vm171, %v7798, 0.0
    %v8071 = vadd.f32 %v8069, %v8070
    %v8072 = vsel %vm171, %v6106, 0.0
    %v8073 = vsel %vm171, %v6219, 0.0
    %v8074 = vadd.f32 %v8072, %v8073
    %v8075 = vsel %vm171, %v6332, 0.0
    %v8076 = vadd.f32 %v8074, %v8075
    %v8077 = vsel %vm171, %v6445, 0.0
    %v8078 = vadd.f32 %v8076, %v8077
    %v8079 = vsel %vm171, %v6558, 0.0
    %v8080 = vadd.f32 %v8078, %v8079
    %v8081 = vsel %vm171, %v6671, 0.0
    %v8082 = vadd.f32 %v8080, %v8081
    %v8083 = vsel %vm171, %v6784, 0.0
    %v8084 = vadd.f32 %v8082, %v8083
    %v8085 = vsel %vm171, %v6897, 0.0
    %v8086 = vadd.f32 %v8084, %v8085
    %v8087 = vsel %vm171, %v7010, 0.0
    %v8088 = vadd.f32 %v8086, %v8087
    %v8089 = vsel %vm171, %v7123, 0.0
    %v8090 = vadd.f32 %v8088, %v8089
    %v8091 = vsel %vm171, %v7236, 0.0
    %v8092 = vadd.f32 %v8090, %v8091
    %v8093 = vsel %vm171, %v7349, 0.0
    %v8094 = vadd.f32 %v8092, %v8093
    %v8095 = vsel %vm171, %v7462, 0.0
    %v8096 = vadd.f32 %v8094, %v8095
    %v8097 = vsel %vm171, %v7575, 0.0
    %v8098 = vadd.f32 %v8096, %v8097
    %v8099 = vsel %vm171, %v7688, 0.0
    %v8100 = vadd.f32 %v8098, %v8099
    %v8101 = vsel %vm171, %v7801, 0.0
    %v8102 = vadd.f32 %v8100, %v8101
    %v8103 = vsel %vm171, %v6109, 0.0
    %v8104 = vsel %vm171, %v6222, 0.0
    %v8105 = vadd.f32 %v8103, %v8104
    %v8106 = vsel %vm171, %v6335, 0.0
    %v8107 = vadd.f32 %v8105, %v8106
    %v8108 = vsel %vm171, %v6448, 0.0
    %v8109 = vadd.f32 %v8107, %v8108
    %v8110 = vsel %vm171, %v6561, 0.0
    %v8111 = vadd.f32 %v8109, %v8110
    %v8112 = vsel %vm171, %v6674, 0.0
    %v8113 = vadd.f32 %v8111, %v8112
    %v8114 = vsel %vm171, %v6787, 0.0
    %v8115 = vadd.f32 %v8113, %v8114
    %v8116 = vsel %vm171, %v6900, 0.0
    %v8117 = vadd.f32 %v8115, %v8116
    %v8118 = vsel %vm171, %v7013, 0.0
    %v8119 = vadd.f32 %v8117, %v8118
    %v8120 = vsel %vm171, %v7126, 0.0
    %v8121 = vadd.f32 %v8119, %v8120
    %v8122 = vsel %vm171, %v7239, 0.0
    %v8123 = vadd.f32 %v8121, %v8122
    %v8124 = vsel %vm171, %v7352, 0.0
    %v8125 = vadd.f32 %v8123, %v8124
    %v8126 = vsel %vm171, %v7465, 0.0
    %v8127 = vadd.f32 %v8125, %v8126
    %v8128 = vsel %vm171, %v7578, 0.0
    %v8129 = vadd.f32 %v8127, %v8128
    %v8130 = vsel %vm171, %v7691, 0.0
    %v8131 = vadd.f32 %v8129, %v8130
    %v8132 = vsel %vm171, %v7804, 0.0
    %v8133 = vadd.f32 %v8131, %v8132
    %v8134 = vsel %vm171, %v6112, 0.0
    %v8135 = vsel %vm171, %v6225, 0.0
    %v8136 = vadd.f32 %v8134, %v8135
    %v8137 = vsel %vm171, %v6338, 0.0
    %v8138 = vadd.f32 %v8136, %v8137
    %v8139 = vsel %vm171, %v6451, 0.0
    %v8140 = vadd.f32 %v8138, %v8139
    %v8141 = vsel %vm171, %v6564, 0.0
    %v8142 = vadd.f32 %v8140, %v8141
    %v8143 = vsel %vm171, %v6677, 0.0
    %v8144 = vadd.f32 %v8142, %v8143
    %v8145 = vsel %vm171, %v6790, 0.0
    %v8146 = vadd.f32 %v8144, %v8145
    %v8147 = vsel %vm171, %v6903, 0.0
    %v8148 = vadd.f32 %v8146, %v8147
    %v8149 = vsel %vm171, %v7016, 0.0
    %v8150 = vadd.f32 %v8148, %v8149
    %v8151 = vsel %vm171, %v7129, 0.0
    %v8152 = vadd.f32 %v8150, %v8151
    %v8153 = vsel %vm171, %v7242, 0.0
    %v8154 = vadd.f32 %v8152, %v8153
    %v8155 = vsel %vm171, %v7355, 0.0
    %v8156 = vadd.f32 %v8154, %v8155
    %v8157 = vsel %vm171, %v7468, 0.0
    %v8158 = vadd.f32 %v8156, %v8157
    %v8159 = vsel %vm171, %v7581, 0.0
    %v8160 = vadd.f32 %v8158, %v8159
    %v8161 = vsel %vm171, %v7694, 0.0
    %v8162 = vadd.f32 %v8160, %v8161
    %v8163 = vsel %vm171, %v7807, 0.0
    %v8164 = vadd.f32 %v8162, %v8163
    %v8165 = vsel %vm171, %v6115, 0.0
    %v8166 = vsel %vm171, %v6228, 0.0
    %v8167 = vadd.f32 %v8165, %v8166
    %v8168 = vsel %vm171, %v6341, 0.0
    %v8169 = vadd.f32 %v8167, %v8168
    %v8170 = vsel %vm171, %v6454, 0.0
    %v8171 = vadd.f32 %v8169, %v8170
    %v8172 = vsel %vm171, %v6567, 0.0
    %v8173 = vadd.f32 %v8171, %v8172
    %v8174 = vsel %vm171, %v6680, 0.0
    %v8175 = vadd.f32 %v8173, %v8174
    %v8176 = vsel %vm171, %v6793, 0.0
    %v8177 = vadd.f32 %v8175, %v8176
    %v8178 = vsel %vm171, %v6906, 0.0
    %v8179 = vadd.f32 %v8177, %v8178
    %v8180 = vsel %vm171, %v7019, 0.0
    %v8181 = vadd.f32 %v8179, %v8180
    %v8182 = vsel %vm171, %v7132, 0.0
    %v8183 = vadd.f32 %v8181, %v8182
    %v8184 = vsel %vm171, %v7245, 0.0
    %v8185 = vadd.f32 %v8183, %v8184
    %v8186 = vsel %vm171, %v7358, 0.0
    %v8187 = vadd.f32 %v8185, %v8186
    %v8188 = vsel %vm171, %v7471, 0.0
    %v8189 = vadd.f32 %v8187, %v8188
    %v8190 = vsel %vm171, %v7584, 0.0
    %v8191 = vadd.f32 %v8189, %v8190
    %v8192 = vsel %vm171, %v7697, 0.0
    %v8193 = vadd.f32 %v8191, %v8192
    %v8194 = vsel %vm171, %v7810, 0.0
    %v8195 = vadd.f32 %v8193, %v8194
    %v8196 = vsel %vm171, %v6118, 0.0
    %v8197 = vsel %vm171, %v6231, 0.0
    %v8198 = vadd.f32 %v8196, %v8197
    %v8199 = vsel %vm171, %v6344, 0.0
    %v8200 = vadd.f32 %v8198, %v8199
    %v8201 = vsel %vm171, %v6457, 0.0
    %v8202 = vadd.f32 %v8200, %v8201
    %v8203 = vsel %vm171, %v6570, 0.0
    %v8204 = vadd.f32 %v8202, %v8203
    %v8205 = vsel %vm171, %v6683, 0.0
    %v8206 = vadd.f32 %v8204, %v8205
    %v8207 = vsel %vm171, %v6796, 0.0
    %v8208 = vadd.f32 %v8206, %v8207
    %v8209 = vsel %vm171, %v6909, 0.0
    %v8210 = vadd.f32 %v8208, %v8209
    %v8211 = vsel %vm171, %v7022, 0.0
    %v8212 = vadd.f32 %v8210, %v8211
    %v8213 = vsel %vm171, %v7135, 0.0
    %v8214 = vadd.f32 %v8212, %v8213
    %v8215 = vsel %vm171, %v7248, 0.0
    %v8216 = vadd.f32 %v8214, %v8215
    %v8217 = vsel %vm171, %v7361, 0.0
    %v8218 = vadd.f32 %v8216, %v8217
    %v8219 = vsel %vm171, %v7474, 0.0
    %v8220 = vadd.f32 %v8218, %v8219
    %v8221 = vsel %vm171, %v7587, 0.0
    %v8222 = vadd.f32 %v8220, %v8221
    %v8223 = vsel %vm171, %v7700, 0.0
    %v8224 = vadd.f32 %v8222, %v8223
    %v8225 = vsel %vm171, %v7813, 0.0
    %v8226 = vadd.f32 %v8224, %v8225
    %v8227 = vsel %vm171, %v6121, 0.0
    %v8228 = vsel %vm171, %v6234, 0.0
    %v8229 = vadd.f32 %v8227, %v8228
    %v8230 = vsel %vm171, %v6347, 0.0
    %v8231 = vadd.f32 %v8229, %v8230
    %v8232 = vsel %vm171, %v6460, 0.0
    %v8233 = vadd.f32 %v8231, %v8232
    %v8234 = vsel %vm171, %v6573, 0.0
    %v8235 = vadd.f32 %v8233, %v8234
    %v8236 = vsel %vm171, %v6686, 0.0
    %v8237 = vadd.f32 %v8235, %v8236
    %v8238 = vsel %vm171, %v6799, 0.0
    %v8239 = vadd.f32 %v8237, %v8238
    %v8240 = vsel %vm171, %v6912, 0.0
    %v8241 = vadd.f32 %v8239, %v8240
    %v8242 = vsel %vm171, %v7025, 0.0
    %v8243 = vadd.f32 %v8241, %v8242
    %v8244 = vsel %vm171, %v7138, 0.0
    %v8245 = vadd.f32 %v8243, %v8244
    %v8246 = vsel %vm171, %v7251, 0.0
    %v8247 = vadd.f32 %v8245, %v8246
    %v8248 = vsel %vm171, %v7364, 0.0
    %v8249 = vadd.f32 %v8247, %v8248
    %v8250 = vsel %vm171, %v7477, 0.0
    %v8251 = vadd.f32 %v8249, %v8250
    %v8252 = vsel %vm171, %v7590, 0.0
    %v8253 = vadd.f32 %v8251, %v8252
    %v8254 = vsel %vm171, %v7703, 0.0
    %v8255 = vadd.f32 %v8253, %v8254
    %v8256 = vsel %vm171, %v7816, 0.0
    %v8257 = vadd.f32 %v8255, %v8256
    %v8258 = vsel %vm171, %v6124, 0.0
    %v8259 = vsel %vm171, %v6237, 0.0
    %v8260 = vadd.f32 %v8258, %v8259
    %v8261 = vsel %vm171, %v6350, 0.0
    %v8262 = vadd.f32 %v8260, %v8261
    %v8263 = vsel %vm171, %v6463, 0.0
    %v8264 = vadd.f32 %v8262, %v8263
    %v8265 = vsel %vm171, %v6576, 0.0
    %v8266 = vadd.f32 %v8264, %v8265
    %v8267 = vsel %vm171, %v6689, 0.0
    %v8268 = vadd.f32 %v8266, %v8267
    %v8269 = vsel %vm171, %v6802, 0.0
    %v8270 = vadd.f32 %v8268, %v8269
    %v8271 = vsel %vm171, %v6915, 0.0
    %v8272 = vadd.f32 %v8270, %v8271
    %v8273 = vsel %vm171, %v7028, 0.0
    %v8274 = vadd.f32 %v8272, %v8273
    %v8275 = vsel %vm171, %v7141, 0.0
    %v8276 = vadd.f32 %v8274, %v8275
    %v8277 = vsel %vm171, %v7254, 0.0
    %v8278 = vadd.f32 %v8276, %v8277
    %v8279 = vsel %vm171, %v7367, 0.0
    %v8280 = vadd.f32 %v8278, %v8279
    %v8281 = vsel %vm171, %v7480, 0.0
    %v8282 = vadd.f32 %v8280, %v8281
    %v8283 = vsel %vm171, %v7593, 0.0
    %v8284 = vadd.f32 %v8282, %v8283
    %v8285 = vsel %vm171, %v7706, 0.0
    %v8286 = vadd.f32 %v8284, %v8285
    %v8287 = vsel %vm171, %v7819, 0.0
    %v8288 = vadd.f32 %v8286, %v8287
    %v8289 = vsel %vm171, %v6127, 0.0
    %v8290 = vsel %vm171, %v6240, 0.0
    %v8291 = vadd.f32 %v8289, %v8290
    %v8292 = vsel %vm171, %v6353, 0.0
    %v8293 = vadd.f32 %v8291, %v8292
    %v8294 = vsel %vm171, %v6466, 0.0
    %v8295 = vadd.f32 %v8293, %v8294
    %v8296 = vsel %vm171, %v6579, 0.0
    %v8297 = vadd.f32 %v8295, %v8296
    %v8298 = vsel %vm171, %v6692, 0.0
    %v8299 = vadd.f32 %v8297, %v8298
    %v8300 = vsel %vm171, %v6805, 0.0
    %v8301 = vadd.f32 %v8299, %v8300
    %v8302 = vsel %vm171, %v6918, 0.0
    %v8303 = vadd.f32 %v8301, %v8302
    %v8304 = vsel %vm171, %v7031, 0.0
    %v8305 = vadd.f32 %v8303, %v8304
    %v8306 = vsel %vm171, %v7144, 0.0
    %v8307 = vadd.f32 %v8305, %v8306
    %v8308 = vsel %vm171, %v7257, 0.0
    %v8309 = vadd.f32 %v8307, %v8308
    %v8310 = vsel %vm171, %v7370, 0.0
    %v8311 = vadd.f32 %v8309, %v8310
    %v8312 = vsel %vm171, %v7483, 0.0
    %v8313 = vadd.f32 %v8311, %v8312
    %v8314 = vsel %vm171, %v7596, 0.0
    %v8315 = vadd.f32 %v8313, %v8314
    %v8316 = vsel %vm171, %v7709, 0.0
    %v8317 = vadd.f32 %v8315, %v8316
    %v8318 = vsel %vm171, %v7822, 0.0
    %v8319 = vadd.f32 %v8317, %v8318
    %v8320 = vld [vmem:[%s6] sm:$0x1]
    %v8322 = vperm.slane %v8320, 0
    %v8324 = vadd.f32 %v7854, %v8322
    %v8325 = vadd.f32 %v7885, %v8322
    %v8326 = vadd.f32 %v7916, %v8322
    %v8327 = vadd.f32 %v7947, %v8322
    %v8328 = vadd.f32 %v7978, %v8322
    %v8329 = vadd.f32 %v8009, %v8322
    %v8330 = vadd.f32 %v8040, %v8322
    %v8331 = vadd.f32 %v8071, %v8322
    %v8332 = vadd.f32 %v8102, %v8322
    %v8333 = vadd.f32 %v8133, %v8322
    %v8334 = vadd.f32 %v8164, %v8322
    %v8335 = vadd.f32 %v8195, %v8322
    %v8336 = vadd.f32 %v8226, %v8322
    %v8337 = vadd.f32 %v8257, %v8322
    %v8338 = vadd.f32 %v8288, %v8322
    %v8339 = vadd.f32 %v8319, %v8322
    %8340 = vxpose.xlu0.b32.start [1/16] %v8324, 128
    %8341 = vxpose.xlu0.b32.cont [2/16] %v8325, 128
    %8342 = vxpose.xlu0.b32.cont [3/16] %v8326, 128
    %8343 = vxpose.xlu0.b32.cont [4/16] %v8327, 128
    %8344 = vxpose.xlu0.b32.cont [5/16] %v8328, 128
    %8345 = vxpose.xlu0.b32.cont [6/16] %v8329, 128
    %8346 = vxpose.xlu0.b32.cont [7/16] %v8330, 128
    %8347 = vxpose.xlu0.b32.cont [8/16] %v8331, 128
    %8348 = vxpose.xlu0.b32.cont [9/16] %v8332, 128
    %8349 = vxpose.xlu0.b32.cont [10/16] %v8333, 128
    %8350 = vxpose.xlu0.b32.cont [11/16] %v8334, 128
    %8351 = vxpose.xlu0.b32.cont [12/16] %v8335, 128
    %8352 = vxpose.xlu0.b32.cont [13/16] %v8336, 128
    %8353 = vxpose.xlu0.b32.cont [14/16] %v8337, 128
    %8354 = vxpose.xlu0.b32.cont [15/16] %v8338, 128
    %8355 = vxpose.xlu0.b32.end [16/16] %v8339, 128
    %v8356 = vpop.trf.xlu0
    %v8357 = vpop.trf.xlu0
    %v8358 = vpop.trf.xlu0
    %v8359 = vpop.trf.xlu0
    %v8360 = vpop.trf.xlu0
    %v8361 = vpop.trf.xlu0
    %v8362 = vpop.trf.xlu0
    %v8363 = vpop.trf.xlu0
    %v8364 = vpop.trf.xlu0
    %v8365 = vpop.trf.xlu0
    %v8366 = vpop.trf.xlu0
    %v8367 = vpop.trf.xlu0
    %v8368 = vpop.trf.xlu0
    %v8369 = vpop.trf.xlu0
    %v8370 = vpop.trf.xlu0
    %v8371 = vpop.trf.xlu0
    %8372 = vst [vmem:[#allocation10] sm:$0xff] %v8356
    %8373 = vst [vmem:[#allocation10 + $0x8] sm:$0xff] %v8357
    %8374 = vst [vmem:[#allocation10 + $0x10] sm:$0xff] %v8358
    %8375 = vst [vmem:[#allocation10 + $0x18] sm:$0xff] %v8359
    // Predicated region
    $region46: #{tpu_custom_call.1} parent=1 // pred_check
      _
    $region47: #{tpu_custom_call.1} parent=1 // pred_check_branch
      %8377 = sbr.rel (0) target = $region49
    $region48: #{tpu_custom_call.1} parent=1 // pred_region
      %8379 = vsyncadd [#allocation4], 0
      %s8380 = sshll.u32 [#allocation10], 4
      %s8381 = int_to_ptr.vmem [resolvable:$true] %s8380
      %s8382 = sshll.u32 %s7, 4
      %s8383 = int_to_ptr.hbm [resolvable:$true] %s8382
      %8388 = dma.vmem_to_hbm [thread:$0]  %s8381, 512, %s8383, [#allocation4], 128, 128, 8
    $region49: #{tpu_custom_call.1} parent=1 // pred_fallthru
      _
    // Predicated region
    $region50: #{tpu_custom_call.1} parent=1 // pred_check
      _
    $region51: #{tpu_custom_call.1} parent=1 // pred_check_branch
      %8390 = sbr.rel (0) target = $region53
    $region52: #{tpu_custom_call.1} parent=1 // pred_region
      %8392 = dma.done [#allocation4], 512
    $region53: #{tpu_custom_call.1} parent=1 // pred_fallthru
      _
    %8393 = vsyncpa [#allocation3], 1
    %8394 = vsyncpa [#allocation6], 1
    %8395 = vsyncpa [#allocation9], 1
    %8396 = vsyncpa [#allocation4], 1

</llo_original>
